<compile_context>
chip_gen: v7x
topology: tpu7x:2x2x1
jax: 0.10.0
libtpu: 0.0.40
codegen_flags: <defaults>
</compile_context>

<pallas_src>
import functools
import math

import numpy as np
import jax
import jax.numpy as jnp
from jax.experimental import pallas as pl
from jax.experimental.pallas import tpu as pltpu

_EPS = 1e-5            # PyTorch LayerNorm default
_APPROX_RECIP = True   # EUP approx reciprocal in softmax denominators (~1e-3 rel err)


# ----------------------------------------------------------------------------
# small in-kernel helpers (f32 math)
# ----------------------------------------------------------------------------
def _recip(x):
    return pl.reciprocal(x, approx=True) if _APPROX_RECIP else 1.0 / x


def _layer_norm(z, g, b, eps=_EPS):
    mu = jnp.mean(z, axis=-1, keepdims=True)
    var = jnp.mean(jnp.square(z - mu), axis=-1, keepdims=True)
    return (z - mu) * jax.lax.rsqrt(var + eps) * g + b


def _softmax_lastdim(x):
    m = jnp.max(x, axis=-1, keepdims=True)
    e = jnp.exp(x - m)
    return e * _recip(jnp.sum(e, axis=-1, keepdims=True))


def _vmem_limit_bytes():
    """Per-generation scoped-VMEM budget: physical minus headroom, capped at 100MiB."""
    cap = 64 * 1024 * 1024
    try:
        info = pltpu.get_tpu_info()
        cap = int(getattr(info, "vmem_capacity_bytes", cap))
    except Exception:
        pass
    return int(min(max(cap - 8 * 1024 * 1024, 32 * 1024 * 1024), 100 * 1024 * 1024))


# ----------------------------------------------------------------------------
# Kernel A: fused self-attention (merged QK in-proj, batched heads) + norm1
# ----------------------------------------------------------------------------
def _self_attn_norm1_kernel(q_ref, e_ref, wqk_ref, bqk_ref, wv_ref, bv_ref,
                            wo_ref, bo_ref, g1_ref, be1_ref,
                            o_emb_ref, o_task_ref, *, n_heads, len_q):
    xq = q_ref[0]                            # [L, C] bf16, query == key (pos folded)
    xe = e_ref[0].astype(jnp.float32)        # [L, C] f32, value source & residual
    L, C = xq.shape
    dh = C // n_heads

    # merged Q/K in-projection; 1/sqrt(dh) was folded into the Q half at prep time.
    qk = jnp.dot(xq, wqk_ref[...], preferred_element_type=jnp.float32) + bqk_ref[...]
    v = jnp.dot(xe.astype(jnp.bfloat16), wv_ref[...],
                preferred_element_type=jnp.float32) + bv_ref[...]

    # heads as a leading batch dim via reshape/transpose (no per-head slice+stack)
    qkb = qk.astype(jnp.bfloat16)
    qh = qkb[:, :C].reshape(L, n_heads, dh).swapaxes(0, 1)       # [H, L, dh]
    kh = qkb[:, C:].reshape(L, n_heads, dh).swapaxes(0, 1)       # [H, L, dh]
    vh = v.astype(jnp.bfloat16).reshape(L, n_heads, dh).swapaxes(0, 1)

    s = jnp.einsum("hqd,hkd->hqk", qh, kh, preferred_element_type=jnp.float32)
    p = _softmax_lastdim(s).astype(jnp.bfloat16)
    oh = jnp.einsum("hqk,hkd->hqd", p, vh, preferred_element_type=jnp.float32)
    attn = oh.swapaxes(0, 1).reshape(L, C).astype(jnp.bfloat16)  # [L, C]

    out = jnp.dot(attn, wo_ref[...], preferred_element_type=jnp.float32) + bo_ref[...]
    zn = _layer_norm(xe + out, g1_ref[...], be1_ref[...])        # dropout p = 0
    o_emb_ref[0] = zn[:len_q, :].astype(o_emb_ref.dtype)
    o_task_ref[0] = zn[len_q:, :].astype(o_task_ref.dtype)


def self_attn_norm1(q_cat_bf, emb_cat, wp, n_heads, len_q):
    bs, L, C = emb_cat.shape
    n_task = L - len_q
    seq_spec = pl.BlockSpec((1, L, C), lambda b: (b, 0, 0))

    def full2(a):
        return pl.BlockSpec(a.shape, lambda b: (0, 0))

    weights = [wp["sa_wqk"], wp["sa_bqk"], wp["sa_wv"], wp["sa_bv"],
               wp["sa_wo"], wp["sa_bo"], wp["ln1_g"], wp["ln1_b"]]
    return pl.pallas_call(
        functools.partial(_self_attn_norm1_kernel, n_heads=n_heads, len_q=len_q),
        grid=(bs,),
        in_specs=[seq_spec, seq_spec] + [full2(w) for w in weights],
        out_specs=(pl.BlockSpec((1, len_q, C), lambda b: (b, 0, 0)),
                   pl.BlockSpec((1, n_task, C), lambda b: (b, 0, 0))),
        out_shape=(jax.ShapeDtypeStruct((bs, len_q, C), emb_cat.dtype),
                   jax.ShapeDtypeStruct((bs, n_task, C), emb_cat.dtype)),
        compiler_params=pltpu.CompilerParams(
            dimension_semantics=("parallel",),
            vmem_limit_bytes=_vmem_limit_bytes()),
    )(q_cat_bf, emb_cat, *weights)


# ----------------------------------------------------------------------------
# Kernel V: value_proj + padding masked_fill, emitted in bf16 (hoisted matmul)
# ----------------------------------------------------------------------------
def _value_proj_kernel(f_ref, m_ref, w_ref, b_ref, o_ref):
    val = jnp.dot(f_ref[0], w_ref[...], preferred_element_type=jnp.float32) + b_ref[...]
    o_ref[0] = (val * m_ref[0]).astype(o_ref.dtype)


def value_proj(feats_bf, keep, wp):
    bs, len_v, C = feats_bf.shape
    tv = len_v if (len_v <= 1024 or len_v % 8 != 0) else 512
    grid = (bs, pl.cdiv(len_v, tv))

    def full2(a):
        return pl.BlockSpec(a.shape, lambda b, i: (0, 0))

    return pl.pallas_call(
        _value_proj_kernel,
        grid=grid,
        in_specs=[pl.BlockSpec((1, tv, C), lambda b, i: (b, i, 0)),
                  pl.BlockSpec((1, tv, 1), lambda b, i: (b, i, 0)),
                  full2(wp["va_w"]), full2(wp["va_b"])],
        out_specs=pl.BlockSpec((1, tv, C), lambda b, i: (b, i, 0)),
        out_shape=jax.ShapeDtypeStruct((bs, len_v, C), jnp.bfloat16),
        compiler_params=pltpu.CompilerParams(
            dimension_semantics=("parallel", "parallel"),
            vmem_limit_bytes=_vmem_limit_bytes()),
    )(feats_bf, keep, wp["va_w"], wp["va_b"])


# ----------------------------------------------------------------------------
# Kernel B: merged offsets/attn-weight projection + MS-deformable sampling +
#           output_proj + norm2 + FFN + norm3, tiled over (batch, query tile).
# ----------------------------------------------------------------------------
def _cross_ffn_kernel(emb_ref, qx_ref, refer_ref, rc_ref, val_ref,
                      sow_ref, sob_ref, opw_ref, opb_ref, g2_ref, be2_ref,
                      w1_ref, fb1_ref, w2_ref, fb2_ref, g3_ref, be3_ref,
                      o_ref, *, shapes, n_heads, n_levels, n_points, hw_chunk):
    emb = emb_ref[0].astype(jnp.float32)     # [TQ, C] residual
    qx = qx_ref[0]                           # [TQ, C] bf16 (embed + query_pos)
    rb = refer_ref[0].astype(jnp.float32)    # [TQ, 4] (cx, cy, w, h)

    tq, C = emb.shape
    dh = C // n_heads
    HLP = n_heads * n_levels * n_points

    # merged sampling_offsets + attention_weights projection (bf16 MXU);
    # columns are pre-permuted to [off_x | off_y | logits | pad] and the
    # 0.5/n_points location scale is folded into the offset columns.
    proj = jnp.dot(qx, sow_ref[...], preferred_element_type=jnp.float32) + sob_ref[...]
    off_x = proj[:, :HLP]
    off_y = proj[:, HLP:2 * HLP]
    logits = proj[:, 2 * HLP:3 * HLP]

    # one wide per-head softmax over the (level, point) axis
    aw = _softmax_lastdim(
        logits.reshape(tq, n_heads, n_levels * n_points)).reshape(tq, HLP)

    cx, cy, bw, bh = rb[:, 0:1], rb[:, 1:2], rb[:, 2:3], rb[:, 3:4]
    loc_x = cx + off_x * bw                  # [TQ, HLP] normalized sample locations
    loc_y = cy + off_y * bh

    # TODO(synk): at production config (H=8, L=4, P=4) convert the static head /
    # point Python loops below to lax.fori_loop to bound trace size & vreg ranges.
    acc = [jnp.zeros((tq, dh), jnp.float32) for _ in range(n_heads)]
    start = 0
    for lvl, (Hl, Wl) in enumerate(shapes):
        hw = Hl * Wl
        for c0 in range(0, hw, hw_chunk):
            csz = min(hw_chunk, hw - c0)
            s0 = start + c0
            v_chunk = val_ref[0, s0:s0 + csz, :]          # [csz, C] bf16
            rc_chunk = rc_ref[:, s0:s0 + csz]             # [2, csz] f32
            rid = rc_chunk[0:1, :]                        # row index within level
            cid = rc_chunk[1:2, :]                        # col index within level
            for h in range(n_heads):
                sel = jnp.zeros((tq, csz), jnp.float32)
                for p in range(n_points):
                    col = (h * n_levels + lvl) * n_points + p
                    # pixel coords (grid_sample, align_corners=False)
                    py = loc_y[:, col:col + 1] * Hl - 0.5      # [TQ, 1]
                    px = loc_x[:, col:col + 1] * Wl - 0.5
                    a = aw[:, col:col + 1]
                    # separable bilinear "hat" weights == grid_sample bilinear
                    # with padding_mode='zeros' (OOB rows/cols weight 0).
                    wy = jnp.maximum(1.0 - jnp.abs(rid - py), 0.0)   # [TQ, csz]
                    wx = jnp.maximum(1.0 - jnp.abs(cid - px), 0.0)
                    sel = sel + (a * wy) * wx
                smp = jnp.dot(sel.astype(jnp.bfloat16),
                              v_chunk[:, h * dh:(h + 1) * dh],
                              preferred_element_type=jnp.float32)    # [TQ, dh]
                acc[h] = acc[h] + smp
        start += hw

    sampled = jnp.concatenate(acc, axis=-1)                          # [TQ, C]

    # ---- output_proj + residual + norm2 ----
    cross = jnp.dot(sampled.astype(jnp.bfloat16), opw_ref[...],
                    preferred_element_type=jnp.float32) + opb_ref[...]
    e2 = _layer_norm(emb + cross, g2_ref[...], be2_ref[...])

    # ---- FFN (linear1 -> ReLU -> linear2) + residual + norm3 ----
    hdn = jnp.dot(e2.astype(jnp.bfloat16), w1_ref[...],
                  preferred_element_type=jnp.float32) + fb1_ref[...]
    hdn = jnp.maximum(hdn, 0.0)
    t2 = jnp.dot(hdn.astype(jnp.bfloat16), w2_ref[...],
                 preferred_element_type=jnp.float32) + fb2_ref[...]
    o_ref[0] = _layer_norm(e2 + t2, g3_ref[...], be3_ref[...]).astype(o_ref.dtype)


def cross_attn_ffn(emb2, qx_bf, refer_bbox, val_bf, rowcol, wp, shapes,
                   n_heads, n_levels, n_points, hw_chunk=2048):
    bs, len_q, C = emb2.shape
    len_v = val_bf.shape[1]
    tq = len_q if (len_q <= 128 or len_q % 8 != 0) else 128
    grid = (bs, pl.cdiv(len_q, tq))          # q-tiles innermost: value fetched once per batch

    def full2(a):
        return pl.BlockSpec(a.shape, lambda b, i: (0, 0))

    weights = [wp["so_aw_w"], wp["so_aw_b"], wp["op_w"], wp["op_b"],
               wp["ln2_g"], wp["ln2_b"], wp["w1"], wp["b1"],
               wp["w2"], wp["b2"], wp["ln3_g"], wp["ln3_b"]]
    return pl.pallas_call(
        functools.partial(_cross_ffn_kernel, shapes=tuple(shapes),
                          n_heads=n_heads, n_levels=n_levels,
                          n_points=n_points, hw_chunk=hw_chunk),
        grid=grid,
        in_specs=[pl.BlockSpec((1, tq, C), lambda b, i: (b, i, 0)),
                  pl.BlockSpec((1, tq, C), lambda b, i: (b, i, 0)),
                  pl.BlockSpec((1, tq, 4), lambda b, i: (b, i, 0)),
                  pl.BlockSpec((2, len_v), lambda b, i: (0, 0)),
                  pl.BlockSpec((1, len_v, C), lambda b, i: (b, 0, 0))]
                 + [full2(w) for w in weights],
        out_specs=pl.BlockSpec((1, tq, C), lambda b, i: (b, i, 0)),
        out_shape=jax.ShapeDtypeStruct((bs, len_q, C), emb2.dtype),
        compiler_params=pltpu.CompilerParams(
            dimension_semantics=("parallel", "parallel"),
            vmem_limit_bytes=_vmem_limit_bytes()),
    )(emb2, qx_bf, refer_bbox, rowcol, val_bf, *weights)


# ----------------------------------------------------------------------------
# parameters (deterministic, synthetic) + packing/casting for the kernels
# ----------------------------------------------------------------------------
def sampling_offset_bias(n_heads, n_levels, n_points):
    # Reproduces MSDeformAttn._reset_parameters grid init for sampling_offsets.bias
    thetas = jnp.arange(n_heads, dtype=jnp.float32) * (2.0 * math.pi / n_heads)
    grid = jnp.stack([jnp.cos(thetas), jnp.sin(thetas)], -1)                # [H, 2]
    grid = grid / jnp.max(jnp.abs(grid), axis=-1, keepdims=True)
    grid = jnp.tile(grid[:, None, None, :], (1, n_levels, n_points, 1))     # [H, L, P, 2]
    scale = jnp.arange(1, n_points + 1, dtype=jnp.float32)[None, None, :, None]
    return (grid * scale).reshape(-1)


def init_params(key, C, n_heads, n_levels, n_points, d_ffn):
    ks = jax.random.split(key, 24)

    def rnd(k, shape, scale=0.05):
        return scale * jax.random.normal(k, shape, jnp.float32)

    p = {}
    # self_attn (nn.MultiheadAttention): weights stored pre-transposed (x @ W)
    p["sa_wq"] = rnd(ks[0], (C, C)); p["sa_wk"] = rnd(ks[1], (C, C)); p["sa_wv"] = rnd(ks[2], (C, C))
    p["sa_bq"] = rnd(ks[3], (C,)); p["sa_bk"] = rnd(ks[4], (C,)); p["sa_bv"] = rnd(ks[5], (C,))
    p["sa_wo"] = rnd(ks[6], (C, C)); p["sa_bo"] = rnd(ks[7], (C,))
    # layernorms
    p["ln1_g"] = jnp.ones((C,), jnp.float32) + rnd(ks[8], (C,), 0.01)
    p["ln1_b"] = rnd(ks[9], (C,), 0.01)
    p["ln2_g"] = jnp.ones((C,), jnp.float32) + rnd(ks[10], (C,), 0.01)
    p["ln2_b"] = rnd(ks[11], (C,), 0.01)
    p["ln3_g"] = jnp.ones((C,), jnp.float32) + rnd(ks[12], (C,), 0.01)
    p["ln3_b"] = rnd(ks[13], (C,), 0.01)
    # cross_attn (MSDeformAttn)
    p["va_w"] = rnd(ks[14], (C, C)); p["va_b"] = jnp.zeros((C,), jnp.float32)
    p["so_w"] = rnd(ks[15], (C, n_heads * n_levels * n_points * 2), 0.01)
    p["so_b"] = sampling_offset_bias(n_heads, n_levels, n_points)
    p["aw_w"] = rnd(ks[16], (C, n_heads * n_levels * n_points), 0.01)
    p["aw_b"] = jnp.zeros((n_heads * n_levels * n_points,), jnp.float32)
    p["op_w"] = rnd(ks[17], (C, C)); p["op_b"] = jnp.zeros((C,), jnp.float32)
    # FFN
    p["w1"] = rnd(ks[18], (C, d_ffn)); p["b1"] = rnd(ks[19], (d_ffn,))
    p["w2"] = rnd(ks[20], (d_ffn, C)); p["b2"] = rnd(ks[21], (C,))
    return p


def prepare_params(p, n_heads, n_levels, n_points, weight_dtype=jnp.bfloat16):
    """Merge / permute / fold constants / cast parameters for the fused kernels.

    Weight matrices -> bf16 (native MXU mode, half HBM/VMEM traffic); biases and
    LayerNorm affine params stay f32.  Constant folds: 1/sqrt(dh) into the Q half
    of the merged QK projection, 0.5/n_points into the sampling-offset columns,
    and the offset columns are permuted to [off_x | off_y | logits | pad128].
    """
    C = p["sa_wq"].shape[0]
    dh = C // n_heads
    q_scale = 1.0 / math.sqrt(dh)
    wp = {}

    wp["sa_wqk"] = jnp.concatenate([p["sa_wq"] * q_scale, p["sa_wk"]], axis=1).astype(weight_dtype)
    wp["sa_bqk"] = jnp.concatenate([p["sa_bq"] * q_scale, p["sa_bk"]]).reshape(1, -1)
    wp["sa_wv"] = p["sa_wv"].astype(weight_dtype)
    wp["sa_bv"] = p["sa_bv"].reshape(1, -1)
    wp["sa_wo"] = p["sa_wo"].astype(weight_dtype)
    wp["sa_bo"] = p["sa_bo"].reshape(1, -1)
    wp["ln1_g"] = p["ln1_g"].reshape(1, -1); wp["ln1_b"] = p["ln1_b"].reshape(1, -1)

    wp["va_w"] = p["va_w"].astype(weight_dtype)
    wp["va_b"] = p["va_b"].reshape(1, -1)

    HLP = n_heads * n_levels * n_points
    so_scale = 0.5 / n_points
    so_w = p["so_w"].reshape(C, n_heads, n_levels, n_points, 2)
    so_w = jnp.transpose(so_w, (0, 4, 1, 2, 3)).reshape(C, 2 * HLP) * so_scale
    so_b = p["so_b"].reshape(n_heads, n_levels, n_points, 2)
    so_b = jnp.transpose(so_b, (3, 0, 1, 2)).reshape(2 * HLP) * so_scale
    so_aw_w = jnp.concatenate([so_w, p["aw_w"]], axis=1)
    so_aw_b = jnp.concatenate([so_b, p["aw_b"]])
    n = so_aw_w.shape[1]
    n_pad = ((n + 127) // 128) * 128
    if n_pad != n:
        so_aw_w = jnp.pad(so_aw_w, ((0, 0), (0, n_pad - n)))
        so_aw_b = jnp.pad(so_aw_b, (0, n_pad - n))
    wp["so_aw_w"] = so_aw_w.astype(weight_dtype)
    wp["so_aw_b"] = so_aw_b.reshape(1, -1)

    wp["op_w"] = p["op_w"].astype(weight_dtype)
    wp["op_b"] = p["op_b"].reshape(1, -1)
    wp["ln2_g"] = p["ln2_g"].reshape(1, -1); wp["ln2_b"] = p["ln2_b"].reshape(1, -1)

    wp["w1"] = p["w1"].astype(weight_dtype); wp["b1"] = p["b1"].reshape(1, -1)
    wp["w2"] = p["w2"].astype(weight_dtype); wp["b2"] = p["b2"].reshape(1, -1)
    wp["ln3_g"] = p["ln3_g"].reshape(1, -1); wp["ln3_b"] = p["ln3_b"].reshape(1, -1)
    return wp


def _build_rowcol(shapes):
    """Per-position (row, col) coordinates within each level, concatenated: [2, len_v]."""
    rows, cols = [], []
    for (Hl, Wl) in shapes:
        ys, xs = np.meshgrid(np.arange(Hl), np.arange(Wl), indexing="ij")
        rows.append(ys.reshape(-1))
        cols.append(xs.reshape(-1))
    return jnp.asarray(
        np.stack([np.concatenate(rows), np.concatenate(cols)]).astype(np.float32))


# ----------------------------------------------------------------------------
# full decoder-layer forward
# ----------------------------------------------------------------------------
def decoder_layer_forward(wp, embed, task_feats, refer_bbox, feats, shapes,
                          padding_mask=None, attn_mask=None, query_pos=None,
                          n_heads=4, n_levels=2, n_points=4, num_queries=700,
                          hw_chunk=2048):
    bs, len_q, C = embed.shape
    len_v = feats.shape[1]

    if attn_mask is not None:
        # TODO(synk): attn_mask handling not implemented (None in this config).
        raise NotImplementedError("attn_mask is not supported")
    # forward_track_attn's output is discarded by the reference forward, and for
    # len_q <= num_queries it is an identity anyway.
    # TODO(synk): track-attn branch (len_q > num_queries) not implemented.
    assert len_q <= num_queries

    qk = embed if query_pos is None else embed + query_pos          # with_pos_embed
    tf = jnp.transpose(task_feats, (1, 0, 2))                       # [bs, n_task, C]
    q_cat = jnp.concatenate([qk, tf], axis=1).astype(jnp.bfloat16)  # query == key
    emb_cat = jnp.concatenate([embed, tf], axis=1)                  # value & residual (f32)

    # self attention + norm1 (fused, per batch)
    emb2, task_part = self_attn_norm1(q_cat, emb_cat, wp, n_heads, len_q)
    task_out = jnp.transpose(task_part, (1, 0, 2))                  # [n_task, bs, C]

    # value_proj + masked_fill hoisted to a lane-dense tiled matmul kernel (bf16 out)
    if padding_mask is not None:
        keep = (1.0 - padding_mask.astype(jnp.float32))[..., None]  # masked_fill -> 0
    else:
        keep = jnp.ones((bs, len_v, 1), jnp.float32)
    val_bf = value_proj(feats.astype(jnp.bfloat16), keep, wp)

    # cross attention (MSDeformAttn) + norm2 + FFN + norm3 (fused, per (batch, q-tile))
    qx_bf = (emb2 if query_pos is None else emb2 + query_pos).astype(jnp.bfloat16)
    rowcol = _build_rowcol(shapes)
    out = cross_attn_ffn(emb2, qx_bf, refer_bbox, val_bf, rowcol, wp, shapes,
                         n_heads, n_levels, n_points, hw_chunk)
    return out, task_out


# ----------------------------------------------------------------------------
if __name__ == "__main__":
    bs, len_q, C = 2, 8, 32
    n_heads, n_levels, n_points = 4, 2, 4
    d_ffn = 64
    n_task = 4
    shapes = ((8, 8), (4, 4))
    len_v = sum(h * w for h, w in shapes)

    key = jax.random.PRNGKey(0)
    keys = jax.random.split(key, 8)

    embed = jax.random.normal(keys[0], (bs, len_q, C), jnp.float32)
    task_feats = jax.random.normal(keys[1], (n_task, bs, C), jnp.float32)
    refer_bbox = jax.random.uniform(keys[2], (bs, len_q, 4), jnp.float32,
                                    minval=0.1, maxval=0.9)          # (cx, cy, w, h)
    feats = jax.random.normal(keys[3], (bs, len_v, C), jnp.float32)
    query_pos = jax.random.normal(keys[4], (bs, len_q, C), jnp.float32)

    params = init_params(keys[5], C, n_heads, n_levels, n_points, d_ffn)
    prepared = prepare_params(params, n_heads, n_levels, n_points,
                              weight_dtype=jnp.bfloat16)

    fwd = jax.jit(functools.partial(
        decoder_layer_forward, shapes=shapes, n_heads=n_heads,
        n_levels=n_levels, n_points=n_points))

    out_embed, out_task = fwd(prepared, embed, task_feats, refer_bbox, feats,
                              query_pos=query_pos)

    jax.block_until_ready((out_embed, out_task))
    assert out_embed.shape == (bs, len_q, C)
    assert out_task.shape == (n_task, bs, C)
    assert bool(jnp.all(jnp.isfinite(out_embed)))
    assert bool(jnp.all(jnp.isfinite(out_task)))
    print("KERNEL_OK")
</pallas_src>

<mosaic_0001>
module attributes {stable_mosaic.version = 11 : i64} {
  func.func @_self_attn_norm1_kernel(%arg0: i32, %arg1: memref<1x12x32xbf16, #tpu.memory_space<vmem>>, %arg2: memref<1x12x32xf32, #tpu.memory_space<vmem>>, %arg3: memref<32x64xbf16, #tpu.memory_space<vmem>>, %arg4: memref<1x64xf32, #tpu.memory_space<vmem>>, %arg5: memref<32x32xbf16, #tpu.memory_space<vmem>>, %arg6: memref<1x32xf32, #tpu.memory_space<vmem>>, %arg7: memref<32x32xbf16, #tpu.memory_space<vmem>>, %arg8: memref<1x32xf32, #tpu.memory_space<vmem>>, %arg9: memref<1x32xf32, #tpu.memory_space<vmem>>, %arg10: memref<1x32xf32, #tpu.memory_space<vmem>>, %arg11: memref<1x8x32xf32, #tpu.memory_space<vmem>>, %arg12: memref<1x4x32xf32, #tpu.memory_space<vmem>>) attributes {dimension_semantics = [#tpu.dimension_semantics<parallel>], iteration_bounds = array<i64: 2>, scalar_prefetch = 0 : i64, scratch_operands = 0 : i64, tpu.core_type = #tpu.core_type<tc>, window_params = [{transform_indices = @transform_0, window_bounds = array<i64: 1, 12, 32>}, {transform_indices = @transform_1, window_bounds = array<i64: 1, 12, 32>}, {pipeline_mode = #tpu.pipeline_mode<synchronous>, transform_indices = @transform_2, window_bounds = array<i64: 32, 64>}, {pipeline_mode = #tpu.pipeline_mode<synchronous>, transform_indices = @transform_3, window_bounds = array<i64: 1, 64>}, {pipeline_mode = #tpu.pipeline_mode<synchronous>, transform_indices = @transform_4, window_bounds = array<i64: 32, 32>}, {pipeline_mode = #tpu.pipeline_mode<synchronous>, transform_indices = @transform_5, window_bounds = array<i64: 1, 32>}, {pipeline_mode = #tpu.pipeline_mode<synchronous>, transform_indices = @transform_6, window_bounds = array<i64: 32, 32>}, {pipeline_mode = #tpu.pipeline_mode<synchronous>, transform_indices = @transform_7, window_bounds = array<i64: 1, 32>}, {pipeline_mode = #tpu.pipeline_mode<synchronous>, transform_indices = @transform_8, window_bounds = array<i64: 1, 32>}, {pipeline_mode = #tpu.pipeline_mode<synchronous>, transform_indices = @transform_9, window_bounds = array<i64: 1, 32>}, {transform_indices = @transform_10, window_bounds = array<i64: 1, 8, 32>}, {transform_indices = @transform_11, window_bounds = array<i64: 1, 4, 32>}]} {
    %c0 = arith.constant 0 : index
    %c0_0 = arith.constant 0 : index
    %c0_1 = arith.constant 0 : index
    %0 = vector.load %arg1[%c0, %c0_0, %c0_1] : memref<1x12x32xbf16, #tpu.memory_space<vmem>>, vector<1x12x32xbf16>
    %1 = vector.shape_cast %0 : vector<1x12x32xbf16> to vector<12x32xbf16>
    %c0_2 = arith.constant 0 : index
    %c0_3 = arith.constant 0 : index
    %c0_4 = arith.constant 0 : index
    %2 = vector.load %arg2[%c0_2, %c0_3, %c0_4] : memref<1x12x32xf32, #tpu.memory_space<vmem>>, vector<1x12x32xf32>
    %3 = vector.shape_cast %2 : vector<1x12x32xf32> to vector<12x32xf32>
    %c0_5 = arith.constant 0 : index
    %c0_6 = arith.constant 0 : index
    %4 = vector.load %arg3[%c0_5, %c0_6] : memref<32x64xbf16, #tpu.memory_space<vmem>>, vector<32x64xbf16>
    %cst = arith.constant dense<0.000000e+00> : vector<12x64xf32>
    %5 = tpu.matmul %1, %4, %cst {dimension_numbers = #tpu.dot_dimension_numbers<[1], [0], [0], [1], [0, 0, 1, 1], [], []>} : vector<12x32xbf16>, vector<32x64xbf16>, vector<12x64xf32> -> vector<12x64xf32>
    %c0_7 = arith.constant 0 : index
    %c0_8 = arith.constant 0 : index
    %6 = vector.load %arg4[%c0_7, %c0_8] : memref<1x64xf32, #tpu.memory_space<vmem>>, vector<1x64xf32>
    %7 = vector.broadcast %6 : vector<1x64xf32> to vector<12x64xf32>
    %8 = arith.addf %5, %7 : vector<12x64xf32>
    %9 = arith.truncf %3 : vector<12x32xf32> to vector<12x32xbf16>
    %c0_9 = arith.constant 0 : index
    %c0_10 = arith.constant 0 : index
    %10 = vector.load %arg5[%c0_9, %c0_10] : memref<32x32xbf16, #tpu.memory_space<vmem>>, vector<32x32xbf16>
    %cst_11 = arith.constant dense<0.000000e+00> : vector<12x32xf32>
    %11 = tpu.matmul %9, %10, %cst_11 {dimension_numbers = #tpu.dot_dimension_numbers<[1], [0], [0], [1], [0, 0, 1, 1], [], []>} : vector<12x32xbf16>, vector<32x32xbf16>, vector<12x32xf32> -> vector<12x32xf32>
    %c0_12 = arith.constant 0 : index
    %c0_13 = arith.constant 0 : index
    %12 = vector.load %arg6[%c0_12, %c0_13] : memref<1x32xf32, #tpu.memory_space<vmem>>, vector<1x32xf32>
    %13 = vector.broadcast %12 : vector<1x32xf32> to vector<12x32xf32>
    %14 = arith.addf %11, %13 : vector<12x32xf32>
    %15 = arith.truncf %8 : vector<12x64xf32> to vector<12x64xbf16>
    %16 = vector.extract_strided_slice %15 {offsets = [0, 0], sizes = [12, 32], strides = [1, 1]} : vector<12x64xbf16> to vector<12x32xbf16>
    %17 = vector.shape_cast %16 : vector<12x32xbf16> to vector<12x4x8xbf16>
    %18 = tpu.transpose %17, [1, 0, 2] : vector<12x4x8xbf16> -> vector<4x12x8xbf16>
    %19 = vector.extract_strided_slice %15 {offsets = [0, 32], sizes = [12, 32], strides = [1, 1]} : vector<12x64xbf16> to vector<12x32xbf16>
    %20 = vector.shape_cast %19 : vector<12x32xbf16> to vector<12x4x8xbf16>
    %21 = tpu.transpose %20, [1, 0, 2] : vector<12x4x8xbf16> -> vector<4x12x8xbf16>
    %22 = arith.truncf %14 : vector<12x32xf32> to vector<12x32xbf16>
    %23 = vector.shape_cast %22 : vector<12x32xbf16> to vector<12x4x8xbf16>
    %24 = tpu.transpose %23, [1, 0, 2] : vector<12x4x8xbf16> -> vector<4x12x8xbf16>
    "tpu.trace_start"() <{level = 10 : i32, message = "hqd,hkd->hqk"}> : () -> ()
    %cst_14 = arith.constant dense<0.000000e+00> : vector<4x12x12xf32>
    %25 = tpu.matmul %18, %21, %cst_14 {dimension_numbers = #tpu.dot_dimension_numbers<[2], [2], [1], [1], [0, 0, 0, 1, 1, 1], [0], [0]>} : vector<4x12x8xbf16>, vector<4x12x8xbf16>, vector<4x12x12xf32> -> vector<4x12x12xf32>
    "tpu.trace_stop"() : () -> ()
    %cst_15 = arith.constant dense<0xFF800000> : vector<4x12xf32>
    %26 = vector.multi_reduction <maximumf>, %25, %cst_15 [2] : vector<4x12x12xf32> to vector<4x12xf32>
    %27 = vector.shape_cast %26 : vector<4x12xf32> to vector<4x12x1xf32>
    %28 = vector.broadcast %27 : vector<4x12x1xf32> to vector<4x12x12xf32>
    %29 = arith.subf %25, %28 : vector<4x12x12xf32>
    %30 = math.exp %29 : vector<4x12x12xf32>
    %cst_16 = arith.constant dense<0.000000e+00> : vector<4x12xf32>
    %31 = vector.multi_reduction <add>, %30, %cst_16 [2] : vector<4x12x12xf32> to vector<4x12xf32>
    %32 = vector.shape_cast %31 : vector<4x12xf32> to vector<4x12x1xf32>
    %33 = tpu.reciprocal %32 {approx = true} : vector<4x12x1xf32> -> vector<4x12x1xf32>
    %34 = vector.broadcast %33 : vector<4x12x1xf32> to vector<4x12x12xf32>
    %35 = arith.mulf %30, %34 : vector<4x12x12xf32>
    %36 = arith.truncf %35 : vector<4x12x12xf32> to vector<4x12x12xbf16>
    "tpu.trace_start"() <{level = 10 : i32, message = "hqk,hkd->hqd"}> : () -> ()
    %cst_17 = arith.constant dense<0.000000e+00> : vector<4x12x8xf32>
    %37 = tpu.matmul %36, %24, %cst_17 {dimension_numbers = #tpu.dot_dimension_numbers<[2], [1], [1], [2], [0, 0, 0, 1, 1, 2], [0], [0]>} : vector<4x12x12xbf16>, vector<4x12x8xbf16>, vector<4x12x8xf32> -> vector<4x12x8xf32>
    "tpu.trace_stop"() : () -> ()
    %38 = tpu.transpose %37, [1, 0, 2] : vector<4x12x8xf32> -> vector<12x4x8xf32>
    %39 = vector.shape_cast %38 : vector<12x4x8xf32> to vector<12x32xf32>
    %40 = arith.truncf %39 : vector<12x32xf32> to vector<12x32xbf16>
    %c0_18 = arith.constant 0 : index
    %c0_19 = arith.constant 0 : index
    %41 = vector.load %arg7[%c0_18, %c0_19] : memref<32x32xbf16, #tpu.memory_space<vmem>>, vector<32x32xbf16>
    %cst_20 = arith.constant dense<0.000000e+00> : vector<12x32xf32>
    %42 = tpu.matmul %40, %41, %cst_20 {dimension_numbers = #tpu.dot_dimension_numbers<[1], [0], [0], [1], [0, 0, 1, 1], [], []>} : vector<12x32xbf16>, vector<32x32xbf16>, vector<12x32xf32> -> vector<12x32xf32>
    %c0_21 = arith.constant 0 : index
    %c0_22 = arith.constant 0 : index
    %43 = vector.load %arg8[%c0_21, %c0_22] : memref<1x32xf32, #tpu.memory_space<vmem>>, vector<1x32xf32>
    %44 = vector.broadcast %43 : vector<1x32xf32> to vector<12x32xf32>
    %45 = arith.addf %42, %44 : vector<12x32xf32>
    %46 = arith.addf %3, %45 : vector<12x32xf32>
    %c0_23 = arith.constant 0 : index
    %c0_24 = arith.constant 0 : index
    %47 = vector.load %arg9[%c0_23, %c0_24] : memref<1x32xf32, #tpu.memory_space<vmem>>, vector<1x32xf32>
    %c0_25 = arith.constant 0 : index
    %c0_26 = arith.constant 0 : index
    %48 = vector.load %arg10[%c0_25, %c0_26] : memref<1x32xf32, #tpu.memory_space<vmem>>, vector<1x32xf32>
    %cst_27 = arith.constant dense<0.000000e+00> : vector<12xf32>
    %49 = vector.multi_reduction <add>, %46, %cst_27 [1] : vector<12x32xf32> to vector<12xf32>
    %50 = vector.shape_cast %49 : vector<12xf32> to vector<12x1xf32>
    %cst_28 = arith.constant 3.200000e+01 : f32
    %51 = vector.broadcast %cst_28 : f32 to vector<12x1xf32>
    %52 = arith.divf %50, %51 : vector<12x1xf32>
    %53 = vector.broadcast %52 : vector<12x1xf32> to vector<12x32xf32>
    %54 = arith.subf %46, %53 : vector<12x32xf32>
    %55 = arith.mulf %54, %54 : vector<12x32xf32>
    %cst_29 = arith.constant dense<0.000000e+00> : vector<12xf32>
    %56 = vector.multi_reduction <add>, %55, %cst_29 [1] : vector<12x32xf32> to vector<12xf32>
    %57 = vector.shape_cast %56 : vector<12xf32> to vector<12x1xf32>
    %cst_30 = arith.constant 3.200000e+01 : f32
    %58 = vector.broadcast %cst_30 : f32 to vector<12x1xf32>
    %59 = arith.divf %57, %58 : vector<12x1xf32>
    %60 = vector.broadcast %52 : vector<12x1xf32> to vector<12x32xf32>
    %61 = arith.subf %46, %60 : vector<12x32xf32>
    %cst_31 = arith.constant 9.99999974E-6 : f32
    %62 = vector.broadcast %cst_31 : f32 to vector<12x1xf32>
    %63 = arith.addf %59, %62 : vector<12x1xf32>
    %64 = math.rsqrt %63 : vector<12x1xf32>
    %65 = vector.broadcast %64 : vector<12x1xf32> to vector<12x32xf32>
    %66 = arith.mulf %61, %65 : vector<12x32xf32>
    %67 = vector.broadcast %47 : vector<1x32xf32> to vector<12x32xf32>
    %68 = arith.mulf %66, %67 : vector<12x32xf32>
    %69 = vector.broadcast %48 : vector<1x32xf32> to vector<12x32xf32>
    %70 = arith.addf %68, %69 : vector<12x32xf32>
    %71 = vector.extract_strided_slice %70 {offsets = [0, 0], sizes = [8, 32], strides = [1, 1]} : vector<12x32xf32> to vector<8x32xf32>
    %c0_32 = arith.constant 0 : index
    %c0_33 = arith.constant 0 : index
    %c0_34 = arith.constant 0 : index
    %72 = vector.load %arg11[%c0_32, %c0_33, %c0_34] : memref<1x8x32xf32, #tpu.memory_space<vmem>>, vector<1x8x32xf32>
    %73 = vector.shape_cast %72 : vector<1x8x32xf32> to vector<8x32xf32>
    %74 = vector.shape_cast %71 : vector<8x32xf32> to vector<1x8x32xf32>
    tpu.vector_store %arg11[%c0_32, %c0_33, %c0_34], %74 {strides = array<i32>} : memref<1x8x32xf32, #tpu.memory_space<vmem>>, vector<1x8x32xf32>,
    %75 = vector.extract_strided_slice %70 {offsets = [8, 0], sizes = [4, 32], strides = [1, 1]} : vector<12x32xf32> to vector<4x32xf32>
    %c0_35 = arith.constant 0 : index
    %c0_36 = arith.constant 0 : index
    %c0_37 = arith.constant 0 : index
    %76 = vector.load %arg12[%c0_35, %c0_36, %c0_37] : memref<1x4x32xf32, #tpu.memory_space<vmem>>, vector<1x4x32xf32>
    %77 = vector.shape_cast %76 : vector<1x4x32xf32> to vector<4x32xf32>
    %78 = vector.shape_cast %75 : vector<4x32xf32> to vector<1x4x32xf32>
    tpu.vector_store %arg12[%c0_35, %c0_36, %c0_37], %78 {strides = array<i32>} : memref<1x4x32xf32, #tpu.memory_space<vmem>>, vector<1x4x32xf32>,
    return
  }
  func.func @transform_0(%arg0: i32) -> (i32, i32, i32) {
    %c0_i32 = arith.constant 0 : i32
    %c0_i32_0 = arith.constant 0 : i32
    %c0_i32_1 = arith.constant 0 : i32
    return %arg0, %c0_i32, %c0_i32_0 : i32, i32, i32
  }
  func.func @transform_1(%arg0: i32) -> (i32, i32, i32) {
    %c0_i32 = arith.constant 0 : i32
    %c0_i32_0 = arith.constant 0 : i32
    %c0_i32_1 = arith.constant 0 : i32
    return %arg0, %c0_i32, %c0_i32_0 : i32, i32, i32
  }
  func.func @transform_2(%arg0: i32) -> (i32, i32) {
    %c0_i32 = arith.constant 0 : i32
    %c0_i32_0 = arith.constant 0 : i32
    %c0_i32_1 = arith.constant 0 : i32
    return %c0_i32, %c0_i32_0 : i32, i32
  }
  func.func @transform_3(%arg0: i32) -> (i32, i32) {
    %c0_i32 = arith.constant 0 : i32
    %c0_i32_0 = arith.constant 0 : i32
    %c0_i32_1 = arith.constant 0 : i32
    return %c0_i32, %c0_i32_0 : i32, i32
  }
  func.func @transform_4(%arg0: i32) -> (i32, i32) {
    %c0_i32 = arith.constant 0 : i32
    %c0_i32_0 = arith.constant 0 : i32
    %c0_i32_1 = arith.constant 0 : i32
    return %c0_i32, %c0_i32_0 : i32, i32
  }
  func.func @transform_5(%arg0: i32) -> (i32, i32) {
    %c0_i32 = arith.constant 0 : i32
    %c0_i32_0 = arith.constant 0 : i32
    %c0_i32_1 = arith.constant 0 : i32
    return %c0_i32, %c0_i32_0 : i32, i32
  }
  func.func @transform_6(%arg0: i32) -> (i32, i32) {
    %c0_i32 = arith.constant 0 : i32
    %c0_i32_0 = arith.constant 0 : i32
    %c0_i32_1 = arith.constant 0 : i32
    return %c0_i32, %c0_i32_0 : i32, i32
  }
  func.func @transform_7(%arg0: i32) -> (i32, i32) {
    %c0_i32 = arith.constant 0 : i32
    %c0_i32_0 = arith.constant 0 : i32
    %c0_i32_1 = arith.constant 0 : i32
    return %c0_i32, %c0_i32_0 : i32, i32
  }
  func.func @transform_8(%arg0: i32) -> (i32, i32) {
    %c0_i32 = arith.constant 0 : i32
    %c0_i32_0 = arith.constant 0 : i32
    %c0_i32_1 = arith.constant 0 : i32
    return %c0_i32, %c0_i32_0 : i32, i32
  }
  func.func @transform_9(%arg0: i32) -> (i32, i32) {
    %c0_i32 = arith.constant 0 : i32
    %c0_i32_0 = arith.constant 0 : i32
    %c0_i32_1 = arith.constant 0 : i32
    return %c0_i32, %c0_i32_0 : i32, i32
  }
  func.func @transform_10(%arg0: i32) -> (i32, i32, i32) {
    %c0_i32 = arith.constant 0 : i32
    %c0_i32_0 = arith.constant 0 : i32
    %c0_i32_1 = arith.constant 0 : i32
    return %arg0, %c0_i32, %c0_i32_0 : i32, i32, i32
  }
  func.func @transform_11(%arg0: i32) -> (i32, i32, i32) {
    %c0_i32 = arith.constant 0 : i32
    %c0_i32_0 = arith.constant 0 : i32
    %c0_i32_1 = arith.constant 0 : i32
    return %arg0, %c0_i32, %c0_i32_0 : i32, i32, i32
  }
}

module attributes {stable_mosaic.version = 11 : i64} {
  func.func @_value_proj_kernel(%arg0: i32, %arg1: i32, %arg2: memref<1x80x32xbf16, #tpu.memory_space<vmem>>, %arg3: memref<1x80x1xf32, #tpu.memory_space<vmem>>, %arg4: memref<32x32xbf16, #tpu.memory_space<vmem>>, %arg5: memref<1x32xf32, #tpu.memory_space<vmem>>, %arg6: memref<1x80x32xbf16, #tpu.memory_space<vmem>>) attributes {dimension_semantics = [#tpu.dimension_semantics<parallel>, #tpu.dimension_semantics<parallel>], iteration_bounds = array<i64: 2, 1>, scalar_prefetch = 0 : i64, scratch_operands = 0 : i64, tpu.core_type = #tpu.core_type<tc>, window_params = [{transform_indices = @transform_0, window_bounds = array<i64: 1, 80, 32>}, {transform_indices = @transform_1, window_bounds = array<i64: 1, 80, 1>}, {pipeline_mode = #tpu.pipeline_mode<synchronous>, transform_indices = @transform_2, window_bounds = array<i64: 32, 32>}, {pipeline_mode = #tpu.pipeline_mode<synchronous>, transform_indices = @transform_3, window_bounds = array<i64: 1, 32>}, {transform_indices = @transform_4, window_bounds = array<i64: 1, 80, 32>}]} {
    %c0 = arith.constant 0 : index
    %c0_0 = arith.constant 0 : index
    %c0_1 = arith.constant 0 : index
    %0 = vector.load %arg2[%c0, %c0_0, %c0_1] : memref<1x80x32xbf16, #tpu.memory_space<vmem>>, vector<1x80x32xbf16>
    %1 = vector.shape_cast %0 : vector<1x80x32xbf16> to vector<80x32xbf16>
    %c0_2 = arith.constant 0 : index
    %c0_3 = arith.constant 0 : index
    %2 = vector.load %arg4[%c0_2, %c0_3] : memref<32x32xbf16, #tpu.memory_space<vmem>>, vector<32x32xbf16>
    %cst = arith.constant dense<0.000000e+00> : vector<80x32xf32>
    %3 = tpu.matmul %1, %2, %cst {dimension_numbers = #tpu.dot_dimension_numbers<[1], [0], [0], [1], [0, 0, 1, 1], [], []>} : vector<80x32xbf16>, vector<32x32xbf16>, vector<80x32xf32> -> vector<80x32xf32>
    %c0_4 = arith.constant 0 : index
    %c0_5 = arith.constant 0 : index
    %4 = vector.load %arg5[%c0_4, %c0_5] : memref<1x32xf32, #tpu.memory_space<vmem>>, vector<1x32xf32>
    %5 = vector.broadcast %4 : vector<1x32xf32> to vector<80x32xf32>
    %6 = arith.addf %3, %5 : vector<80x32xf32>
    %c0_6 = arith.constant 0 : index
    %c0_7 = arith.constant 0 : index
    %c0_8 = arith.constant 0 : index
    %7 = vector.load %arg3[%c0_6, %c0_7, %c0_8] : memref<1x80x1xf32, #tpu.memory_space<vmem>>, vector<1x80x1xf32>
    %8 = vector.shape_cast %7 : vector<1x80x1xf32> to vector<80x1xf32>
    %9 = vector.broadcast %8 : vector<80x1xf32> to vector<80x32xf32>
    %10 = arith.mulf %6, %9 : vector<80x32xf32>
    %11 = arith.truncf %10 : vector<80x32xf32> to vector<80x32xbf16>
    %c0_9 = arith.constant 0 : index
    %c0_10 = arith.constant 0 : index
    %c0_11 = arith.constant 0 : index
    %12 = vector.load %arg6[%c0_9, %c0_10, %c0_11] : memref<1x80x32xbf16, #tpu.memory_space<vmem>>, vector<1x80x32xbf16>
    %13 = vector.shape_cast %12 : vector<1x80x32xbf16> to vector<80x32xbf16>
    %14 = vector.shape_cast %11 : vector<80x32xbf16> to vector<1x80x32xbf16>
    tpu.vector_store %arg6[%c0_9, %c0_10, %c0_11], %14 {strides = array<i32>} : memref<1x80x32xbf16, #tpu.memory_space<vmem>>, vector<1x80x32xbf16>,
    return
  }
  func.func @transform_0(%arg0: i32, %arg1: i32) -> (i32, i32, i32) {
    %c0_i32 = arith.constant 0 : i32
    %c0_i32_0 = arith.constant 0 : i32
    return %arg0, %arg1, %c0_i32 : i32, i32, i32
  }
  func.func @transform_1(%arg0: i32, %arg1: i32) -> (i32, i32, i32) {
    %c0_i32 = arith.constant 0 : i32
    %c0_i32_0 = arith.constant 0 : i32
    return %arg0, %arg1, %c0_i32 : i32, i32, i32
  }
  func.func @transform_2(%arg0: i32, %arg1: i32) -> (i32, i32) {
    %c0_i32 = arith.constant 0 : i32
    %c0_i32_0 = arith.constant 0 : i32
    %c0_i32_1 = arith.constant 0 : i32
    return %c0_i32, %c0_i32_0 : i32, i32
  }
  func.func @transform_3(%arg0: i32, %arg1: i32) -> (i32, i32) {
    %c0_i32 = arith.constant 0 : i32
    %c0_i32_0 = arith.constant 0 : i32
    %c0_i32_1 = arith.constant 0 : i32
    return %c0_i32, %c0_i32_0 : i32, i32
  }
  func.func @transform_4(%arg0: i32, %arg1: i32) -> (i32, i32, i32) {
    %c0_i32 = arith.constant 0 : i32
    %c0_i32_0 = arith.constant 0 : i32
    return %arg0, %arg1, %c0_i32 : i32, i32, i32
  }
}

module attributes {stable_mosaic.version = 11 : i64} {
  func.func @_cross_ffn_kernel(%arg0: i32, %arg1: i32, %arg2: memref<1x8x32xf32, #tpu.memory_space<vmem>>, %arg3: memref<1x8x32xbf16, #tpu.memory_space<vmem>>, %arg4: memref<1x8x4xf32, #tpu.memory_space<vmem>>, %arg5: memref<2x80xf32, #tpu.memory_space<vmem>>, %arg6: memref<1x80x32xbf16, #tpu.memory_space<vmem>>, %arg7: memref<32x128xbf16, #tpu.memory_space<vmem>>, %arg8: memref<1x128xf32, #tpu.memory_space<vmem>>, %arg9: memref<32x32xbf16, #tpu.memory_space<vmem>>, %arg10: memref<1x32xf32, #tpu.memory_space<vmem>>, %arg11: memref<1x32xf32, #tpu.memory_space<vmem>>, %arg12: memref<1x32xf32, #tpu.memory_space<vmem>>, %arg13: memref<32x64xbf16, #tpu.memory_space<vmem>>, %arg14: memref<1x64xf32, #tpu.memory_space<vmem>>, %arg15: memref<64x32xbf16, #tpu.memory_space<vmem>>, %arg16: memref<1x32xf32, #tpu.memory_space<vmem>>, %arg17: memref<1x32xf32, #tpu.memory_space<vmem>>, %arg18: memref<1x32xf32, #tpu.memory_space<vmem>>, %arg19: memref<1x8x32xf32, #tpu.memory_space<vmem>>) attributes {dimension_semantics = [#tpu.dimension_semantics<parallel>, #tpu.dimension_semantics<parallel>], iteration_bounds = array<i64: 2, 1>, scalar_prefetch = 0 : i64, scratch_operands = 0 : i64, tpu.core_type = #tpu.core_type<tc>, window_params = [{transform_indices = @transform_0, window_bounds = array<i64: 1, 8, 32>}, {transform_indices = @transform_1, window_bounds = array<i64: 1, 8, 32>}, {transform_indices = @transform_2, window_bounds = array<i64: 1, 8, 4>}, {pipeline_mode = #tpu.pipeline_mode<synchronous>, transform_indices = @transform_3, window_bounds = array<i64: 2, 80>}, {transform_indices = @transform_4, window_bounds = array<i64: 1, 80, 32>}, {pipeline_mode = #tpu.pipeline_mode<synchronous>, transform_indices = @transform_5, window_bounds = array<i64: 32, 128>}, {pipeline_mode = #tpu.pipeline_mode<synchronous>, transform_indices = @transform_6, window_bounds = array<i64: 1, 128>}, {pipeline_mode = #tpu.pipeline_mode<synchronous>, transform_indices = @transform_7, window_bounds = array<i64: 32, 32>}, {pipeline_mode = #tpu.pipeline_mode<synchronous>, transform_indices = @transform_8, window_bounds = array<i64: 1, 32>}, {pipeline_mode = #tpu.pipeline_mode<synchronous>, transform_indices = @transform_9, window_bounds = array<i64: 1, 32>}, {pipeline_mode = #tpu.pipeline_mode<synchronous>, transform_indices = @transform_10, window_bounds = array<i64: 1, 32>}, {pipeline_mode = #tpu.pipeline_mode<synchronous>, transform_indices = @transform_11, window_bounds = array<i64: 32, 64>}, {pipeline_mode = #tpu.pipeline_mode<synchronous>, transform_indices = @transform_12, window_bounds = array<i64: 1, 64>}, {pipeline_mode = #tpu.pipeline_mode<synchronous>, transform_indices = @transform_13, window_bounds = array<i64: 64, 32>}, {pipeline_mode = #tpu.pipeline_mode<synchronous>, transform_indices = @transform_14, window_bounds = array<i64: 1, 32>}, {pipeline_mode = #tpu.pipeline_mode<synchronous>, transform_indices = @transform_15, window_bounds = array<i64: 1, 32>}, {pipeline_mode = #tpu.pipeline_mode<synchronous>, transform_indices = @transform_16, window_bounds = array<i64: 1, 32>}, {transform_indices = @transform_17, window_bounds = array<i64: 1, 8, 32>}]} {
    %c0 = arith.constant 0 : index
    %c0_0 = arith.constant 0 : index
    %c0_1 = arith.constant 0 : index
    %0 = vector.load %arg2[%c0, %c0_0, %c0_1] : memref<1x8x32xf32, #tpu.memory_space<vmem>>, vector<1x8x32xf32>
    %1 = vector.shape_cast %0 : vector<1x8x32xf32> to vector<8x32xf32>
    %c0_2 = arith.constant 0 : index
    %c0_3 = arith.constant 0 : index
    %c0_4 = arith.constant 0 : index
    %2 = vector.load %arg3[%c0_2, %c0_3, %c0_4] : memref<1x8x32xbf16, #tpu.memory_space<vmem>>, vector<1x8x32xbf16>
    %3 = vector.shape_cast %2 : vector<1x8x32xbf16> to vector<8x32xbf16>
    %c0_5 = arith.constant 0 : index
    %c0_6 = arith.constant 0 : index
    %c0_7 = arith.constant 0 : index
    %4 = vector.load %arg4[%c0_5, %c0_6, %c0_7] : memref<1x8x4xf32, #tpu.memory_space<vmem>>, vector<1x8x4xf32>
    %5 = vector.shape_cast %4 : vector<1x8x4xf32> to vector<8x4xf32>
    %c0_8 = arith.constant 0 : index
    %c0_9 = arith.constant 0 : index
    %6 = vector.load %arg7[%c0_8, %c0_9] : memref<32x128xbf16, #tpu.memory_space<vmem>>, vector<32x128xbf16>
    %cst = arith.constant dense<0.000000e+00> : vector<8x128xf32>
    %7 = tpu.matmul %3, %6, %cst {dimension_numbers = #tpu.dot_dimension_numbers<[1], [0], [0], [1], [0, 0, 1, 1], [], []>} : vector<8x32xbf16>, vector<32x128xbf16>, vector<8x128xf32> -> vector<8x128xf32>
    %c0_10 = arith.constant 0 : index
    %c0_11 = arith.constant 0 : index
    %8 = vector.load %arg8[%c0_10, %c0_11] : memref<1x128xf32, #tpu.memory_space<vmem>>, vector<1x128xf32>
    %9 = vector.broadcast %8 : vector<1x128xf32> to vector<8x128xf32>
    %10 = arith.addf %7, %9 : vector<8x128xf32>
    %11 = vector.extract_strided_slice %10 {offsets = [0, 0], sizes = [8, 32], strides = [1, 1]} : vector<8x128xf32> to vector<8x32xf32>
    %12 = vector.extract_strided_slice %10 {offsets = [0, 32], sizes = [8, 32], strides = [1, 1]} : vector<8x128xf32> to vector<8x32xf32>
    %13 = vector.extract_strided_slice %10 {offsets = [0, 64], sizes = [8, 32], strides = [1, 1]} : vector<8x128xf32> to vector<8x32xf32>
    %14 = vector.shape_cast %13 : vector<8x32xf32> to vector<8x4x8xf32>
    %cst_12 = arith.constant dense<0xFF800000> : vector<8x4xf32>
    %15 = vector.multi_reduction <maximumf>, %14, %cst_12 [2] : vector<8x4x8xf32> to vector<8x4xf32>
    %16 = vector.shape_cast %15 : vector<8x4xf32> to vector<8x4x1xf32>
    %17 = vector.broadcast %16 : vector<8x4x1xf32> to vector<8x4x8xf32>
    %18 = arith.subf %14, %17 : vector<8x4x8xf32>
    %19 = math.exp %18 : vector<8x4x8xf32>
    %cst_13 = arith.constant dense<0.000000e+00> : vector<8x4xf32>
    %20 = vector.multi_reduction <add>, %19, %cst_13 [2] : vector<8x4x8xf32> to vector<8x4xf32>
    %21 = vector.shape_cast %20 : vector<8x4xf32> to vector<8x4x1xf32>
    %22 = tpu.reciprocal %21 {approx = true} : vector<8x4x1xf32> -> vector<8x4x1xf32>
    %23 = vector.broadcast %22 : vector<8x4x1xf32> to vector<8x4x8xf32>
    %24 = arith.mulf %19, %23 : vector<8x4x8xf32>
    %25 = vector.shape_cast %24 : vector<8x4x8xf32> to vector<8x32xf32>
    %26 = vector.extract_strided_slice %5 {offsets = [0, 0], sizes = [8, 1], strides = [1, 1]} : vector<8x4xf32> to vector<8x1xf32>
    %27 = vector.extract_strided_slice %5 {offsets = [0, 1], sizes = [8, 1], strides = [1, 1]} : vector<8x4xf32> to vector<8x1xf32>
    %28 = vector.extract_strided_slice %5 {offsets = [0, 2], sizes = [8, 1], strides = [1, 1]} : vector<8x4xf32> to vector<8x1xf32>
    %29 = vector.extract_strided_slice %5 {offsets = [0, 3], sizes = [8, 1], strides = [1, 1]} : vector<8x4xf32> to vector<8x1xf32>
    %30 = vector.broadcast %28 : vector<8x1xf32> to vector<8x32xf32>
    %31 = arith.mulf %11, %30 : vector<8x32xf32>
    %32 = vector.broadcast %26 : vector<8x1xf32> to vector<8x32xf32>
    %33 = arith.addf %32, %31 : vector<8x32xf32>
    %34 = vector.broadcast %29 : vector<8x1xf32> to vector<8x32xf32>
    %35 = arith.mulf %12, %34 : vector<8x32xf32>
    %36 = vector.broadcast %27 : vector<8x1xf32> to vector<8x32xf32>
    %37 = arith.addf %36, %35 : vector<8x32xf32>
    %cst_14 = arith.constant 0.000000e+00 : f32
    %38 = vector.broadcast %cst_14 : f32 to vector<8x8xf32>
    %cst_15 = arith.constant 0.000000e+00 : f32
    %39 = vector.broadcast %cst_15 : f32 to vector<8x8xf32>
    %cst_16 = arith.constant 0.000000e+00 : f32
    %40 = vector.broadcast %cst_16 : f32 to vector<8x8xf32>
    %cst_17 = arith.constant 0.000000e+00 : f32
    %41 = vector.broadcast %cst_17 : f32 to vector<8x8xf32>
    %c0_18 = arith.constant 0 : index
    %c0_19 = arith.constant 0 : index
    %c0_20 = arith.constant 0 : index
    %42 = vector.load %arg6[%c0_18, %c0_19, %c0_20] : memref<1x80x32xbf16, #tpu.memory_space<vmem>>, vector<1x64x32xbf16>
    %43 = vector.shape_cast %42 : vector<1x64x32xbf16> to vector<64x32xbf16>
    %c0_21 = arith.constant 0 : index
    %c0_22 = arith.constant 0 : index
    %44 = vector.load %arg5[%c0_21, %c0_22] : memref<2x80xf32, #tpu.memory_space<vmem>>, vector<2x64xf32>
    %45 = vector.extract_strided_slice %44 {offsets = [0, 0], sizes = [1, 64], strides = [1, 1]} : vector<2x64xf32> to vector<1x64xf32>
    %46 = vector.extract_strided_slice %44 {offsets = [1, 0], sizes = [1, 64], strides = [1, 1]} : vector<2x64xf32> to vector<1x64xf32>
    %cst_23 = arith.constant 0.000000e+00 : f32
    %47 = vector.broadcast %cst_23 : f32 to vector<8x64xf32>
    %48 = vector.extract_strided_slice %37 {offsets = [0, 0], sizes = [8, 1], strides = [1, 1]} : vector<8x32xf32> to vector<8x1xf32>
    %cst_24 = arith.constant 8.000000e+00 : f32
    %49 = vector.broadcast %cst_24 : f32 to vector<8x1xf32>
    %50 = arith.mulf %48, %49 : vector<8x1xf32>
    %cst_25 = arith.constant 5.000000e-01 : f32
    %51 = vector.broadcast %cst_25 : f32 to vector<8x1xf32>
    %52 = arith.subf %50, %51 : vector<8x1xf32>
    %53 = vector.extract_strided_slice %33 {offsets = [0, 0], sizes = [8, 1], strides = [1, 1]} : vector<8x32xf32> to vector<8x1xf32>
    %cst_26 = arith.constant 8.000000e+00 : f32
    %54 = vector.broadcast %cst_26 : f32 to vector<8x1xf32>
    %55 = arith.mulf %53, %54 : vector<8x1xf32>
    %cst_27 = arith.constant 5.000000e-01 : f32
    %56 = vector.broadcast %cst_27 : f32 to vector<8x1xf32>
    %57 = arith.subf %55, %56 : vector<8x1xf32>
    %58 = vector.extract_strided_slice %25 {offsets = [0, 0], sizes = [8, 1], strides = [1, 1]} : vector<8x32xf32> to vector<8x1xf32>
    %59 = vector.broadcast %45 : vector<1x64xf32> to vector<8x64xf32>
    %60 = vector.broadcast %52 : vector<8x1xf32> to vector<8x64xf32>
    %61 = arith.subf %59, %60 : vector<8x64xf32>
    %62 = math.absf %61 : vector<8x64xf32>
    %cst_28 = arith.constant 1.000000e+00 : f32
    %63 = vector.broadcast %cst_28 : f32 to vector<8x64xf32>
    %64 = arith.subf %63, %62 : vector<8x64xf32>
    %cst_29 = arith.constant 0.000000e+00 : f32
    %65 = vector.broadcast %cst_29 : f32 to vector<8x64xf32>
    %66 = arith.maximumf %64, %65 : vector<8x64xf32>
    %67 = vector.broadcast %46 : vector<1x64xf32> to vector<8x64xf32>
    %68 = vector.broadcast %57 : vector<8x1xf32> to vector<8x64xf32>
    %69 = arith.subf %67, %68 : vector<8x64xf32>
    %70 = math.absf %69 : vector<8x64xf32>
    %cst_30 = arith.constant 1.000000e+00 : f32
    %71 = vector.broadcast %cst_30 : f32 to vector<8x64xf32>
    %72 = arith.subf %71, %70 : vector<8x64xf32>
    %cst_31 = arith.constant 0.000000e+00 : f32
    %73 = vector.broadcast %cst_31 : f32 to vector<8x64xf32>
    %74 = arith.maximumf %72, %73 : vector<8x64xf32>
    %75 = vector.broadcast %58 : vector<8x1xf32> to vector<8x64xf32>
    %76 = arith.mulf %75, %66 : vector<8x64xf32>
    %77 = arith.mulf %76, %74 : vector<8x64xf32>
    %78 = arith.addf %47, %77 : vector<8x64xf32>
    %79 = vector.extract_strided_slice %37 {offsets = [0, 1], sizes = [8, 1], strides = [1, 1]} : vector<8x32xf32> to vector<8x1xf32>
    %cst_32 = arith.constant 8.000000e+00 : f32
    %80 = vector.broadcast %cst_32 : f32 to vector<8x1xf32>
    %81 = arith.mulf %79, %80 : vector<8x1xf32>
    %cst_33 = arith.constant 5.000000e-01 : f32
    %82 = vector.broadcast %cst_33 : f32 to vector<8x1xf32>
    %83 = arith.subf %81, %82 : vector<8x1xf32>
    %84 = vector.extract_strided_slice %33 {offsets = [0, 1], sizes = [8, 1], strides = [1, 1]} : vector<8x32xf32> to vector<8x1xf32>
    %cst_34 = arith.constant 8.000000e+00 : f32
    %85 = vector.broadcast %cst_34 : f32 to vector<8x1xf32>
    %86 = arith.mulf %84, %85 : vector<8x1xf32>
    %cst_35 = arith.constant 5.000000e-01 : f32
    %87 = vector.broadcast %cst_35 : f32 to vector<8x1xf32>
    %88 = arith.subf %86, %87 : vector<8x1xf32>
    %89 = vector.extract_strided_slice %25 {offsets = [0, 1], sizes = [8, 1], strides = [1, 1]} : vector<8x32xf32> to vector<8x1xf32>
    %90 = vector.broadcast %45 : vector<1x64xf32> to vector<8x64xf32>
    %91 = vector.broadcast %83 : vector<8x1xf32> to vector<8x64xf32>
    %92 = arith.subf %90, %91 : vector<8x64xf32>
    %93 = math.absf %92 : vector<8x64xf32>
    %cst_36 = arith.constant 1.000000e+00 : f32
    %94 = vector.broadcast %cst_36 : f32 to vector<8x64xf32>
    %95 = arith.subf %94, %93 : vector<8x64xf32>
    %cst_37 = arith.constant 0.000000e+00 : f32
    %96 = vector.broadcast %cst_37 : f32 to vector<8x64xf32>
    %97 = arith.maximumf %95, %96 : vector<8x64xf32>
    %98 = vector.broadcast %46 : vector<1x64xf32> to vector<8x64xf32>
    %99 = vector.broadcast %88 : vector<8x1xf32> to vector<8x64xf32>
    %100 = arith.subf %98, %99 : vector<8x64xf32>
    %101 = math.absf %100 : vector<8x64xf32>
    %cst_38 = arith.constant 1.000000e+00 : f32
    %102 = vector.broadcast %cst_38 : f32 to vector<8x64xf32>
    %103 = arith.subf %102, %101 : vector<8x64xf32>
    %cst_39 = arith.constant 0.000000e+00 : f32
    %104 = vector.broadcast %cst_39 : f32 to vector<8x64xf32>
    %105 = arith.maximumf %103, %104 : vector<8x64xf32>
    %106 = vector.broadcast %89 : vector<8x1xf32> to vector<8x64xf32>
    %107 = arith.mulf %106, %97 : vector<8x64xf32>
    %108 = arith.mulf %107, %105 : vector<8x64xf32>
    %109 = arith.addf %78, %108 : vector<8x64xf32>
    %110 = vector.extract_strided_slice %37 {offsets = [0, 2], sizes = [8, 1], strides = [1, 1]} : vector<8x32xf32> to vector<8x1xf32>
    %cst_40 = arith.constant 8.000000e+00 : f32
    %111 = vector.broadcast %cst_40 : f32 to vector<8x1xf32>
    %112 = arith.mulf %110, %111 : vector<8x1xf32>
    %cst_41 = arith.constant 5.000000e-01 : f32
    %113 = vector.broadcast %cst_41 : f32 to vector<8x1xf32>
    %114 = arith.subf %112, %113 : vector<8x1xf32>
    %115 = vector.extract_strided_slice %33 {offsets = [0, 2], sizes = [8, 1], strides = [1, 1]} : vector<8x32xf32> to vector<8x1xf32>
    %cst_42 = arith.constant 8.000000e+00 : f32
    %116 = vector.broadcast %cst_42 : f32 to vector<8x1xf32>
    %117 = arith.mulf %115, %116 : vector<8x1xf32>
    %cst_43 = arith.constant 5.000000e-01 : f32
    %118 = vector.broadcast %cst_43 : f32 to vector<8x1xf32>
    %119 = arith.subf %117, %118 : vector<8x1xf32>
    %120 = vector.extract_strided_slice %25 {offsets = [0, 2], sizes = [8, 1], strides = [1, 1]} : vector<8x32xf32> to vector<8x1xf32>
    %121 = vector.broadcast %45 : vector<1x64xf32> to vector<8x64xf32>
    %122 = vector.broadcast %114 : vector<8x1xf32> to vector<8x64xf32>
    %123 = arith.subf %121, %122 : vector<8x64xf32>
    %124 = math.absf %123 : vector<8x64xf32>
    %cst_44 = arith.constant 1.000000e+00 : f32
    %125 = vector.broadcast %cst_44 : f32 to vector<8x64xf32>
    %126 = arith.subf %125, %124 : vector<8x64xf32>
    %cst_45 = arith.constant 0.000000e+00 : f32
    %127 = vector.broadcast %cst_45 : f32 to vector<8x64xf32>
    %128 = arith.maximumf %126, %127 : vector<8x64xf32>
    %129 = vector.broadcast %46 : vector<1x64xf32> to vector<8x64xf32>
    %130 = vector.broadcast %119 : vector<8x1xf32> to vector<8x64xf32>
    %131 = arith.subf %129, %130 : vector<8x64xf32>
    %132 = math.absf %131 : vector<8x64xf32>
    %cst_46 = arith.constant 1.000000e+00 : f32
    %133 = vector.broadcast %cst_46 : f32 to vector<8x64xf32>
    %134 = arith.subf %133, %132 : vector<8x64xf32>
    %cst_47 = arith.constant 0.000000e+00 : f32
    %135 = vector.broadcast %cst_47 : f32 to vector<8x64xf32>
    %136 = arith.maximumf %134, %135 : vector<8x64xf32>
    %137 = vector.broadcast %120 : vector<8x1xf32> to vector<8x64xf32>
    %138 = arith.mulf %137, %128 : vector<8x64xf32>
    %139 = arith.mulf %138, %136 : vector<8x64xf32>
    %140 = arith.addf %109, %139 : vector<8x64xf32>
    %141 = vector.extract_strided_slice %37 {offsets = [0, 3], sizes = [8, 1], strides = [1, 1]} : vector<8x32xf32> to vector<8x1xf32>
    %cst_48 = arith.constant 8.000000e+00 : f32
    %142 = vector.broadcast %cst_48 : f32 to vector<8x1xf32>
    %143 = arith.mulf %141, %142 : vector<8x1xf32>
    %cst_49 = arith.constant 5.000000e-01 : f32
    %144 = vector.broadcast %cst_49 : f32 to vector<8x1xf32>
    %145 = arith.subf %143, %144 : vector<8x1xf32>
    %146 = vector.extract_strided_slice %33 {offsets = [0, 3], sizes = [8, 1], strides = [1, 1]} : vector<8x32xf32> to vector<8x1xf32>
    %cst_50 = arith.constant 8.000000e+00 : f32
    %147 = vector.broadcast %cst_50 : f32 to vector<8x1xf32>
    %148 = arith.mulf %146, %147 : vector<8x1xf32>
    %cst_51 = arith.constant 5.000000e-01 : f32
    %149 = vector.broadcast %cst_51 : f32 to vector<8x1xf32>
    %150 = arith.subf %148, %149 : vector<8x1xf32>
    %151 = vector.extract_strided_slice %25 {offsets = [0, 3], sizes = [8, 1], strides = [1, 1]} : vector<8x32xf32> to vector<8x1xf32>
    %152 = vector.broadcast %45 : vector<1x64xf32> to vector<8x64xf32>
    %153 = vector.broadcast %145 : vector<8x1xf32> to vector<8x64xf32>
    %154 = arith.subf %152, %153 : vector<8x64xf32>
    %155 = math.absf %154 : vector<8x64xf32>
    %cst_52 = arith.constant 1.000000e+00 : f32
    %156 = vector.broadcast %cst_52 : f32 to vector<8x64xf32>
    %157 = arith.subf %156, %155 : vector<8x64xf32>
    %cst_53 = arith.constant 0.000000e+00 : f32
    %158 = vector.broadcast %cst_53 : f32 to vector<8x64xf32>
    %159 = arith.maximumf %157, %158 : vector<8x64xf32>
    %160 = vector.broadcast %46 : vector<1x64xf32> to vector<8x64xf32>
    %161 = vector.broadcast %150 : vector<8x1xf32> to vector<8x64xf32>
    %162 = arith.subf %160, %161 : vector<8x64xf32>
    %163 = math.absf %162 : vector<8x64xf32>
    %cst_54 = arith.constant 1.000000e+00 : f32
    %164 = vector.broadcast %cst_54 : f32 to vector<8x64xf32>
    %165 = arith.subf %164, %163 : vector<8x64xf32>
    %cst_55 = arith.constant 0.000000e+00 : f32
    %166 = vector.broadcast %cst_55 : f32 to vector<8x64xf32>
    %167 = arith.maximumf %165, %166 : vector<8x64xf32>
    %168 = vector.broadcast %151 : vector<8x1xf32> to vector<8x64xf32>
    %169 = arith.mulf %168, %159 : vector<8x64xf32>
    %170 = arith.mulf %169, %167 : vector<8x64xf32>
    %171 = arith.addf %140, %170 : vector<8x64xf32>
    %172 = arith.truncf %171 : vector<8x64xf32> to vector<8x64xbf16>
    %173 = vector.extract_strided_slice %43 {offsets = [0, 0], sizes = [64, 8], strides = [1, 1]} : vector<64x32xbf16> to vector<64x8xbf16>
    %cst_56 = arith.constant dense<0.000000e+00> : vector<8x8xf32>
    %174 = tpu.matmul %172, %173, %cst_56 {dimension_numbers = #tpu.dot_dimension_numbers<[1], [0], [0], [1], [0, 0, 1, 1], [], []>} : vector<8x64xbf16>, vector<64x8xbf16>, vector<8x8xf32> -> vector<8x8xf32>
    %175 = arith.addf %38, %174 : vector<8x8xf32>
    %cst_57 = arith.constant 0.000000e+00 : f32
    %176 = vector.broadcast %cst_57 : f32 to vector<8x64xf32>
    %177 = vector.extract_strided_slice %37 {offsets = [0, 8], sizes = [8, 1], strides = [1, 1]} : vector<8x32xf32> to vector<8x1xf32>
    %cst_58 = arith.constant 8.000000e+00 : f32
    %178 = vector.broadcast %cst_58 : f32 to vector<8x1xf32>
    %179 = arith.mulf %177, %178 : vector<8x1xf32>
    %cst_59 = arith.constant 5.000000e-01 : f32
    %180 = vector.broadcast %cst_59 : f32 to vector<8x1xf32>
    %181 = arith.subf %179, %180 : vector<8x1xf32>
    %182 = vector.extract_strided_slice %33 {offsets = [0, 8], sizes = [8, 1], strides = [1, 1]} : vector<8x32xf32> to vector<8x1xf32>
    %cst_60 = arith.constant 8.000000e+00 : f32
    %183 = vector.broadcast %cst_60 : f32 to vector<8x1xf32>
    %184 = arith.mulf %182, %183 : vector<8x1xf32>
    %cst_61 = arith.constant 5.000000e-01 : f32
    %185 = vector.broadcast %cst_61 : f32 to vector<8x1xf32>
    %186 = arith.subf %184, %185 : vector<8x1xf32>
    %187 = vector.extract_strided_slice %25 {offsets = [0, 8], sizes = [8, 1], strides = [1, 1]} : vector<8x32xf32> to vector<8x1xf32>
    %188 = vector.broadcast %45 : vector<1x64xf32> to vector<8x64xf32>
    %189 = vector.broadcast %181 : vector<8x1xf32> to vector<8x64xf32>
    %190 = arith.subf %188, %189 : vector<8x64xf32>
    %191 = math.absf %190 : vector<8x64xf32>
    %cst_62 = arith.constant 1.000000e+00 : f32
    %192 = vector.broadcast %cst_62 : f32 to vector<8x64xf32>
    %193 = arith.subf %192, %191 : vector<8x64xf32>
    %cst_63 = arith.constant 0.000000e+00 : f32
    %194 = vector.broadcast %cst_63 : f32 to vector<8x64xf32>
    %195 = arith.maximumf %193, %194 : vector<8x64xf32>
    %196 = vector.broadcast %46 : vector<1x64xf32> to vector<8x64xf32>
    %197 = vector.broadcast %186 : vector<8x1xf32> to vector<8x64xf32>
    %198 = arith.subf %196, %197 : vector<8x64xf32>
    %199 = math.absf %198 : vector<8x64xf32>
    %cst_64 = arith.constant 1.000000e+00 : f32
    %200 = vector.broadcast %cst_64 : f32 to vector<8x64xf32>
    %201 = arith.subf %200, %199 : vector<8x64xf32>
    %cst_65 = arith.constant 0.000000e+00 : f32
    %202 = vector.broadcast %cst_65 : f32 to vector<8x64xf32>
    %203 = arith.maximumf %201, %202 : vector<8x64xf32>
    %204 = vector.broadcast %187 : vector<8x1xf32> to vector<8x64xf32>
    %205 = arith.mulf %204, %195 : vector<8x64xf32>
    %206 = arith.mulf %205, %203 : vector<8x64xf32>
    %207 = arith.addf %176, %206 : vector<8x64xf32>
    %208 = vector.extract_strided_slice %37 {offsets = [0, 9], sizes = [8, 1], strides = [1, 1]} : vector<8x32xf32> to vector<8x1xf32>
    %cst_66 = arith.constant 8.000000e+00 : f32
    %209 = vector.broadcast %cst_66 : f32 to vector<8x1xf32>
    %210 = arith.mulf %208, %209 : vector<8x1xf32>
    %cst_67 = arith.constant 5.000000e-01 : f32
    %211 = vector.broadcast %cst_67 : f32 to vector<8x1xf32>
    %212 = arith.subf %210, %211 : vector<8x1xf32>
    %213 = vector.extract_strided_slice %33 {offsets = [0, 9], sizes = [8, 1], strides = [1, 1]} : vector<8x32xf32> to vector<8x1xf32>
    %cst_68 = arith.constant 8.000000e+00 : f32
    %214 = vector.broadcast %cst_68 : f32 to vector<8x1xf32>
    %215 = arith.mulf %213, %214 : vector<8x1xf32>
    %cst_69 = arith.constant 5.000000e-01 : f32
    %216 = vector.broadcast %cst_69 : f32 to vector<8x1xf32>
    %217 = arith.subf %215, %216 : vector<8x1xf32>
    %218 = vector.extract_strided_slice %25 {offsets = [0, 9], sizes = [8, 1], strides = [1, 1]} : vector<8x32xf32> to vector<8x1xf32>
    %219 = vector.broadcast %45 : vector<1x64xf32> to vector<8x64xf32>
    %220 = vector.broadcast %212 : vector<8x1xf32> to vector<8x64xf32>
    %221 = arith.subf %219, %220 : vector<8x64xf32>
    %222 = math.absf %221 : vector<8x64xf32>
    %cst_70 = arith.constant 1.000000e+00 : f32
    %223 = vector.broadcast %cst_70 : f32 to vector<8x64xf32>
    %224 = arith.subf %223, %222 : vector<8x64xf32>
    %cst_71 = arith.constant 0.000000e+00 : f32
    %225 = vector.broadcast %cst_71 : f32 to vector<8x64xf32>
    %226 = arith.maximumf %224, %225 : vector<8x64xf32>
    %227 = vector.broadcast %46 : vector<1x64xf32> to vector<8x64xf32>
    %228 = vector.broadcast %217 : vector<8x1xf32> to vector<8x64xf32>
    %229 = arith.subf %227, %228 : vector<8x64xf32>
    %230 = math.absf %229 : vector<8x64xf32>
    %cst_72 = arith.constant 1.000000e+00 : f32
    %231 = vector.broadcast %cst_72 : f32 to vector<8x64xf32>
    %232 = arith.subf %231, %230 : vector<8x64xf32>
    %cst_73 = arith.constant 0.000000e+00 : f32
    %233 = vector.broadcast %cst_73 : f32 to vector<8x64xf32>
    %234 = arith.maximumf %232, %233 : vector<8x64xf32>
    %235 = vector.broadcast %218 : vector<8x1xf32> to vector<8x64xf32>
    %236 = arith.mulf %235, %226 : vector<8x64xf32>
    %237 = arith.mulf %236, %234 : vector<8x64xf32>
    %238 = arith.addf %207, %237 : vector<8x64xf32>
    %239 = vector.extract_strided_slice %37 {offsets = [0, 10], sizes = [8, 1], strides = [1, 1]} : vector<8x32xf32> to vector<8x1xf32>
    %cst_74 = arith.constant 8.000000e+00 : f32
    %240 = vector.broadcast %cst_74 : f32 to vector<8x1xf32>
    %241 = arith.mulf %239, %240 : vector<8x1xf32>
    %cst_75 = arith.constant 5.000000e-01 : f32
    %242 = vector.broadcast %cst_75 : f32 to vector<8x1xf32>
    %243 = arith.subf %241, %242 : vector<8x1xf32>
    %244 = vector.extract_strided_slice %33 {offsets = [0, 10], sizes = [8, 1], strides = [1, 1]} : vector<8x32xf32> to vector<8x1xf32>
    %cst_76 = arith.constant 8.000000e+00 : f32
    %245 = vector.broadcast %cst_76 : f32 to vector<8x1xf32>
    %246 = arith.mulf %244, %245 : vector<8x1xf32>
    %cst_77 = arith.constant 5.000000e-01 : f32
    %247 = vector.broadcast %cst_77 : f32 to vector<8x1xf32>
    %248 = arith.subf %246, %247 : vector<8x1xf32>
    %249 = vector.extract_strided_slice %25 {offsets = [0, 10], sizes = [8, 1], strides = [1, 1]} : vector<8x32xf32> to vector<8x1xf32>
    %250 = vector.broadcast %45 : vector<1x64xf32> to vector<8x64xf32>
    %251 = vector.broadcast %243 : vector<8x1xf32> to vector<8x64xf32>
    %252 = arith.subf %250, %251 : vector<8x64xf32>
    %253 = math.absf %252 : vector<8x64xf32>
    %cst_78 = arith.constant 1.000000e+00 : f32
    %254 = vector.broadcast %cst_78 : f32 to vector<8x64xf32>
    %255 = arith.subf %254, %253 : vector<8x64xf32>
    %cst_79 = arith.constant 0.000000e+00 : f32
    %256 = vector.broadcast %cst_79 : f32 to vector<8x64xf32>
    %257 = arith.maximumf %255, %256 : vector<8x64xf32>
    %258 = vector.broadcast %46 : vector<1x64xf32> to vector<8x64xf32>
    %259 = vector.broadcast %248 : vector<8x1xf32> to vector<8x64xf32>
    %260 = arith.subf %258, %259 : vector<8x64xf32>
    %261 = math.absf %260 : vector<8x64xf32>
    %cst_80 = arith.constant 1.000000e+00 : f32
    %262 = vector.broadcast %cst_80 : f32 to vector<8x64xf32>
    %263 = arith.subf %262, %261 : vector<8x64xf32>
    %cst_81 = arith.constant 0.000000e+00 : f32
    %264 = vector.broadcast %cst_81 : f32 to vector<8x64xf32>
    %265 = arith.maximumf %263, %264 : vector<8x64xf32>
    %266 = vector.broadcast %249 : vector<8x1xf32> to vector<8x64xf32>
    %267 = arith.mulf %266, %257 : vector<8x64xf32>
    %268 = arith.mulf %267, %265 : vector<8x64xf32>
    %269 = arith.addf %238, %268 : vector<8x64xf32>
    %270 = vector.extract_strided_slice %37 {offsets = [0, 11], sizes = [8, 1], strides = [1, 1]} : vector<8x32xf32> to vector<8x1xf32>
    %cst_82 = arith.constant 8.000000e+00 : f32
    %271 = vector.broadcast %cst_82 : f32 to vector<8x1xf32>
    %272 = arith.mulf %270, %271 : vector<8x1xf32>
    %cst_83 = arith.constant 5.000000e-01 : f32
    %273 = vector.broadcast %cst_83 : f32 to vector<8x1xf32>
    %274 = arith.subf %272, %273 : vector<8x1xf32>
    %275 = vector.extract_strided_slice %33 {offsets = [0, 11], sizes = [8, 1], strides = [1, 1]} : vector<8x32xf32> to vector<8x1xf32>
    %cst_84 = arith.constant 8.000000e+00 : f32
    %276 = vector.broadcast %cst_84 : f32 to vector<8x1xf32>
    %277 = arith.mulf %275, %276 : vector<8x1xf32>
    %cst_85 = arith.constant 5.000000e-01 : f32
    %278 = vector.broadcast %cst_85 : f32 to vector<8x1xf32>
    %279 = arith.subf %277, %278 : vector<8x1xf32>
    %280 = vector.extract_strided_slice %25 {offsets = [0, 11], sizes = [8, 1], strides = [1, 1]} : vector<8x32xf32> to vector<8x1xf32>
    %281 = vector.broadcast %45 : vector<1x64xf32> to vector<8x64xf32>
    %282 = vector.broadcast %274 : vector<8x1xf32> to vector<8x64xf32>
    %283 = arith.subf %281, %282 : vector<8x64xf32>
    %284 = math.absf %283 : vector<8x64xf32>
    %cst_86 = arith.constant 1.000000e+00 : f32
    %285 = vector.broadcast %cst_86 : f32 to vector<8x64xf32>
    %286 = arith.subf %285, %284 : vector<8x64xf32>
    %cst_87 = arith.constant 0.000000e+00 : f32
    %287 = vector.broadcast %cst_87 : f32 to vector<8x64xf32>
    %288 = arith.maximumf %286, %287 : vector<8x64xf32>
    %289 = vector.broadcast %46 : vector<1x64xf32> to vector<8x64xf32>
    %290 = vector.broadcast %279 : vector<8x1xf32> to vector<8x64xf32>
    %291 = arith.subf %289, %290 : vector<8x64xf32>
    %292 = math.absf %291 : vector<8x64xf32>
    %cst_88 = arith.constant 1.000000e+00 : f32
    %293 = vector.broadcast %cst_88 : f32 to vector<8x64xf32>
    %294 = arith.subf %293, %292 : vector<8x64xf32>
    %cst_89 = arith.constant 0.000000e+00 : f32
    %295 = vector.broadcast %cst_89 : f32 to vector<8x64xf32>
    %296 = arith.maximumf %294, %295 : vector<8x64xf32>
    %297 = vector.broadcast %280 : vector<8x1xf32> to vector<8x64xf32>
    %298 = arith.mulf %297, %288 : vector<8x64xf32>
    %299 = arith.mulf %298, %296 : vector<8x64xf32>
    %300 = arith.addf %269, %299 : vector<8x64xf32>
    %301 = arith.truncf %300 : vector<8x64xf32> to vector<8x64xbf16>
    %302 = vector.extract_strided_slice %43 {offsets = [0, 8], sizes = [64, 8], strides = [1, 1]} : vector<64x32xbf16> to vector<64x8xbf16>
    %cst_90 = arith.constant dense<0.000000e+00> : vector<8x8xf32>
    %303 = tpu.matmul %301, %302, %cst_90 {dimension_numbers = #tpu.dot_dimension_numbers<[1], [0], [0], [1], [0, 0, 1, 1], [], []>} : vector<8x64xbf16>, vector<64x8xbf16>, vector<8x8xf32> -> vector<8x8xf32>
    %304 = arith.addf %39, %303 : vector<8x8xf32>
    %cst_91 = arith.constant 0.000000e+00 : f32
    %305 = vector.broadcast %cst_91 : f32 to vector<8x64xf32>
    %306 = vector.extract_strided_slice %37 {offsets = [0, 16], sizes = [8, 1], strides = [1, 1]} : vector<8x32xf32> to vector<8x1xf32>
    %cst_92 = arith.constant 8.000000e+00 : f32
    %307 = vector.broadcast %cst_92 : f32 to vector<8x1xf32>
    %308 = arith.mulf %306, %307 : vector<8x1xf32>
    %cst_93 = arith.constant 5.000000e-01 : f32
    %309 = vector.broadcast %cst_93 : f32 to vector<8x1xf32>
    %310 = arith.subf %308, %309 : vector<8x1xf32>
    %311 = vector.extract_strided_slice %33 {offsets = [0, 16], sizes = [8, 1], strides = [1, 1]} : vector<8x32xf32> to vector<8x1xf32>
    %cst_94 = arith.constant 8.000000e+00 : f32
    %312 = vector.broadcast %cst_94 : f32 to vector<8x1xf32>
    %313 = arith.mulf %311, %312 : vector<8x1xf32>
    %cst_95 = arith.constant 5.000000e-01 : f32
    %314 = vector.broadcast %cst_95 : f32 to vector<8x1xf32>
    %315 = arith.subf %313, %314 : vector<8x1xf32>
    %316 = vector.extract_strided_slice %25 {offsets = [0, 16], sizes = [8, 1], strides = [1, 1]} : vector<8x32xf32> to vector<8x1xf32>
    %317 = vector.broadcast %45 : vector<1x64xf32> to vector<8x64xf32>
    %318 = vector.broadcast %310 : vector<8x1xf32> to vector<8x64xf32>
    %319 = arith.subf %317, %318 : vector<8x64xf32>
    %320 = math.absf %319 : vector<8x64xf32>
    %cst_96 = arith.constant 1.000000e+00 : f32
    %321 = vector.broadcast %cst_96 : f32 to vector<8x64xf32>
    %322 = arith.subf %321, %320 : vector<8x64xf32>
    %cst_97 = arith.constant 0.000000e+00 : f32
    %323 = vector.broadcast %cst_97 : f32 to vector<8x64xf32>
    %324 = arith.maximumf %322, %323 : vector<8x64xf32>
    %325 = vector.broadcast %46 : vector<1x64xf32> to vector<8x64xf32>
    %326 = vector.broadcast %315 : vector<8x1xf32> to vector<8x64xf32>
    %327 = arith.subf %325, %326 : vector<8x64xf32>
    %328 = math.absf %327 : vector<8x64xf32>
    %cst_98 = arith.constant 1.000000e+00 : f32
    %329 = vector.broadcast %cst_98 : f32 to vector<8x64xf32>
    %330 = arith.subf %329, %328 : vector<8x64xf32>
    %cst_99 = arith.constant 0.000000e+00 : f32
    %331 = vector.broadcast %cst_99 : f32 to vector<8x64xf32>
    %332 = arith.maximumf %330, %331 : vector<8x64xf32>
    %333 = vector.broadcast %316 : vector<8x1xf32> to vector<8x64xf32>
    %334 = arith.mulf %333, %324 : vector<8x64xf32>
    %335 = arith.mulf %334, %332 : vector<8x64xf32>
    %336 = arith.addf %305, %335 : vector<8x64xf32>
    %337 = vector.extract_strided_slice %37 {offsets = [0, 17], sizes = [8, 1], strides = [1, 1]} : vector<8x32xf32> to vector<8x1xf32>
    %cst_100 = arith.constant 8.000000e+00 : f32
    %338 = vector.broadcast %cst_100 : f32 to vector<8x1xf32>
    %339 = arith.mulf %337, %338 : vector<8x1xf32>
    %cst_101 = arith.constant 5.000000e-01 : f32
    %340 = vector.broadcast %cst_101 : f32 to vector<8x1xf32>
    %341 = arith.subf %339, %340 : vector<8x1xf32>
    %342 = vector.extract_strided_slice %33 {offsets = [0, 17], sizes = [8, 1], strides = [1, 1]} : vector<8x32xf32> to vector<8x1xf32>
    %cst_102 = arith.constant 8.000000e+00 : f32
    %343 = vector.broadcast %cst_102 : f32 to vector<8x1xf32>
    %344 = arith.mulf %342, %343 : vector<8x1xf32>
    %cst_103 = arith.constant 5.000000e-01 : f32
    %345 = vector.broadcast %cst_103 : f32 to vector<8x1xf32>
    %346 = arith.subf %344, %345 : vector<8x1xf32>
    %347 = vector.extract_strided_slice %25 {offsets = [0, 17], sizes = [8, 1], strides = [1, 1]} : vector<8x32xf32> to vector<8x1xf32>
    %348 = vector.broadcast %45 : vector<1x64xf32> to vector<8x64xf32>
    %349 = vector.broadcast %341 : vector<8x1xf32> to vector<8x64xf32>
    %350 = arith.subf %348, %349 : vector<8x64xf32>
    %351 = math.absf %350 : vector<8x64xf32>
    %cst_104 = arith.constant 1.000000e+00 : f32
    %352 = vector.broadcast %cst_104 : f32 to vector<8x64xf32>
    %353 = arith.subf %352, %351 : vector<8x64xf32>
    %cst_105 = arith.constant 0.000000e+00 : f32
    %354 = vector.broadcast %cst_105 : f32 to vector<8x64xf32>
    %355 = arith.maximumf %353, %354 : vector<8x64xf32>
    %356 = vector.broadcast %46 : vector<1x64xf32> to vector<8x64xf32>
    %357 = vector.broadcast %346 : vector<8x1xf32> to vector<8x64xf32>
    %358 = arith.subf %356, %357 : vector<8x64xf32>
    %359 = math.absf %358 : vector<8x64xf32>
    %cst_106 = arith.constant 1.000000e+00 : f32
    %360 = vector.broadcast %cst_106 : f32 to vector<8x64xf32>
    %361 = arith.subf %360, %359 : vector<8x64xf32>
    %cst_107 = arith.constant 0.000000e+00 : f32
    %362 = vector.broadcast %cst_107 : f32 to vector<8x64xf32>
    %363 = arith.maximumf %361, %362 : vector<8x64xf32>
    %364 = vector.broadcast %347 : vector<8x1xf32> to vector<8x64xf32>
    %365 = arith.mulf %364, %355 : vector<8x64xf32>
    %366 = arith.mulf %365, %363 : vector<8x64xf32>
    %367 = arith.addf %336, %366 : vector<8x64xf32>
    %368 = vector.extract_strided_slice %37 {offsets = [0, 18], sizes = [8, 1], strides = [1, 1]} : vector<8x32xf32> to vector<8x1xf32>
    %cst_108 = arith.constant 8.000000e+00 : f32
    %369 = vector.broadcast %cst_108 : f32 to vector<8x1xf32>
    %370 = arith.mulf %368, %369 : vector<8x1xf32>
    %cst_109 = arith.constant 5.000000e-01 : f32
    %371 = vector.broadcast %cst_109 : f32 to vector<8x1xf32>
    %372 = arith.subf %370, %371 : vector<8x1xf32>
    %373 = vector.extract_strided_slice %33 {offsets = [0, 18], sizes = [8, 1], strides = [1, 1]} : vector<8x32xf32> to vector<8x1xf32>
    %cst_110 = arith.constant 8.000000e+00 : f32
    %374 = vector.broadcast %cst_110 : f32 to vector<8x1xf32>
    %375 = arith.mulf %373, %374 : vector<8x1xf32>
    %cst_111 = arith.constant 5.000000e-01 : f32
    %376 = vector.broadcast %cst_111 : f32 to vector<8x1xf32>
    %377 = arith.subf %375, %376 : vector<8x1xf32>
    %378 = vector.extract_strided_slice %25 {offsets = [0, 18], sizes = [8, 1], strides = [1, 1]} : vector<8x32xf32> to vector<8x1xf32>
    %379 = vector.broadcast %45 : vector<1x64xf32> to vector<8x64xf32>
    %380 = vector.broadcast %372 : vector<8x1xf32> to vector<8x64xf32>
    %381 = arith.subf %379, %380 : vector<8x64xf32>
    %382 = math.absf %381 : vector<8x64xf32>
    %cst_112 = arith.constant 1.000000e+00 : f32
    %383 = vector.broadcast %cst_112 : f32 to vector<8x64xf32>
    %384 = arith.subf %383, %382 : vector<8x64xf32>
    %cst_113 = arith.constant 0.000000e+00 : f32
    %385 = vector.broadcast %cst_113 : f32 to vector<8x64xf32>
    %386 = arith.maximumf %384, %385 : vector<8x64xf32>
    %387 = vector.broadcast %46 : vector<1x64xf32> to vector<8x64xf32>
    %388 = vector.broadcast %377 : vector<8x1xf32> to vector<8x64xf32>
    %389 = arith.subf %387, %388 : vector<8x64xf32>
    %390 = math.absf %389 : vector<8x64xf32>
    %cst_114 = arith.constant 1.000000e+00 : f32
    %391 = vector.broadcast %cst_114 : f32 to vector<8x64xf32>
    %392 = arith.subf %391, %390 : vector<8x64xf32>
    %cst_115 = arith.constant 0.000000e+00 : f32
    %393 = vector.broadcast %cst_115 : f32 to vector<8x64xf32>
    %394 = arith.maximumf %392, %393 : vector<8x64xf32>
    %395 = vector.broadcast %378 : vector<8x1xf32> to vector<8x64xf32>
    %396 = arith.mulf %395, %386 : vector<8x64xf32>
    %397 = arith.mulf %396, %394 : vector<8x64xf32>
    %398 = arith.addf %367, %397 : vector<8x64xf32>
    %399 = vector.extract_strided_slice %37 {offsets = [0, 19], sizes = [8, 1], strides = [1, 1]} : vector<8x32xf32> to vector<8x1xf32>
    %cst_116 = arith.constant 8.000000e+00 : f32
    %400 = vector.broadcast %cst_116 : f32 to vector<8x1xf32>
    %401 = arith.mulf %399, %400 : vector<8x1xf32>
    %cst_117 = arith.constant 5.000000e-01 : f32
    %402 = vector.broadcast %cst_117 : f32 to vector<8x1xf32>
    %403 = arith.subf %401, %402 : vector<8x1xf32>
    %404 = vector.extract_strided_slice %33 {offsets = [0, 19], sizes = [8, 1], strides = [1, 1]} : vector<8x32xf32> to vector<8x1xf32>
    %cst_118 = arith.constant 8.000000e+00 : f32
    %405 = vector.broadcast %cst_118 : f32 to vector<8x1xf32>
    %406 = arith.mulf %404, %405 : vector<8x1xf32>
    %cst_119 = arith.constant 5.000000e-01 : f32
    %407 = vector.broadcast %cst_119 : f32 to vector<8x1xf32>
    %408 = arith.subf %406, %407 : vector<8x1xf32>
    %409 = vector.extract_strided_slice %25 {offsets = [0, 19], sizes = [8, 1], strides = [1, 1]} : vector<8x32xf32> to vector<8x1xf32>
    %410 = vector.broadcast %45 : vector<1x64xf32> to vector<8x64xf32>
    %411 = vector.broadcast %403 : vector<8x1xf32> to vector<8x64xf32>
    %412 = arith.subf %410, %411 : vector<8x64xf32>
    %413 = math.absf %412 : vector<8x64xf32>
    %cst_120 = arith.constant 1.000000e+00 : f32
    %414 = vector.broadcast %cst_120 : f32 to vector<8x64xf32>
    %415 = arith.subf %414, %413 : vector<8x64xf32>
    %cst_121 = arith.constant 0.000000e+00 : f32
    %416 = vector.broadcast %cst_121 : f32 to vector<8x64xf32>
    %417 = arith.maximumf %415, %416 : vector<8x64xf32>
    %418 = vector.broadcast %46 : vector<1x64xf32> to vector<8x64xf32>
    %419 = vector.broadcast %408 : vector<8x1xf32> to vector<8x64xf32>
    %420 = arith.subf %418, %419 : vector<8x64xf32>
    %421 = math.absf %420 : vector<8x64xf32>
    %cst_122 = arith.constant 1.000000e+00 : f32
    %422 = vector.broadcast %cst_122 : f32 to vector<8x64xf32>
    %423 = arith.subf %422, %421 : vector<8x64xf32>
    %cst_123 = arith.constant 0.000000e+00 : f32
    %424 = vector.broadcast %cst_123 : f32 to vector<8x64xf32>
    %425 = arith.maximumf %423, %424 : vector<8x64xf32>
    %426 = vector.broadcast %409 : vector<8x1xf32> to vector<8x64xf32>
    %427 = arith.mulf %426, %417 : vector<8x64xf32>
    %428 = arith.mulf %427, %425 : vector<8x64xf32>
    %429 = arith.addf %398, %428 : vector<8x64xf32>
    %430 = arith.truncf %429 : vector<8x64xf32> to vector<8x64xbf16>
    %431 = vector.extract_strided_slice %43 {offsets = [0, 16], sizes = [64, 8], strides = [1, 1]} : vector<64x32xbf16> to vector<64x8xbf16>
    %cst_124 = arith.constant dense<0.000000e+00> : vector<8x8xf32>
    %432 = tpu.matmul %430, %431, %cst_124 {dimension_numbers = #tpu.dot_dimension_numbers<[1], [0], [0], [1], [0, 0, 1, 1], [], []>} : vector<8x64xbf16>, vector<64x8xbf16>, vector<8x8xf32> -> vector<8x8xf32>
    %433 = arith.addf %40, %432 : vector<8x8xf32>
    %cst_125 = arith.constant 0.000000e+00 : f32
    %434 = vector.broadcast %cst_125 : f32 to vector<8x64xf32>
    %435 = vector.extract_strided_slice %37 {offsets = [0, 24], sizes = [8, 1], strides = [1, 1]} : vector<8x32xf32> to vector<8x1xf32>
    %cst_126 = arith.constant 8.000000e+00 : f32
    %436 = vector.broadcast %cst_126 : f32 to vector<8x1xf32>
    %437 = arith.mulf %435, %436 : vector<8x1xf32>
    %cst_127 = arith.constant 5.000000e-01 : f32
    %438 = vector.broadcast %cst_127 : f32 to vector<8x1xf32>
    %439 = arith.subf %437, %438 : vector<8x1xf32>
    %440 = vector.extract_strided_slice %33 {offsets = [0, 24], sizes = [8, 1], strides = [1, 1]} : vector<8x32xf32> to vector<8x1xf32>
    %cst_128 = arith.constant 8.000000e+00 : f32
    %441 = vector.broadcast %cst_128 : f32 to vector<8x1xf32>
    %442 = arith.mulf %440, %441 : vector<8x1xf32>
    %cst_129 = arith.constant 5.000000e-01 : f32
    %443 = vector.broadcast %cst_129 : f32 to vector<8x1xf32>
    %444 = arith.subf %442, %443 : vector<8x1xf32>
    %445 = vector.extract_strided_slice %25 {offsets = [0, 24], sizes = [8, 1], strides = [1, 1]} : vector<8x32xf32> to vector<8x1xf32>
    %446 = vector.broadcast %45 : vector<1x64xf32> to vector<8x64xf32>
    %447 = vector.broadcast %439 : vector<8x1xf32> to vector<8x64xf32>
    %448 = arith.subf %446, %447 : vector<8x64xf32>
    %449 = math.absf %448 : vector<8x64xf32>
    %cst_130 = arith.constant 1.000000e+00 : f32
    %450 = vector.broadcast %cst_130 : f32 to vector<8x64xf32>
    %451 = arith.subf %450, %449 : vector<8x64xf32>
    %cst_131 = arith.constant 0.000000e+00 : f32
    %452 = vector.broadcast %cst_131 : f32 to vector<8x64xf32>
    %453 = arith.maximumf %451, %452 : vector<8x64xf32>
    %454 = vector.broadcast %46 : vector<1x64xf32> to vector<8x64xf32>
    %455 = vector.broadcast %444 : vector<8x1xf32> to vector<8x64xf32>
    %456 = arith.subf %454, %455 : vector<8x64xf32>
    %457 = math.absf %456 : vector<8x64xf32>
    %cst_132 = arith.constant 1.000000e+00 : f32
    %458 = vector.broadcast %cst_132 : f32 to vector<8x64xf32>
    %459 = arith.subf %458, %457 : vector<8x64xf32>
    %cst_133 = arith.constant 0.000000e+00 : f32
    %460 = vector.broadcast %cst_133 : f32 to vector<8x64xf32>
    %461 = arith.maximumf %459, %460 : vector<8x64xf32>
    %462 = vector.broadcast %445 : vector<8x1xf32> to vector<8x64xf32>
    %463 = arith.mulf %462, %453 : vector<8x64xf32>
    %464 = arith.mulf %463, %461 : vector<8x64xf32>
    %465 = arith.addf %434, %464 : vector<8x64xf32>
    %466 = vector.extract_strided_slice %37 {offsets = [0, 25], sizes = [8, 1], strides = [1, 1]} : vector<8x32xf32> to vector<8x1xf32>
    %cst_134 = arith.constant 8.000000e+00 : f32
    %467 = vector.broadcast %cst_134 : f32 to vector<8x1xf32>
    %468 = arith.mulf %466, %467 : vector<8x1xf32>
    %cst_135 = arith.constant 5.000000e-01 : f32
    %469 = vector.broadcast %cst_135 : f32 to vector<8x1xf32>
    %470 = arith.subf %468, %469 : vector<8x1xf32>
    %471 = vector.extract_strided_slice %33 {offsets = [0, 25], sizes = [8, 1], strides = [1, 1]} : vector<8x32xf32> to vector<8x1xf32>
    %cst_136 = arith.constant 8.000000e+00 : f32
    %472 = vector.broadcast %cst_136 : f32 to vector<8x1xf32>
    %473 = arith.mulf %471, %472 : vector<8x1xf32>
    %cst_137 = arith.constant 5.000000e-01 : f32
    %474 = vector.broadcast %cst_137 : f32 to vector<8x1xf32>
    %475 = arith.subf %473, %474 : vector<8x1xf32>
    %476 = vector.extract_strided_slice %25 {offsets = [0, 25], sizes = [8, 1], strides = [1, 1]} : vector<8x32xf32> to vector<8x1xf32>
    %477 = vector.broadcast %45 : vector<1x64xf32> to vector<8x64xf32>
    %478 = vector.broadcast %470 : vector<8x1xf32> to vector<8x64xf32>
    %479 = arith.subf %477, %478 : vector<8x64xf32>
    %480 = math.absf %479 : vector<8x64xf32>
    %cst_138 = arith.constant 1.000000e+00 : f32
    %481 = vector.broadcast %cst_138 : f32 to vector<8x64xf32>
    %482 = arith.subf %481, %480 : vector<8x64xf32>
    %cst_139 = arith.constant 0.000000e+00 : f32
    %483 = vector.broadcast %cst_139 : f32 to vector<8x64xf32>
    %484 = arith.maximumf %482, %483 : vector<8x64xf32>
    %485 = vector.broadcast %46 : vector<1x64xf32> to vector<8x64xf32>
    %486 = vector.broadcast %475 : vector<8x1xf32> to vector<8x64xf32>
    %487 = arith.subf %485, %486 : vector<8x64xf32>
    %488 = math.absf %487 : vector<8x64xf32>
    %cst_140 = arith.constant 1.000000e+00 : f32
    %489 = vector.broadcast %cst_140 : f32 to vector<8x64xf32>
    %490 = arith.subf %489, %488 : vector<8x64xf32>
    %cst_141 = arith.constant 0.000000e+00 : f32
    %491 = vector.broadcast %cst_141 : f32 to vector<8x64xf32>
    %492 = arith.maximumf %490, %491 : vector<8x64xf32>
    %493 = vector.broadcast %476 : vector<8x1xf32> to vector<8x64xf32>
    %494 = arith.mulf %493, %484 : vector<8x64xf32>
    %495 = arith.mulf %494, %492 : vector<8x64xf32>
    %496 = arith.addf %465, %495 : vector<8x64xf32>
    %497 = vector.extract_strided_slice %37 {offsets = [0, 26], sizes = [8, 1], strides = [1, 1]} : vector<8x32xf32> to vector<8x1xf32>
    %cst_142 = arith.constant 8.000000e+00 : f32
    %498 = vector.broadcast %cst_142 : f32 to vector<8x1xf32>
    %499 = arith.mulf %497, %498 : vector<8x1xf32>
    %cst_143 = arith.constant 5.000000e-01 : f32
    %500 = vector.broadcast %cst_143 : f32 to vector<8x1xf32>
    %501 = arith.subf %499, %500 : vector<8x1xf32>
    %502 = vector.extract_strided_slice %33 {offsets = [0, 26], sizes = [8, 1], strides = [1, 1]} : vector<8x32xf32> to vector<8x1xf32>
    %cst_144 = arith.constant 8.000000e+00 : f32
    %503 = vector.broadcast %cst_144 : f32 to vector<8x1xf32>
    %504 = arith.mulf %502, %503 : vector<8x1xf32>
    %cst_145 = arith.constant 5.000000e-01 : f32
    %505 = vector.broadcast %cst_145 : f32 to vector<8x1xf32>
    %506 = arith.subf %504, %505 : vector<8x1xf32>
    %507 = vector.extract_strided_slice %25 {offsets = [0, 26], sizes = [8, 1], strides = [1, 1]} : vector<8x32xf32> to vector<8x1xf32>
    %508 = vector.broadcast %45 : vector<1x64xf32> to vector<8x64xf32>
    %509 = vector.broadcast %501 : vector<8x1xf32> to vector<8x64xf32>
    %510 = arith.subf %508, %509 : vector<8x64xf32>
    %511 = math.absf %510 : vector<8x64xf32>
    %cst_146 = arith.constant 1.000000e+00 : f32
    %512 = vector.broadcast %cst_146 : f32 to vector<8x64xf32>
    %513 = arith.subf %512, %511 : vector<8x64xf32>
    %cst_147 = arith.constant 0.000000e+00 : f32
    %514 = vector.broadcast %cst_147 : f32 to vector<8x64xf32>
    %515 = arith.maximumf %513, %514 : vector<8x64xf32>
    %516 = vector.broadcast %46 : vector<1x64xf32> to vector<8x64xf32>
    %517 = vector.broadcast %506 : vector<8x1xf32> to vector<8x64xf32>
    %518 = arith.subf %516, %517 : vector<8x64xf32>
    %519 = math.absf %518 : vector<8x64xf32>
    %cst_148 = arith.constant 1.000000e+00 : f32
    %520 = vector.broadcast %cst_148 : f32 to vector<8x64xf32>
    %521 = arith.subf %520, %519 : vector<8x64xf32>
    %cst_149 = arith.constant 0.000000e+00 : f32
    %522 = vector.broadcast %cst_149 : f32 to vector<8x64xf32>
    %523 = arith.maximumf %521, %522 : vector<8x64xf32>
    %524 = vector.broadcast %507 : vector<8x1xf32> to vector<8x64xf32>
    %525 = arith.mulf %524, %515 : vector<8x64xf32>
    %526 = arith.mulf %525, %523 : vector<8x64xf32>
    %527 = arith.addf %496, %526 : vector<8x64xf32>
    %528 = vector.extract_strided_slice %37 {offsets = [0, 27], sizes = [8, 1], strides = [1, 1]} : vector<8x32xf32> to vector<8x1xf32>
    %cst_150 = arith.constant 8.000000e+00 : f32
    %529 = vector.broadcast %cst_150 : f32 to vector<8x1xf32>
    %530 = arith.mulf %528, %529 : vector<8x1xf32>
    %cst_151 = arith.constant 5.000000e-01 : f32
    %531 = vector.broadcast %cst_151 : f32 to vector<8x1xf32>
    %532 = arith.subf %530, %531 : vector<8x1xf32>
    %533 = vector.extract_strided_slice %33 {offsets = [0, 27], sizes = [8, 1], strides = [1, 1]} : vector<8x32xf32> to vector<8x1xf32>
    %cst_152 = arith.constant 8.000000e+00 : f32
    %534 = vector.broadcast %cst_152 : f32 to vector<8x1xf32>
    %535 = arith.mulf %533, %534 : vector<8x1xf32>
    %cst_153 = arith.constant 5.000000e-01 : f32
    %536 = vector.broadcast %cst_153 : f32 to vector<8x1xf32>
    %537 = arith.subf %535, %536 : vector<8x1xf32>
    %538 = vector.extract_strided_slice %25 {offsets = [0, 27], sizes = [8, 1], strides = [1, 1]} : vector<8x32xf32> to vector<8x1xf32>
    %539 = vector.broadcast %45 : vector<1x64xf32> to vector<8x64xf32>
    %540 = vector.broadcast %532 : vector<8x1xf32> to vector<8x64xf32>
    %541 = arith.subf %539, %540 : vector<8x64xf32>
    %542 = math.absf %541 : vector<8x64xf32>
    %cst_154 = arith.constant 1.000000e+00 : f32
    %543 = vector.broadcast %cst_154 : f32 to vector<8x64xf32>
    %544 = arith.subf %543, %542 : vector<8x64xf32>
    %cst_155 = arith.constant 0.000000e+00 : f32
    %545 = vector.broadcast %cst_155 : f32 to vector<8x64xf32>
    %546 = arith.maximumf %544, %545 : vector<8x64xf32>
    %547 = vector.broadcast %46 : vector<1x64xf32> to vector<8x64xf32>
    %548 = vector.broadcast %537 : vector<8x1xf32> to vector<8x64xf32>
    %549 = arith.subf %547, %548 : vector<8x64xf32>
    %550 = math.absf %549 : vector<8x64xf32>
    %cst_156 = arith.constant 1.000000e+00 : f32
    %551 = vector.broadcast %cst_156 : f32 to vector<8x64xf32>
    %552 = arith.subf %551, %550 : vector<8x64xf32>
    %cst_157 = arith.constant 0.000000e+00 : f32
    %553 = vector.broadcast %cst_157 : f32 to vector<8x64xf32>
    %554 = arith.maximumf %552, %553 : vector<8x64xf32>
    %555 = vector.broadcast %538 : vector<8x1xf32> to vector<8x64xf32>
    %556 = arith.mulf %555, %546 : vector<8x64xf32>
    %557 = arith.mulf %556, %554 : vector<8x64xf32>
    %558 = arith.addf %527, %557 : vector<8x64xf32>
    %559 = arith.truncf %558 : vector<8x64xf32> to vector<8x64xbf16>
    %560 = vector.extract_strided_slice %43 {offsets = [0, 24], sizes = [64, 8], strides = [1, 1]} : vector<64x32xbf16> to vector<64x8xbf16>
    %cst_158 = arith.constant dense<0.000000e+00> : vector<8x8xf32>
    %561 = tpu.matmul %559, %560, %cst_158 {dimension_numbers = #tpu.dot_dimension_numbers<[1], [0], [0], [1], [0, 0, 1, 1], [], []>} : vector<8x64xbf16>, vector<64x8xbf16>, vector<8x8xf32> -> vector<8x8xf32>
    %562 = arith.addf %41, %561 : vector<8x8xf32>
    %c0_159 = arith.constant 0 : index
    %c64 = arith.constant 64 : index
    %c0_160 = arith.constant 0 : index
    %563 = vector.load %arg6[%c0_159, %c64, %c0_160] : memref<1x80x32xbf16, #tpu.memory_space<vmem>>, vector<1x16x32xbf16>
    %564 = vector.shape_cast %563 : vector<1x16x32xbf16> to vector<16x32xbf16>
    %c0_161 = arith.constant 0 : index
    %c64_162 = arith.constant 64 : index
    %565 = vector.load %arg5[%c0_161, %c64_162] : memref<2x80xf32, #tpu.memory_space<vmem>>, vector<2x16xf32>
    %566 = vector.extract_strided_slice %565 {offsets = [0, 0], sizes = [1, 16], strides = [1, 1]} : vector<2x16xf32> to vector<1x16xf32>
    %567 = vector.extract_strided_slice %565 {offsets = [1, 0], sizes = [1, 16], strides = [1, 1]} : vector<2x16xf32> to vector<1x16xf32>
    %cst_163 = arith.constant 0.000000e+00 : f32
    %568 = vector.broadcast %cst_163 : f32 to vector<8x16xf32>
    %569 = vector.extract_strided_slice %37 {offsets = [0, 4], sizes = [8, 1], strides = [1, 1]} : vector<8x32xf32> to vector<8x1xf32>
    %cst_164 = arith.constant 4.000000e+00 : f32
    %570 = vector.broadcast %cst_164 : f32 to vector<8x1xf32>
    %571 = arith.mulf %569, %570 : vector<8x1xf32>
    %cst_165 = arith.constant 5.000000e-01 : f32
    %572 = vector.broadcast %cst_165 : f32 to vector<8x1xf32>
    %573 = arith.subf %571, %572 : vector<8x1xf32>
    %574 = vector.extract_strided_slice %33 {offsets = [0, 4], sizes = [8, 1], strides = [1, 1]} : vector<8x32xf32> to vector<8x1xf32>
    %cst_166 = arith.constant 4.000000e+00 : f32
    %575 = vector.broadcast %cst_166 : f32 to vector<8x1xf32>
    %576 = arith.mulf %574, %575 : vector<8x1xf32>
    %cst_167 = arith.constant 5.000000e-01 : f32
    %577 = vector.broadcast %cst_167 : f32 to vector<8x1xf32>
    %578 = arith.subf %576, %577 : vector<8x1xf32>
    %579 = vector.extract_strided_slice %25 {offsets = [0, 4], sizes = [8, 1], strides = [1, 1]} : vector<8x32xf32> to vector<8x1xf32>
    %580 = vector.broadcast %566 : vector<1x16xf32> to vector<8x16xf32>
    %581 = vector.broadcast %573 : vector<8x1xf32> to vector<8x16xf32>
    %582 = arith.subf %580, %581 : vector<8x16xf32>
    %583 = math.absf %582 : vector<8x16xf32>
    %cst_168 = arith.constant 1.000000e+00 : f32
    %584 = vector.broadcast %cst_168 : f32 to vector<8x16xf32>
    %585 = arith.subf %584, %583 : vector<8x16xf32>
    %cst_169 = arith.constant 0.000000e+00 : f32
    %586 = vector.broadcast %cst_169 : f32 to vector<8x16xf32>
    %587 = arith.maximumf %585, %586 : vector<8x16xf32>
    %588 = vector.broadcast %567 : vector<1x16xf32> to vector<8x16xf32>
    %589 = vector.broadcast %578 : vector<8x1xf32> to vector<8x16xf32>
    %590 = arith.subf %588, %589 : vector<8x16xf32>
    %591 = math.absf %590 : vector<8x16xf32>
    %cst_170 = arith.constant 1.000000e+00 : f32
    %592 = vector.broadcast %cst_170 : f32 to vector<8x16xf32>
    %593 = arith.subf %592, %591 : vector<8x16xf32>
    %cst_171 = arith.constant 0.000000e+00 : f32
    %594 = vector.broadcast %cst_171 : f32 to vector<8x16xf32>
    %595 = arith.maximumf %593, %594 : vector<8x16xf32>
    %596 = vector.broadcast %579 : vector<8x1xf32> to vector<8x16xf32>
    %597 = arith.mulf %596, %587 : vector<8x16xf32>
    %598 = arith.mulf %597, %595 : vector<8x16xf32>
    %599 = arith.addf %568, %598 : vector<8x16xf32>
    %600 = vector.extract_strided_slice %37 {offsets = [0, 5], sizes = [8, 1], strides = [1, 1]} : vector<8x32xf32> to vector<8x1xf32>
    %cst_172 = arith.constant 4.000000e+00 : f32
    %601 = vector.broadcast %cst_172 : f32 to vector<8x1xf32>
    %602 = arith.mulf %600, %601 : vector<8x1xf32>
    %cst_173 = arith.constant 5.000000e-01 : f32
    %603 = vector.broadcast %cst_173 : f32 to vector<8x1xf32>
    %604 = arith.subf %602, %603 : vector<8x1xf32>
    %605 = vector.extract_strided_slice %33 {offsets = [0, 5], sizes = [8, 1], strides = [1, 1]} : vector<8x32xf32> to vector<8x1xf32>
    %cst_174 = arith.constant 4.000000e+00 : f32
    %606 = vector.broadcast %cst_174 : f32 to vector<8x1xf32>
    %607 = arith.mulf %605, %606 : vector<8x1xf32>
    %cst_175 = arith.constant 5.000000e-01 : f32
    %608 = vector.broadcast %cst_175 : f32 to vector<8x1xf32>
    %609 = arith.subf %607, %608 : vector<8x1xf32>
    %610 = vector.extract_strided_slice %25 {offsets = [0, 5], sizes = [8, 1], strides = [1, 1]} : vector<8x32xf32> to vector<8x1xf32>
    %611 = vector.broadcast %566 : vector<1x16xf32> to vector<8x16xf32>
    %612 = vector.broadcast %604 : vector<8x1xf32> to vector<8x16xf32>
    %613 = arith.subf %611, %612 : vector<8x16xf32>
    %614 = math.absf %613 : vector<8x16xf32>
    %cst_176 = arith.constant 1.000000e+00 : f32
    %615 = vector.broadcast %cst_176 : f32 to vector<8x16xf32>
    %616 = arith.subf %615, %614 : vector<8x16xf32>
    %cst_177 = arith.constant 0.000000e+00 : f32
    %617 = vector.broadcast %cst_177 : f32 to vector<8x16xf32>
    %618 = arith.maximumf %616, %617 : vector<8x16xf32>
    %619 = vector.broadcast %567 : vector<1x16xf32> to vector<8x16xf32>
    %620 = vector.broadcast %609 : vector<8x1xf32> to vector<8x16xf32>
    %621 = arith.subf %619, %620 : vector<8x16xf32>
    %622 = math.absf %621 : vector<8x16xf32>
    %cst_178 = arith.constant 1.000000e+00 : f32
    %623 = vector.broadcast %cst_178 : f32 to vector<8x16xf32>
    %624 = arith.subf %623, %622 : vector<8x16xf32>
    %cst_179 = arith.constant 0.000000e+00 : f32
    %625 = vector.broadcast %cst_179 : f32 to vector<8x16xf32>
    %626 = arith.maximumf %624, %625 : vector<8x16xf32>
    %627 = vector.broadcast %610 : vector<8x1xf32> to vector<8x16xf32>
    %628 = arith.mulf %627, %618 : vector<8x16xf32>
    %629 = arith.mulf %628, %626 : vector<8x16xf32>
    %630 = arith.addf %599, %629 : vector<8x16xf32>
    %631 = vector.extract_strided_slice %37 {offsets = [0, 6], sizes = [8, 1], strides = [1, 1]} : vector<8x32xf32> to vector<8x1xf32>
    %cst_180 = arith.constant 4.000000e+00 : f32
    %632 = vector.broadcast %cst_180 : f32 to vector<8x1xf32>
    %633 = arith.mulf %631, %632 : vector<8x1xf32>
    %cst_181 = arith.constant 5.000000e-01 : f32
    %634 = vector.broadcast %cst_181 : f32 to vector<8x1xf32>
    %635 = arith.subf %633, %634 : vector<8x1xf32>
    %636 = vector.extract_strided_slice %33 {offsets = [0, 6], sizes = [8, 1], strides = [1, 1]} : vector<8x32xf32> to vector<8x1xf32>
    %cst_182 = arith.constant 4.000000e+00 : f32
    %637 = vector.broadcast %cst_182 : f32 to vector<8x1xf32>
    %638 = arith.mulf %636, %637 : vector<8x1xf32>
    %cst_183 = arith.constant 5.000000e-01 : f32
    %639 = vector.broadcast %cst_183 : f32 to vector<8x1xf32>
    %640 = arith.subf %638, %639 : vector<8x1xf32>
    %641 = vector.extract_strided_slice %25 {offsets = [0, 6], sizes = [8, 1], strides = [1, 1]} : vector<8x32xf32> to vector<8x1xf32>
    %642 = vector.broadcast %566 : vector<1x16xf32> to vector<8x16xf32>
    %643 = vector.broadcast %635 : vector<8x1xf32> to vector<8x16xf32>
    %644 = arith.subf %642, %643 : vector<8x16xf32>
    %645 = math.absf %644 : vector<8x16xf32>
    %cst_184 = arith.constant 1.000000e+00 : f32
    %646 = vector.broadcast %cst_184 : f32 to vector<8x16xf32>
    %647 = arith.subf %646, %645 : vector<8x16xf32>
    %cst_185 = arith.constant 0.000000e+00 : f32
    %648 = vector.broadcast %cst_185 : f32 to vector<8x16xf32>
    %649 = arith.maximumf %647, %648 : vector<8x16xf32>
    %650 = vector.broadcast %567 : vector<1x16xf32> to vector<8x16xf32>
    %651 = vector.broadcast %640 : vector<8x1xf32> to vector<8x16xf32>
    %652 = arith.subf %650, %651 : vector<8x16xf32>
    %653 = math.absf %652 : vector<8x16xf32>
    %cst_186 = arith.constant 1.000000e+00 : f32
    %654 = vector.broadcast %cst_186 : f32 to vector<8x16xf32>
    %655 = arith.subf %654, %653 : vector<8x16xf32>
    %cst_187 = arith.constant 0.000000e+00 : f32
    %656 = vector.broadcast %cst_187 : f32 to vector<8x16xf32>
    %657 = arith.maximumf %655, %656 : vector<8x16xf32>
    %658 = vector.broadcast %641 : vector<8x1xf32> to vector<8x16xf32>
    %659 = arith.mulf %658, %649 : vector<8x16xf32>
    %660 = arith.mulf %659, %657 : vector<8x16xf32>
    %661 = arith.addf %630, %660 : vector<8x16xf32>
    %662 = vector.extract_strided_slice %37 {offsets = [0, 7], sizes = [8, 1], strides = [1, 1]} : vector<8x32xf32> to vector<8x1xf32>
    %cst_188 = arith.constant 4.000000e+00 : f32
    %663 = vector.broadcast %cst_188 : f32 to vector<8x1xf32>
    %664 = arith.mulf %662, %663 : vector<8x1xf32>
    %cst_189 = arith.constant 5.000000e-01 : f32
    %665 = vector.broadcast %cst_189 : f32 to vector<8x1xf32>
    %666 = arith.subf %664, %665 : vector<8x1xf32>
    %667 = vector.extract_strided_slice %33 {offsets = [0, 7], sizes = [8, 1], strides = [1, 1]} : vector<8x32xf32> to vector<8x1xf32>
    %cst_190 = arith.constant 4.000000e+00 : f32
    %668 = vector.broadcast %cst_190 : f32 to vector<8x1xf32>
    %669 = arith.mulf %667, %668 : vector<8x1xf32>
    %cst_191 = arith.constant 5.000000e-01 : f32
    %670 = vector.broadcast %cst_191 : f32 to vector<8x1xf32>
    %671 = arith.subf %669, %670 : vector<8x1xf32>
    %672 = vector.extract_strided_slice %25 {offsets = [0, 7], sizes = [8, 1], strides = [1, 1]} : vector<8x32xf32> to vector<8x1xf32>
    %673 = vector.broadcast %566 : vector<1x16xf32> to vector<8x16xf32>
    %674 = vector.broadcast %666 : vector<8x1xf32> to vector<8x16xf32>
    %675 = arith.subf %673, %674 : vector<8x16xf32>
    %676 = math.absf %675 : vector<8x16xf32>
    %cst_192 = arith.constant 1.000000e+00 : f32
    %677 = vector.broadcast %cst_192 : f32 to vector<8x16xf32>
    %678 = arith.subf %677, %676 : vector<8x16xf32>
    %cst_193 = arith.constant 0.000000e+00 : f32
    %679 = vector.broadcast %cst_193 : f32 to vector<8x16xf32>
    %680 = arith.maximumf %678, %679 : vector<8x16xf32>
    %681 = vector.broadcast %567 : vector<1x16xf32> to vector<8x16xf32>
    %682 = vector.broadcast %671 : vector<8x1xf32> to vector<8x16xf32>
    %683 = arith.subf %681, %682 : vector<8x16xf32>
    %684 = math.absf %683 : vector<8x16xf32>
    %cst_194 = arith.constant 1.000000e+00 : f32
    %685 = vector.broadcast %cst_194 : f32 to vector<8x16xf32>
    %686 = arith.subf %685, %684 : vector<8x16xf32>
    %cst_195 = arith.constant 0.000000e+00 : f32
    %687 = vector.broadcast %cst_195 : f32 to vector<8x16xf32>
    %688 = arith.maximumf %686, %687 : vector<8x16xf32>
    %689 = vector.broadcast %672 : vector<8x1xf32> to vector<8x16xf32>
    %690 = arith.mulf %689, %680 : vector<8x16xf32>
    %691 = arith.mulf %690, %688 : vector<8x16xf32>
    %692 = arith.addf %661, %691 : vector<8x16xf32>
    %693 = arith.truncf %692 : vector<8x16xf32> to vector<8x16xbf16>
    %694 = vector.extract_strided_slice %564 {offsets = [0, 0], sizes = [16, 8], strides = [1, 1]} : vector<16x32xbf16> to vector<16x8xbf16>
    %cst_196 = arith.constant dense<0.000000e+00> : vector<8x8xf32>
    %695 = tpu.matmul %693, %694, %cst_196 {dimension_numbers = #tpu.dot_dimension_numbers<[1], [0], [0], [1], [0, 0, 1, 1], [], []>} : vector<8x16xbf16>, vector<16x8xbf16>, vector<8x8xf32> -> vector<8x8xf32>
    %696 = arith.addf %175, %695 : vector<8x8xf32>
    %cst_197 = arith.constant 0.000000e+00 : f32
    %697 = vector.broadcast %cst_197 : f32 to vector<8x16xf32>
    %698 = vector.extract_strided_slice %37 {offsets = [0, 12], sizes = [8, 1], strides = [1, 1]} : vector<8x32xf32> to vector<8x1xf32>
    %cst_198 = arith.constant 4.000000e+00 : f32
    %699 = vector.broadcast %cst_198 : f32 to vector<8x1xf32>
    %700 = arith.mulf %698, %699 : vector<8x1xf32>
    %cst_199 = arith.constant 5.000000e-01 : f32
    %701 = vector.broadcast %cst_199 : f32 to vector<8x1xf32>
    %702 = arith.subf %700, %701 : vector<8x1xf32>
    %703 = vector.extract_strided_slice %33 {offsets = [0, 12], sizes = [8, 1], strides = [1, 1]} : vector<8x32xf32> to vector<8x1xf32>
    %cst_200 = arith.constant 4.000000e+00 : f32
    %704 = vector.broadcast %cst_200 : f32 to vector<8x1xf32>
    %705 = arith.mulf %703, %704 : vector<8x1xf32>
    %cst_201 = arith.constant 5.000000e-01 : f32
    %706 = vector.broadcast %cst_201 : f32 to vector<8x1xf32>
    %707 = arith.subf %705, %706 : vector<8x1xf32>
    %708 = vector.extract_strided_slice %25 {offsets = [0, 12], sizes = [8, 1], strides = [1, 1]} : vector<8x32xf32> to vector<8x1xf32>
    %709 = vector.broadcast %566 : vector<1x16xf32> to vector<8x16xf32>
    %710 = vector.broadcast %702 : vector<8x1xf32> to vector<8x16xf32>
    %711 = arith.subf %709, %710 : vector<8x16xf32>
    %712 = math.absf %711 : vector<8x16xf32>
    %cst_202 = arith.constant 1.000000e+00 : f32
    %713 = vector.broadcast %cst_202 : f32 to vector<8x16xf32>
    %714 = arith.subf %713, %712 : vector<8x16xf32>
    %cst_203 = arith.constant 0.000000e+00 : f32
    %715 = vector.broadcast %cst_203 : f32 to vector<8x16xf32>
    %716 = arith.maximumf %714, %715 : vector<8x16xf32>
    %717 = vector.broadcast %567 : vector<1x16xf32> to vector<8x16xf32>
    %718 = vector.broadcast %707 : vector<8x1xf32> to vector<8x16xf32>
    %719 = arith.subf %717, %718 : vector<8x16xf32>
    %720 = math.absf %719 : vector<8x16xf32>
    %cst_204 = arith.constant 1.000000e+00 : f32
    %721 = vector.broadcast %cst_204 : f32 to vector<8x16xf32>
    %722 = arith.subf %721, %720 : vector<8x16xf32>
    %cst_205 = arith.constant 0.000000e+00 : f32
    %723 = vector.broadcast %cst_205 : f32 to vector<8x16xf32>
    %724 = arith.maximumf %722, %723 : vector<8x16xf32>
    %725 = vector.broadcast %708 : vector<8x1xf32> to vector<8x16xf32>
    %726 = arith.mulf %725, %716 : vector<8x16xf32>
    %727 = arith.mulf %726, %724 : vector<8x16xf32>
    %728 = arith.addf %697, %727 : vector<8x16xf32>
    %729 = vector.extract_strided_slice %37 {offsets = [0, 13], sizes = [8, 1], strides = [1, 1]} : vector<8x32xf32> to vector<8x1xf32>
    %cst_206 = arith.constant 4.000000e+00 : f32
    %730 = vector.broadcast %cst_206 : f32 to vector<8x1xf32>
    %731 = arith.mulf %729, %730 : vector<8x1xf32>
    %cst_207 = arith.constant 5.000000e-01 : f32
    %732 = vector.broadcast %cst_207 : f32 to vector<8x1xf32>
    %733 = arith.subf %731, %732 : vector<8x1xf32>
    %734 = vector.extract_strided_slice %33 {offsets = [0, 13], sizes = [8, 1], strides = [1, 1]} : vector<8x32xf32> to vector<8x1xf32>
    %cst_208 = arith.constant 4.000000e+00 : f32
    %735 = vector.broadcast %cst_208 : f32 to vector<8x1xf32>
    %736 = arith.mulf %734, %735 : vector<8x1xf32>
    %cst_209 = arith.constant 5.000000e-01 : f32
    %737 = vector.broadcast %cst_209 : f32 to vector<8x1xf32>
    %738 = arith.subf %736, %737 : vector<8x1xf32>
    %739 = vector.extract_strided_slice %25 {offsets = [0, 13], sizes = [8, 1], strides = [1, 1]} : vector<8x32xf32> to vector<8x1xf32>
    %740 = vector.broadcast %566 : vector<1x16xf32> to vector<8x16xf32>
    %741 = vector.broadcast %733 : vector<8x1xf32> to vector<8x16xf32>
    %742 = arith.subf %740, %741 : vector<8x16xf32>
    %743 = math.absf %742 : vector<8x16xf32>
    %cst_210 = arith.constant 1.000000e+00 : f32
    %744 = vector.broadcast %cst_210 : f32 to vector<8x16xf32>
    %745 = arith.subf %744, %743 : vector<8x16xf32>
    %cst_211 = arith.constant 0.000000e+00 : f32
    %746 = vector.broadcast %cst_211 : f32 to vector<8x16xf32>
    %747 = arith.maximumf %745, %746 : vector<8x16xf32>
    %748 = vector.broadcast %567 : vector<1x16xf32> to vector<8x16xf32>
    %749 = vector.broadcast %738 : vector<8x1xf32> to vector<8x16xf32>
    %750 = arith.subf %748, %749 : vector<8x16xf32>
    %751 = math.absf %750 : vector<8x16xf32>
    %cst_212 = arith.constant 1.000000e+00 : f32
    %752 = vector.broadcast %cst_212 : f32 to vector<8x16xf32>
    %753 = arith.subf %752, %751 : vector<8x16xf32>
    %cst_213 = arith.constant 0.000000e+00 : f32
    %754 = vector.broadcast %cst_213 : f32 to vector<8x16xf32>
    %755 = arith.maximumf %753, %754 : vector<8x16xf32>
    %756 = vector.broadcast %739 : vector<8x1xf32> to vector<8x16xf32>
    %757 = arith.mulf %756, %747 : vector<8x16xf32>
    %758 = arith.mulf %757, %755 : vector<8x16xf32>
    %759 = arith.addf %728, %758 : vector<8x16xf32>
    %760 = vector.extract_strided_slice %37 {offsets = [0, 14], sizes = [8, 1], strides = [1, 1]} : vector<8x32xf32> to vector<8x1xf32>
    %cst_214 = arith.constant 4.000000e+00 : f32
    %761 = vector.broadcast %cst_214 : f32 to vector<8x1xf32>
    %762 = arith.mulf %760, %761 : vector<8x1xf32>
    %cst_215 = arith.constant 5.000000e-01 : f32
    %763 = vector.broadcast %cst_215 : f32 to vector<8x1xf32>
    %764 = arith.subf %762, %763 : vector<8x1xf32>
    %765 = vector.extract_strided_slice %33 {offsets = [0, 14], sizes = [8, 1], strides = [1, 1]} : vector<8x32xf32> to vector<8x1xf32>
    %cst_216 = arith.constant 4.000000e+00 : f32
    %766 = vector.broadcast %cst_216 : f32 to vector<8x1xf32>
    %767 = arith.mulf %765, %766 : vector<8x1xf32>
    %cst_217 = arith.constant 5.000000e-01 : f32
    %768 = vector.broadcast %cst_217 : f32 to vector<8x1xf32>
    %769 = arith.subf %767, %768 : vector<8x1xf32>
    %770 = vector.extract_strided_slice %25 {offsets = [0, 14], sizes = [8, 1], strides = [1, 1]} : vector<8x32xf32> to vector<8x1xf32>
    %771 = vector.broadcast %566 : vector<1x16xf32> to vector<8x16xf32>
    %772 = vector.broadcast %764 : vector<8x1xf32> to vector<8x16xf32>
    %773 = arith.subf %771, %772 : vector<8x16xf32>
    %774 = math.absf %773 : vector<8x16xf32>
    %cst_218 = arith.constant 1.000000e+00 : f32
    %775 = vector.broadcast %cst_218 : f32 to vector<8x16xf32>
    %776 = arith.subf %775, %774 : vector<8x16xf32>
    %cst_219 = arith.constant 0.000000e+00 : f32
    %777 = vector.broadcast %cst_219 : f32 to vector<8x16xf32>
    %778 = arith.maximumf %776, %777 : vector<8x16xf32>
    %779 = vector.broadcast %567 : vector<1x16xf32> to vector<8x16xf32>
    %780 = vector.broadcast %769 : vector<8x1xf32> to vector<8x16xf32>
    %781 = arith.subf %779, %780 : vector<8x16xf32>
    %782 = math.absf %781 : vector<8x16xf32>
    %cst_220 = arith.constant 1.000000e+00 : f32
    %783 = vector.broadcast %cst_220 : f32 to vector<8x16xf32>
    %784 = arith.subf %783, %782 : vector<8x16xf32>
    %cst_221 = arith.constant 0.000000e+00 : f32
    %785 = vector.broadcast %cst_221 : f32 to vector<8x16xf32>
    %786 = arith.maximumf %784, %785 : vector<8x16xf32>
    %787 = vector.broadcast %770 : vector<8x1xf32> to vector<8x16xf32>
    %788 = arith.mulf %787, %778 : vector<8x16xf32>
    %789 = arith.mulf %788, %786 : vector<8x16xf32>
    %790 = arith.addf %759, %789 : vector<8x16xf32>
    %791 = vector.extract_strided_slice %37 {offsets = [0, 15], sizes = [8, 1], strides = [1, 1]} : vector<8x32xf32> to vector<8x1xf32>
    %cst_222 = arith.constant 4.000000e+00 : f32
    %792 = vector.broadcast %cst_222 : f32 to vector<8x1xf32>
    %793 = arith.mulf %791, %792 : vector<8x1xf32>
    %cst_223 = arith.constant 5.000000e-01 : f32
    %794 = vector.broadcast %cst_223 : f32 to vector<8x1xf32>
    %795 = arith.subf %793, %794 : vector<8x1xf32>
    %796 = vector.extract_strided_slice %33 {offsets = [0, 15], sizes = [8, 1], strides = [1, 1]} : vector<8x32xf32> to vector<8x1xf32>
    %cst_224 = arith.constant 4.000000e+00 : f32
    %797 = vector.broadcast %cst_224 : f32 to vector<8x1xf32>
    %798 = arith.mulf %796, %797 : vector<8x1xf32>
    %cst_225 = arith.constant 5.000000e-01 : f32
    %799 = vector.broadcast %cst_225 : f32 to vector<8x1xf32>
    %800 = arith.subf %798, %799 : vector<8x1xf32>
    %801 = vector.extract_strided_slice %25 {offsets = [0, 15], sizes = [8, 1], strides = [1, 1]} : vector<8x32xf32> to vector<8x1xf32>
    %802 = vector.broadcast %566 : vector<1x16xf32> to vector<8x16xf32>
    %803 = vector.broadcast %795 : vector<8x1xf32> to vector<8x16xf32>
    %804 = arith.subf %802, %803 : vector<8x16xf32>
    %805 = math.absf %804 : vector<8x16xf32>
    %cst_226 = arith.constant 1.000000e+00 : f32
    %806 = vector.broadcast %cst_226 : f32 to vector<8x16xf32>
    %807 = arith.subf %806, %805 : vector<8x16xf32>
    %cst_227 = arith.constant 0.000000e+00 : f32
    %808 = vector.broadcast %cst_227 : f32 to vector<8x16xf32>
    %809 = arith.maximumf %807, %808 : vector<8x16xf32>
    %810 = vector.broadcast %567 : vector<1x16xf32> to vector<8x16xf32>
    %811 = vector.broadcast %800 : vector<8x1xf32> to vector<8x16xf32>
    %812 = arith.subf %810, %811 : vector<8x16xf32>
    %813 = math.absf %812 : vector<8x16xf32>
    %cst_228 = arith.constant 1.000000e+00 : f32
    %814 = vector.broadcast %cst_228 : f32 to vector<8x16xf32>
    %815 = arith.subf %814, %813 : vector<8x16xf32>
    %cst_229 = arith.constant 0.000000e+00 : f32
    %816 = vector.broadcast %cst_229 : f32 to vector<8x16xf32>
    %817 = arith.maximumf %815, %816 : vector<8x16xf32>
    %818 = vector.broadcast %801 : vector<8x1xf32> to vector<8x16xf32>
    %819 = arith.mulf %818, %809 : vector<8x16xf32>
    %820 = arith.mulf %819, %817 : vector<8x16xf32>
    %821 = arith.addf %790, %820 : vector<8x16xf32>
    %822 = arith.truncf %821 : vector<8x16xf32> to vector<8x16xbf16>
    %823 = vector.extract_strided_slice %564 {offsets = [0, 8], sizes = [16, 8], strides = [1, 1]} : vector<16x32xbf16> to vector<16x8xbf16>
    %cst_230 = arith.constant dense<0.000000e+00> : vector<8x8xf32>
    %824 = tpu.matmul %822, %823, %cst_230 {dimension_numbers = #tpu.dot_dimension_numbers<[1], [0], [0], [1], [0, 0, 1, 1], [], []>} : vector<8x16xbf16>, vector<16x8xbf16>, vector<8x8xf32> -> vector<8x8xf32>
    %825 = arith.addf %304, %824 : vector<8x8xf32>
    %cst_231 = arith.constant 0.000000e+00 : f32
    %826 = vector.broadcast %cst_231 : f32 to vector<8x16xf32>
    %827 = vector.extract_strided_slice %37 {offsets = [0, 20], sizes = [8, 1], strides = [1, 1]} : vector<8x32xf32> to vector<8x1xf32>
    %cst_232 = arith.constant 4.000000e+00 : f32
    %828 = vector.broadcast %cst_232 : f32 to vector<8x1xf32>
    %829 = arith.mulf %827, %828 : vector<8x1xf32>
    %cst_233 = arith.constant 5.000000e-01 : f32
    %830 = vector.broadcast %cst_233 : f32 to vector<8x1xf32>
    %831 = arith.subf %829, %830 : vector<8x1xf32>
    %832 = vector.extract_strided_slice %33 {offsets = [0, 20], sizes = [8, 1], strides = [1, 1]} : vector<8x32xf32> to vector<8x1xf32>
    %cst_234 = arith.constant 4.000000e+00 : f32
    %833 = vector.broadcast %cst_234 : f32 to vector<8x1xf32>
    %834 = arith.mulf %832, %833 : vector<8x1xf32>
    %cst_235 = arith.constant 5.000000e-01 : f32
    %835 = vector.broadcast %cst_235 : f32 to vector<8x1xf32>
    %836 = arith.subf %834, %835 : vector<8x1xf32>
    %837 = vector.extract_strided_slice %25 {offsets = [0, 20], sizes = [8, 1], strides = [1, 1]} : vector<8x32xf32> to vector<8x1xf32>
    %838 = vector.broadcast %566 : vector<1x16xf32> to vector<8x16xf32>
    %839 = vector.broadcast %831 : vector<8x1xf32> to vector<8x16xf32>
    %840 = arith.subf %838, %839 : vector<8x16xf32>
    %841 = math.absf %840 : vector<8x16xf32>
    %cst_236 = arith.constant 1.000000e+00 : f32
    %842 = vector.broadcast %cst_236 : f32 to vector<8x16xf32>
    %843 = arith.subf %842, %841 : vector<8x16xf32>
    %cst_237 = arith.constant 0.000000e+00 : f32
    %844 = vector.broadcast %cst_237 : f32 to vector<8x16xf32>
    %845 = arith.maximumf %843, %844 : vector<8x16xf32>
    %846 = vector.broadcast %567 : vector<1x16xf32> to vector<8x16xf32>
    %847 = vector.broadcast %836 : vector<8x1xf32> to vector<8x16xf32>
    %848 = arith.subf %846, %847 : vector<8x16xf32>
    %849 = math.absf %848 : vector<8x16xf32>
    %cst_238 = arith.constant 1.000000e+00 : f32
    %850 = vector.broadcast %cst_238 : f32 to vector<8x16xf32>
    %851 = arith.subf %850, %849 : vector<8x16xf32>
    %cst_239 = arith.constant 0.000000e+00 : f32
    %852 = vector.broadcast %cst_239 : f32 to vector<8x16xf32>
    %853 = arith.maximumf %851, %852 : vector<8x16xf32>
    %854 = vector.broadcast %837 : vector<8x1xf32> to vector<8x16xf32>
    %855 = arith.mulf %854, %845 : vector<8x16xf32>
    %856 = arith.mulf %855, %853 : vector<8x16xf32>
    %857 = arith.addf %826, %856 : vector<8x16xf32>
    %858 = vector.extract_strided_slice %37 {offsets = [0, 21], sizes = [8, 1], strides = [1, 1]} : vector<8x32xf32> to vector<8x1xf32>
    %cst_240 = arith.constant 4.000000e+00 : f32
    %859 = vector.broadcast %cst_240 : f32 to vector<8x1xf32>
    %860 = arith.mulf %858, %859 : vector<8x1xf32>
    %cst_241 = arith.constant 5.000000e-01 : f32
    %861 = vector.broadcast %cst_241 : f32 to vector<8x1xf32>
    %862 = arith.subf %860, %861 : vector<8x1xf32>
    %863 = vector.extract_strided_slice %33 {offsets = [0, 21], sizes = [8, 1], strides = [1, 1]} : vector<8x32xf32> to vector<8x1xf32>
    %cst_242 = arith.constant 4.000000e+00 : f32
    %864 = vector.broadcast %cst_242 : f32 to vector<8x1xf32>
    %865 = arith.mulf %863, %864 : vector<8x1xf32>
    %cst_243 = arith.constant 5.000000e-01 : f32
    %866 = vector.broadcast %cst_243 : f32 to vector<8x1xf32>
    %867 = arith.subf %865, %866 : vector<8x1xf32>
    %868 = vector.extract_strided_slice %25 {offsets = [0, 21], sizes = [8, 1], strides = [1, 1]} : vector<8x32xf32> to vector<8x1xf32>
    %869 = vector.broadcast %566 : vector<1x16xf32> to vector<8x16xf32>
    %870 = vector.broadcast %862 : vector<8x1xf32> to vector<8x16xf32>
    %871 = arith.subf %869, %870 : vector<8x16xf32>
    %872 = math.absf %871 : vector<8x16xf32>
    %cst_244 = arith.constant 1.000000e+00 : f32
    %873 = vector.broadcast %cst_244 : f32 to vector<8x16xf32>
    %874 = arith.subf %873, %872 : vector<8x16xf32>
    %cst_245 = arith.constant 0.000000e+00 : f32
    %875 = vector.broadcast %cst_245 : f32 to vector<8x16xf32>
    %876 = arith.maximumf %874, %875 : vector<8x16xf32>
    %877 = vector.broadcast %567 : vector<1x16xf32> to vector<8x16xf32>
    %878 = vector.broadcast %867 : vector<8x1xf32> to vector<8x16xf32>
    %879 = arith.subf %877, %878 : vector<8x16xf32>
    %880 = math.absf %879 : vector<8x16xf32>
    %cst_246 = arith.constant 1.000000e+00 : f32
    %881 = vector.broadcast %cst_246 : f32 to vector<8x16xf32>
    %882 = arith.subf %881, %880 : vector<8x16xf32>
    %cst_247 = arith.constant 0.000000e+00 : f32
    %883 = vector.broadcast %cst_247 : f32 to vector<8x16xf32>
    %884 = arith.maximumf %882, %883 : vector<8x16xf32>
    %885 = vector.broadcast %868 : vector<8x1xf32> to vector<8x16xf32>
    %886 = arith.mulf %885, %876 : vector<8x16xf32>
    %887 = arith.mulf %886, %884 : vector<8x16xf32>
    %888 = arith.addf %857, %887 : vector<8x16xf32>
    %889 = vector.extract_strided_slice %37 {offsets = [0, 22], sizes = [8, 1], strides = [1, 1]} : vector<8x32xf32> to vector<8x1xf32>
    %cst_248 = arith.constant 4.000000e+00 : f32
    %890 = vector.broadcast %cst_248 : f32 to vector<8x1xf32>
    %891 = arith.mulf %889, %890 : vector<8x1xf32>
    %cst_249 = arith.constant 5.000000e-01 : f32
    %892 = vector.broadcast %cst_249 : f32 to vector<8x1xf32>
    %893 = arith.subf %891, %892 : vector<8x1xf32>
    %894 = vector.extract_strided_slice %33 {offsets = [0, 22], sizes = [8, 1], strides = [1, 1]} : vector<8x32xf32> to vector<8x1xf32>
    %cst_250 = arith.constant 4.000000e+00 : f32
    %895 = vector.broadcast %cst_250 : f32 to vector<8x1xf32>
    %896 = arith.mulf %894, %895 : vector<8x1xf32>
    %cst_251 = arith.constant 5.000000e-01 : f32
    %897 = vector.broadcast %cst_251 : f32 to vector<8x1xf32>
    %898 = arith.subf %896, %897 : vector<8x1xf32>
    %899 = vector.extract_strided_slice %25 {offsets = [0, 22], sizes = [8, 1], strides = [1, 1]} : vector<8x32xf32> to vector<8x1xf32>
    %900 = vector.broadcast %566 : vector<1x16xf32> to vector<8x16xf32>
    %901 = vector.broadcast %893 : vector<8x1xf32> to vector<8x16xf32>
    %902 = arith.subf %900, %901 : vector<8x16xf32>
    %903 = math.absf %902 : vector<8x16xf32>
    %cst_252 = arith.constant 1.000000e+00 : f32
    %904 = vector.broadcast %cst_252 : f32 to vector<8x16xf32>
    %905 = arith.subf %904, %903 : vector<8x16xf32>
    %cst_253 = arith.constant 0.000000e+00 : f32
    %906 = vector.broadcast %cst_253 : f32 to vector<8x16xf32>
    %907 = arith.maximumf %905, %906 : vector<8x16xf32>
    %908 = vector.broadcast %567 : vector<1x16xf32> to vector<8x16xf32>
    %909 = vector.broadcast %898 : vector<8x1xf32> to vector<8x16xf32>
    %910 = arith.subf %908, %909 : vector<8x16xf32>
    %911 = math.absf %910 : vector<8x16xf32>
    %cst_254 = arith.constant 1.000000e+00 : f32
    %912 = vector.broadcast %cst_254 : f32 to vector<8x16xf32>
    %913 = arith.subf %912, %911 : vector<8x16xf32>
    %cst_255 = arith.constant 0.000000e+00 : f32
    %914 = vector.broadcast %cst_255 : f32 to vector<8x16xf32>
    %915 = arith.maximumf %913, %914 : vector<8x16xf32>
    %916 = vector.broadcast %899 : vector<8x1xf32> to vector<8x16xf32>
    %917 = arith.mulf %916, %907 : vector<8x16xf32>
    %918 = arith.mulf %917, %915 : vector<8x16xf32>
    %919 = arith.addf %888, %918 : vector<8x16xf32>
    %920 = vector.extract_strided_slice %37 {offsets = [0, 23], sizes = [8, 1], strides = [1, 1]} : vector<8x32xf32> to vector<8x1xf32>
    %cst_256 = arith.constant 4.000000e+00 : f32
    %921 = vector.broadcast %cst_256 : f32 to vector<8x1xf32>
    %922 = arith.mulf %920, %921 : vector<8x1xf32>
    %cst_257 = arith.constant 5.000000e-01 : f32
    %923 = vector.broadcast %cst_257 : f32 to vector<8x1xf32>
    %924 = arith.subf %922, %923 : vector<8x1xf32>
    %925 = vector.extract_strided_slice %33 {offsets = [0, 23], sizes = [8, 1], strides = [1, 1]} : vector<8x32xf32> to vector<8x1xf32>
    %cst_258 = arith.constant 4.000000e+00 : f32
    %926 = vector.broadcast %cst_258 : f32 to vector<8x1xf32>
    %927 = arith.mulf %925, %926 : vector<8x1xf32>
    %cst_259 = arith.constant 5.000000e-01 : f32
    %928 = vector.broadcast %cst_259 : f32 to vector<8x1xf32>
    %929 = arith.subf %927, %928 : vector<8x1xf32>
    %930 = vector.extract_strided_slice %25 {offsets = [0, 23], sizes = [8, 1], strides = [1, 1]} : vector<8x32xf32> to vector<8x1xf32>
    %931 = vector.broadcast %566 : vector<1x16xf32> to vector<8x16xf32>
    %932 = vector.broadcast %924 : vector<8x1xf32> to vector<8x16xf32>
    %933 = arith.subf %931, %932 : vector<8x16xf32>
    %934 = math.absf %933 : vector<8x16xf32>
    %cst_260 = arith.constant 1.000000e+00 : f32
    %935 = vector.broadcast %cst_260 : f32 to vector<8x16xf32>
    %936 = arith.subf %935, %934 : vector<8x16xf32>
    %cst_261 = arith.constant 0.000000e+00 : f32
    %937 = vector.broadcast %cst_261 : f32 to vector<8x16xf32>
    %938 = arith.maximumf %936, %937 : vector<8x16xf32>
    %939 = vector.broadcast %567 : vector<1x16xf32> to vector<8x16xf32>
    %940 = vector.broadcast %929 : vector<8x1xf32> to vector<8x16xf32>
    %941 = arith.subf %939, %940 : vector<8x16xf32>
    %942 = math.absf %941 : vector<8x16xf32>
    %cst_262 = arith.constant 1.000000e+00 : f32
    %943 = vector.broadcast %cst_262 : f32 to vector<8x16xf32>
    %944 = arith.subf %943, %942 : vector<8x16xf32>
    %cst_263 = arith.constant 0.000000e+00 : f32
    %945 = vector.broadcast %cst_263 : f32 to vector<8x16xf32>
    %946 = arith.maximumf %944, %945 : vector<8x16xf32>
    %947 = vector.broadcast %930 : vector<8x1xf32> to vector<8x16xf32>
    %948 = arith.mulf %947, %938 : vector<8x16xf32>
    %949 = arith.mulf %948, %946 : vector<8x16xf32>
    %950 = arith.addf %919, %949 : vector<8x16xf32>
    %951 = arith.truncf %950 : vector<8x16xf32> to vector<8x16xbf16>
    %952 = vector.extract_strided_slice %564 {offsets = [0, 16], sizes = [16, 8], strides = [1, 1]} : vector<16x32xbf16> to vector<16x8xbf16>
    %cst_264 = arith.constant dense<0.000000e+00> : vector<8x8xf32>
    %953 = tpu.matmul %951, %952, %cst_264 {dimension_numbers = #tpu.dot_dimension_numbers<[1], [0], [0], [1], [0, 0, 1, 1], [], []>} : vector<8x16xbf16>, vector<16x8xbf16>, vector<8x8xf32> -> vector<8x8xf32>
    %954 = arith.addf %433, %953 : vector<8x8xf32>
    %cst_265 = arith.constant 0.000000e+00 : f32
    %955 = vector.broadcast %cst_265 : f32 to vector<8x16xf32>
    %956 = vector.extract_strided_slice %37 {offsets = [0, 28], sizes = [8, 1], strides = [1, 1]} : vector<8x32xf32> to vector<8x1xf32>
    %cst_266 = arith.constant 4.000000e+00 : f32
    %957 = vector.broadcast %cst_266 : f32 to vector<8x1xf32>
    %958 = arith.mulf %956, %957 : vector<8x1xf32>
    %cst_267 = arith.constant 5.000000e-01 : f32
    %959 = vector.broadcast %cst_267 : f32 to vector<8x1xf32>
    %960 = arith.subf %958, %959 : vector<8x1xf32>
    %961 = vector.extract_strided_slice %33 {offsets = [0, 28], sizes = [8, 1], strides = [1, 1]} : vector<8x32xf32> to vector<8x1xf32>
    %cst_268 = arith.constant 4.000000e+00 : f32
    %962 = vector.broadcast %cst_268 : f32 to vector<8x1xf32>
    %963 = arith.mulf %961, %962 : vector<8x1xf32>
    %cst_269 = arith.constant 5.000000e-01 : f32
    %964 = vector.broadcast %cst_269 : f32 to vector<8x1xf32>
    %965 = arith.subf %963, %964 : vector<8x1xf32>
    %966 = vector.extract_strided_slice %25 {offsets = [0, 28], sizes = [8, 1], strides = [1, 1]} : vector<8x32xf32> to vector<8x1xf32>
    %967 = vector.broadcast %566 : vector<1x16xf32> to vector<8x16xf32>
    %968 = vector.broadcast %960 : vector<8x1xf32> to vector<8x16xf32>
    %969 = arith.subf %967, %968 : vector<8x16xf32>
    %970 = math.absf %969 : vector<8x16xf32>
    %cst_270 = arith.constant 1.000000e+00 : f32
    %971 = vector.broadcast %cst_270 : f32 to vector<8x16xf32>
    %972 = arith.subf %971, %970 : vector<8x16xf32>
    %cst_271 = arith.constant 0.000000e+00 : f32
    %973 = vector.broadcast %cst_271 : f32 to vector<8x16xf32>
    %974 = arith.maximumf %972, %973 : vector<8x16xf32>
    %975 = vector.broadcast %567 : vector<1x16xf32> to vector<8x16xf32>
    %976 = vector.broadcast %965 : vector<8x1xf32> to vector<8x16xf32>
    %977 = arith.subf %975, %976 : vector<8x16xf32>
    %978 = math.absf %977 : vector<8x16xf32>
    %cst_272 = arith.constant 1.000000e+00 : f32
    %979 = vector.broadcast %cst_272 : f32 to vector<8x16xf32>
    %980 = arith.subf %979, %978 : vector<8x16xf32>
    %cst_273 = arith.constant 0.000000e+00 : f32
    %981 = vector.broadcast %cst_273 : f32 to vector<8x16xf32>
    %982 = arith.maximumf %980, %981 : vector<8x16xf32>
    %983 = vector.broadcast %966 : vector<8x1xf32> to vector<8x16xf32>
    %984 = arith.mulf %983, %974 : vector<8x16xf32>
    %985 = arith.mulf %984, %982 : vector<8x16xf32>
    %986 = arith.addf %955, %985 : vector<8x16xf32>
    %987 = vector.extract_strided_slice %37 {offsets = [0, 29], sizes = [8, 1], strides = [1, 1]} : vector<8x32xf32> to vector<8x1xf32>
    %cst_274 = arith.constant 4.000000e+00 : f32
    %988 = vector.broadcast %cst_274 : f32 to vector<8x1xf32>
    %989 = arith.mulf %987, %988 : vector<8x1xf32>
    %cst_275 = arith.constant 5.000000e-01 : f32
    %990 = vector.broadcast %cst_275 : f32 to vector<8x1xf32>
    %991 = arith.subf %989, %990 : vector<8x1xf32>
    %992 = vector.extract_strided_slice %33 {offsets = [0, 29], sizes = [8, 1], strides = [1, 1]} : vector<8x32xf32> to vector<8x1xf32>
    %cst_276 = arith.constant 4.000000e+00 : f32
    %993 = vector.broadcast %cst_276 : f32 to vector<8x1xf32>
    %994 = arith.mulf %992, %993 : vector<8x1xf32>
    %cst_277 = arith.constant 5.000000e-01 : f32
    %995 = vector.broadcast %cst_277 : f32 to vector<8x1xf32>
    %996 = arith.subf %994, %995 : vector<8x1xf32>
    %997 = vector.extract_strided_slice %25 {offsets = [0, 29], sizes = [8, 1], strides = [1, 1]} : vector<8x32xf32> to vector<8x1xf32>
    %998 = vector.broadcast %566 : vector<1x16xf32> to vector<8x16xf32>
    %999 = vector.broadcast %991 : vector<8x1xf32> to vector<8x16xf32>
    %1000 = arith.subf %998, %999 : vector<8x16xf32>
    %1001 = math.absf %1000 : vector<8x16xf32>
    %cst_278 = arith.constant 1.000000e+00 : f32
    %1002 = vector.broadcast %cst_278 : f32 to vector<8x16xf32>
    %1003 = arith.subf %1002, %1001 : vector<8x16xf32>
    %cst_279 = arith.constant 0.000000e+00 : f32
    %1004 = vector.broadcast %cst_279 : f32 to vector<8x16xf32>
    %1005 = arith.maximumf %1003, %1004 : vector<8x16xf32>
    %1006 = vector.broadcast %567 : vector<1x16xf32> to vector<8x16xf32>
    %1007 = vector.broadcast %996 : vector<8x1xf32> to vector<8x16xf32>
    %1008 = arith.subf %1006, %1007 : vector<8x16xf32>
    %1009 = math.absf %1008 : vector<8x16xf32>
    %cst_280 = arith.constant 1.000000e+00 : f32
    %1010 = vector.broadcast %cst_280 : f32 to vector<8x16xf32>
    %1011 = arith.subf %1010, %1009 : vector<8x16xf32>
    %cst_281 = arith.constant 0.000000e+00 : f32
    %1012 = vector.broadcast %cst_281 : f32 to vector<8x16xf32>
    %1013 = arith.maximumf %1011, %1012 : vector<8x16xf32>
    %1014 = vector.broadcast %997 : vector<8x1xf32> to vector<8x16xf32>
    %1015 = arith.mulf %1014, %1005 : vector<8x16xf32>
    %1016 = arith.mulf %1015, %1013 : vector<8x16xf32>
    %1017 = arith.addf %986, %1016 : vector<8x16xf32>
    %1018 = vector.extract_strided_slice %37 {offsets = [0, 30], sizes = [8, 1], strides = [1, 1]} : vector<8x32xf32> to vector<8x1xf32>
    %cst_282 = arith.constant 4.000000e+00 : f32
    %1019 = vector.broadcast %cst_282 : f32 to vector<8x1xf32>
    %1020 = arith.mulf %1018, %1019 : vector<8x1xf32>
    %cst_283 = arith.constant 5.000000e-01 : f32
    %1021 = vector.broadcast %cst_283 : f32 to vector<8x1xf32>
    %1022 = arith.subf %1020, %1021 : vector<8x1xf32>
    %1023 = vector.extract_strided_slice %33 {offsets = [0, 30], sizes = [8, 1], strides = [1, 1]} : vector<8x32xf32> to vector<8x1xf32>
    %cst_284 = arith.constant 4.000000e+00 : f32
    %1024 = vector.broadcast %cst_284 : f32 to vector<8x1xf32>
    %1025 = arith.mulf %1023, %1024 : vector<8x1xf32>
    %cst_285 = arith.constant 5.000000e-01 : f32
    %1026 = vector.broadcast %cst_285 : f32 to vector<8x1xf32>
    %1027 = arith.subf %1025, %1026 : vector<8x1xf32>
    %1028 = vector.extract_strided_slice %25 {offsets = [0, 30], sizes = [8, 1], strides = [1, 1]} : vector<8x32xf32> to vector<8x1xf32>
    %1029 = vector.broadcast %566 : vector<1x16xf32> to vector<8x16xf32>
    %1030 = vector.broadcast %1022 : vector<8x1xf32> to vector<8x16xf32>
    %1031 = arith.subf %1029, %1030 : vector<8x16xf32>
    %1032 = math.absf %1031 : vector<8x16xf32>
    %cst_286 = arith.constant 1.000000e+00 : f32
    %1033 = vector.broadcast %cst_286 : f32 to vector<8x16xf32>
    %1034 = arith.subf %1033, %1032 : vector<8x16xf32>
    %cst_287 = arith.constant 0.000000e+00 : f32
    %1035 = vector.broadcast %cst_287 : f32 to vector<8x16xf32>
    %1036 = arith.maximumf %1034, %1035 : vector<8x16xf32>
    %1037 = vector.broadcast %567 : vector<1x16xf32> to vector<8x16xf32>
    %1038 = vector.broadcast %1027 : vector<8x1xf32> to vector<8x16xf32>
    %1039 = arith.subf %1037, %1038 : vector<8x16xf32>
    %1040 = math.absf %1039 : vector<8x16xf32>
    %cst_288 = arith.constant 1.000000e+00 : f32
    %1041 = vector.broadcast %cst_288 : f32 to vector<8x16xf32>
    %1042 = arith.subf %1041, %1040 : vector<8x16xf32>
    %cst_289 = arith.constant 0.000000e+00 : f32
    %1043 = vector.broadcast %cst_289 : f32 to vector<8x16xf32>
    %1044 = arith.maximumf %1042, %1043 : vector<8x16xf32>
    %1045 = vector.broadcast %1028 : vector<8x1xf32> to vector<8x16xf32>
    %1046 = arith.mulf %1045, %1036 : vector<8x16xf32>
    %1047 = arith.mulf %1046, %1044 : vector<8x16xf32>
    %1048 = arith.addf %1017, %1047 : vector<8x16xf32>
    %1049 = vector.extract_strided_slice %37 {offsets = [0, 31], sizes = [8, 1], strides = [1, 1]} : vector<8x32xf32> to vector<8x1xf32>
    %cst_290 = arith.constant 4.000000e+00 : f32
    %1050 = vector.broadcast %cst_290 : f32 to vector<8x1xf32>
    %1051 = arith.mulf %1049, %1050 : vector<8x1xf32>
    %cst_291 = arith.constant 5.000000e-01 : f32
    %1052 = vector.broadcast %cst_291 : f32 to vector<8x1xf32>
    %1053 = arith.subf %1051, %1052 : vector<8x1xf32>
    %1054 = vector.extract_strided_slice %33 {offsets = [0, 31], sizes = [8, 1], strides = [1, 1]} : vector<8x32xf32> to vector<8x1xf32>
    %cst_292 = arith.constant 4.000000e+00 : f32
    %1055 = vector.broadcast %cst_292 : f32 to vector<8x1xf32>
    %1056 = arith.mulf %1054, %1055 : vector<8x1xf32>
    %cst_293 = arith.constant 5.000000e-01 : f32
    %1057 = vector.broadcast %cst_293 : f32 to vector<8x1xf32>
    %1058 = arith.subf %1056, %1057 : vector<8x1xf32>
    %1059 = vector.extract_strided_slice %25 {offsets = [0, 31], sizes = [8, 1], strides = [1, 1]} : vector<8x32xf32> to vector<8x1xf32>
    %1060 = vector.broadcast %566 : vector<1x16xf32> to vector<8x16xf32>
    %1061 = vector.broadcast %1053 : vector<8x1xf32> to vector<8x16xf32>
    %1062 = arith.subf %1060, %1061 : vector<8x16xf32>
    %1063 = math.absf %1062 : vector<8x16xf32>
    %cst_294 = arith.constant 1.000000e+00 : f32
    %1064 = vector.broadcast %cst_294 : f32 to vector<8x16xf32>
    %1065 = arith.subf %1064, %1063 : vector<8x16xf32>
    %cst_295 = arith.constant 0.000000e+00 : f32
    %1066 = vector.broadcast %cst_295 : f32 to vector<8x16xf32>
    %1067 = arith.maximumf %1065, %1066 : vector<8x16xf32>
    %1068 = vector.broadcast %567 : vector<1x16xf32> to vector<8x16xf32>
    %1069 = vector.broadcast %1058 : vector<8x1xf32> to vector<8x16xf32>
    %1070 = arith.subf %1068, %1069 : vector<8x16xf32>
    %1071 = math.absf %1070 : vector<8x16xf32>
    %cst_296 = arith.constant 1.000000e+00 : f32
    %1072 = vector.broadcast %cst_296 : f32 to vector<8x16xf32>
    %1073 = arith.subf %1072, %1071 : vector<8x16xf32>
    %cst_297 = arith.constant 0.000000e+00 : f32
    %1074 = vector.broadcast %cst_297 : f32 to vector<8x16xf32>
    %1075 = arith.maximumf %1073, %1074 : vector<8x16xf32>
    %1076 = vector.broadcast %1059 : vector<8x1xf32> to vector<8x16xf32>
    %1077 = arith.mulf %1076, %1067 : vector<8x16xf32>
    %1078 = arith.mulf %1077, %1075 : vector<8x16xf32>
    %1079 = arith.addf %1048, %1078 : vector<8x16xf32>
    %1080 = arith.truncf %1079 : vector<8x16xf32> to vector<8x16xbf16>
    %1081 = vector.extract_strided_slice %564 {offsets = [0, 24], sizes = [16, 8], strides = [1, 1]} : vector<16x32xbf16> to vector<16x8xbf16>
    %cst_298 = arith.constant dense<0.000000e+00> : vector<8x8xf32>
    %1082 = tpu.matmul %1080, %1081, %cst_298 {dimension_numbers = #tpu.dot_dimension_numbers<[1], [0], [0], [1], [0, 0, 1, 1], [], []>} : vector<8x16xbf16>, vector<16x8xbf16>, vector<8x8xf32> -> vector<8x8xf32>
    %1083 = arith.addf %562, %1082 : vector<8x8xf32>
    %1084 = tpu.concatenate %696, %825, %954, %1083 in 1 : vector<8x8xf32>, vector<8x8xf32>, vector<8x8xf32>, vector<8x8xf32> -> vector<8x32xf32>
    %1085 = arith.truncf %1084 : vector<8x32xf32> to vector<8x32xbf16>
    %c0_299 = arith.constant 0 : index
    %c0_300 = arith.constant 0 : index
    %1086 = vector.load %arg9[%c0_299, %c0_300] : memref<32x32xbf16, #tpu.memory_space<vmem>>, vector<32x32xbf16>
    %cst_301 = arith.constant dense<0.000000e+00> : vector<8x32xf32>
    %1087 = tpu.matmul %1085, %1086, %cst_301 {dimension_numbers = #tpu.dot_dimension_numbers<[1], [0], [0], [1], [0, 0, 1, 1], [], []>} : vector<8x32xbf16>, vector<32x32xbf16>, vector<8x32xf32> -> vector<8x32xf32>
    %c0_302 = arith.constant 0 : index
    %c0_303 = arith.constant 0 : index
    %1088 = vector.load %arg10[%c0_302, %c0_303] : memref<1x32xf32, #tpu.memory_space<vmem>>, vector<1x32xf32>
    %1089 = vector.broadcast %1088 : vector<1x32xf32> to vector<8x32xf32>
    %1090 = arith.addf %1087, %1089 : vector<8x32xf32>
    %1091 = arith.addf %1, %1090 : vector<8x32xf32>
    %c0_304 = arith.constant 0 : index
    %c0_305 = arith.constant 0 : index
    %1092 = vector.load %arg11[%c0_304, %c0_305] : memref<1x32xf32, #tpu.memory_space<vmem>>, vector<1x32xf32>
    %c0_306 = arith.constant 0 : index
    %c0_307 = arith.constant 0 : index
    %1093 = vector.load %arg12[%c0_306, %c0_307] : memref<1x32xf32, #tpu.memory_space<vmem>>, vector<1x32xf32>
    %cst_308 = arith.constant dense<0.000000e+00> : vector<8xf32>
    %1094 = vector.multi_reduction <add>, %1091, %cst_308 [1] : vector<8x32xf32> to vector<8xf32>
    %1095 = vector.shape_cast %1094 : vector<8xf32> to vector<8x1xf32>
    %cst_309 = arith.constant 3.200000e+01 : f32
    %1096 = vector.broadcast %cst_309 : f32 to vector<8x1xf32>
    %1097 = arith.divf %1095, %1096 : vector<8x1xf32>
    %1098 = vector.broadcast %1097 : vector<8x1xf32> to vector<8x32xf32>
    %1099 = arith.subf %1091, %1098 : vector<8x32xf32>
    %1100 = arith.mulf %1099, %1099 : vector<8x32xf32>
    %cst_310 = arith.constant dense<0.000000e+00> : vector<8xf32>
    %1101 = vector.multi_reduction <add>, %1100, %cst_310 [1] : vector<8x32xf32> to vector<8xf32>
    %1102 = vector.shape_cast %1101 : vector<8xf32> to vector<8x1xf32>
    %cst_311 = arith.constant 3.200000e+01 : f32
    %1103 = vector.broadcast %cst_311 : f32 to vector<8x1xf32>
    %1104 = arith.divf %1102, %1103 : vector<8x1xf32>
    %1105 = vector.broadcast %1097 : vector<8x1xf32> to vector<8x32xf32>
    %1106 = arith.subf %1091, %1105 : vector<8x32xf32>
    %cst_312 = arith.constant 9.99999974E-6 : f32
    %1107 = vector.broadcast %cst_312 : f32 to vector<8x1xf32>
    %1108 = arith.addf %1104, %1107 : vector<8x1xf32>
    %1109 = math.rsqrt %1108 : vector<8x1xf32>
    %1110 = vector.broadcast %1109 : vector<8x1xf32> to vector<8x32xf32>
    %1111 = arith.mulf %1106, %1110 : vector<8x32xf32>
    %1112 = vector.broadcast %1092 : vector<1x32xf32> to vector<8x32xf32>
    %1113 = arith.mulf %1111, %1112 : vector<8x32xf32>
    %1114 = vector.broadcast %1093 : vector<1x32xf32> to vector<8x32xf32>
    %1115 = arith.addf %1113, %1114 : vector<8x32xf32>
    %1116 = arith.truncf %1115 : vector<8x32xf32> to vector<8x32xbf16>
    %c0_313 = arith.constant 0 : index
    %c0_314 = arith.constant 0 : index
    %1117 = vector.load %arg13[%c0_313, %c0_314] : memref<32x64xbf16, #tpu.memory_space<vmem>>, vector<32x64xbf16>
    %cst_315 = arith.constant dense<0.000000e+00> : vector<8x64xf32>
    %1118 = tpu.matmul %1116, %1117, %cst_315 {dimension_numbers = #tpu.dot_dimension_numbers<[1], [0], [0], [1], [0, 0, 1, 1], [], []>} : vector<8x32xbf16>, vector<32x64xbf16>, vector<8x64xf32> -> vector<8x64xf32>
    %c0_316 = arith.constant 0 : index
    %c0_317 = arith.constant 0 : index
    %1119 = vector.load %arg14[%c0_316, %c0_317] : memref<1x64xf32, #tpu.memory_space<vmem>>, vector<1x64xf32>
    %1120 = vector.broadcast %1119 : vector<1x64xf32> to vector<8x64xf32>
    %1121 = arith.addf %1118, %1120 : vector<8x64xf32>
    %cst_318 = arith.constant 0.000000e+00 : f32
    %1122 = vector.broadcast %cst_318 : f32 to vector<8x64xf32>
    %1123 = arith.maximumf %1121, %1122 : vector<8x64xf32>
    %1124 = arith.truncf %1123 : vector<8x64xf32> to vector<8x64xbf16>
    %c0_319 = arith.constant 0 : index
    %c0_320 = arith.constant 0 : index
    %1125 = vector.load %arg15[%c0_319, %c0_320] : memref<64x32xbf16, #tpu.memory_space<vmem>>, vector<64x32xbf16>
    %cst_321 = arith.constant dense<0.000000e+00> : vector<8x32xf32>
    %1126 = tpu.matmul %1124, %1125, %cst_321 {dimension_numbers = #tpu.dot_dimension_numbers<[1], [0], [0], [1], [0, 0, 1, 1], [], []>} : vector<8x64xbf16>, vector<64x32xbf16>, vector<8x32xf32> -> vector<8x32xf32>
    %c0_322 = arith.constant 0 : index
    %c0_323 = arith.constant 0 : index
    %1127 = vector.load %arg16[%c0_322, %c0_323] : memref<1x32xf32, #tpu.memory_space<vmem>>, vector<1x32xf32>
    %1128 = vector.broadcast %1127 : vector<1x32xf32> to vector<8x32xf32>
    %1129 = arith.addf %1126, %1128 : vector<8x32xf32>
    %1130 = arith.addf %1115, %1129 : vector<8x32xf32>
    %c0_324 = arith.constant 0 : index
    %c0_325 = arith.constant 0 : index
    %1131 = vector.load %arg17[%c0_324, %c0_325] : memref<1x32xf32, #tpu.memory_space<vmem>>, vector<1x32xf32>
    %c0_326 = arith.constant 0 : index
    %c0_327 = arith.constant 0 : index
    %1132 = vector.load %arg18[%c0_326, %c0_327] : memref<1x32xf32, #tpu.memory_space<vmem>>, vector<1x32xf32>
    %cst_328 = arith.constant dense<0.000000e+00> : vector<8xf32>
    %1133 = vector.multi_reduction <add>, %1130, %cst_328 [1] : vector<8x32xf32> to vector<8xf32>
    %1134 = vector.shape_cast %1133 : vector<8xf32> to vector<8x1xf32>
    %cst_329 = arith.constant 3.200000e+01 : f32
    %1135 = vector.broadcast %cst_329 : f32 to vector<8x1xf32>
    %1136 = arith.divf %1134, %1135 : vector<8x1xf32>
    %1137 = vector.broadcast %1136 : vector<8x1xf32> to vector<8x32xf32>
    %1138 = arith.subf %1130, %1137 : vector<8x32xf32>
    %1139 = arith.mulf %1138, %1138 : vector<8x32xf32>
    %cst_330 = arith.constant dense<0.000000e+00> : vector<8xf32>
    %1140 = vector.multi_reduction <add>, %1139, %cst_330 [1] : vector<8x32xf32> to vector<8xf32>
    %1141 = vector.shape_cast %1140 : vector<8xf32> to vector<8x1xf32>
    %cst_331 = arith.constant 3.200000e+01 : f32
    %1142 = vector.broadcast %cst_331 : f32 to vector<8x1xf32>
    %1143 = arith.divf %1141, %1142 : vector<8x1xf32>
    %1144 = vector.broadcast %1136 : vector<8x1xf32> to vector<8x32xf32>
    %1145 = arith.subf %1130, %1144 : vector<8x32xf32>
    %cst_332 = arith.constant 9.99999974E-6 : f32
    %1146 = vector.broadcast %cst_332 : f32 to vector<8x1xf32>
    %1147 = arith.addf %1143, %1146 : vector<8x1xf32>
    %1148 = math.rsqrt %1147 : vector<8x1xf32>
    %1149 = vector.broadcast %1148 : vector<8x1xf32> to vector<8x32xf32>
    %1150 = arith.mulf %1145, %1149 : vector<8x32xf32>
    %1151 = vector.broadcast %1131 : vector<1x32xf32> to vector<8x32xf32>
    %1152 = arith.mulf %1150, %1151 : vector<8x32xf32>
    %1153 = vector.broadcast %1132 : vector<1x32xf32> to vector<8x32xf32>
    %1154 = arith.addf %1152, %1153 : vector<8x32xf32>
    %c0_333 = arith.constant 0 : index
    %c0_334 = arith.constant 0 : index
    %c0_335 = arith.constant 0 : index
    %1155 = vector.load %arg19[%c0_333, %c0_334, %c0_335] : memref<1x8x32xf32, #tpu.memory_space<vmem>>, vector<1x8x32xf32>
    %1156 = vector.shape_cast %1155 : vector<1x8x32xf32> to vector<8x32xf32>
    %1157 = vector.shape_cast %1154 : vector<8x32xf32> to vector<1x8x32xf32>
    tpu.vector_store %arg19[%c0_333, %c0_334, %c0_335], %1157 {strides = array<i32>} : memref<1x8x32xf32, #tpu.memory_space<vmem>>, vector<1x8x32xf32>,
    return
  }
  func.func @transform_0(%arg0: i32, %arg1: i32) -> (i32, i32, i32) {
    %c0_i32 = arith.constant 0 : i32
    %c0_i32_0 = arith.constant 0 : i32
    return %arg0, %arg1, %c0_i32 : i32, i32, i32
  }
  func.func @transform_1(%arg0: i32, %arg1: i32) -> (i32, i32, i32) {
    %c0_i32 = arith.constant 0 : i32
    %c0_i32_0 = arith.constant 0 : i32
    return %arg0, %arg1, %c0_i32 : i32, i32, i32
  }
  func.func @transform_2(%arg0: i32, %arg1: i32) -> (i32, i32, i32) {
    %c0_i32 = arith.constant 0 : i32
    %c0_i32_0 = arith.constant 0 : i32
    return %arg0, %arg1, %c0_i32 : i32, i32, i32
  }
  func.func @transform_3(%arg0: i32, %arg1: i32) -> (i32, i32) {
    %c0_i32 = arith.constant 0 : i32
    %c0_i32_0 = arith.constant 0 : i32
    %c0_i32_1 = arith.constant 0 : i32
    return %c0_i32, %c0_i32_0 : i32, i32
  }
  func.func @transform_4(%arg0: i32, %arg1: i32) -> (i32, i32, i32) {
    %c0_i32 = arith.constant 0 : i32
    %c0_i32_0 = arith.constant 0 : i32
    %c0_i32_1 = arith.constant 0 : i32
    return %arg0, %c0_i32, %c0_i32_0 : i32, i32, i32
  }
  func.func @transform_5(%arg0: i32, %arg1: i32) -> (i32, i32) {
    %c0_i32 = arith.constant 0 : i32
    %c0_i32_0 = arith.constant 0 : i32
    %c0_i32_1 = arith.constant 0 : i32
    return %c0_i32, %c0_i32_0 : i32, i32
  }
  func.func @transform_6(%arg0: i32, %arg1: i32) -> (i32, i32) {
    %c0_i32 = arith.constant 0 : i32
    %c0_i32_0 = arith.constant 0 : i32
    %c0_i32_1 = arith.constant 0 : i32
    return %c0_i32, %c0_i32_0 : i32, i32
  }
  func.func @transform_7(%arg0: i32, %arg1: i32) -> (i32, i32) {
    %c0_i32 = arith.constant 0 : i32
    %c0_i32_0 = arith.constant 0 : i32
    %c0_i32_1 = arith.constant 0 : i32
    return %c0_i32, %c0_i32_0 : i32, i32
  }
  func.func @transform_8(%arg0: i32, %arg1: i32) -> (i32, i32) {
    %c0_i32 = arith.constant 0 : i32
    %c0_i32_0 = arith.constant 0 : i32
    %c0_i32_1 = arith.constant 0 : i32
    return %c0_i32, %c0_i32_0 : i32, i32
  }
  func.func @transform_9(%arg0: i32, %arg1: i32) -> (i32, i32) {
    %c0_i32 = arith.constant 0 : i32
    %c0_i32_0 = arith.constant 0 : i32
    %c0_i32_1 = arith.constant 0 : i32
    return %c0_i32, %c0_i32_0 : i32, i32
  }
  func.func @transform_10(%arg0: i32, %arg1: i32) -> (i32, i32) {
    %c0_i32 = arith.constant 0 : i32
    %c0_i32_0 = arith.constant 0 : i32
    %c0_i32_1 = arith.constant 0 : i32
    return %c0_i32, %c0_i32_0 : i32, i32
  }
  func.func @transform_11(%arg0: i32, %arg1: i32) -> (i32, i32) {
    %c0_i32 = arith.constant 0 : i32
    %c0_i32_0 = arith.constant 0 : i32
    %c0_i32_1 = arith.constant 0 : i32
    return %c0_i32, %c0_i32_0 : i32, i32
  }
  func.func @transform_12(%arg0: i32, %arg1: i32) -> (i32, i32) {
    %c0_i32 = arith.constant 0 : i32
    %c0_i32_0 = arith.constant 0 : i32
    %c0_i32_1 = arith.constant 0 : i32
    return %c0_i32, %c0_i32_0 : i32, i32
  }
  func.func @transform_13(%arg0: i32, %arg1: i32) -> (i32, i32) {
    %c0_i32 = arith.constant 0 : i32
    %c0_i32_0 = arith.constant 0 : i32
    %c0_i32_1 = arith.constant 0 : i32
    return %c0_i32, %c0_i32_0 : i32, i32
  }
  func.func @transform_14(%arg0: i32, %arg1: i32) -> (i32, i32) {
    %c0_i32 = arith.constant 0 : i32
    %c0_i32_0 = arith.constant 0 : i32
    %c0_i32_1 = arith.constant 0 : i32
    return %c0_i32, %c0_i32_0 : i32, i32
  }
  func.func @transform_15(%arg0: i32, %arg1: i32) -> (i32, i32) {
    %c0_i32 = arith.constant 0 : i32
    %c0_i32_0 = arith.constant 0 : i32
    %c0_i32_1 = arith.constant 0 : i32
    return %c0_i32, %c0_i32_0 : i32, i32
  }
  func.func @transform_16(%arg0: i32, %arg1: i32) -> (i32, i32) {
    %c0_i32 = arith.constant 0 : i32
    %c0_i32_0 = arith.constant 0 : i32
    %c0_i32_1 = arith.constant 0 : i32
    return %c0_i32, %c0_i32_0 : i32, i32
  }
  func.func @transform_17(%arg0: i32, %arg1: i32) -> (i32, i32, i32) {
    %c0_i32 = arith.constant 0 : i32
    %c0_i32_0 = arith.constant 0 : i32
    return %arg0, %arg1, %c0_i32 : i32, i32, i32
  }
}

</mosaic_0001>

<llo_original>
// kernel: decoder_layer_forward.4
$region0: #{decoder_layer_forward.4}
  #allocation0 [shape = 'u32[]', space=smem, size = 0x4, offset = 0x4, fixed_abs, tag = 'smem constant byte address 0x4 - core index']
  #allocation1 [shape = 'u32[144,128]{1,0:T(1,128)}', space=vmem, size = 0x12000, scoped, tag = 'internal scratch']
  %s0 = inlined_call_operand.vmem [shape: bf16[2,80,32], index: 0, kind: input, shape index: {}]
  %s1 = inlined_call_operand.vmem [shape: f32[2,80,1], index: 1, kind: input, shape index: {}]
  %s2 = inlined_call_operand.vmem [shape: bf16[32,32], index: 2, kind: input, shape index: {}]
  %s3 = inlined_call_operand.vmem [shape: f32[1,32], index: 3, kind: input, shape index: {}]
  %s4 = inlined_call_operand.vmem [shape: bf16[2,80,32], index: 4, kind: output, shape index: {}]
  %s5 = sld [smem:[#allocation0]]
  $region49: #{decoder_layer_forward.4} parent=0
    _
  %s7 = ssub.s32 1, %s5
  %s8 = scalar_select 0, %s7, %s5
  loop: start=0, step=1, limit=4
  $region2: #{decoder_layer_forward.4} parent=0 // loop_pre_header
    _
  $region3: #{decoder_layer_forward.4} parent=0 // loop_header
    %s10 = sphi 0, %s14
    %p11 = scmp.ge.s32.totalorder %s10, 4
    %s17 = sphi 0, %s29
    %s18 = sphi 0, %s25
    %s19 = sphi 0, %s17
    %s20 = sphi 0, %s18
    %s21 = sphi 0, %s19
    %s22 = sphi 0, %s20
    %s34 = sphi 0, %s36
    %s37 = sphi 0, %s34
    %s38 = sphi 0, %s37
    %s54 = sphi 0, %s38
    %s62 = sphi 0, %s64
    %s65 = sphi 0, %s62
    %s66 = sphi 0, %s65
    %s82 = sphi 0, %s66
    %s86 = sphi 0, %s86
    %s88 = sphi 0, %s86
    %s89 = sphi 0, %s88
    %s103 = sphi 0, %s89
    %s107 = sphi 0, %s107
    %s109 = sphi 0, %s107
    %s110 = sphi 0, %s109
    %s124 = sphi 0, %s110
    %s132 = sphi 0, %s134
    %s135 = sphi 0, %s132
    %s136 = sphi 0, %s135
    %s152 = sphi 0, %s136
  $region4: #{decoder_layer_forward.4} parent=0 // loop_header_branch
    %13 = sbr.rel (%p11) target = $region8
  $region5: #{decoder_layer_forward.4} parent=0 // loop_body
    %s15 = ssub.s32 %s10, 1
    %s16 = ssub.s32 %s10, 2
    %s23 = sadd.s32 1, %s18
    %p24 = scmp.ge.s32.totalorder %s23, 1
    %s25 = scalar_select %p24, 0, %s23
    %s26 = sadd.s32 1, %s17
    %s27 = scalar_select %p24, %s26, %s17
    %p28 = scmp.ge.s32.totalorder %s27, 2
    %s29 = scalar_select %p28, 0, %s27
    %s30 = ssub.s32 %s17, %s29
    %s31 = ssub.s32 %s18, %s25
    %s32 = sor.u32 %s30, %s31
    %p33 = scmp.eq.s32.totalorder %s32, 0
    %s35 = sadd.s32 %s34, 1
    %s36 = scalar_select %p33, %s34, %s35
    %p39 = pneg %p33
    %p40 = scmp.eq.s32.totalorder %s10, 1
    %p41 = por %p39, %p40
    %p42 = scmp.ne.s32.totalorder %s34, %s37
    %p43 = scmp.eq.s32.totalorder %s10, 0
    %p44 = por %p42, %p43
    %p45 = scmp.ne.s32.totalorder %s34, %s37
    %p46 = scmp.eq.s32.totalorder %s15, 1
    %p47 = por %p45, %p46
    %p48 = scmp.ne.s32.totalorder %s37, %s38
    %p49 = scmp.eq.s32.totalorder %s15, 0
    %p50 = por %p48, %p49
    %p51 = scmp.ne.s32.totalorder %s37, %s38
    %p52 = scmp.eq.s32.totalorder %s16, 1
    %p53 = por %p51, %p52
    %p55 = scmp.ne.s32.totalorder %s38, %s54
    %p56 = scmp.eq.s32.totalorder %s16, 0
    %p57 = por %p55, %p56
    %s58 = ssub.s32 %s17, %s29
    %s59 = ssub.s32 %s18, %s25
    %s60 = sor.u32 %s58, %s59
    %p61 = scmp.eq.s32.totalorder %s60, 0
    %s63 = sadd.s32 %s62, 1
    %s64 = scalar_select %p61, %s62, %s63
    %p67 = pneg %p61
    %p68 = scmp.eq.s32.totalorder %s10, 1
    %p69 = por %p67, %p68
    %p70 = scmp.ne.s32.totalorder %s62, %s65
    %p71 = scmp.eq.s32.totalorder %s10, 0
    %p72 = por %p70, %p71
    %p73 = scmp.ne.s32.totalorder %s62, %s65
    %p74 = scmp.eq.s32.totalorder %s15, 1
    %p75 = por %p73, %p74
    %p76 = scmp.ne.s32.totalorder %s65, %s66
    %p77 = scmp.eq.s32.totalorder %s15, 0
    %p78 = por %p76, %p77
    %p79 = scmp.ne.s32.totalorder %s65, %s66
    %p80 = scmp.eq.s32.totalorder %s16, 1
    %p81 = por %p79, %p80
    %p83 = scmp.ne.s32.totalorder %s66, %s82
    %p84 = scmp.eq.s32.totalorder %s16, 0
    %p85 = por %p83, %p84
    %s87 = sadd.s32 %s86, 1
    %p90 = scmp.eq.s32.totalorder %s10, 1
    %p91 = scmp.ne.s32.totalorder %s86, %s88
    %p92 = scmp.eq.s32.totalorder %s10, 0
    %p93 = por %p91, %p92
    %p94 = scmp.ne.s32.totalorder %s86, %s88
    %p95 = scmp.eq.s32.totalorder %s15, 1
    %p96 = por %p94, %p95
    %p97 = scmp.ne.s32.totalorder %s88, %s89
    %p98 = scmp.eq.s32.totalorder %s15, 0
    %p99 = por %p97, %p98
    %p100 = scmp.ne.s32.totalorder %s88, %s89
    %p101 = scmp.eq.s32.totalorder %s16, 1
    %p102 = por %p100, %p101
    %p104 = scmp.ne.s32.totalorder %s89, %s103
    %p105 = scmp.eq.s32.totalorder %s16, 0
    %p106 = por %p104, %p105
    %s108 = sadd.s32 %s107, 1
    %p111 = scmp.eq.s32.totalorder %s10, 1
    %p112 = scmp.ne.s32.totalorder %s107, %s109
    %p113 = scmp.eq.s32.totalorder %s10, 0
    %p114 = por %p112, %p113
    %p115 = scmp.ne.s32.totalorder %s107, %s109
    %p116 = scmp.eq.s32.totalorder %s15, 1
    %p117 = por %p115, %p116
    %p118 = scmp.ne.s32.totalorder %s109, %s110
    %p119 = scmp.eq.s32.totalorder %s15, 0
    %p120 = por %p118, %p119
    %p121 = scmp.ne.s32.totalorder %s109, %s110
    %p122 = scmp.eq.s32.totalorder %s16, 1
    %p123 = por %p121, %p122
    %p125 = scmp.ne.s32.totalorder %s110, %s124
    %p126 = scmp.eq.s32.totalorder %s16, 0
    %p127 = por %p125, %p126
    %s128 = ssub.s32 %s17, %s29
    %s129 = ssub.s32 %s18, %s25
    %s130 = sor.u32 %s128, %s129
    %p131 = scmp.eq.s32.totalorder %s130, 0
    %s133 = sadd.s32 %s132, 1
    %s134 = scalar_select %p131, %s132, %s133
    %p137 = pneg %p131
    %p138 = scmp.eq.s32.totalorder %s10, 1
    %p139 = por %p137, %p138
    %p140 = scmp.ne.s32.totalorder %s132, %s135
    %p141 = scmp.eq.s32.totalorder %s10, 0
    %p142 = por %p140, %p141
    %p143 = scmp.ne.s32.totalorder %s132, %s135
    %p144 = scmp.eq.s32.totalorder %s15, 1
    %p145 = por %p143, %p144
    %p146 = scmp.ne.s32.totalorder %s135, %s136
    %p147 = scmp.eq.s32.totalorder %s15, 0
    %p148 = por %p146, %p147
    %p149 = scmp.ne.s32.totalorder %s135, %s136
    %p150 = scmp.eq.s32.totalorder %s16, 1
    %p151 = por %p149, %p150
    %p153 = scmp.ne.s32.totalorder %s136, %s152
    %p154 = scmp.eq.s32.totalorder %s16, 0
    %p155 = por %p153, %p154
    %p156 = scmp.le.s32.totalorder 1, %s10
    %p157 = scmp.lt.s32.totalorder %s10, 3
    %p158 = pnand %p156, %p157
    %p159 = pneg %p158
    // Predicated region
    $region9: #{decoder_layer_forward.4} parent=5 // pred_check
      _
    $region10: #{decoder_layer_forward.4} parent=5 // pred_check_branch
      %161 = sbr.rel (%p158) target = $region12
    $region11: #{decoder_layer_forward.4} parent=5 // pred_region
      %s162 = ssub.s32 %s10, 1
      // Predicated region
      $region13: #{decoder_layer_forward.4} parent=11 // pred_check
        %p163 = pneg %p99
      $region14: #{decoder_layer_forward.4} parent=11 // pred_check_branch
        %165 = sbr.rel (%p163) target = $region16
      $region15: #{decoder_layer_forward.4} parent=11 // pred_region
        _
      $region16: #{decoder_layer_forward.4} parent=11 // pred_fallthru
        _
      // Predicated region
      $region17: #{decoder_layer_forward.4} parent=11 // pred_check
        %p166 = pneg %p120
      $region18: #{decoder_layer_forward.4} parent=11 // pred_check_branch
        %168 = sbr.rel (%p166) target = $region20
      $region19: #{decoder_layer_forward.4} parent=11 // pred_region
        _
      $region20: #{decoder_layer_forward.4} parent=11 // pred_fallthru
        _
    $region12: #{decoder_layer_forward.4} parent=5 // pred_fallthru
      _
    %p169 = scmp.lt.s32.totalorder %s10, 2
    // Predicated region
    $region21: #{decoder_layer_forward.4} parent=5 // pred_check
      %p170 = pneg %p169
    $region22: #{decoder_layer_forward.4} parent=5 // pred_check_branch
      %172 = sbr.rel (%p170) target = $region24
    $region23: #{decoder_layer_forward.4} parent=5 // pred_region
      // Predicated region
      $region25: #{decoder_layer_forward.4} parent=23 // pred_check
        %p173 = pneg %p44
      $region26: #{decoder_layer_forward.4} parent=23 // pred_check_branch
        %175 = sbr.rel (%p173) target = $region28
      $region27: #{decoder_layer_forward.4} parent=23 // pred_region
        %s176 = smul.u32 10, %s18
        %p177 = scmp.lt.s32.totalorder %s17, 1
        %s178 = scalar_select %p177, %s17, 1
        %p179 = scmp.lt.s32.totalorder %s176, 9
        %s180 = scalar_select %p179, %s176, 9
        %s181 = smul.addr %s178, 10
        %s182 = sadd.s32 %s180, %s181
        %s183 = smul.addr %s182, 4
        %s184 = scalar_lea.vmem %s0, %s183
        %s185 = smul.u32 10, %s18
      $region28: #{decoder_layer_forward.4} parent=23 // pred_fallthru
        _
      // Predicated region
      $region29: #{decoder_layer_forward.4} parent=23 // pred_check
        %p186 = pneg %p72
      $region30: #{decoder_layer_forward.4} parent=23 // pred_check_branch
        %188 = sbr.rel (%p186) target = $region32
      $region31: #{decoder_layer_forward.4} parent=23 // pred_region
        %s189 = smul.u32 10, %s18
        %p190 = scmp.lt.s32.totalorder %s17, 1
        %s191 = scalar_select %p190, %s17, 1
        %p192 = scmp.lt.s32.totalorder %s189, 9
        %s193 = scalar_select %p192, %s189, 9
        %s194 = smul.addr %s191, 10
        %s195 = sadd.s32 %s193, %s194
        %s196 = smul.addr %s195, 8
        %s197 = scalar_lea.vmem %s1, %s196
        %s198 = smul.u32 10, %s18
      $region32: #{decoder_layer_forward.4} parent=23 // pred_fallthru
        _
    $region24: #{decoder_layer_forward.4} parent=5 // pred_fallthru
      _
    %p199 = scmp.le.s32.totalorder 1, %s10
    %p200 = scmp.lt.s32.totalorder %s10, 3
    %p201 = pnand %p199, %p200
    %p202 = pneg %p201
    // Predicated region
    $region33: #{decoder_layer_forward.4} parent=5 // pred_check
      _
    $region34: #{decoder_layer_forward.4} parent=5 // pred_check_branch
      %204 = sbr.rel (%p201) target = $region36
    $region35: #{decoder_layer_forward.4} parent=5 // pred_region
      %s205 = ssub.s32 %s10, 1
      %s206 = smul.u32 10, %s20
      %p207 = scmp.lt.s32.totalorder %s19, 1
      %s208 = scalar_select %p207, %s19, 1
      %p209 = scmp.lt.s32.totalorder %s206, 9
      %s210 = scalar_select %p209, %s206, 9
      %s211 = smul.addr %s208, 10
      %s212 = sadd.s32 %s210, %s211
      %s213 = smul.addr %s212, 4
      %s214 = scalar_lea.vmem %s0, %s213
      %p215 = pneg %p50
      %p216 = pneg %p47
      %s217 = smul.u32 10, %s20
      %p218 = scmp.lt.s32.totalorder %s19, 1
      %s219 = scalar_select %p218, %s19, 1
      %p220 = scmp.lt.s32.totalorder %s217, 9
      %s221 = scalar_select %p220, %s217, 9
      %s222 = smul.addr %s219, 10
      %s223 = sadd.s32 %s221, %s222
      %s224 = smul.addr %s223, 8
      %s225 = scalar_lea.vmem %s1, %s224
      %p226 = pneg %p78
      %p227 = pneg %p75
      %p228 = pneg %p99
      %p229 = pneg %p96
      %p230 = pneg %p120
      %p231 = pneg %p117
      %p232 = pneg %p148
      %p233 = pneg %p145
      %s234 = smul.u32 10, %s20
      %p235 = scmp.lt.s32.totalorder %s19, 1
      %s236 = scalar_select %p235, %s19, 1
      %p237 = scmp.lt.s32.totalorder %s234, 9
      %s238 = scalar_select %p237, %s234, 9
      %s239 = smul.addr %s236, 10
      %s240 = sadd.s32 %s238, %s239
      %s241 = smul.addr %s240, 4
      %s242 = scalar_lea.vmem %s4, %s241
      %s243 = smul.u32 10, %s20
      %p244 = scmp.lt.s32.totalorder %s19, 1
      %s245 = scalar_select %p244, %s19, 1
      %p246 = scmp.lt.s32.totalorder %s243, 9
      %s247 = scalar_select %p246, %s243, 9
      %s248 = smul.addr %s245, 10
      %s249 = sadd.s32 %s247, %s248
      %s250 = smul.addr %s249, 4
      %s251 = scalar_lea.vmem %s0, %s250
      %s252 = smul.u32 10, %s20
      %s253 = smul.u32 10, %s20
      %p254 = scmp.lt.s32.totalorder %s19, 1
      %s255 = scalar_select %p254, %s19, 1
      %p256 = scmp.lt.s32.totalorder %s253, 9
      %s257 = scalar_select %p256, %s253, 9
      %s258 = smul.addr %s255, 10
      %s259 = sadd.s32 %s257, %s258
      %s260 = smul.addr %s259, 8
      %s261 = scalar_lea.vmem %s1, %s260
      %s262 = smul.u32 10, %s20
      %s263 = smul.u32 10, %s20
      %p264 = scmp.lt.s32.totalorder %s19, 1
      %s265 = scalar_select %p264, %s19, 1
      %p266 = scmp.lt.s32.totalorder %s263, 9
      %s267 = scalar_select %p266, %s263, 9
      %s268 = smul.addr %s265, 10
      %s269 = sadd.s32 %s267, %s268
      %s270 = smul.addr %s269, 4
      %s271 = scalar_lea.vmem %s4, %s270
      %s272 = smul.u32 10, %s20
      %v274 = vld [vmem:[%s251] sm:$0xf]
      %v275 = vld [vmem:[%s251 + $0x4] sm:$0xf]
      %v276 = vld [vmem:[%s251 + $0x8] sm:$0xf]
      %v277 = vld [vmem:[%s251 + $0xc] sm:$0xf]
      %v278 = vld [vmem:[%s251 + $0x10] sm:$0xf]
      %v279 = vld [vmem:[%s251 + $0x14] sm:$0xf]
      %v280 = vld [vmem:[%s251 + $0x18] sm:$0xf]
      %v281 = vld [vmem:[%s251 + $0x1c] sm:$0xf]
      %v282 = vld [vmem:[%s251 + $0x20] sm:$0xf]
      %v283 = vld [vmem:[%s251 + $0x24] sm:$0xf]
      %v284 = vld [vmem:[%s2] sm:$0xf]
      %v285 = vld [vmem:[%s2 + $0x4] sm:$0xf]
      %v286 = vld [vmem:[%s2 + $0x8] sm:$0xf]
      %v287 = vld [vmem:[%s2 + $0xc] sm:$0xf]
      %v288 = vld [vmem:[%s3] sm:$0x1]
      %v290 = vlaneseq
      %v291 = vshrl.u32 %v290, 7
      %v292 = vsub.s32 0, %v291
      %v293 = vrot.slane %v288, %v292
      %v305 = vunpack.c.l.b16 %v274
      %v306 = vunpack.c.l.b16 %v275
      %v307 = vunpack.c.l.b16 %v276
      %v308 = vunpack.c.l.b16 %v277
      %v309 = vunpack.c.l.b16 %v278
      %v310 = vunpack.c.l.b16 %v279
      %v311 = vunpack.c.l.b16 %v280
      %v312 = vunpack.c.l.b16 %v281
      %v313 = vunpack.c.l.b16 %v282
      %v314 = vunpack.c.l.b16 %v283
      %v315 = vpack.c.b16 %v306, %v305
      %v316 = vpack.c.b16 %v308, %v307
      %v317 = vpack.c.b16 %v310, %v309
      %v318 = vpack.c.b16 %v312, %v311
      %v319 = vpack.c.b16 %v314, %v313
      %v324 = vunpack.c.l.b16 %v284
      %v325 = vunpack.c.l.b16 %v285
      %v326 = vunpack.c.l.b16 %v286
      %v327 = vunpack.c.l.b16 %v287
      %v328 = vpack.c.b16 %v325, %v324
      %v329 = vpack.c.b16 %v327, %v326
      %vm332 = vcmask 261120
      %v334 = vsel %vm332, %v315, 0
      %v337 = vsel %vm332, %v316, 0
      %v340 = vsel %vm332, %v317, 0
      %v343 = vsel %vm332, %v318, 0
      %v346 = vsel %vm332, %v319, 0
      %348 = vmatprep.subr.bf16.mxu0 0
      %349 = vmatpush1.bf16.msra.mxu0 %v328
      %350 = vmatprep.subr.bf16.mxu0 0
      %351 = vmatpush1.bf16.msra.mxu0 %v329
      %352 = vmatprep.subr.bf16.mxu0 0
      %353 = vmatpush1.bf16.msra.mxu0 0
      %354 = vmatprep.subr.bf16.mxu0 0
      %355 = vmatpush1.bf16.msra.mxu0 0
      %356 = vmatprep.subr.bf16.mxu0 0
      %357 = vmatpush1.bf16.msra.mxu0 0
      %358 = vmatprep.subr.bf16.mxu0 0
      %359 = vmatpush1.bf16.msra.mxu0 0
      %360 = vmatprep.subr.bf16.mxu0 0
      %361 = vmatpush1.bf16.msra.mxu0 0
      %362 = vmatprep.subr.bf16.mxu0 0
      %363 = vmatpush1.bf16.msra.mxu0 0
      %364 = vmatprep.subr.bf16.mxu0 0
      %365 = vmatpush1.bf16.msra.mxu0 0
      %366 = vmatprep.subr.bf16.mxu0 0
      %367 = vmatpush1.bf16.msra.mxu0 0
      %368 = vmatprep.subr.bf16.mxu0 0
      %369 = vmatpush1.bf16.msra.mxu0 0
      %370 = vmatprep.subr.bf16.mxu0 0
      %371 = vmatpush1.bf16.msra.mxu0 0
      %372 = vmatprep.subr.bf16.mxu0 0
      %373 = vmatpush1.bf16.msra.mxu0 0
      %374 = vmatprep.subr.bf16.mxu0 0
      %375 = vmatpush1.bf16.msra.mxu0 0
      %376 = vmatprep.subr.bf16.mxu0 0
      %377 = vmatpush1.bf16.msra.mxu0 0
      %378 = vmatprep.subr.bf16.mxu0 0
      %379 = vmatpush1.bf16.msra.mxu0 0
      %380 = vmatprep.mubr.bf16.mxu0 0
      %381 = vmatmul.mubr.bf16.gmra.mrb[0].mxu0 %v334
      %v382 = vpop.f32.mrb[0].mxu0
      %v383 = vadd.f32 %v293, %v382
      %v384 = vpop.f32.mrb[0].mxu0
      %v385 = vpop.f32.mrb[0].mxu0
      %v386 = vadd.f32 %v293, %v385
      %v387 = vpop.f32.mrb[0].mxu0
      %388 = vmatprep.mubr.bf16.mxu0 0
      %389 = vmatmul.mubr.bf16.gmra.mrb[0].mxu0 %v337
      %v390 = vpop.f32.mrb[0].mxu0
      %v391 = vadd.f32 %v293, %v390
      %v392 = vpop.f32.mrb[0].mxu0
      %v393 = vpop.f32.mrb[0].mxu0
      %v394 = vadd.f32 %v293, %v393
      %v395 = vpop.f32.mrb[0].mxu0
      %396 = vmatprep.mubr.bf16.mxu0 0
      %397 = vmatmul.mubr.bf16.gmra.mrb[0].mxu0 %v340
      %v398 = vpop.f32.mrb[0].mxu0
      %v399 = vadd.f32 %v293, %v398
      %v400 = vpop.f32.mrb[0].mxu0
      %v401 = vpop.f32.mrb[0].mxu0
      %v402 = vadd.f32 %v293, %v401
      %v403 = vpop.f32.mrb[0].mxu0
      %404 = vmatprep.mubr.bf16.mxu0 0
      %405 = vmatmul.mubr.bf16.gmra.mrb[0].mxu0 %v343
      %v406 = vpop.f32.mrb[0].mxu0
      %v407 = vadd.f32 %v293, %v406
      %v408 = vpop.f32.mrb[0].mxu0
      %v409 = vpop.f32.mrb[0].mxu0
      %v410 = vadd.f32 %v293, %v409
      %v411 = vpop.f32.mrb[0].mxu0
      %412 = vmatprep.mubr.bf16.mxu0 0
      %413 = vmatmul.mubr.bf16.gmra.mrb[0].mxu0 %v346
      %v414 = vpop.f32.mrb[0].mxu0
      %v415 = vadd.f32 %v293, %v414
      %v416 = vpop.f32.mrb[0].mxu0
      %v417 = vpop.f32.mrb[0].mxu0
      %v418 = vadd.f32 %v293, %v417
      %v419 = vpop.f32.mrb[0].mxu0
      %420 = vdwg.mxu0
      %v421 = vld [vmem:[%s261] sm:$0xff]
      %v422 = vld [vmem:[%s261 + $0x8] sm:$0xff]
      %v423 = vld [vmem:[%s261 + $0x10] sm:$0xff]
      %v424 = vld [vmem:[%s261 + $0x18] sm:$0xff]
      %v425 = vld [vmem:[%s261 + $0x20] sm:$0xff]
      %v426 = vld [vmem:[%s261 + $0x28] sm:$0xff]
      %v427 = vld [vmem:[%s261 + $0x30] sm:$0xff]
      %v428 = vld [vmem:[%s261 + $0x38] sm:$0xff]
      %v429 = vld [vmem:[%s261 + $0x40] sm:$0xff]
      %v430 = vld [vmem:[%s261 + $0x48] sm:$0xff]
      %432 = vset.pattern.permute.xlu0 0
      %433 = vperm.xlu0 %432, %v421
      %v434 = vpop.permute.xlu0 %433
      %437 = vset.pattern.permute.xlu0 0
      %438 = vperm.xlu0 %437, %v422
      %v439 = vpop.permute.xlu0 %438
      %442 = vset.pattern.permute.xlu0 0
      %443 = vperm.xlu0 %442, %v423
      %v444 = vpop.permute.xlu0 %443
      %447 = vset.pattern.permute.xlu0 0
      %448 = vperm.xlu0 %447, %v424
      %v449 = vpop.permute.xlu0 %448
      %452 = vset.pattern.permute.xlu0 0
      %453 = vperm.xlu0 %452, %v425
      %v454 = vpop.permute.xlu0 %453
      %457 = vset.pattern.permute.xlu0 0
      %458 = vperm.xlu0 %457, %v426
      %v459 = vpop.permute.xlu0 %458
      %462 = vset.pattern.permute.xlu0 0
      %463 = vperm.xlu0 %462, %v427
      %v464 = vpop.permute.xlu0 %463
      %467 = vset.pattern.permute.xlu0 0
      %468 = vperm.xlu0 %467, %v428
      %v469 = vpop.permute.xlu0 %468
      %472 = vset.pattern.permute.xlu0 0
      %473 = vperm.xlu0 %472, %v429
      %v474 = vpop.permute.xlu0 %473
      %477 = vset.pattern.permute.xlu0 0
      %478 = vperm.xlu0 %477, %v430
      %v479 = vpop.permute.xlu0 %478
      %v481 = vmul.f32 %v383, %v434
      %v482 = vmul.f32 %v386, %v439
      %v483 = vmul.f32 %v391, %v444
      %v484 = vmul.f32 %v394, %v449
      %v485 = vmul.f32 %v399, %v454
      %v486 = vmul.f32 %v402, %v459
      %v487 = vmul.f32 %v407, %v464
      %v488 = vmul.f32 %v410, %v469
      %v489 = vmul.f32 %v415, %v474
      %v490 = vmul.f32 %v418, %v479
      %v491 = vpack.c.bf16 %v482, %v481
      %v492 = vpack.c.bf16 %v484, %v483
      %v493 = vpack.c.bf16 %v486, %v485
      %v494 = vpack.c.bf16 %v488, %v487
      %v495 = vpack.c.bf16 %v490, %v489
      %v501 = vunpack.c.l.b16 %v491
      %v502 = vunpack.c.h.b16 %v491
      %v503 = vunpack.c.l.b16 %v492
      %v504 = vunpack.c.h.b16 %v492
      %v505 = vunpack.c.l.b16 %v493
      %v506 = vunpack.c.h.b16 %v493
      %v507 = vunpack.c.l.b16 %v494
      %v508 = vunpack.c.h.b16 %v494
      %v509 = vunpack.c.l.b16 %v495
      %v510 = vunpack.c.h.b16 %v495
      %v511 = vpack.c.b16 %v501, %v501
      %v512 = vpack.c.b16 %v502, %v502
      %v513 = vpack.c.b16 %v503, %v503
      %v514 = vpack.c.b16 %v504, %v504
      %v515 = vpack.c.b16 %v505, %v505
      %v516 = vpack.c.b16 %v506, %v506
      %v517 = vpack.c.b16 %v507, %v507
      %v518 = vpack.c.b16 %v508, %v508
      %v519 = vpack.c.b16 %v509, %v509
      %v520 = vpack.c.b16 %v510, %v510
      %vm531 = vcmask 257024
      %532 = vst.msk [vmem:[%s271] sm:$0xf] %vm531, %v511
      %533 = vst.msk [vmem:[%s271 + $0x4] sm:$0xf] %vm531, %v512
      %534 = vst.msk [vmem:[%s271 + $0x8] sm:$0xf] %vm531, %v513
      %535 = vst.msk [vmem:[%s271 + $0xc] sm:$0xf] %vm531, %v514
      %536 = vst.msk [vmem:[%s271 + $0x10] sm:$0xf] %vm531, %v515
      %537 = vst.msk [vmem:[%s271 + $0x14] sm:$0xf] %vm531, %v516
      %538 = vst.msk [vmem:[%s271 + $0x18] sm:$0xf] %vm531, %v517
      %539 = vst.msk [vmem:[%s271 + $0x1c] sm:$0xf] %vm531, %v518
      %540 = vst.msk [vmem:[%s271 + $0x20] sm:$0xf] %vm531, %v519
      %541 = vst.msk [vmem:[%s271 + $0x24] sm:$0xf] %vm531, %v520
      %s542 = smul.u32 10, %s20
      %p543 = scmp.lt.s32.totalorder %s19, 1
      %s544 = scalar_select %p543, %s19, 1
      %p545 = scmp.lt.s32.totalorder %s542, 9
      %s546 = scalar_select %p545, %s542, 9
      %s547 = smul.addr %s544, 10
      %s548 = sadd.s32 %s546, %s547
      %s549 = smul.addr %s548, 4
      %s550 = scalar_lea.vmem %s4, %s549
      // Predicated region
      $region37: #{decoder_layer_forward.4} parent=35 // pred_check
        %p551 = pneg %p145
      $region38: #{decoder_layer_forward.4} parent=35 // pred_check_branch
        %553 = sbr.rel (%p551) target = $region40
      $region39: #{decoder_layer_forward.4} parent=35 // pred_region
        %s554 = smul.u32 10, %s20
      $region40: #{decoder_layer_forward.4} parent=35 // pred_fallthru
        _
    $region36: #{decoder_layer_forward.4} parent=5 // pred_fallthru
      _
    %p555 = scmp.le.s32.totalorder 2, %s10
    // Predicated region
    $region41: #{decoder_layer_forward.4} parent=5 // pred_check
      %p556 = pneg %p555
    $region42: #{decoder_layer_forward.4} parent=5 // pred_check_branch
      %558 = sbr.rel (%p556) target = $region44
    $region43: #{decoder_layer_forward.4} parent=5 // pred_region
      %s559 = ssub.s32 %s10, 2
      // Predicated region
      $region45: #{decoder_layer_forward.4} parent=43 // pred_check
        %p560 = pneg %p151
      $region46: #{decoder_layer_forward.4} parent=43 // pred_check_branch
        %562 = sbr.rel (%p560) target = $region48
      $region47: #{decoder_layer_forward.4} parent=43 // pred_region
        %s563 = smul.u32 10, %s22
        %p564 = scmp.lt.s32.totalorder %s21, 1
        %s565 = scalar_select %p564, %s21, 1
        %p566 = scmp.lt.s32.totalorder %s563, 9
        %s567 = scalar_select %p566, %s563, 9
        %s568 = smul.addr %s565, 10
        %s569 = sadd.s32 %s567, %s568
        %s570 = smul.addr %s569, 4
        %s571 = scalar_lea.vmem %s4, %s570
      $region48: #{decoder_layer_forward.4} parent=43 // pred_fallthru
        _
    $region44: #{decoder_layer_forward.4} parent=5 // pred_fallthru
      _
  $region6: #{decoder_layer_forward.4} parent=0 // loop_footer
    %s14 = sadd.s32 1, %s10
  $region7: #{decoder_layer_forward.4} parent=0 // loop_footer_branch
    %9 = sbr.rel target = $region3
  $region8: #{decoder_layer_forward.4} parent=0 // loop_exit
    _

// kernel: decoder_layer_forward.3
$region0: #{decoder_layer_forward.3}
  #allocation0 [shape = 'u32[]', space=smem, size = 0x4, offset = 0x4, fixed_abs, tag = 'smem constant byte address 0x4 - core index']
  #allocation1 [shape = 'u32[144,128]{1,0:T(1,128)}', space=vmem, size = 0x12000, scoped, tag = 'internal scratch']
  %s0 = inlined_call_operand.vmem [shape: bf16[2,12,32], index: 0, kind: input, shape index: {}]
  %s1 = inlined_call_operand.vmem [shape: f32[2,12,32], index: 1, kind: input, shape index: {}]
  %s2 = inlined_call_operand.vmem [shape: bf16[32,64], index: 2, kind: input, shape index: {}]
  %s3 = inlined_call_operand.vmem [shape: f32[1,64], index: 3, kind: input, shape index: {}]
  %s4 = inlined_call_operand.vmem [shape: bf16[32,32], index: 4, kind: input, shape index: {}]
  %s5 = inlined_call_operand.vmem [shape: f32[1,32], index: 5, kind: input, shape index: {}]
  %s6 = inlined_call_operand.vmem [shape: bf16[32,32], index: 6, kind: input, shape index: {}]
  %s7 = inlined_call_operand.vmem [shape: f32[1,32], index: 7, kind: input, shape index: {}]
  %s8 = inlined_call_operand.vmem [shape: f32[1,32], index: 8, kind: input, shape index: {}]
  %s9 = inlined_call_operand.vmem [shape: f32[1,32], index: 9, kind: input, shape index: {}]
  %s10 = inlined_call_operand.vmem [shape: f32[2,8,32], index: 10, kind: output, shape index: {0}]
  %s11 = inlined_call_operand.vmem [shape: f32[2,4,32], index: 11, kind: output, shape index: {1}]
  %12 = xla_tuple %s10, %s11
  %s13 = sld [smem:[#allocation0]]
  $region81: #{decoder_layer_forward.3} parent=0
    _
  %s15 = ssub.s32 1, %s13
  %s16 = scalar_select 0, %s15, %s13
  loop: start=0, step=1, limit=4
  $region2: #{decoder_layer_forward.3} parent=0 // loop_pre_header
    _
  $region3: #{decoder_layer_forward.3} parent=0 // loop_header
    %s18 = sphi 0, %s22
    %p19 = scmp.ge.s32.totalorder %s18, 4
    %s28 = sphi 0, %s30
    %s31 = sphi 0, %s28
    %s32 = sphi 0, %s31
    %s48 = sphi 0, %s32
    %s54 = sphi 0, %s56
    %s57 = sphi 0, %s54
    %s58 = sphi 0, %s57
    %s74 = sphi 0, %s58
    %s78 = sphi 0, %s78
    %s80 = sphi 0, %s78
    %s81 = sphi 0, %s80
    %s95 = sphi 0, %s81
    %s99 = sphi 0, %s99
    %s101 = sphi 0, %s99
    %s102 = sphi 0, %s101
    %s116 = sphi 0, %s102
    %s120 = sphi 0, %s120
    %s122 = sphi 0, %s120
    %s123 = sphi 0, %s122
    %s137 = sphi 0, %s123
    %s141 = sphi 0, %s141
    %s143 = sphi 0, %s141
    %s144 = sphi 0, %s143
    %s158 = sphi 0, %s144
    %s162 = sphi 0, %s162
    %s164 = sphi 0, %s162
    %s165 = sphi 0, %s164
    %s179 = sphi 0, %s165
    %s183 = sphi 0, %s183
    %s185 = sphi 0, %s183
    %s186 = sphi 0, %s185
    %s200 = sphi 0, %s186
    %s204 = sphi 0, %s204
    %s206 = sphi 0, %s204
    %s207 = sphi 0, %s206
    %s221 = sphi 0, %s207
    %s225 = sphi 0, %s225
    %s227 = sphi 0, %s225
    %s228 = sphi 0, %s227
    %s242 = sphi 0, %s228
    %s248 = sphi 0, %s250
    %s251 = sphi 0, %s248
    %s252 = sphi 0, %s251
    %s268 = sphi 0, %s252
    %s274 = sphi 0, %s276
    %s277 = sphi 0, %s274
    %s278 = sphi 0, %s277
    %s294 = sphi 0, %s278
  $region4: #{decoder_layer_forward.3} parent=0 // loop_header_branch
    %21 = sbr.rel (%p19) target = $region8
  $region5: #{decoder_layer_forward.3} parent=0 // loop_body
    %s23 = ssub.s32 %s18, 1
    %s24 = ssub.s32 %s18, 2
    %s25 = sadd.s32 %s18, 1
    %s26 = ssub.s32 %s18, %s25
    %p27 = scmp.eq.s32.totalorder %s26, 0
    %s29 = sadd.s32 %s28, 1
    %s30 = scalar_select %p27, %s28, %s29
    %p33 = pneg %p27
    %p34 = scmp.eq.s32.totalorder %s18, 1
    %p35 = por %p33, %p34
    %p36 = scmp.ne.s32.totalorder %s28, %s31
    %p37 = scmp.eq.s32.totalorder %s18, 0
    %p38 = por %p36, %p37
    %p39 = scmp.ne.s32.totalorder %s28, %s31
    %p40 = scmp.eq.s32.totalorder %s23, 1
    %p41 = por %p39, %p40
    %p42 = scmp.ne.s32.totalorder %s31, %s32
    %p43 = scmp.eq.s32.totalorder %s23, 0
    %p44 = por %p42, %p43
    %p45 = scmp.ne.s32.totalorder %s31, %s32
    %p46 = scmp.eq.s32.totalorder %s24, 1
    %p47 = por %p45, %p46
    %p49 = scmp.ne.s32.totalorder %s32, %s48
    %p50 = scmp.eq.s32.totalorder %s24, 0
    %p51 = por %p49, %p50
    %s52 = ssub.s32 %s18, %s25
    %p53 = scmp.eq.s32.totalorder %s52, 0
    %s55 = sadd.s32 %s54, 1
    %s56 = scalar_select %p53, %s54, %s55
    %p59 = pneg %p53
    %p60 = scmp.eq.s32.totalorder %s18, 1
    %p61 = por %p59, %p60
    %p62 = scmp.ne.s32.totalorder %s54, %s57
    %p63 = scmp.eq.s32.totalorder %s18, 0
    %p64 = por %p62, %p63
    %p65 = scmp.ne.s32.totalorder %s54, %s57
    %p66 = scmp.eq.s32.totalorder %s23, 1
    %p67 = por %p65, %p66
    %p68 = scmp.ne.s32.totalorder %s57, %s58
    %p69 = scmp.eq.s32.totalorder %s23, 0
    %p70 = por %p68, %p69
    %p71 = scmp.ne.s32.totalorder %s57, %s58
    %p72 = scmp.eq.s32.totalorder %s24, 1
    %p73 = por %p71, %p72
    %p75 = scmp.ne.s32.totalorder %s58, %s74
    %p76 = scmp.eq.s32.totalorder %s24, 0
    %p77 = por %p75, %p76
    %s79 = sadd.s32 %s78, 1
    %p82 = scmp.eq.s32.totalorder %s18, 1
    %p83 = scmp.ne.s32.totalorder %s78, %s80
    %p84 = scmp.eq.s32.totalorder %s18, 0
    %p85 = por %p83, %p84
    %p86 = scmp.ne.s32.totalorder %s78, %s80
    %p87 = scmp.eq.s32.totalorder %s23, 1
    %p88 = por %p86, %p87
    %p89 = scmp.ne.s32.totalorder %s80, %s81
    %p90 = scmp.eq.s32.totalorder %s23, 0
    %p91 = por %p89, %p90
    %p92 = scmp.ne.s32.totalorder %s80, %s81
    %p93 = scmp.eq.s32.totalorder %s24, 1
    %p94 = por %p92, %p93
    %p96 = scmp.ne.s32.totalorder %s81, %s95
    %p97 = scmp.eq.s32.totalorder %s24, 0
    %p98 = por %p96, %p97
    %s100 = sadd.s32 %s99, 1
    %p103 = scmp.eq.s32.totalorder %s18, 1
    %p104 = scmp.ne.s32.totalorder %s99, %s101
    %p105 = scmp.eq.s32.totalorder %s18, 0
    %p106 = por %p104, %p105
    %p107 = scmp.ne.s32.totalorder %s99, %s101
    %p108 = scmp.eq.s32.totalorder %s23, 1
    %p109 = por %p107, %p108
    %p110 = scmp.ne.s32.totalorder %s101, %s102
    %p111 = scmp.eq.s32.totalorder %s23, 0
    %p112 = por %p110, %p111
    %p113 = scmp.ne.s32.totalorder %s101, %s102
    %p114 = scmp.eq.s32.totalorder %s24, 1
    %p115 = por %p113, %p114
    %p117 = scmp.ne.s32.totalorder %s102, %s116
    %p118 = scmp.eq.s32.totalorder %s24, 0
    %p119 = por %p117, %p118
    %s121 = sadd.s32 %s120, 1
    %p124 = scmp.eq.s32.totalorder %s18, 1
    %p125 = scmp.ne.s32.totalorder %s120, %s122
    %p126 = scmp.eq.s32.totalorder %s18, 0
    %p127 = por %p125, %p126
    %p128 = scmp.ne.s32.totalorder %s120, %s122
    %p129 = scmp.eq.s32.totalorder %s23, 1
    %p130 = por %p128, %p129
    %p131 = scmp.ne.s32.totalorder %s122, %s123
    %p132 = scmp.eq.s32.totalorder %s23, 0
    %p133 = por %p131, %p132
    %p134 = scmp.ne.s32.totalorder %s122, %s123
    %p135 = scmp.eq.s32.totalorder %s24, 1
    %p136 = por %p134, %p135
    %p138 = scmp.ne.s32.totalorder %s123, %s137
    %p139 = scmp.eq.s32.totalorder %s24, 0
    %p140 = por %p138, %p139
    %s142 = sadd.s32 %s141, 1
    %p145 = scmp.eq.s32.totalorder %s18, 1
    %p146 = scmp.ne.s32.totalorder %s141, %s143
    %p147 = scmp.eq.s32.totalorder %s18, 0
    %p148 = por %p146, %p147
    %p149 = scmp.ne.s32.totalorder %s141, %s143
    %p150 = scmp.eq.s32.totalorder %s23, 1
    %p151 = por %p149, %p150
    %p152 = scmp.ne.s32.totalorder %s143, %s144
    %p153 = scmp.eq.s32.totalorder %s23, 0
    %p154 = por %p152, %p153
    %p155 = scmp.ne.s32.totalorder %s143, %s144
    %p156 = scmp.eq.s32.totalorder %s24, 1
    %p157 = por %p155, %p156
    %p159 = scmp.ne.s32.totalorder %s144, %s158
    %p160 = scmp.eq.s32.totalorder %s24, 0
    %p161 = por %p159, %p160
    %s163 = sadd.s32 %s162, 1
    %p166 = scmp.eq.s32.totalorder %s18, 1
    %p167 = scmp.ne.s32.totalorder %s162, %s164
    %p168 = scmp.eq.s32.totalorder %s18, 0
    %p169 = por %p167, %p168
    %p170 = scmp.ne.s32.totalorder %s162, %s164
    %p171 = scmp.eq.s32.totalorder %s23, 1
    %p172 = por %p170, %p171
    %p173 = scmp.ne.s32.totalorder %s164, %s165
    %p174 = scmp.eq.s32.totalorder %s23, 0
    %p175 = por %p173, %p174
    %p176 = scmp.ne.s32.totalorder %s164, %s165
    %p177 = scmp.eq.s32.totalorder %s24, 1
    %p178 = por %p176, %p177
    %p180 = scmp.ne.s32.totalorder %s165, %s179
    %p181 = scmp.eq.s32.totalorder %s24, 0
    %p182 = por %p180, %p181
    %s184 = sadd.s32 %s183, 1
    %p187 = scmp.eq.s32.totalorder %s18, 1
    %p188 = scmp.ne.s32.totalorder %s183, %s185
    %p189 = scmp.eq.s32.totalorder %s18, 0
    %p190 = por %p188, %p189
    %p191 = scmp.ne.s32.totalorder %s183, %s185
    %p192 = scmp.eq.s32.totalorder %s23, 1
    %p193 = por %p191, %p192
    %p194 = scmp.ne.s32.totalorder %s185, %s186
    %p195 = scmp.eq.s32.totalorder %s23, 0
    %p196 = por %p194, %p195
    %p197 = scmp.ne.s32.totalorder %s185, %s186
    %p198 = scmp.eq.s32.totalorder %s24, 1
    %p199 = por %p197, %p198
    %p201 = scmp.ne.s32.totalorder %s186, %s200
    %p202 = scmp.eq.s32.totalorder %s24, 0
    %p203 = por %p201, %p202
    %s205 = sadd.s32 %s204, 1
    %p208 = scmp.eq.s32.totalorder %s18, 1
    %p209 = scmp.ne.s32.totalorder %s204, %s206
    %p210 = scmp.eq.s32.totalorder %s18, 0
    %p211 = por %p209, %p210
    %p212 = scmp.ne.s32.totalorder %s204, %s206
    %p213 = scmp.eq.s32.totalorder %s23, 1
    %p214 = por %p212, %p213
    %p215 = scmp.ne.s32.totalorder %s206, %s207
    %p216 = scmp.eq.s32.totalorder %s23, 0
    %p217 = por %p215, %p216
    %p218 = scmp.ne.s32.totalorder %s206, %s207
    %p219 = scmp.eq.s32.totalorder %s24, 1
    %p220 = por %p218, %p219
    %p222 = scmp.ne.s32.totalorder %s207, %s221
    %p223 = scmp.eq.s32.totalorder %s24, 0
    %p224 = por %p222, %p223
    %s226 = sadd.s32 %s225, 1
    %p229 = scmp.eq.s32.totalorder %s18, 1
    %p230 = scmp.ne.s32.totalorder %s225, %s227
    %p231 = scmp.eq.s32.totalorder %s18, 0
    %p232 = por %p230, %p231
    %p233 = scmp.ne.s32.totalorder %s225, %s227
    %p234 = scmp.eq.s32.totalorder %s23, 1
    %p235 = por %p233, %p234
    %p236 = scmp.ne.s32.totalorder %s227, %s228
    %p237 = scmp.eq.s32.totalorder %s23, 0
    %p238 = por %p236, %p237
    %p239 = scmp.ne.s32.totalorder %s227, %s228
    %p240 = scmp.eq.s32.totalorder %s24, 1
    %p241 = por %p239, %p240
    %p243 = scmp.ne.s32.totalorder %s228, %s242
    %p244 = scmp.eq.s32.totalorder %s24, 0
    %p245 = por %p243, %p244
    %s246 = ssub.s32 %s18, %s25
    %p247 = scmp.eq.s32.totalorder %s246, 0
    %s249 = sadd.s32 %s248, 1
    %s250 = scalar_select %p247, %s248, %s249
    %p253 = pneg %p247
    %p254 = scmp.eq.s32.totalorder %s18, 1
    %p255 = por %p253, %p254
    %p256 = scmp.ne.s32.totalorder %s248, %s251
    %p257 = scmp.eq.s32.totalorder %s18, 0
    %p258 = por %p256, %p257
    %p259 = scmp.ne.s32.totalorder %s248, %s251
    %p260 = scmp.eq.s32.totalorder %s23, 1
    %p261 = por %p259, %p260
    %p262 = scmp.ne.s32.totalorder %s251, %s252
    %p263 = scmp.eq.s32.totalorder %s23, 0
    %p264 = por %p262, %p263
    %p265 = scmp.ne.s32.totalorder %s251, %s252
    %p266 = scmp.eq.s32.totalorder %s24, 1
    %p267 = por %p265, %p266
    %p269 = scmp.ne.s32.totalorder %s252, %s268
    %p270 = scmp.eq.s32.totalorder %s24, 0
    %p271 = por %p269, %p270
    %s272 = ssub.s32 %s18, %s25
    %p273 = scmp.eq.s32.totalorder %s272, 0
    %s275 = sadd.s32 %s274, 1
    %s276 = scalar_select %p273, %s274, %s275
    %p279 = pneg %p273
    %p280 = scmp.eq.s32.totalorder %s18, 1
    %p281 = por %p279, %p280
    %p282 = scmp.ne.s32.totalorder %s274, %s277
    %p283 = scmp.eq.s32.totalorder %s18, 0
    %p284 = por %p282, %p283
    %p285 = scmp.ne.s32.totalorder %s274, %s277
    %p286 = scmp.eq.s32.totalorder %s23, 1
    %p287 = por %p285, %p286
    %p288 = scmp.ne.s32.totalorder %s277, %s278
    %p289 = scmp.eq.s32.totalorder %s23, 0
    %p290 = por %p288, %p289
    %p291 = scmp.ne.s32.totalorder %s277, %s278
    %p292 = scmp.eq.s32.totalorder %s24, 1
    %p293 = por %p291, %p292
    %p295 = scmp.ne.s32.totalorder %s278, %s294
    %p296 = scmp.eq.s32.totalorder %s24, 0
    %p297 = por %p295, %p296
    %p298 = scmp.le.s32.totalorder 1, %s18
    %p299 = scmp.lt.s32.totalorder %s18, 3
    %p300 = pnand %p298, %p299
    %p301 = pneg %p300
    // Predicated region
    $region9: #{decoder_layer_forward.3} parent=5 // pred_check
      _
    $region10: #{decoder_layer_forward.3} parent=5 // pred_check_branch
      %303 = sbr.rel (%p300) target = $region12
    $region11: #{decoder_layer_forward.3} parent=5 // pred_region
      %s304 = ssub.s32 %s18, 1
      // Predicated region
      $region13: #{decoder_layer_forward.3} parent=11 // pred_check
        %p305 = pneg %p91
      $region14: #{decoder_layer_forward.3} parent=11 // pred_check_branch
        %307 = sbr.rel (%p305) target = $region16
      $region15: #{decoder_layer_forward.3} parent=11 // pred_region
        _
      $region16: #{decoder_layer_forward.3} parent=11 // pred_fallthru
        _
      // Predicated region
      $region17: #{decoder_layer_forward.3} parent=11 // pred_check
        %p308 = pneg %p112
      $region18: #{decoder_layer_forward.3} parent=11 // pred_check_branch
        %310 = sbr.rel (%p308) target = $region20
      $region19: #{decoder_layer_forward.3} parent=11 // pred_region
        _
      $region20: #{decoder_layer_forward.3} parent=11 // pred_fallthru
        _
      // Predicated region
      $region21: #{decoder_layer_forward.3} parent=11 // pred_check
        %p311 = pneg %p133
      $region22: #{decoder_layer_forward.3} parent=11 // pred_check_branch
        %313 = sbr.rel (%p311) target = $region24
      $region23: #{decoder_layer_forward.3} parent=11 // pred_region
        _
      $region24: #{decoder_layer_forward.3} parent=11 // pred_fallthru
        _
      // Predicated region
      $region25: #{decoder_layer_forward.3} parent=11 // pred_check
        %p314 = pneg %p154
      $region26: #{decoder_layer_forward.3} parent=11 // pred_check_branch
        %316 = sbr.rel (%p314) target = $region28
      $region27: #{decoder_layer_forward.3} parent=11 // pred_region
        _
      $region28: #{decoder_layer_forward.3} parent=11 // pred_fallthru
        _
      // Predicated region
      $region29: #{decoder_layer_forward.3} parent=11 // pred_check
        %p317 = pneg %p175
      $region30: #{decoder_layer_forward.3} parent=11 // pred_check_branch
        %319 = sbr.rel (%p317) target = $region32
      $region31: #{decoder_layer_forward.3} parent=11 // pred_region
        _
      $region32: #{decoder_layer_forward.3} parent=11 // pred_fallthru
        _
      // Predicated region
      $region33: #{decoder_layer_forward.3} parent=11 // pred_check
        %p320 = pneg %p196
      $region34: #{decoder_layer_forward.3} parent=11 // pred_check_branch
        %322 = sbr.rel (%p320) target = $region36
      $region35: #{decoder_layer_forward.3} parent=11 // pred_region
        _
      $region36: #{decoder_layer_forward.3} parent=11 // pred_fallthru
        _
      // Predicated region
      $region37: #{decoder_layer_forward.3} parent=11 // pred_check
        %p323 = pneg %p217
      $region38: #{decoder_layer_forward.3} parent=11 // pred_check_branch
        %325 = sbr.rel (%p323) target = $region40
      $region39: #{decoder_layer_forward.3} parent=11 // pred_region
        _
      $region40: #{decoder_layer_forward.3} parent=11 // pred_fallthru
        _
      // Predicated region
      $region41: #{decoder_layer_forward.3} parent=11 // pred_check
        %p326 = pneg %p238
      $region42: #{decoder_layer_forward.3} parent=11 // pred_check_branch
        %328 = sbr.rel (%p326) target = $region44
      $region43: #{decoder_layer_forward.3} parent=11 // pred_region
        _
      $region44: #{decoder_layer_forward.3} parent=11 // pred_fallthru
        _
    $region12: #{decoder_layer_forward.3} parent=5 // pred_fallthru
      _
    %p329 = scmp.lt.s32.totalorder %s18, 2
    // Predicated region
    $region45: #{decoder_layer_forward.3} parent=5 // pred_check
      %p330 = pneg %p329
    $region46: #{decoder_layer_forward.3} parent=5 // pred_check_branch
      %332 = sbr.rel (%p330) target = $region48
    $region47: #{decoder_layer_forward.3} parent=5 // pred_region
      // Predicated region
      $region49: #{decoder_layer_forward.3} parent=47 // pred_check
        %p333 = pneg %p38
      $region50: #{decoder_layer_forward.3} parent=47 // pred_check_branch
        %335 = sbr.rel (%p333) target = $region52
      $region51: #{decoder_layer_forward.3} parent=47 // pred_region
        %p336 = scmp.lt.s32.totalorder %s18, 1
        %s337 = scalar_select %p336, %s18, 1
        %s338 = smul.addr %s337, 2
        %s339 = smul.addr %s338, 4
        %s340 = scalar_lea.vmem %s0, %s339
      $region52: #{decoder_layer_forward.3} parent=47 // pred_fallthru
        _
      // Predicated region
      $region53: #{decoder_layer_forward.3} parent=47 // pred_check
        %p341 = pneg %p64
      $region54: #{decoder_layer_forward.3} parent=47 // pred_check_branch
        %343 = sbr.rel (%p341) target = $region56
      $region55: #{decoder_layer_forward.3} parent=47 // pred_region
        %p344 = scmp.lt.s32.totalorder %s18, 1
        %s345 = scalar_select %p344, %s18, 1
        %s346 = smul.addr %s345, 2
        %s347 = smul.addr %s346, 8
        %s348 = scalar_lea.vmem %s1, %s347
      $region56: #{decoder_layer_forward.3} parent=47 // pred_fallthru
        _
    $region48: #{decoder_layer_forward.3} parent=5 // pred_fallthru
      _
    %p349 = scmp.le.s32.totalorder 1, %s18
    %p350 = scmp.lt.s32.totalorder %s18, 3
    %p351 = pnand %p349, %p350
    %p352 = pneg %p351
    // Predicated region
    $region57: #{decoder_layer_forward.3} parent=5 // pred_check
      _
    $region58: #{decoder_layer_forward.3} parent=5 // pred_check_branch
      %354 = sbr.rel (%p351) target = $region60
    $region59: #{decoder_layer_forward.3} parent=5 // pred_region
      %s355 = ssub.s32 %s18, 1
      %p356 = scmp.lt.s32.totalorder %s23, 1
      %s357 = scalar_select %p356, %s23, 1
      %s358 = smul.addr %s357, 2
      %s359 = smul.addr %s358, 4
      %s360 = scalar_lea.vmem %s0, %s359
      %p361 = pneg %p44
      %p362 = pneg %p41
      %p363 = scmp.lt.s32.totalorder %s23, 1
      %s364 = scalar_select %p363, %s23, 1
      %s365 = smul.addr %s364, 2
      %s366 = smul.addr %s365, 8
      %s367 = scalar_lea.vmem %s1, %s366
      %p368 = pneg %p70
      %p369 = pneg %p67
      %p370 = pneg %p91
      %p371 = pneg %p88
      %p372 = pneg %p112
      %p373 = pneg %p109
      %p374 = pneg %p133
      %p375 = pneg %p130
      %p376 = pneg %p154
      %p377 = pneg %p151
      %p378 = pneg %p175
      %p379 = pneg %p172
      %p380 = pneg %p196
      %p381 = pneg %p193
      %p382 = pneg %p217
      %p383 = pneg %p214
      %p384 = pneg %p238
      %p385 = pneg %p235
      %p386 = pneg %p264
      %p387 = pneg %p261
      %p388 = scmp.lt.s32.totalorder %s23, 1
      %s389 = scalar_select %p388, %s23, 1
      %s390 = smul.addr %s389, 8
      %s391 = scalar_lea.vmem %s10, %s390
      %p392 = pneg %p290
      %p393 = pneg %p287
      %p394 = scmp.lt.s32.totalorder %s23, 1
      %s395 = scalar_select %p394, %s23, 1
      %s396 = smul.addr %s395, 4
      %s397 = scalar_lea.vmem %s11, %s396
      %p398 = scmp.lt.s32.totalorder %s23, 1
      %s399 = scalar_select %p398, %s23, 1
      %s400 = smul.addr %s399, 2
      %s401 = smul.addr %s400, 4
      %s402 = scalar_lea.vmem %s0, %s401
      %p403 = scmp.lt.s32.totalorder %s23, 1
      %s404 = scalar_select %p403, %s23, 1
      %s405 = smul.addr %s404, 2
      %s406 = smul.addr %s405, 8
      %s407 = scalar_lea.vmem %s1, %s406
      %p408 = scmp.lt.s32.totalorder %s23, 1
      %s409 = scalar_select %p408, %s23, 1
      %s410 = smul.addr %s409, 8
      %s411 = scalar_lea.vmem %s10, %s410
      %p412 = scmp.lt.s32.totalorder %s23, 1
      %s413 = scalar_select %p412, %s23, 1
      %s414 = smul.addr %s413, 4
      %s415 = scalar_lea.vmem %s11, %s414
      %v417 = vld [vmem:[%s402] sm:$0xf]
      %v418 = vld [vmem:[%s402 + $0x4] sm:$0x3]
      %v419 = vld [vmem:[%s407] sm:$0xff]
      %v420 = vld [vmem:[%s407 + $0x8] sm:$0xf]
      %v421 = vld [vmem:[%s2] sm:$0xf]
      %v422 = vld [vmem:[%s2 + $0x4] sm:$0xf]
      %v423 = vld [vmem:[%s2 + $0x8] sm:$0xf]
      %v424 = vld [vmem:[%s2 + $0xc] sm:$0xf]
      %v425 = vld [vmem:[%s3] sm:$0x1]
      %v427 = vlaneseq
      %v428 = vshrl.u32 %v427, 7
      %v429 = vsub.s32 0, %v428
      %v430 = vrot.slane %v425, %v429
      %v434 = vunpack.c.l.b16 %v417
      %v435 = vunpack.c.l.b16 %v418
      %v436 = vpack.c.b16 %v435, %v434
      %v441 = vunpack.c.l.b16 %v421
      %v442 = vunpack.c.l.b16 %v422
      %v443 = vunpack.c.l.b16 %v423
      %v444 = vunpack.c.l.b16 %v424
      %v445 = vpack.c.b16 %v442, %v441
      %v446 = vpack.c.b16 %v444, %v443
      %vm449 = vcmask 261120
      %v451 = vsel %vm449, %v436, 0
      %453 = vmatprep.subr.bf16.mxu0 0
      %454 = vmatpush1.bf16.msra.mxu0 %v445
      %455 = vmatprep.subr.bf16.mxu0 0
      %456 = vmatpush1.bf16.msra.mxu0 %v446
      %457 = vmatprep.subr.bf16.mxu0 0
      %458 = vmatpush1.bf16.msra.mxu0 0
      %459 = vmatprep.subr.bf16.mxu0 0
      %460 = vmatpush1.bf16.msra.mxu0 0
      %461 = vmatprep.subr.bf16.mxu0 0
      %462 = vmatpush1.bf16.msra.mxu0 0
      %463 = vmatprep.subr.bf16.mxu0 0
      %464 = vmatpush1.bf16.msra.mxu0 0
      %465 = vmatprep.subr.bf16.mxu0 0
      %466 = vmatpush1.bf16.msra.mxu0 0
      %467 = vmatprep.subr.bf16.mxu0 0
      %468 = vmatpush1.bf16.msra.mxu0 0
      %469 = vmatprep.subr.bf16.mxu0 0
      %470 = vmatpush1.bf16.msra.mxu0 0
      %471 = vmatprep.subr.bf16.mxu0 0
      %472 = vmatpush1.bf16.msra.mxu0 0
      %473 = vmatprep.subr.bf16.mxu0 0
      %474 = vmatpush1.bf16.msra.mxu0 0
      %475 = vmatprep.subr.bf16.mxu0 0
      %476 = vmatpush1.bf16.msra.mxu0 0
      %477 = vmatprep.subr.bf16.mxu0 0
      %478 = vmatpush1.bf16.msra.mxu0 0
      %479 = vmatprep.subr.bf16.mxu0 0
      %480 = vmatpush1.bf16.msra.mxu0 0
      %481 = vmatprep.subr.bf16.mxu0 0
      %482 = vmatpush1.bf16.msra.mxu0 0
      %483 = vmatprep.subr.bf16.mxu0 0
      %484 = vmatpush1.bf16.msra.mxu0 0
      %485 = vmatprep.mubr.bf16.mxu0 0
      %486 = vmatmul.mubr.bf16.gmra.mrb[0].mxu0 %v451
      %v487 = vpop.f32.mrb[0].mxu0
      %v488 = vadd.f32 %v430, %v487
      %v489 = vpop.f32.mrb[0].mxu0
      %v490 = vpop.f32.mrb[0].mxu0
      %v491 = vadd.f32 %v430, %v490
      %v492 = vpop.f32.mrb[0].mxu0
      %493 = vdwg.mxu0
      %v494 = vpack.c.bf16 %v420, %v419
      %v495 = vld [vmem:[%s4] sm:$0xf]
      %v496 = vld [vmem:[%s4 + $0x4] sm:$0xf]
      %v497 = vld [vmem:[%s4 + $0x8] sm:$0xf]
      %v498 = vld [vmem:[%s4 + $0xc] sm:$0xf]
      %v499 = vld [vmem:[%s5] sm:$0x1]
      %v501 = vlaneseq
      %v502 = vshrl.u32 %v501, 7
      %v503 = vsub.s32 0, %v502
      %v504 = vrot.slane %v499, %v503
      %v510 = vunpack.c.l.b16 %v495
      %v511 = vunpack.c.l.b16 %v496
      %v512 = vunpack.c.l.b16 %v497
      %v513 = vunpack.c.l.b16 %v498
      %v514 = vpack.c.b16 %v511, %v510
      %v515 = vpack.c.b16 %v513, %v512
      %v519 = vsel %vm449, %v494, 0
      %521 = vmatprep.subr.bf16.mxu0 0
      %522 = vmatpush1.bf16.msra.mxu0 %v514
      %523 = vmatprep.subr.bf16.mxu0 0
      %524 = vmatpush1.bf16.msra.mxu0 %v515
      %525 = vmatprep.subr.bf16.mxu0 0
      %526 = vmatpush1.bf16.msra.mxu0 0
      %527 = vmatprep.subr.bf16.mxu0 0
      %528 = vmatpush1.bf16.msra.mxu0 0
      %529 = vmatprep.subr.bf16.mxu0 0
      %530 = vmatpush1.bf16.msra.mxu0 0
      %531 = vmatprep.subr.bf16.mxu0 0
      %532 = vmatpush1.bf16.msra.mxu0 0
      %533 = vmatprep.subr.bf16.mxu0 0
      %534 = vmatpush1.bf16.msra.mxu0 0
      %535 = vmatprep.subr.bf16.mxu0 0
      %536 = vmatpush1.bf16.msra.mxu0 0
      %537 = vmatprep.subr.bf16.mxu0 0
      %538 = vmatpush1.bf16.msra.mxu0 0
      %539 = vmatprep.subr.bf16.mxu0 0
      %540 = vmatpush1.bf16.msra.mxu0 0
      %541 = vmatprep.subr.bf16.mxu0 0
      %542 = vmatpush1.bf16.msra.mxu0 0
      %543 = vmatprep.subr.bf16.mxu0 0
      %544 = vmatpush1.bf16.msra.mxu0 0
      %545 = vmatprep.subr.bf16.mxu0 0
      %546 = vmatpush1.bf16.msra.mxu0 0
      %547 = vmatprep.subr.bf16.mxu0 0
      %548 = vmatpush1.bf16.msra.mxu0 0
      %549 = vmatprep.subr.bf16.mxu0 0
      %550 = vmatpush1.bf16.msra.mxu0 0
      %551 = vmatprep.subr.bf16.mxu0 0
      %552 = vmatpush1.bf16.msra.mxu0 0
      %553 = vmatprep.mubr.bf16.mxu0 0
      %554 = vmatmul.mubr.bf16.gmra.mrb[0].mxu0 %v519
      %v555 = vpop.f32.mrb[0].mxu0
      %v556 = vadd.f32 %v504, %v555
      %v557 = vpop.f32.mrb[0].mxu0
      %v558 = vpop.f32.mrb[0].mxu0
      %v559 = vadd.f32 %v504, %v558
      %v560 = vpop.f32.mrb[0].mxu0
      %561 = vdwg.mxu0
      %v562 = vpack.c.bf16 %v491, %v488
      %564 = vrot.lane.b32.xlu0 %v562, 120
      %v565 = vpop.permute.xlu0 %564
      %567 = vrot.lane.b32.xlu0 %v562, 112
      %v568 = vpop.permute.xlu0 %567
      %570 = vrot.lane.b32.xlu0 %v562, 104
      %v571 = vpop.permute.xlu0 %570
      %v574 = vunpack.c.l.s4 1983009808
      %v575 = vunpack.c.0.s8 %v574
      %v576 = vlaneseq
      %v577 = vshrl.u32 %v576, 7
      %v578 = vsub.s32 %v575, %v577
      %v579 = vrot.slane %v562, %v578
      %v580 = vcombine.high %v562, 0
      %v582 = vunpack.c.l.s4 1983009808
      %v583 = vunpack.c.0.s8 %v582
      %v584 = vlaneseq
      %v585 = vshrl.u32 %v584, 7
      %v586 = vsub.s32 %v583, %v585
      %v587 = vrot.slane %v568, %v586
      %v588 = vcombine.high %v568, 0
      %v589 = vcombine.low %v579, %v587
      %v590 = vcombine.high %v579, %v587
      %v592 = vunpack.c.l.s4 1934713408
      %v593 = vunpack.c.0.s8 %v592
      %v594 = vlaneseq
      %v595 = vshrl.u32 %v594, 7
      %v596 = vsub.s32 %v593, %v595
      %v597 = vrot.slane %v589, %v596
      %v599 = vunpack.c.l.s4 1934713408
      %v600 = vunpack.c.0.s8 %v599
      %v601 = vlaneseq
      %v602 = vshrl.u32 %v601, 7
      %v603 = vsub.s32 %v600, %v602
      %v604 = vrot.slane %v590, %v603
      %v605 = vcombine.low %v580, %v588
      %v607 = vunpack.c.l.s4 1934713408
      %v608 = vunpack.c.0.s8 %v607
      %v609 = vlaneseq
      %v610 = vshrl.u32 %v609, 7
      %v611 = vsub.s32 %v608, %v610
      %v612 = vrot.slane %v605, %v611
      %v613 = vcombine.high %v597, 0
      %v614 = vcombine.high %v604, 0
      %v615 = vcombine.high %v612, 0
      %v617 = vunpack.c.l.s4 1983009808
      %v618 = vunpack.c.0.s8 %v617
      %v619 = vlaneseq
      %v620 = vshrl.u32 %v619, 7
      %v621 = vsub.s32 %v618, %v620
      %v622 = vrot.slane %v565, %v621
      %v623 = vcombine.high %v565, 0
      %v625 = vunpack.c.l.s4 1983009808
      %v626 = vunpack.c.0.s8 %v625
      %v627 = vlaneseq
      %v628 = vshrl.u32 %v627, 7
      %v629 = vsub.s32 %v626, %v628
      %v630 = vrot.slane %v571, %v629
      %v631 = vcombine.high %v571, 0
      %v632 = vcombine.low %v622, %v630
      %v633 = vcombine.high %v622, %v630
      %v635 = vunpack.c.l.s4 1934713408
      %v636 = vunpack.c.0.s8 %v635
      %v637 = vlaneseq
      %v638 = vshrl.u32 %v637, 7
      %v639 = vsub.s32 %v636, %v638
      %v640 = vrot.slane %v632, %v639
      %v642 = vunpack.c.l.s4 1934713408
      %v643 = vunpack.c.0.s8 %v642
      %v644 = vlaneseq
      %v645 = vshrl.u32 %v644, 7
      %v646 = vsub.s32 %v643, %v645
      %v647 = vrot.slane %v633, %v646
      %v648 = vcombine.low %v623, %v631
      %v650 = vunpack.c.l.s4 1934713408
      %v651 = vunpack.c.0.s8 %v650
      %v652 = vlaneseq
      %v653 = vshrl.u32 %v652, 7
      %v654 = vsub.s32 %v651, %v653
      %v655 = vrot.slane %v648, %v654
      %v656 = vcombine.high %v640, 0
      %v657 = vcombine.high %v647, 0
      %v658 = vcombine.high %v655, 0
      %v661 = vpack.i.b16 %v640, %v597
      %v663 = vshrl.u32 %v597, 16
      %v664 = vshrl.u32 %v640, 16
      %v665 = vpack.i.b16 %v664, %v663
      %v669 = vpack.i.b16 %v656, %v613
      %v671 = vshrl.u32 %v613, 16
      %v672 = vshrl.u32 %v656, 16
      %v673 = vpack.i.b16 %v672, %v671
      %v677 = vpack.i.b16 %v647, %v604
      %v679 = vshrl.u32 %v604, 16
      %v680 = vshrl.u32 %v647, 16
      %v681 = vpack.i.b16 %v680, %v679
      %v685 = vpack.i.b16 %v657, %v614
      %v687 = vshrl.u32 %v614, 16
      %v688 = vshrl.u32 %v657, 16
      %v689 = vpack.i.b16 %v688, %v687
      %v693 = vpack.i.b16 %v655, %v612
      %v694 = vshrl.u32 %v612, 16
      %v695 = vshrl.u32 %v655, 16
      %v696 = vpack.i.b16 %v695, %v694
      %v699 = vpack.i.b16 %v658, %v615
      %v700 = vshrl.u32 %v615, 16
      %v701 = vshrl.u32 %v658, 16
      %v702 = vpack.i.b16 %v701, %v700
      %v703 = vcombine.low %v661, %v677
      %v705 = vunpack.c.l.s4 1983009808
      %v706 = vunpack.c.0.s8 %v705
      %v707 = vlaneseq
      %v708 = vshrl.u32 %v707, 7
      %v709 = vsub.s32 %v706, %v708
      %v710 = vrot.slane %v703, %v709
      %v711 = vcombine.low %v669, %v685
      %v713 = vunpack.c.l.s4 1983009808
      %v714 = vunpack.c.0.s8 %v713
      %v715 = vlaneseq
      %v716 = vshrl.u32 %v715, 7
      %v717 = vsub.s32 %v714, %v716
      %v718 = vrot.slane %v711, %v717
      %v721 = vcombine.low %v710, %v718
      %v723 = vunpack.c.l.s4 1934713408
      %v724 = vunpack.c.0.s8 %v723
      %v725 = vlaneseq
      %v726 = vshrl.u32 %v725, 7
      %v727 = vsub.s32 %v724, %v726
      %v728 = vrot.slane %v721, %v727
      %v729 = vcombine.low %v693, %v699
      %v731 = vunpack.c.l.s4 1934713408
      %v732 = vunpack.c.0.s8 %v731
      %v733 = vlaneseq
      %v734 = vshrl.u32 %v733, 7
      %v735 = vsub.s32 %v732, %v734
      %v736 = vrot.slane %v729, %v735
      %v737 = vcombine.low %v728, %v736
      %v738 = vcombine.high %v728, %v736
      %v739 = vcombine.low %v665, %v681
      %v741 = vunpack.c.l.s4 1983009808
      %v742 = vunpack.c.0.s8 %v741
      %v743 = vlaneseq
      %v744 = vshrl.u32 %v743, 7
      %v745 = vsub.s32 %v742, %v744
      %v746 = vrot.slane %v739, %v745
      %v747 = vcombine.low %v673, %v689
      %v749 = vunpack.c.l.s4 1983009808
      %v750 = vunpack.c.0.s8 %v749
      %v751 = vlaneseq
      %v752 = vshrl.u32 %v751, 7
      %v753 = vsub.s32 %v750, %v752
      %v754 = vrot.slane %v747, %v753
      %v757 = vcombine.low %v746, %v754
      %v759 = vunpack.c.l.s4 1934713408
      %v760 = vunpack.c.0.s8 %v759
      %v761 = vlaneseq
      %v762 = vshrl.u32 %v761, 7
      %v763 = vsub.s32 %v760, %v762
      %v764 = vrot.slane %v757, %v763
      %v765 = vcombine.low %v696, %v702
      %v767 = vunpack.c.l.s4 1934713408
      %v768 = vunpack.c.0.s8 %v767
      %v769 = vlaneseq
      %v770 = vshrl.u32 %v769, 7
      %v771 = vsub.s32 %v768, %v770
      %v772 = vrot.slane %v765, %v771
      %v773 = vcombine.low %v764, %v772
      %v774 = vcombine.high %v764, %v772
      %v777 = vpack.i.b16 %v773, %v737
      %v778 = vshrl.u32 %v737, 16
      %v779 = vshrl.u32 %v773, 16
      %v780 = vpack.i.b16 %v779, %v778
      %v783 = vpack.i.b16 %v774, %v738
      %v784 = vshrl.u32 %v738, 16
      %v785 = vshrl.u32 %v774, 16
      %v786 = vpack.i.b16 %v785, %v784
      %787 = vrot.lane.b32.xlu0 %v562, 96
      %v788 = vpop.permute.xlu0 %787
      %789 = vrot.lane.b32.xlu0 %v565, 96
      %v790 = vpop.permute.xlu0 %789
      %791 = vrot.lane.b32.xlu0 %v568, 96
      %v792 = vpop.permute.xlu0 %791
      %793 = vrot.lane.b32.xlu0 %v571, 96
      %v794 = vpop.permute.xlu0 %793
      %v800 = vunpack.c.l.s4 1983009808
      %v801 = vunpack.c.0.s8 %v800
      %v802 = vlaneseq
      %v803 = vshrl.u32 %v802, 7
      %v804 = vsub.s32 %v801, %v803
      %v805 = vrot.slane %v788, %v804
      %v806 = vcombine.high %v788, 0
      %v808 = vunpack.c.l.s4 1983009808
      %v809 = vunpack.c.0.s8 %v808
      %v810 = vlaneseq
      %v811 = vshrl.u32 %v810, 7
      %v812 = vsub.s32 %v809, %v811
      %v813 = vrot.slane %v792, %v812
      %v814 = vcombine.high %v792, 0
      %v815 = vcombine.low %v805, %v813
      %v816 = vcombine.high %v805, %v813
      %v818 = vunpack.c.l.s4 1934713408
      %v819 = vunpack.c.0.s8 %v818
      %v820 = vlaneseq
      %v821 = vshrl.u32 %v820, 7
      %v822 = vsub.s32 %v819, %v821
      %v823 = vrot.slane %v815, %v822
      %v825 = vunpack.c.l.s4 1934713408
      %v826 = vunpack.c.0.s8 %v825
      %v827 = vlaneseq
      %v828 = vshrl.u32 %v827, 7
      %v829 = vsub.s32 %v826, %v828
      %v830 = vrot.slane %v816, %v829
      %v831 = vcombine.low %v806, %v814
      %v833 = vunpack.c.l.s4 1934713408
      %v834 = vunpack.c.0.s8 %v833
      %v835 = vlaneseq
      %v836 = vshrl.u32 %v835, 7
      %v837 = vsub.s32 %v834, %v836
      %v838 = vrot.slane %v831, %v837
      %v839 = vcombine.high %v823, 0
      %v840 = vcombine.high %v830, 0
      %v841 = vcombine.high %v838, 0
      %v843 = vunpack.c.l.s4 1983009808
      %v844 = vunpack.c.0.s8 %v843
      %v845 = vlaneseq
      %v846 = vshrl.u32 %v845, 7
      %v847 = vsub.s32 %v844, %v846
      %v848 = vrot.slane %v790, %v847
      %v849 = vcombine.high %v790, 0
      %v851 = vunpack.c.l.s4 1983009808
      %v852 = vunpack.c.0.s8 %v851
      %v853 = vlaneseq
      %v854 = vshrl.u32 %v853, 7
      %v855 = vsub.s32 %v852, %v854
      %v856 = vrot.slane %v794, %v855
      %v857 = vcombine.high %v794, 0
      %v858 = vcombine.low %v848, %v856
      %v859 = vcombine.high %v848, %v856
      %v861 = vunpack.c.l.s4 1934713408
      %v862 = vunpack.c.0.s8 %v861
      %v863 = vlaneseq
      %v864 = vshrl.u32 %v863, 7
      %v865 = vsub.s32 %v862, %v864
      %v866 = vrot.slane %v858, %v865
      %v868 = vunpack.c.l.s4 1934713408
      %v869 = vunpack.c.0.s8 %v868
      %v870 = vlaneseq
      %v871 = vshrl.u32 %v870, 7
      %v872 = vsub.s32 %v869, %v871
      %v873 = vrot.slane %v859, %v872
      %v874 = vcombine.low %v849, %v857
      %v876 = vunpack.c.l.s4 1934713408
      %v877 = vunpack.c.0.s8 %v876
      %v878 = vlaneseq
      %v879 = vshrl.u32 %v878, 7
      %v880 = vsub.s32 %v877, %v879
      %v881 = vrot.slane %v874, %v880
      %v882 = vcombine.high %v866, 0
      %v883 = vcombine.high %v873, 0
      %v884 = vcombine.high %v881, 0
      %v887 = vpack.i.b16 %v866, %v823
      %v889 = vshrl.u32 %v823, 16
      %v890 = vshrl.u32 %v866, 16
      %v891 = vpack.i.b16 %v890, %v889
      %v895 = vpack.i.b16 %v882, %v839
      %v897 = vshrl.u32 %v839, 16
      %v898 = vshrl.u32 %v882, 16
      %v899 = vpack.i.b16 %v898, %v897
      %v903 = vpack.i.b16 %v873, %v830
      %v905 = vshrl.u32 %v830, 16
      %v906 = vshrl.u32 %v873, 16
      %v907 = vpack.i.b16 %v906, %v905
      %v911 = vpack.i.b16 %v883, %v840
      %v913 = vshrl.u32 %v840, 16
      %v914 = vshrl.u32 %v883, 16
      %v915 = vpack.i.b16 %v914, %v913
      %v919 = vpack.i.b16 %v881, %v838
      %v920 = vshrl.u32 %v838, 16
      %v921 = vshrl.u32 %v881, 16
      %v922 = vpack.i.b16 %v921, %v920
      %v925 = vpack.i.b16 %v884, %v841
      %v926 = vshrl.u32 %v841, 16
      %v927 = vshrl.u32 %v884, 16
      %v928 = vpack.i.b16 %v927, %v926
      %v929 = vcombine.low %v887, %v903
      %v931 = vunpack.c.l.s4 1983009808
      %v932 = vunpack.c.0.s8 %v931
      %v933 = vlaneseq
      %v934 = vshrl.u32 %v933, 7
      %v935 = vsub.s32 %v932, %v934
      %v936 = vrot.slane %v929, %v935
      %v937 = vcombine.low %v895, %v911
      %v939 = vunpack.c.l.s4 1983009808
      %v940 = vunpack.c.0.s8 %v939
      %v941 = vlaneseq
      %v942 = vshrl.u32 %v941, 7
      %v943 = vsub.s32 %v940, %v942
      %v944 = vrot.slane %v937, %v943
      %v947 = vcombine.low %v936, %v944
      %v949 = vunpack.c.l.s4 1934713408
      %v950 = vunpack.c.0.s8 %v949
      %v951 = vlaneseq
      %v952 = vshrl.u32 %v951, 7
      %v953 = vsub.s32 %v950, %v952
      %v954 = vrot.slane %v947, %v953
      %v955 = vcombine.low %v919, %v925
      %v957 = vunpack.c.l.s4 1934713408
      %v958 = vunpack.c.0.s8 %v957
      %v959 = vlaneseq
      %v960 = vshrl.u32 %v959, 7
      %v961 = vsub.s32 %v958, %v960
      %v962 = vrot.slane %v955, %v961
      %v963 = vcombine.low %v954, %v962
      %v964 = vcombine.high %v954, %v962
      %v965 = vcombine.low %v891, %v907
      %v967 = vunpack.c.l.s4 1983009808
      %v968 = vunpack.c.0.s8 %v967
      %v969 = vlaneseq
      %v970 = vshrl.u32 %v969, 7
      %v971 = vsub.s32 %v968, %v970
      %v972 = vrot.slane %v965, %v971
      %v973 = vcombine.low %v899, %v915
      %v975 = vunpack.c.l.s4 1983009808
      %v976 = vunpack.c.0.s8 %v975
      %v977 = vlaneseq
      %v978 = vshrl.u32 %v977, 7
      %v979 = vsub.s32 %v976, %v978
      %v980 = vrot.slane %v973, %v979
      %v983 = vcombine.low %v972, %v980
      %v985 = vunpack.c.l.s4 1934713408
      %v986 = vunpack.c.0.s8 %v985
      %v987 = vlaneseq
      %v988 = vshrl.u32 %v987, 7
      %v989 = vsub.s32 %v986, %v988
      %v990 = vrot.slane %v983, %v989
      %v991 = vcombine.low %v922, %v928
      %v993 = vunpack.c.l.s4 1934713408
      %v994 = vunpack.c.0.s8 %v993
      %v995 = vlaneseq
      %v996 = vshrl.u32 %v995, 7
      %v997 = vsub.s32 %v994, %v996
      %v998 = vrot.slane %v991, %v997
      %v999 = vcombine.low %v990, %v998
      %v1000 = vcombine.high %v990, %v998
      %v1003 = vpack.i.b16 %v999, %v963
      %v1004 = vshrl.u32 %v963, 16
      %v1005 = vshrl.u32 %v999, 16
      %v1006 = vpack.i.b16 %v1005, %v1004
      %v1009 = vpack.i.b16 %v1000, %v964
      %v1010 = vshrl.u32 %v964, 16
      %v1011 = vshrl.u32 %v1000, 16
      %v1012 = vpack.i.b16 %v1011, %v1010
      %v1013 = vpack.c.bf16 %v559, %v556
      %1015 = vrot.lane.b32.xlu0 %v1013, 120
      %v1016 = vpop.permute.xlu0 %1015
      %1018 = vrot.lane.b32.xlu0 %v1013, 112
      %v1019 = vpop.permute.xlu0 %1018
      %1021 = vrot.lane.b32.xlu0 %v1013, 104
      %v1022 = vpop.permute.xlu0 %1021
      %v1025 = vunpack.c.l.s4 1983009808
      %v1026 = vunpack.c.0.s8 %v1025
      %v1027 = vlaneseq
      %v1028 = vshrl.u32 %v1027, 7
      %v1029 = vsub.s32 %v1026, %v1028
      %v1030 = vrot.slane %v1013, %v1029
      %v1031 = vcombine.high %v1013, 0
      %v1033 = vunpack.c.l.s4 1983009808
      %v1034 = vunpack.c.0.s8 %v1033
      %v1035 = vlaneseq
      %v1036 = vshrl.u32 %v1035, 7
      %v1037 = vsub.s32 %v1034, %v1036
      %v1038 = vrot.slane %v1019, %v1037
      %v1039 = vcombine.high %v1019, 0
      %v1040 = vcombine.low %v1030, %v1038
      %v1041 = vcombine.high %v1030, %v1038
      %v1043 = vunpack.c.l.s4 1934713408
      %v1044 = vunpack.c.0.s8 %v1043
      %v1045 = vlaneseq
      %v1046 = vshrl.u32 %v1045, 7
      %v1047 = vsub.s32 %v1044, %v1046
      %v1048 = vrot.slane %v1040, %v1047
      %v1050 = vunpack.c.l.s4 1934713408
      %v1051 = vunpack.c.0.s8 %v1050
      %v1052 = vlaneseq
      %v1053 = vshrl.u32 %v1052, 7
      %v1054 = vsub.s32 %v1051, %v1053
      %v1055 = vrot.slane %v1041, %v1054
      %v1056 = vcombine.low %v1031, %v1039
      %v1058 = vunpack.c.l.s4 1934713408
      %v1059 = vunpack.c.0.s8 %v1058
      %v1060 = vlaneseq
      %v1061 = vshrl.u32 %v1060, 7
      %v1062 = vsub.s32 %v1059, %v1061
      %v1063 = vrot.slane %v1056, %v1062
      %v1064 = vcombine.high %v1048, 0
      %v1065 = vcombine.high %v1055, 0
      %v1066 = vcombine.high %v1063, 0
      %v1068 = vunpack.c.l.s4 1983009808
      %v1069 = vunpack.c.0.s8 %v1068
      %v1070 = vlaneseq
      %v1071 = vshrl.u32 %v1070, 7
      %v1072 = vsub.s32 %v1069, %v1071
      %v1073 = vrot.slane %v1016, %v1072
      %v1074 = vcombine.high %v1016, 0
      %v1076 = vunpack.c.l.s4 1983009808
      %v1077 = vunpack.c.0.s8 %v1076
      %v1078 = vlaneseq
      %v1079 = vshrl.u32 %v1078, 7
      %v1080 = vsub.s32 %v1077, %v1079
      %v1081 = vrot.slane %v1022, %v1080
      %v1082 = vcombine.high %v1022, 0
      %v1083 = vcombine.low %v1073, %v1081
      %v1084 = vcombine.high %v1073, %v1081
      %v1086 = vunpack.c.l.s4 1934713408
      %v1087 = vunpack.c.0.s8 %v1086
      %v1088 = vlaneseq
      %v1089 = vshrl.u32 %v1088, 7
      %v1090 = vsub.s32 %v1087, %v1089
      %v1091 = vrot.slane %v1083, %v1090
      %v1093 = vunpack.c.l.s4 1934713408
      %v1094 = vunpack.c.0.s8 %v1093
      %v1095 = vlaneseq
      %v1096 = vshrl.u32 %v1095, 7
      %v1097 = vsub.s32 %v1094, %v1096
      %v1098 = vrot.slane %v1084, %v1097
      %v1099 = vcombine.low %v1074, %v1082
      %v1101 = vunpack.c.l.s4 1934713408
      %v1102 = vunpack.c.0.s8 %v1101
      %v1103 = vlaneseq
      %v1104 = vshrl.u32 %v1103, 7
      %v1105 = vsub.s32 %v1102, %v1104
      %v1106 = vrot.slane %v1099, %v1105
      %v1107 = vcombine.high %v1091, 0
      %v1108 = vcombine.high %v1098, 0
      %v1109 = vcombine.high %v1106, 0
      %v1112 = vpack.i.b16 %v1091, %v1048
      %v1114 = vshrl.u32 %v1048, 16
      %v1115 = vshrl.u32 %v1091, 16
      %v1116 = vpack.i.b16 %v1115, %v1114
      %v1120 = vpack.i.b16 %v1107, %v1064
      %v1122 = vshrl.u32 %v1064, 16
      %v1123 = vshrl.u32 %v1107, 16
      %v1124 = vpack.i.b16 %v1123, %v1122
      %v1128 = vpack.i.b16 %v1098, %v1055
      %v1130 = vshrl.u32 %v1055, 16
      %v1131 = vshrl.u32 %v1098, 16
      %v1132 = vpack.i.b16 %v1131, %v1130
      %v1136 = vpack.i.b16 %v1108, %v1065
      %v1138 = vshrl.u32 %v1065, 16
      %v1139 = vshrl.u32 %v1108, 16
      %v1140 = vpack.i.b16 %v1139, %v1138
      %v1144 = vpack.i.b16 %v1106, %v1063
      %v1145 = vshrl.u32 %v1063, 16
      %v1146 = vshrl.u32 %v1106, 16
      %v1147 = vpack.i.b16 %v1146, %v1145
      %v1150 = vpack.i.b16 %v1109, %v1066
      %v1151 = vshrl.u32 %v1066, 16
      %v1152 = vshrl.u32 %v1109, 16
      %v1153 = vpack.i.b16 %v1152, %v1151
      %v1154 = vcombine.low %v1112, %v1128
      %v1156 = vunpack.c.l.s4 1983009808
      %v1157 = vunpack.c.0.s8 %v1156
      %v1158 = vlaneseq
      %v1159 = vshrl.u32 %v1158, 7
      %v1160 = vsub.s32 %v1157, %v1159
      %v1161 = vrot.slane %v1154, %v1160
      %v1162 = vcombine.low %v1120, %v1136
      %v1164 = vunpack.c.l.s4 1983009808
      %v1165 = vunpack.c.0.s8 %v1164
      %v1166 = vlaneseq
      %v1167 = vshrl.u32 %v1166, 7
      %v1168 = vsub.s32 %v1165, %v1167
      %v1169 = vrot.slane %v1162, %v1168
      %v1172 = vcombine.low %v1161, %v1169
      %v1174 = vunpack.c.l.s4 1934713408
      %v1175 = vunpack.c.0.s8 %v1174
      %v1176 = vlaneseq
      %v1177 = vshrl.u32 %v1176, 7
      %v1178 = vsub.s32 %v1175, %v1177
      %v1179 = vrot.slane %v1172, %v1178
      %v1180 = vcombine.low %v1144, %v1150
      %v1182 = vunpack.c.l.s4 1934713408
      %v1183 = vunpack.c.0.s8 %v1182
      %v1184 = vlaneseq
      %v1185 = vshrl.u32 %v1184, 7
      %v1186 = vsub.s32 %v1183, %v1185
      %v1187 = vrot.slane %v1180, %v1186
      %v1188 = vcombine.low %v1179, %v1187
      %v1189 = vcombine.high %v1179, %v1187
      %v1190 = vcombine.low %v1116, %v1132
      %v1192 = vunpack.c.l.s4 1983009808
      %v1193 = vunpack.c.0.s8 %v1192
      %v1194 = vlaneseq
      %v1195 = vshrl.u32 %v1194, 7
      %v1196 = vsub.s32 %v1193, %v1195
      %v1197 = vrot.slane %v1190, %v1196
      %v1198 = vcombine.low %v1124, %v1140
      %v1200 = vunpack.c.l.s4 1983009808
      %v1201 = vunpack.c.0.s8 %v1200
      %v1202 = vlaneseq
      %v1203 = vshrl.u32 %v1202, 7
      %v1204 = vsub.s32 %v1201, %v1203
      %v1205 = vrot.slane %v1198, %v1204
      %v1208 = vcombine.low %v1197, %v1205
      %v1210 = vunpack.c.l.s4 1934713408
      %v1211 = vunpack.c.0.s8 %v1210
      %v1212 = vlaneseq
      %v1213 = vshrl.u32 %v1212, 7
      %v1214 = vsub.s32 %v1211, %v1213
      %v1215 = vrot.slane %v1208, %v1214
      %v1216 = vcombine.low %v1147, %v1153
      %v1218 = vunpack.c.l.s4 1934713408
      %v1219 = vunpack.c.0.s8 %v1218
      %v1220 = vlaneseq
      %v1221 = vshrl.u32 %v1220, 7
      %v1222 = vsub.s32 %v1219, %v1221
      %v1223 = vrot.slane %v1216, %v1222
      %v1224 = vcombine.low %v1215, %v1223
      %v1225 = vcombine.high %v1215, %v1223
      %v1228 = vpack.i.b16 %v1224, %v1188
      %v1229 = vshrl.u32 %v1188, 16
      %v1230 = vshrl.u32 %v1224, 16
      %v1231 = vpack.i.b16 %v1230, %v1229
      %v1234 = vpack.i.b16 %v1225, %v1189
      %v1235 = vshrl.u32 %v1189, 16
      %v1236 = vshrl.u32 %v1225, 16
      %v1237 = vpack.i.b16 %v1236, %v1235
      %vm1238 = vcmask 64512
      %v1240 = vsel %vm1238, %v777, 0
      %v1243 = vsel %vm1238, %v1003, 0
      %1245 = vmatprep.subr.bf16.mxu0 0
      %1246 = vmatpush1.bf16.xpose.msra.mxu0 %v1243
      %1247 = vmatprep.subr.bf16.mxu0 0
      %1248 = vmatpush1.bf16.xpose.msra.mxu0 0
      %1249 = vmatprep.subr.bf16.mxu0 0
      %1250 = vmatpush1.bf16.xpose.msra.mxu0 0
      %1251 = vmatprep.subr.bf16.mxu0 0
      %1252 = vmatpush1.bf16.xpose.msra.mxu0 0
      %1253 = vmatprep.subr.bf16.mxu0 0
      %1254 = vmatpush1.bf16.xpose.msra.mxu0 0
      %1255 = vmatprep.subr.bf16.mxu0 0
      %1256 = vmatpush1.bf16.xpose.msra.mxu0 0
      %1257 = vmatprep.subr.bf16.mxu0 0
      %1258 = vmatpush1.bf16.xpose.msra.mxu0 0
      %1259 = vmatprep.subr.bf16.mxu0 0
      %1260 = vmatpush1.bf16.xpose.msra.mxu0 0
      %1261 = vmatprep.subr.bf16.mxu0 0
      %1262 = vmatpush1.bf16.xpose.msra.mxu0 0
      %1263 = vmatprep.subr.bf16.mxu0 0
      %1264 = vmatpush1.bf16.xpose.msra.mxu0 0
      %1265 = vmatprep.subr.bf16.mxu0 0
      %1266 = vmatpush1.bf16.xpose.msra.mxu0 0
      %1267 = vmatprep.subr.bf16.mxu0 0
      %1268 = vmatpush1.bf16.xpose.msra.mxu0 0
      %1269 = vmatprep.subr.bf16.mxu0 0
      %1270 = vmatpush1.bf16.xpose.msra.mxu0 0
      %1271 = vmatprep.subr.bf16.mxu0 0
      %1272 = vmatpush1.bf16.xpose.msra.mxu0 0
      %1273 = vmatprep.subr.bf16.mxu0 0
      %1274 = vmatpush1.bf16.xpose.msra.mxu0 0
      %1275 = vmatprep.subr.bf16.mxu0 0
      %1276 = vmatpush1.bf16.xpose.msra.mxu0 0
      %1277 = vmatprep.mubr.bf16.mxu0 0
      %1278 = vmatmul.mubr.bf16.gmra.mrb[0].mxu0 %v1240
      %v1279 = vpop.f32.mrb[0].mxu0
      %v1280 = vadd.f32 0.0, %v1279
      %v1281 = vpop.f32.mrb[0].mxu0
      %v1282 = vpop.f32.mrb[0].mxu0
      %v1283 = vadd.f32 0.0, %v1282
      %v1284 = vpop.f32.mrb[0].mxu0
      %1285 = vdwg.mxu0
      %v1287 = vsel %vm1238, %v780, 0
      %v1290 = vsel %vm1238, %v1006, 0
      %1292 = vmatprep.subr.bf16.mxu0 0
      %1293 = vmatpush1.bf16.xpose.msra.mxu0 %v1290
      %1294 = vmatprep.subr.bf16.mxu0 0
      %1295 = vmatpush1.bf16.xpose.msra.mxu0 0
      %1296 = vmatprep.subr.bf16.mxu0 0
      %1297 = vmatpush1.bf16.xpose.msra.mxu0 0
      %1298 = vmatprep.subr.bf16.mxu0 0
      %1299 = vmatpush1.bf16.xpose.msra.mxu0 0
      %1300 = vmatprep.subr.bf16.mxu0 0
      %1301 = vmatpush1.bf16.xpose.msra.mxu0 0
      %1302 = vmatprep.subr.bf16.mxu0 0
      %1303 = vmatpush1.bf16.xpose.msra.mxu0 0
      %1304 = vmatprep.subr.bf16.mxu0 0
      %1305 = vmatpush1.bf16.xpose.msra.mxu0 0
      %1306 = vmatprep.subr.bf16.mxu0 0
      %1307 = vmatpush1.bf16.xpose.msra.mxu0 0
      %1308 = vmatprep.subr.bf16.mxu0 0
      %1309 = vmatpush1.bf16.xpose.msra.mxu0 0
      %1310 = vmatprep.subr.bf16.mxu0 0
      %1311 = vmatpush1.bf16.xpose.msra.mxu0 0
      %1312 = vmatprep.subr.bf16.mxu0 0
      %1313 = vmatpush1.bf16.xpose.msra.mxu0 0
      %1314 = vmatprep.subr.bf16.mxu0 0
      %1315 = vmatpush1.bf16.xpose.msra.mxu0 0
      %1316 = vmatprep.subr.bf16.mxu0 0
      %1317 = vmatpush1.bf16.xpose.msra.mxu0 0
      %1318 = vmatprep.subr.bf16.mxu0 0
      %1319 = vmatpush1.bf16.xpose.msra.mxu0 0
      %1320 = vmatprep.subr.bf16.mxu0 0
      %1321 = vmatpush1.bf16.xpose.msra.mxu0 0
      %1322 = vmatprep.subr.bf16.mxu0 0
      %1323 = vmatpush1.bf16.xpose.msra.mxu0 0
      %1324 = vmatprep.mubr.bf16.mxu0 0
      %1325 = vmatmul.mubr.bf16.gmra.mrb[0].mxu0 %v1287
      %v1326 = vpop.f32.mrb[0].mxu0
      %v1327 = vadd.f32 0.0, %v1326
      %v1328 = vpop.f32.mrb[0].mxu0
      %v1329 = vpop.f32.mrb[0].mxu0
      %v1330 = vadd.f32 0.0, %v1329
      %v1331 = vpop.f32.mrb[0].mxu0
      %1332 = vdwg.mxu0
      %v1334 = vsel %vm1238, %v783, 0
      %v1337 = vsel %vm1238, %v1009, 0
      %1339 = vmatprep.subr.bf16.mxu0 0
      %1340 = vmatpush1.bf16.xpose.msra.mxu0 %v1337
      %1341 = vmatprep.subr.bf16.mxu0 0
      %1342 = vmatpush1.bf16.xpose.msra.mxu0 0
      %1343 = vmatprep.subr.bf16.mxu0 0
      %1344 = vmatpush1.bf16.xpose.msra.mxu0 0
      %1345 = vmatprep.subr.bf16.mxu0 0
      %1346 = vmatpush1.bf16.xpose.msra.mxu0 0
      %1347 = vmatprep.subr.bf16.mxu0 0
      %1348 = vmatpush1.bf16.xpose.msra.mxu0 0
      %1349 = vmatprep.subr.bf16.mxu0 0
      %1350 = vmatpush1.bf16.xpose.msra.mxu0 0
      %1351 = vmatprep.subr.bf16.mxu0 0
      %1352 = vmatpush1.bf16.xpose.msra.mxu0 0
      %1353 = vmatprep.subr.bf16.mxu0 0
      %1354 = vmatpush1.bf16.xpose.msra.mxu0 0
      %1355 = vmatprep.subr.bf16.mxu0 0
      %1356 = vmatpush1.bf16.xpose.msra.mxu0 0
      %1357 = vmatprep.subr.bf16.mxu0 0
      %1358 = vmatpush1.bf16.xpose.msra.mxu0 0
      %1359 = vmatprep.subr.bf16.mxu0 0
      %1360 = vmatpush1.bf16.xpose.msra.mxu0 0
      %1361 = vmatprep.subr.bf16.mxu0 0
      %1362 = vmatpush1.bf16.xpose.msra.mxu0 0
      %1363 = vmatprep.subr.bf16.mxu0 0
      %1364 = vmatpush1.bf16.xpose.msra.mxu0 0
      %1365 = vmatprep.subr.bf16.mxu0 0
      %1366 = vmatpush1.bf16.xpose.msra.mxu0 0
      %1367 = vmatprep.subr.bf16.mxu0 0
      %1368 = vmatpush1.bf16.xpose.msra.mxu0 0
      %1369 = vmatprep.subr.bf16.mxu0 0
      %1370 = vmatpush1.bf16.xpose.msra.mxu0 0
      %1371 = vmatprep.mubr.bf16.mxu0 0
      %1372 = vmatmul.mubr.bf16.gmra.mrb[0].mxu0 %v1334
      %v1373 = vpop.f32.mrb[0].mxu0
      %v1374 = vadd.f32 0.0, %v1373
      %v1375 = vpop.f32.mrb[0].mxu0
      %v1376 = vpop.f32.mrb[0].mxu0
      %v1377 = vadd.f32 0.0, %v1376
      %v1378 = vpop.f32.mrb[0].mxu0
      %1379 = vdwg.mxu0
      %v1381 = vsel %vm1238, %v786, 0
      %v1384 = vsel %vm1238, %v1012, 0
      %1386 = vmatprep.subr.bf16.mxu0 0
      %1387 = vmatpush1.bf16.xpose.msra.mxu0 %v1384
      %1388 = vmatprep.subr.bf16.mxu0 0
      %1389 = vmatpush1.bf16.xpose.msra.mxu0 0
      %1390 = vmatprep.subr.bf16.mxu0 0
      %1391 = vmatpush1.bf16.xpose.msra.mxu0 0
      %1392 = vmatprep.subr.bf16.mxu0 0
      %1393 = vmatpush1.bf16.xpose.msra.mxu0 0
      %1394 = vmatprep.subr.bf16.mxu0 0
      %1395 = vmatpush1.bf16.xpose.msra.mxu0 0
      %1396 = vmatprep.subr.bf16.mxu0 0
      %1397 = vmatpush1.bf16.xpose.msra.mxu0 0
      %1398 = vmatprep.subr.bf16.mxu0 0
      %1399 = vmatpush1.bf16.xpose.msra.mxu0 0
      %1400 = vmatprep.subr.bf16.mxu0 0
      %1401 = vmatpush1.bf16.xpose.msra.mxu0 0
      %1402 = vmatprep.subr.bf16.mxu0 0
      %1403 = vmatpush1.bf16.xpose.msra.mxu0 0
      %1404 = vmatprep.subr.bf16.mxu0 0
      %1405 = vmatpush1.bf16.xpose.msra.mxu0 0
      %1406 = vmatprep.subr.bf16.mxu0 0
      %1407 = vmatpush1.bf16.xpose.msra.mxu0 0
      %1408 = vmatprep.subr.bf16.mxu0 0
      %1409 = vmatpush1.bf16.xpose.msra.mxu0 0
      %1410 = vmatprep.subr.bf16.mxu0 0
      %1411 = vmatpush1.bf16.xpose.msra.mxu0 0
      %1412 = vmatprep.subr.bf16.mxu0 0
      %1413 = vmatpush1.bf16.xpose.msra.mxu0 0
      %1414 = vmatprep.subr.bf16.mxu0 0
      %1415 = vmatpush1.bf16.xpose.msra.mxu0 0
      %1416 = vmatprep.subr.bf16.mxu0 0
      %1417 = vmatpush1.bf16.xpose.msra.mxu0 0
      %1418 = vmatprep.mubr.bf16.mxu0 0
      %1419 = vmatmul.mubr.bf16.gmra.mrb[0].mxu0 %v1381
      %v1420 = vpop.f32.mrb[0].mxu0
      %v1421 = vadd.f32 0.0, %v1420
      %v1422 = vpop.f32.mrb[0].mxu0
      %v1423 = vpop.f32.mrb[0].mxu0
      %v1424 = vadd.f32 0.0, %v1423
      %v1425 = vpop.f32.mrb[0].mxu0
      %1426 = vdwg.mxu0
      %vm1427 = vcmask 97280
      %v1428 = vsel %vm1427, %v1280, -inf
      %1429 = vmax.xlane.f32.xlu0 %v1428
      %v1430 = vpop.xlane.xlu0 %1429
      %vm1431 = vcmask 93184
      %v1432 = vsel %vm1431, %v1283, -inf
      %1433 = vmax.xlane.f32.xlu0 %v1432
      %v1434 = vpop.xlane.xlu0 %1433
      %v1435 = vsel %vm1427, %v1327, -inf
      %1436 = vmax.xlane.f32.xlu0 %v1435
      %v1437 = vpop.xlane.xlu0 %1436
      %v1438 = vsel %vm1431, %v1330, -inf
      %1439 = vmax.xlane.f32.xlu0 %v1438
      %v1440 = vpop.xlane.xlu0 %1439
      %v1441 = vsel %vm1427, %v1374, -inf
      %1442 = vmax.xlane.f32.xlu0 %v1441
      %v1443 = vpop.xlane.xlu0 %1442
      %v1444 = vsel %vm1431, %v1377, -inf
      %1445 = vmax.xlane.f32.xlu0 %v1444
      %v1446 = vpop.xlane.xlu0 %1445
      %v1447 = vsel %vm1427, %v1421, -inf
      %1448 = vmax.xlane.f32.xlu0 %v1447
      %v1449 = vpop.xlane.xlu0 %1448
      %v1450 = vsel %vm1431, %v1424, -inf
      %1451 = vmax.xlane.f32.xlu0 %v1450
      %v1452 = vpop.xlane.xlu0 %1451
      %v1453 = vsub.f32 %v1280, %v1430
      %v1454 = vsub.f32 %v1283, %v1434
      %v1455 = vsub.f32 %v1327, %v1437
      %v1456 = vsub.f32 %v1330, %v1440
      %v1457 = vsub.f32 %v1374, %v1443
      %v1458 = vsub.f32 %v1377, %v1446
      %v1459 = vsub.f32 %v1421, %v1449
      %v1460 = vsub.f32 %v1424, %v1452
      %v1461 = vmul.f32 %v1453, 1.442695
      %v1462 = vpow.pop %v1461
      %v1463 = vmul.f32 %v1454, 1.442695
      %v1464 = vpow.pop %v1463
      %v1465 = vmul.f32 %v1455, 1.442695
      %v1466 = vpow.pop %v1465
      %v1467 = vmul.f32 %v1456, 1.442695
      %v1468 = vpow.pop %v1467
      %v1469 = vmul.f32 %v1457, 1.442695
      %v1470 = vpow.pop %v1469
      %v1471 = vmul.f32 %v1458, 1.442695
      %v1472 = vpow.pop %v1471
      %v1473 = vmul.f32 %v1459, 1.442695
      %v1474 = vpow.pop %v1473
      %v1475 = vmul.f32 %v1460, 1.442695
      %v1476 = vpow.pop %v1475
      %v1477 = vsel %vm1427, %v1462, 0.0
      %1478 = vadd.xlane.f32.xlu0 %v1477
      %v1479 = vpop.xlane.xlu0 %1478
      %v1480 = vsel %vm1431, %v1464, 0.0
      %1481 = vadd.xlane.f32.xlu0 %v1480
      %v1482 = vpop.xlane.xlu0 %1481
      %v1483 = vsel %vm1427, %v1466, 0.0
      %1484 = vadd.xlane.f32.xlu0 %v1483
      %v1485 = vpop.xlane.xlu0 %1484
      %v1486 = vsel %vm1431, %v1468, 0.0
      %1487 = vadd.xlane.f32.xlu0 %v1486
      %v1488 = vpop.xlane.xlu0 %1487
      %v1489 = vsel %vm1427, %v1470, 0.0
      %1490 = vadd.xlane.f32.xlu0 %v1489
      %v1491 = vpop.xlane.xlu0 %1490
      %v1492 = vsel %vm1431, %v1472, 0.0
      %1493 = vadd.xlane.f32.xlu0 %v1492
      %v1494 = vpop.xlane.xlu0 %1493
      %v1495 = vsel %vm1427, %v1474, 0.0
      %1496 = vadd.xlane.f32.xlu0 %v1495
      %v1497 = vpop.xlane.xlu0 %1496
      %v1498 = vsel %vm1431, %v1476, 0.0
      %1499 = vadd.xlane.f32.xlu0 %v1498
      %v1500 = vpop.xlane.xlu0 %1499
      %v1501 = vrcp.pop %v1479
      %v1502 = vrcp.pop %v1482
      %v1503 = vrcp.pop %v1485
      %v1504 = vrcp.pop %v1488
      %v1505 = vrcp.pop %v1491
      %v1506 = vrcp.pop %v1494
      %v1507 = vrcp.pop %v1497
      %v1508 = vrcp.pop %v1500
      %v1509 = vmul.f32 %v1462, %v1501
      %v1510 = vmul.f32 %v1464, %v1502
      %v1511 = vmul.f32 %v1466, %v1503
      %v1512 = vmul.f32 %v1468, %v1504
      %v1513 = vmul.f32 %v1470, %v1505
      %v1514 = vmul.f32 %v1472, %v1506
      %v1515 = vmul.f32 %v1474, %v1507
      %v1516 = vmul.f32 %v1476, %v1508
      %v1517 = vpack.c.bf16 %v1510, %v1509
      %v1518 = vpack.c.bf16 %v1512, %v1511
      %v1519 = vpack.c.bf16 %v1514, %v1513
      %v1520 = vpack.c.bf16 %v1516, %v1515
      %v1522 = vsel %vm1427, %v1517, 0
      %vm1524 = vcmask 1045504
      %v1526 = vsel %vm1524, %v1228, 0
      %1528 = vmatprep.subr.bf16.mxu0 0
      %1529 = vmatpush1.bf16.msra.mxu0 %v1526
      %1530 = vmatprep.subr.bf16.mxu0 0
      %1531 = vmatpush1.bf16.msra.mxu0 0
      %1532 = vmatprep.subr.bf16.mxu0 0
      %1533 = vmatpush1.bf16.msra.mxu0 0
      %1534 = vmatprep.subr.bf16.mxu0 0
      %1535 = vmatpush1.bf16.msra.mxu0 0
      %1536 = vmatprep.subr.bf16.mxu0 0
      %1537 = vmatpush1.bf16.msra.mxu0 0
      %1538 = vmatprep.subr.bf16.mxu0 0
      %1539 = vmatpush1.bf16.msra.mxu0 0
      %1540 = vmatprep.subr.bf16.mxu0 0
      %1541 = vmatpush1.bf16.msra.mxu0 0
      %1542 = vmatprep.subr.bf16.mxu0 0
      %1543 = vmatpush1.bf16.msra.mxu0 0
      %1544 = vmatprep.subr.bf16.mxu0 0
      %1545 = vmatpush1.bf16.msra.mxu0 0
      %1546 = vmatprep.subr.bf16.mxu0 0
      %1547 = vmatpush1.bf16.msra.mxu0 0
      %1548 = vmatprep.subr.bf16.mxu0 0
      %1549 = vmatpush1.bf16.msra.mxu0 0
      %1550 = vmatprep.subr.bf16.mxu0 0
      %1551 = vmatpush1.bf16.msra.mxu0 0
      %1552 = vmatprep.subr.bf16.mxu0 0
      %1553 = vmatpush1.bf16.msra.mxu0 0
      %1554 = vmatprep.subr.bf16.mxu0 0
      %1555 = vmatpush1.bf16.msra.mxu0 0
      %1556 = vmatprep.subr.bf16.mxu0 0
      %1557 = vmatpush1.bf16.msra.mxu0 0
      %1558 = vmatprep.subr.bf16.mxu0 0
      %1559 = vmatpush1.bf16.msra.mxu0 0
      %1560 = vmatprep.mubr.bf16.mxu0 0
      %1561 = vmatmul.mubr.bf16.gmra.mrb[0].mxu0 %v1522
      %v1562 = vpop.f32.mrb[0].mxu0
      %v1563 = vadd.f32 0.0, %v1562
      %v1564 = vpop.f32.mrb[0].mxu0
      %v1565 = vpop.f32.mrb[0].mxu0
      %v1566 = vadd.f32 0.0, %v1565
      %v1567 = vpop.f32.mrb[0].mxu0
      %1568 = vdwg.mxu0
      %v1570 = vsel %vm1427, %v1518, 0
      %v1573 = vsel %vm1524, %v1231, 0
      %1575 = vmatprep.subr.bf16.mxu0 0
      %1576 = vmatpush1.bf16.msra.mxu0 %v1573
      %1577 = vmatprep.subr.bf16.mxu0 0
      %1578 = vmatpush1.bf16.msra.mxu0 0
      %1579 = vmatprep.subr.bf16.mxu0 0
      %1580 = vmatpush1.bf16.msra.mxu0 0
      %1581 = vmatprep.subr.bf16.mxu0 0
      %1582 = vmatpush1.bf16.msra.mxu0 0
      %1583 = vmatprep.subr.bf16.mxu0 0
      %1584 = vmatpush1.bf16.msra.mxu0 0
      %1585 = vmatprep.subr.bf16.mxu0 0
      %1586 = vmatpush1.bf16.msra.mxu0 0
      %1587 = vmatprep.subr.bf16.mxu0 0
      %1588 = vmatpush1.bf16.msra.mxu0 0
      %1589 = vmatprep.subr.bf16.mxu0 0
      %1590 = vmatpush1.bf16.msra.mxu0 0
      %1591 = vmatprep.subr.bf16.mxu0 0
      %1592 = vmatpush1.bf16.msra.mxu0 0
      %1593 = vmatprep.subr.bf16.mxu0 0
      %1594 = vmatpush1.bf16.msra.mxu0 0
      %1595 = vmatprep.subr.bf16.mxu0 0
      %1596 = vmatpush1.bf16.msra.mxu0 0
      %1597 = vmatprep.subr.bf16.mxu0 0
      %1598 = vmatpush1.bf16.msra.mxu0 0
      %1599 = vmatprep.subr.bf16.mxu0 0
      %1600 = vmatpush1.bf16.msra.mxu0 0
      %1601 = vmatprep.subr.bf16.mxu0 0
      %1602 = vmatpush1.bf16.msra.mxu0 0
      %1603 = vmatprep.subr.bf16.mxu0 0
      %1604 = vmatpush1.bf16.msra.mxu0 0
      %1605 = vmatprep.subr.bf16.mxu0 0
      %1606 = vmatpush1.bf16.msra.mxu0 0
      %1607 = vmatprep.mubr.bf16.mxu0 0
      %1608 = vmatmul.mubr.bf16.gmra.mrb[0].mxu0 %v1570
      %v1609 = vpop.f32.mrb[0].mxu0
      %v1610 = vadd.f32 0.0, %v1609
      %v1611 = vpop.f32.mrb[0].mxu0
      %v1612 = vpop.f32.mrb[0].mxu0
      %v1613 = vadd.f32 0.0, %v1612
      %v1614 = vpop.f32.mrb[0].mxu0
      %1615 = vdwg.mxu0
      %v1617 = vsel %vm1427, %v1519, 0
      %v1620 = vsel %vm1524, %v1234, 0
      %1622 = vmatprep.subr.bf16.mxu0 0
      %1623 = vmatpush1.bf16.msra.mxu0 %v1620
      %1624 = vmatprep.subr.bf16.mxu0 0
      %1625 = vmatpush1.bf16.msra.mxu0 0
      %1626 = vmatprep.subr.bf16.mxu0 0
      %1627 = vmatpush1.bf16.msra.mxu0 0
      %1628 = vmatprep.subr.bf16.mxu0 0
      %1629 = vmatpush1.bf16.msra.mxu0 0
      %1630 = vmatprep.subr.bf16.mxu0 0
      %1631 = vmatpush1.bf16.msra.mxu0 0
      %1632 = vmatprep.subr.bf16.mxu0 0
      %1633 = vmatpush1.bf16.msra.mxu0 0
      %1634 = vmatprep.subr.bf16.mxu0 0
      %1635 = vmatpush1.bf16.msra.mxu0 0
      %1636 = vmatprep.subr.bf16.mxu0 0
      %1637 = vmatpush1.bf16.msra.mxu0 0
      %1638 = vmatprep.subr.bf16.mxu0 0
      %1639 = vmatpush1.bf16.msra.mxu0 0
      %1640 = vmatprep.subr.bf16.mxu0 0
      %1641 = vmatpush1.bf16.msra.mxu0 0
      %1642 = vmatprep.subr.bf16.mxu0 0
      %1643 = vmatpush1.bf16.msra.mxu0 0
      %1644 = vmatprep.subr.bf16.mxu0 0
      %1645 = vmatpush1.bf16.msra.mxu0 0
      %1646 = vmatprep.subr.bf16.mxu0 0
      %1647 = vmatpush1.bf16.msra.mxu0 0
      %1648 = vmatprep.subr.bf16.mxu0 0
      %1649 = vmatpush1.bf16.msra.mxu0 0
      %1650 = vmatprep.subr.bf16.mxu0 0
      %1651 = vmatpush1.bf16.msra.mxu0 0
      %1652 = vmatprep.subr.bf16.mxu0 0
      %1653 = vmatpush1.bf16.msra.mxu0 0
      %1654 = vmatprep.mubr.bf16.mxu0 0
      %1655 = vmatmul.mubr.bf16.gmra.mrb[0].mxu0 %v1617
      %v1656 = vpop.f32.mrb[0].mxu0
      %v1657 = vadd.f32 0.0, %v1656
      %v1658 = vpop.f32.mrb[0].mxu0
      %v1659 = vpop.f32.mrb[0].mxu0
      %v1660 = vadd.f32 0.0, %v1659
      %v1661 = vpop.f32.mrb[0].mxu0
      %1662 = vdwg.mxu0
      %v1664 = vsel %vm1427, %v1520, 0
      %v1667 = vsel %vm1524, %v1237, 0
      %1669 = vmatprep.subr.bf16.mxu0 0
      %1670 = vmatpush1.bf16.msra.mxu0 %v1667
      %1671 = vmatprep.subr.bf16.mxu0 0
      %1672 = vmatpush1.bf16.msra.mxu0 0
      %1673 = vmatprep.subr.bf16.mxu0 0
      %1674 = vmatpush1.bf16.msra.mxu0 0
      %1675 = vmatprep.subr.bf16.mxu0 0
      %1676 = vmatpush1.bf16.msra.mxu0 0
      %1677 = vmatprep.subr.bf16.mxu0 0
      %1678 = vmatpush1.bf16.msra.mxu0 0
      %1679 = vmatprep.subr.bf16.mxu0 0
      %1680 = vmatpush1.bf16.msra.mxu0 0
      %1681 = vmatprep.subr.bf16.mxu0 0
      %1682 = vmatpush1.bf16.msra.mxu0 0
      %1683 = vmatprep.subr.bf16.mxu0 0
      %1684 = vmatpush1.bf16.msra.mxu0 0
      %1685 = vmatprep.subr.bf16.mxu0 0
      %1686 = vmatpush1.bf16.msra.mxu0 0
      %1687 = vmatprep.subr.bf16.mxu0 0
      %1688 = vmatpush1.bf16.msra.mxu0 0
      %1689 = vmatprep.subr.bf16.mxu0 0
      %1690 = vmatpush1.bf16.msra.mxu0 0
      %1691 = vmatprep.subr.bf16.mxu0 0
      %1692 = vmatpush1.bf16.msra.mxu0 0
      %1693 = vmatprep.subr.bf16.mxu0 0
      %1694 = vmatpush1.bf16.msra.mxu0 0
      %1695 = vmatprep.subr.bf16.mxu0 0
      %1696 = vmatpush1.bf16.msra.mxu0 0
      %1697 = vmatprep.subr.bf16.mxu0 0
      %1698 = vmatpush1.bf16.msra.mxu0 0
      %1699 = vmatprep.subr.bf16.mxu0 0
      %1700 = vmatpush1.bf16.msra.mxu0 0
      %1701 = vmatprep.mubr.bf16.mxu0 0
      %1702 = vmatmul.mubr.bf16.gmra.mrb[0].mxu0 %v1664
      %v1703 = vpop.f32.mrb[0].mxu0
      %v1704 = vadd.f32 0.0, %v1703
      %v1705 = vpop.f32.mrb[0].mxu0
      %v1706 = vpop.f32.mrb[0].mxu0
      %v1707 = vadd.f32 0.0, %v1706
      %v1708 = vpop.f32.mrb[0].mxu0
      %1709 = vdwg.mxu0
      %v1710 = vcombine.low %v1563, %v1657
      %v1711 = vcombine.high %v1563, %v1657
      %v1713 = vunpack.c.l.s4 1983009808
      %v1714 = vunpack.c.0.s8 %v1713
      %v1715 = vlaneseq
      %v1716 = vshrl.u32 %v1715, 7
      %v1717 = vsub.s32 %v1714, %v1716
      %v1718 = vrot.slane %v1710, %v1717
      %v1720 = vunpack.c.l.s4 1983009808
      %v1721 = vunpack.c.0.s8 %v1720
      %v1722 = vlaneseq
      %v1723 = vshrl.u32 %v1722, 7
      %v1724 = vsub.s32 %v1721, %v1723
      %v1725 = vrot.slane %v1711, %v1724
      %v1726 = vcombine.low %v1610, %v1704
      %v1727 = vcombine.high %v1610, %v1704
      %v1729 = vunpack.c.l.s4 1983009808
      %v1730 = vunpack.c.0.s8 %v1729
      %v1731 = vlaneseq
      %v1732 = vshrl.u32 %v1731, 7
      %v1733 = vsub.s32 %v1730, %v1732
      %v1734 = vrot.slane %v1726, %v1733
      %v1736 = vunpack.c.l.s4 1983009808
      %v1737 = vunpack.c.0.s8 %v1736
      %v1738 = vlaneseq
      %v1739 = vshrl.u32 %v1738, 7
      %v1740 = vsub.s32 %v1737, %v1739
      %v1741 = vrot.slane %v1727, %v1740
      %v1742 = vcombine.low %v1718, %v1734
      %v1743 = vcombine.high %v1718, %v1734
      %v1745 = vunpack.c.l.s4 1934713408
      %v1746 = vunpack.c.0.s8 %v1745
      %v1747 = vlaneseq
      %v1748 = vshrl.u32 %v1747, 7
      %v1749 = vsub.s32 %v1746, %v1748
      %v1750 = vrot.slane %v1742, %v1749
      %v1752 = vunpack.c.l.s4 1934713408
      %v1753 = vunpack.c.0.s8 %v1752
      %v1754 = vlaneseq
      %v1755 = vshrl.u32 %v1754, 7
      %v1756 = vsub.s32 %v1753, %v1755
      %v1757 = vrot.slane %v1743, %v1756
      %v1758 = vcombine.low %v1725, %v1741
      %v1759 = vcombine.high %v1725, %v1741
      %v1761 = vunpack.c.l.s4 1934713408
      %v1762 = vunpack.c.0.s8 %v1761
      %v1763 = vlaneseq
      %v1764 = vshrl.u32 %v1763, 7
      %v1765 = vsub.s32 %v1762, %v1764
      %v1766 = vrot.slane %v1758, %v1765
      %v1768 = vunpack.c.l.s4 1934713408
      %v1769 = vunpack.c.0.s8 %v1768
      %v1770 = vlaneseq
      %v1771 = vshrl.u32 %v1770, 7
      %v1772 = vsub.s32 %v1769, %v1771
      %v1773 = vrot.slane %v1759, %v1772
      %v1774 = vcombine.high %v1750, 0.0
      %v1775 = vcombine.high %v1757, 0.0
      %v1776 = vcombine.high %v1766, 0.0
      %v1777 = vcombine.high %v1773, 0.0
      %v1778 = vcombine.low %v1566, %v1660
      %v1780 = vunpack.c.l.s4 1983009808
      %v1781 = vunpack.c.0.s8 %v1780
      %v1782 = vlaneseq
      %v1783 = vshrl.u32 %v1782, 7
      %v1784 = vsub.s32 %v1781, %v1783
      %v1785 = vrot.slane %v1778, %v1784
      %v1786 = vcombine.low %v1613, %v1707
      %v1788 = vunpack.c.l.s4 1983009808
      %v1789 = vunpack.c.0.s8 %v1788
      %v1790 = vlaneseq
      %v1791 = vshrl.u32 %v1790, 7
      %v1792 = vsub.s32 %v1789, %v1791
      %v1793 = vrot.slane %v1786, %v1792
      %v1794 = vcombine.low %v1785, %v1793
      %v1795 = vcombine.high %v1785, %v1793
      %v1797 = vunpack.c.l.s4 1934713408
      %v1798 = vunpack.c.0.s8 %v1797
      %v1799 = vlaneseq
      %v1800 = vshrl.u32 %v1799, 7
      %v1801 = vsub.s32 %v1798, %v1800
      %v1802 = vrot.slane %v1794, %v1801
      %v1804 = vunpack.c.l.s4 1934713408
      %v1805 = vunpack.c.0.s8 %v1804
      %v1806 = vlaneseq
      %v1807 = vshrl.u32 %v1806, 7
      %v1808 = vsub.s32 %v1805, %v1807
      %v1809 = vrot.slane %v1795, %v1808
      %v1810 = vcombine.high %v1802, 0.0
      %v1811 = vcombine.high %v1809, 0.0
      %v1812 = vcombine.low %v1750, %v1757
      %v1814 = vunpack.c.l.s4 1983009808
      %v1815 = vunpack.c.0.s8 %v1814
      %v1816 = vlaneseq
      %v1817 = vshrl.u32 %v1816, 7
      %v1818 = vsub.s32 %v1815, %v1817
      %v1819 = vrot.slane %v1812, %v1818
      %v1820 = vcombine.low %v1774, %v1775
      %v1822 = vunpack.c.l.s4 1983009808
      %v1823 = vunpack.c.0.s8 %v1822
      %v1824 = vlaneseq
      %v1825 = vshrl.u32 %v1824, 7
      %v1826 = vsub.s32 %v1823, %v1825
      %v1827 = vrot.slane %v1820, %v1826
      %v1828 = vcombine.low %v1766, %v1773
      %v1830 = vunpack.c.l.s4 1983009808
      %v1831 = vunpack.c.0.s8 %v1830
      %v1832 = vlaneseq
      %v1833 = vshrl.u32 %v1832, 7
      %v1834 = vsub.s32 %v1831, %v1833
      %v1835 = vrot.slane %v1828, %v1834
      %v1836 = vcombine.low %v1776, %v1777
      %v1838 = vunpack.c.l.s4 1983009808
      %v1839 = vunpack.c.0.s8 %v1838
      %v1840 = vlaneseq
      %v1841 = vshrl.u32 %v1840, 7
      %v1842 = vsub.s32 %v1839, %v1841
      %v1843 = vrot.slane %v1836, %v1842
      %v1844 = vcombine.low %v1819, %v1827
      %v1845 = vcombine.high %v1819, %v1827
      %v1847 = vunpack.c.l.s4 1934713408
      %v1848 = vunpack.c.0.s8 %v1847
      %v1849 = vlaneseq
      %v1850 = vshrl.u32 %v1849, 7
      %v1851 = vsub.s32 %v1848, %v1850
      %v1852 = vrot.slane %v1844, %v1851
      %v1854 = vunpack.c.l.s4 1934713408
      %v1855 = vunpack.c.0.s8 %v1854
      %v1856 = vlaneseq
      %v1857 = vshrl.u32 %v1856, 7
      %v1858 = vsub.s32 %v1855, %v1857
      %v1859 = vrot.slane %v1845, %v1858
      %v1860 = vcombine.low %v1835, %v1843
      %v1861 = vcombine.high %v1835, %v1843
      %v1863 = vunpack.c.l.s4 1934713408
      %v1864 = vunpack.c.0.s8 %v1863
      %v1865 = vlaneseq
      %v1866 = vshrl.u32 %v1865, 7
      %v1867 = vsub.s32 %v1864, %v1866
      %v1868 = vrot.slane %v1860, %v1867
      %v1870 = vunpack.c.l.s4 1934713408
      %v1871 = vunpack.c.0.s8 %v1870
      %v1872 = vlaneseq
      %v1873 = vshrl.u32 %v1872, 7
      %v1874 = vsub.s32 %v1871, %v1873
      %v1875 = vrot.slane %v1861, %v1874
      %v1876 = vcombine.low %v1852, %v1868
      %v1877 = vcombine.high %v1852, %v1868
      %v1878 = vcombine.low %v1859, %v1875
      %v1879 = vcombine.high %v1859, %v1875
      %v1880 = vcombine.low %v1802, %v1809
      %v1882 = vunpack.c.l.s4 1983009808
      %v1883 = vunpack.c.0.s8 %v1882
      %v1884 = vlaneseq
      %v1885 = vshrl.u32 %v1884, 7
      %v1886 = vsub.s32 %v1883, %v1885
      %v1887 = vrot.slane %v1880, %v1886
      %v1888 = vcombine.low %v1810, %v1811
      %v1890 = vunpack.c.l.s4 1983009808
      %v1891 = vunpack.c.0.s8 %v1890
      %v1892 = vlaneseq
      %v1893 = vshrl.u32 %v1892, 7
      %v1894 = vsub.s32 %v1891, %v1893
      %v1895 = vrot.slane %v1888, %v1894
      %v1896 = vcombine.low %v1887, %v1895
      %v1897 = vcombine.high %v1887, %v1895
      %v1899 = vunpack.c.l.s4 1934713408
      %v1900 = vunpack.c.0.s8 %v1899
      %v1901 = vlaneseq
      %v1902 = vshrl.u32 %v1901, 7
      %v1903 = vsub.s32 %v1900, %v1902
      %v1904 = vrot.slane %v1896, %v1903
      %v1906 = vunpack.c.l.s4 1934713408
      %v1907 = vunpack.c.0.s8 %v1906
      %v1908 = vlaneseq
      %v1909 = vshrl.u32 %v1908, 7
      %v1910 = vsub.s32 %v1907, %v1909
      %v1911 = vrot.slane %v1897, %v1910
      %v1912 = vcombine.high %v1904, 0.0
      %v1913 = vcombine.high %v1911, 0.0
      %1916 = vrot.lane.b32.xlu0 %v1877, 8
      %v1917 = vpop.permute.xlu0 %1916
      %1918 = vrot.lane.b32.xlu0 %v1912, 8
      %v1919 = vpop.permute.xlu0 %1918
      %1924 = vrot.lane.b32.xlu0 %v1878, 16
      %v1925 = vpop.permute.xlu0 %1924
      %1926 = vrot.lane.b32.xlu0 %v1911, 16
      %v1927 = vpop.permute.xlu0 %1926
      %1932 = vrot.lane.b32.xlu0 %v1879, 24
      %v1933 = vpop.permute.xlu0 %1932
      %1934 = vrot.lane.b32.xlu0 %v1913, 24
      %v1935 = vpop.permute.xlu0 %1934
      %v1938 = vsel %vm1238, %v1876, %v1917
      %v1939 = vsel %vm1238, %v1904, %v1919
      %vm1940 = vcmask 130048
      %v1941 = vsel %vm1940, %v1938, %v1925
      %v1942 = vsel %vm1940, %v1939, %v1927
      %vm1943 = vcmask 195584
      %v1944 = vsel %vm1943, %v1941, %v1933
      %v1945 = vsel %vm1943, %v1942, %v1935
      %v1946 = vpack.c.bf16 %v1945, %v1944
      %v1947 = vld [vmem:[%s6] sm:$0xf]
      %v1948 = vld [vmem:[%s6 + $0x4] sm:$0xf]
      %v1949 = vld [vmem:[%s6 + $0x8] sm:$0xf]
      %v1950 = vld [vmem:[%s6 + $0xc] sm:$0xf]
      %v1951 = vld [vmem:[%s7] sm:$0x1]
      %v1953 = vlaneseq
      %v1954 = vshrl.u32 %v1953, 7
      %v1955 = vsub.s32 0, %v1954
      %v1956 = vrot.slane %v1951, %v1955
      %v1962 = vunpack.c.l.b16 %v1947
      %v1963 = vunpack.c.l.b16 %v1948
      %v1964 = vunpack.c.l.b16 %v1949
      %v1965 = vunpack.c.l.b16 %v1950
      %v1966 = vpack.c.b16 %v1963, %v1962
      %v1967 = vpack.c.b16 %v1965, %v1964
      %v1971 = vsel %vm449, %v1946, 0
      %1973 = vmatprep.subr.bf16.mxu0 0
      %1974 = vmatpush1.bf16.msra.mxu0 %v1966
      %1975 = vmatprep.subr.bf16.mxu0 0
      %1976 = vmatpush1.bf16.msra.mxu0 %v1967
      %1977 = vmatprep.subr.bf16.mxu0 0
      %1978 = vmatpush1.bf16.msra.mxu0 0
      %1979 = vmatprep.subr.bf16.mxu0 0
      %1980 = vmatpush1.bf16.msra.mxu0 0
      %1981 = vmatprep.subr.bf16.mxu0 0
      %1982 = vmatpush1.bf16.msra.mxu0 0
      %1983 = vmatprep.subr.bf16.mxu0 0
      %1984 = vmatpush1.bf16.msra.mxu0 0
      %1985 = vmatprep.subr.bf16.mxu0 0
      %1986 = vmatpush1.bf16.msra.mxu0 0
      %1987 = vmatprep.subr.bf16.mxu0 0
      %1988 = vmatpush1.bf16.msra.mxu0 0
      %1989 = vmatprep.subr.bf16.mxu0 0
      %1990 = vmatpush1.bf16.msra.mxu0 0
      %1991 = vmatprep.subr.bf16.mxu0 0
      %1992 = vmatpush1.bf16.msra.mxu0 0
      %1993 = vmatprep.subr.bf16.mxu0 0
      %1994 = vmatpush1.bf16.msra.mxu0 0
      %1995 = vmatprep.subr.bf16.mxu0 0
      %1996 = vmatpush1.bf16.msra.mxu0 0
      %1997 = vmatprep.subr.bf16.mxu0 0
      %1998 = vmatpush1.bf16.msra.mxu0 0
      %1999 = vmatprep.subr.bf16.mxu0 0
      %2000 = vmatpush1.bf16.msra.mxu0 0
      %2001 = vmatprep.subr.bf16.mxu0 0
      %2002 = vmatpush1.bf16.msra.mxu0 0
      %2003 = vmatprep.subr.bf16.mxu0 0
      %2004 = vmatpush1.bf16.msra.mxu0 0
      %2005 = vmatprep.mubr.bf16.mxu0 0
      %2006 = vmatmul.mubr.bf16.gmra.mrb[0].mxu0 %v1971
      %v2007 = vpop.f32.mrb[0].mxu0
      %v2008 = vadd.f32 %v1956, %v2007
      %v2009 = vpop.f32.mrb[0].mxu0
      %v2010 = vpop.f32.mrb[0].mxu0
      %v2011 = vadd.f32 %v1956, %v2010
      %v2012 = vpop.f32.mrb[0].mxu0
      %2013 = vdwg.mxu0
      %v2014 = vadd.f32 %v419, %v2008
      %v2015 = vadd.f32 %v420, %v2011
      %v2016 = vld [vmem:[%s8] sm:$0x1]
      %v2017 = vld [vmem:[%s9] sm:$0x1]
      %v2018 = vsel %vm449, %v2014, 0.0
      %2019 = vadd.xlane.f32.xlu0 %v2018
      %v2020 = vpop.xlane.xlu0 %2019
      %vm2021 = vcmask 257024
      %v2022 = vsel %vm2021, %v2015, 0.0
      %2023 = vadd.xlane.f32.xlu0 %v2022
      %v2024 = vpop.xlane.xlu0 %2023
      %v2025 = vrcp.pop 32.0
      %v2026 = vmul.f32 %v2020, %v2025
      %v2027 = vmul.f32 %v2024, %v2025
      %v2028 = vsub.f32 %v2014, %v2026
      %v2029 = vsub.f32 %v2015, %v2027
      %v2030 = vmul.f32 %v2028, %v2028
      %v2031 = vmul.f32 %v2029, %v2029
      %v2032 = vsel %vm449, %v2030, 0.0
      %2033 = vadd.xlane.f32.xlu0 %v2032
      %v2034 = vpop.xlane.xlu0 %2033
      %v2035 = vsel %vm2021, %v2031, 0.0
      %2036 = vadd.xlane.f32.xlu0 %v2035
      %v2037 = vpop.xlane.xlu0 %2036
      %v2038 = vmul.f32 %v2034, %v2025
      %v2039 = vmul.f32 %v2037, %v2025
      %v2040 = vadd.f32 %v2038, 1e-05
      %v2041 = vadd.f32 %v2039, 1e-05
      %v2042 = vrsqrt.pop %v2040
      %v2043 = vrsqrt.pop %v2041
      %v2044 = vmul.f32 %v2028, %v2042
      %v2045 = vmul.f32 %v2029, %v2043
      %v2047 = vlaneseq
      %v2048 = vshrl.u32 %v2047, 7
      %v2049 = vsub.s32 0, %v2048
      %v2050 = vrot.slane %v2016, %v2049
      %v2052 = vmul.f32 %v2044, %v2050
      %v2053 = vmul.f32 %v2045, %v2050
      %v2055 = vlaneseq
      %v2056 = vshrl.u32 %v2055, 7
      %v2057 = vsub.s32 0, %v2056
      %v2058 = vrot.slane %v2017, %v2057
      %v2060 = vadd.f32 %v2052, %v2058
      %v2061 = vadd.f32 %v2053, %v2058
      %2062 = vst.msk [vmem:[%s411] sm:$0xff] %vm449, %v2060
      %2063 = vst.msk [vmem:[%s415] sm:$0xf] %vm2021, %v2061
      %p2064 = scmp.lt.s32.totalorder %s23, 1
      %s2065 = scalar_select %p2064, %s23, 1
      %s2066 = smul.addr %s2065, 8
      %s2067 = scalar_lea.vmem %s10, %s2066
      %p2068 = scmp.lt.s32.totalorder %s23, 1
      %s2069 = scalar_select %p2068, %s23, 1
      %s2070 = smul.addr %s2069, 4
      %s2071 = scalar_lea.vmem %s11, %s2070
      // Predicated region
      $region61: #{decoder_layer_forward.3} parent=59 // pred_check
        %p2072 = pneg %p261
      $region62: #{decoder_layer_forward.3} parent=59 // pred_check_branch
        %2074 = sbr.rel (%p2072) target = $region64
      $region63: #{decoder_layer_forward.3} parent=59 // pred_region
        _
      $region64: #{decoder_layer_forward.3} parent=59 // pred_fallthru
        _
      // Predicated region
      $region65: #{decoder_layer_forward.3} parent=59 // pred_check
        %p2075 = pneg %p287
      $region66: #{decoder_layer_forward.3} parent=59 // pred_check_branch
        %2077 = sbr.rel (%p2075) target = $region68
      $region67: #{decoder_layer_forward.3} parent=59 // pred_region
        _
      $region68: #{decoder_layer_forward.3} parent=59 // pred_fallthru
        _
    $region60: #{decoder_layer_forward.3} parent=5 // pred_fallthru
      _
    %p2078 = scmp.le.s32.totalorder 2, %s18
    // Predicated region
    $region69: #{decoder_layer_forward.3} parent=5 // pred_check
      %p2079 = pneg %p2078
    $region70: #{decoder_layer_forward.3} parent=5 // pred_check_branch
      %2081 = sbr.rel (%p2079) target = $region72
    $region71: #{decoder_layer_forward.3} parent=5 // pred_region
      %s2082 = ssub.s32 %s18, 2
      // Predicated region
      $region73: #{decoder_layer_forward.3} parent=71 // pred_check
        %p2083 = pneg %p267
      $region74: #{decoder_layer_forward.3} parent=71 // pred_check_branch
        %2085 = sbr.rel (%p2083) target = $region76
      $region75: #{decoder_layer_forward.3} parent=71 // pred_region
        %p2086 = scmp.lt.s32.totalorder %s24, 1
        %s2087 = scalar_select %p2086, %s24, 1
        %s2088 = smul.addr %s2087, 8
        %s2089 = scalar_lea.vmem %s10, %s2088
      $region76: #{decoder_layer_forward.3} parent=71 // pred_fallthru
        _
      // Predicated region
      $region77: #{decoder_layer_forward.3} parent=71 // pred_check
        %p2090 = pneg %p293
      $region78: #{decoder_layer_forward.3} parent=71 // pred_check_branch
        %2092 = sbr.rel (%p2090) target = $region80
      $region79: #{decoder_layer_forward.3} parent=71 // pred_region
        %p2093 = scmp.lt.s32.totalorder %s24, 1
        %s2094 = scalar_select %p2093, %s24, 1
        %s2095 = smul.addr %s2094, 4
        %s2096 = scalar_lea.vmem %s11, %s2095
      $region80: #{decoder_layer_forward.3} parent=71 // pred_fallthru
        _
    $region72: #{decoder_layer_forward.3} parent=5 // pred_fallthru
      _
  $region6: #{decoder_layer_forward.3} parent=0 // loop_footer
    %s22 = sadd.s32 1, %s18
  $region7: #{decoder_layer_forward.3} parent=0 // loop_footer_branch
    %17 = sbr.rel target = $region3
  $region8: #{decoder_layer_forward.3} parent=0 // loop_exit
    _

// kernel: decoder_layer_forward.5
$region0: #{decoder_layer_forward.5}
  #allocation0 [shape = 'u32[]', space=smem, size = 0x4, offset = 0x4, fixed_abs, tag = 'smem constant byte address 0x4 - core index']
  #allocation1 [shape = 'u32[144,128]{1,0:T(1,128)}', space=vmem, size = 0x12000, scoped, tag = 'internal scratch']
  %s0 = inlined_call_operand.vmem [shape: f32[2,8,32], index: 0, kind: input, shape index: {}]
  %s1 = inlined_call_operand.vmem [shape: bf16[2,8,32], index: 1, kind: input, shape index: {}]
  %s2 = inlined_call_operand.vmem [shape: f32[2,8,4], index: 2, kind: input, shape index: {}]
  %s3 = inlined_call_operand.vmem [shape: f32[2,80], index: 3, kind: input, shape index: {}]
  %s4 = inlined_call_operand.vmem [shape: bf16[2,80,32], index: 4, kind: input, shape index: {}]
  %s5 = inlined_call_operand.vmem [shape: bf16[32,128], index: 5, kind: input, shape index: {}]
  %s6 = inlined_call_operand.vmem [shape: f32[1,128], index: 6, kind: input, shape index: {}]
  %s7 = inlined_call_operand.vmem [shape: bf16[32,32], index: 7, kind: input, shape index: {}]
  %s8 = inlined_call_operand.vmem [shape: f32[1,32], index: 8, kind: input, shape index: {}]
  %s9 = inlined_call_operand.vmem [shape: f32[1,32], index: 9, kind: input, shape index: {}]
  %s10 = inlined_call_operand.vmem [shape: f32[1,32], index: 10, kind: input, shape index: {}]
  %s11 = inlined_call_operand.vmem [shape: bf16[32,64], index: 11, kind: input, shape index: {}]
  %s12 = inlined_call_operand.vmem [shape: f32[1,64], index: 12, kind: input, shape index: {}]
  %s13 = inlined_call_operand.vmem [shape: bf16[64,32], index: 13, kind: input, shape index: {}]
  %s14 = inlined_call_operand.vmem [shape: f32[1,32], index: 14, kind: input, shape index: {}]
  %s15 = inlined_call_operand.vmem [shape: f32[1,32], index: 15, kind: input, shape index: {}]
  %s16 = inlined_call_operand.vmem [shape: f32[1,32], index: 16, kind: input, shape index: {}]
  %s17 = inlined_call_operand.hbm [shape: f32[2,8,32], index: 17, kind: output, shape index: {}]
  %s18 = sld [smem:[#allocation0]]
  $region101: #{decoder_layer_forward.5} parent=0
    _
  %s20 = ssub.s32 1, %s18
  %s21 = scalar_select 0, %s20, %s18
  $region1: #{decoder_layer_forward.5} parent=0
    #allocation2 [shape = 'u8[8192]{0}', space=vmem, size = 0x2000, scoped, tag = 'output window, operand 0']
    #allocation3 [shape = 's32[2]{0}', space=sflag, size = 0x8, scoped, tag = 'scoped memory for decoder_layer_forward.5']
    %22 = vsyncpa [#allocation3], 0
    %s23 = scalar_lea.sflag [#allocation3], 1
    %24 = vsyncpa %s23, 0
    loop: start=0, step=1, limit=4
    $region2: #{decoder_layer_forward.5} parent=1 // loop_pre_header
      _
    $region3: #{decoder_layer_forward.5} parent=1 // loop_header
      %s26 = sphi 0, %s30
      %p27 = scmp.ge.s32.totalorder %s26, 4
      %s33 = sphi 0, %s45
      %s34 = sphi 0, %s41
      %s35 = sphi 0, %s33
      %s36 = sphi 0, %s34
      %s37 = sphi 0, %s35
      %s38 = sphi 0, %s36
      %s50 = sphi 0, %s52
      %s53 = sphi 0, %s50
      %s54 = sphi 0, %s53
      %s70 = sphi 0, %s54
      %s78 = sphi 0, %s80
      %s81 = sphi 0, %s78
      %s82 = sphi 0, %s81
      %s98 = sphi 0, %s82
      %s106 = sphi 0, %s108
      %s109 = sphi 0, %s106
      %s110 = sphi 0, %s109
      %s126 = sphi 0, %s110
      %s130 = sphi 0, %s130
      %s132 = sphi 0, %s130
      %s133 = sphi 0, %s132
      %s147 = sphi 0, %s133
      %s153 = sphi 0, %s155
      %s156 = sphi 0, %s153
      %s157 = sphi 0, %s156
      %s173 = sphi 0, %s157
      %s177 = sphi 0, %s177
      %s179 = sphi 0, %s177
      %s180 = sphi 0, %s179
      %s194 = sphi 0, %s180
      %s198 = sphi 0, %s198
      %s200 = sphi 0, %s198
      %s201 = sphi 0, %s200
      %s215 = sphi 0, %s201
      %s219 = sphi 0, %s219
      %s221 = sphi 0, %s219
      %s222 = sphi 0, %s221
      %s236 = sphi 0, %s222
      %s240 = sphi 0, %s240
      %s242 = sphi 0, %s240
      %s243 = sphi 0, %s242
      %s257 = sphi 0, %s243
      %s261 = sphi 0, %s261
      %s263 = sphi 0, %s261
      %s264 = sphi 0, %s263
      %s278 = sphi 0, %s264
      %s282 = sphi 0, %s282
      %s284 = sphi 0, %s282
      %s285 = sphi 0, %s284
      %s299 = sphi 0, %s285
      %s303 = sphi 0, %s303
      %s305 = sphi 0, %s303
      %s306 = sphi 0, %s305
      %s320 = sphi 0, %s306
      %s324 = sphi 0, %s324
      %s326 = sphi 0, %s324
      %s327 = sphi 0, %s326
      %s341 = sphi 0, %s327
      %s345 = sphi 0, %s345
      %s347 = sphi 0, %s345
      %s348 = sphi 0, %s347
      %s362 = sphi 0, %s348
      %s366 = sphi 0, %s366
      %s368 = sphi 0, %s366
      %s369 = sphi 0, %s368
      %s383 = sphi 0, %s369
      %s387 = sphi 0, %s387
      %s389 = sphi 0, %s387
      %s390 = sphi 0, %s389
      %s404 = sphi 0, %s390
      %s408 = sphi 0, %s408
      %s410 = sphi 0, %s408
      %s411 = sphi 0, %s410
      %s425 = sphi 0, %s411
      %s433 = sphi 0, %s435
      %s436 = sphi 0, %s433
      %s437 = sphi 0, %s436
      %s453 = sphi 0, %s437
    $region4: #{decoder_layer_forward.5} parent=1 // loop_header_branch
      %29 = sbr.rel (%p27) target = $region8
    $region5: #{decoder_layer_forward.5} parent=1 // loop_body
      %s31 = ssub.s32 %s26, 1
      %s32 = ssub.s32 %s26, 2
      %s39 = sadd.s32 1, %s34
      %p40 = scmp.ge.s32.totalorder %s39, 1
      %s41 = scalar_select %p40, 0, %s39
      %s42 = sadd.s32 1, %s33
      %s43 = scalar_select %p40, %s42, %s33
      %p44 = scmp.ge.s32.totalorder %s43, 2
      %s45 = scalar_select %p44, 0, %s43
      %s46 = ssub.s32 %s33, %s45
      %s47 = ssub.s32 %s34, %s41
      %s48 = sor.u32 %s46, %s47
      %p49 = scmp.eq.s32.totalorder %s48, 0
      %s51 = sadd.s32 %s50, 1
      %s52 = scalar_select %p49, %s50, %s51
      %p55 = pneg %p49
      %p56 = scmp.eq.s32.totalorder %s26, 1
      %p57 = por %p55, %p56
      %p58 = scmp.ne.s32.totalorder %s50, %s53
      %p59 = scmp.eq.s32.totalorder %s26, 0
      %p60 = por %p58, %p59
      %p61 = scmp.ne.s32.totalorder %s50, %s53
      %p62 = scmp.eq.s32.totalorder %s31, 1
      %p63 = por %p61, %p62
      %p64 = scmp.ne.s32.totalorder %s53, %s54
      %p65 = scmp.eq.s32.totalorder %s31, 0
      %p66 = por %p64, %p65
      %p67 = scmp.ne.s32.totalorder %s53, %s54
      %p68 = scmp.eq.s32.totalorder %s32, 1
      %p69 = por %p67, %p68
      %p71 = scmp.ne.s32.totalorder %s54, %s70
      %p72 = scmp.eq.s32.totalorder %s32, 0
      %p73 = por %p71, %p72
      %s74 = ssub.s32 %s33, %s45
      %s75 = ssub.s32 %s34, %s41
      %s76 = sor.u32 %s74, %s75
      %p77 = scmp.eq.s32.totalorder %s76, 0
      %s79 = sadd.s32 %s78, 1
      %s80 = scalar_select %p77, %s78, %s79
      %p83 = pneg %p77
      %p84 = scmp.eq.s32.totalorder %s26, 1
      %p85 = por %p83, %p84
      %p86 = scmp.ne.s32.totalorder %s78, %s81
      %p87 = scmp.eq.s32.totalorder %s26, 0
      %p88 = por %p86, %p87
      %p89 = scmp.ne.s32.totalorder %s78, %s81
      %p90 = scmp.eq.s32.totalorder %s31, 1
      %p91 = por %p89, %p90
      %p92 = scmp.ne.s32.totalorder %s81, %s82
      %p93 = scmp.eq.s32.totalorder %s31, 0
      %p94 = por %p92, %p93
      %p95 = scmp.ne.s32.totalorder %s81, %s82
      %p96 = scmp.eq.s32.totalorder %s32, 1
      %p97 = por %p95, %p96
      %p99 = scmp.ne.s32.totalorder %s82, %s98
      %p100 = scmp.eq.s32.totalorder %s32, 0
      %p101 = por %p99, %p100
      %s102 = ssub.s32 %s33, %s45
      %s103 = ssub.s32 %s34, %s41
      %s104 = sor.u32 %s102, %s103
      %p105 = scmp.eq.s32.totalorder %s104, 0
      %s107 = sadd.s32 %s106, 1
      %s108 = scalar_select %p105, %s106, %s107
      %p111 = pneg %p105
      %p112 = scmp.eq.s32.totalorder %s26, 1
      %p113 = por %p111, %p112
      %p114 = scmp.ne.s32.totalorder %s106, %s109
      %p115 = scmp.eq.s32.totalorder %s26, 0
      %p116 = por %p114, %p115
      %p117 = scmp.ne.s32.totalorder %s106, %s109
      %p118 = scmp.eq.s32.totalorder %s31, 1
      %p119 = por %p117, %p118
      %p120 = scmp.ne.s32.totalorder %s109, %s110
      %p121 = scmp.eq.s32.totalorder %s31, 0
      %p122 = por %p120, %p121
      %p123 = scmp.ne.s32.totalorder %s109, %s110
      %p124 = scmp.eq.s32.totalorder %s32, 1
      %p125 = por %p123, %p124
      %p127 = scmp.ne.s32.totalorder %s110, %s126
      %p128 = scmp.eq.s32.totalorder %s32, 0
      %p129 = por %p127, %p128
      %s131 = sadd.s32 %s130, 1
      %p134 = scmp.eq.s32.totalorder %s26, 1
      %p135 = scmp.ne.s32.totalorder %s130, %s132
      %p136 = scmp.eq.s32.totalorder %s26, 0
      %p137 = por %p135, %p136
      %p138 = scmp.ne.s32.totalorder %s130, %s132
      %p139 = scmp.eq.s32.totalorder %s31, 1
      %p140 = por %p138, %p139
      %p141 = scmp.ne.s32.totalorder %s132, %s133
      %p142 = scmp.eq.s32.totalorder %s31, 0
      %p143 = por %p141, %p142
      %p144 = scmp.ne.s32.totalorder %s132, %s133
      %p145 = scmp.eq.s32.totalorder %s32, 1
      %p146 = por %p144, %p145
      %p148 = scmp.ne.s32.totalorder %s133, %s147
      %p149 = scmp.eq.s32.totalorder %s32, 0
      %p150 = por %p148, %p149
      %s151 = ssub.s32 %s33, %s45
      %p152 = scmp.eq.s32.totalorder %s151, 0
      %s154 = sadd.s32 %s153, 1
      %s155 = scalar_select %p152, %s153, %s154
      %p158 = pneg %p152
      %p159 = scmp.eq.s32.totalorder %s26, 1
      %p160 = por %p158, %p159
      %p161 = scmp.ne.s32.totalorder %s153, %s156
      %p162 = scmp.eq.s32.totalorder %s26, 0
      %p163 = por %p161, %p162
      %p164 = scmp.ne.s32.totalorder %s153, %s156
      %p165 = scmp.eq.s32.totalorder %s31, 1
      %p166 = por %p164, %p165
      %p167 = scmp.ne.s32.totalorder %s156, %s157
      %p168 = scmp.eq.s32.totalorder %s31, 0
      %p169 = por %p167, %p168
      %p170 = scmp.ne.s32.totalorder %s156, %s157
      %p171 = scmp.eq.s32.totalorder %s32, 1
      %p172 = por %p170, %p171
      %p174 = scmp.ne.s32.totalorder %s157, %s173
      %p175 = scmp.eq.s32.totalorder %s32, 0
      %p176 = por %p174, %p175
      %s178 = sadd.s32 %s177, 1
      %p181 = scmp.eq.s32.totalorder %s26, 1
      %p182 = scmp.ne.s32.totalorder %s177, %s179
      %p183 = scmp.eq.s32.totalorder %s26, 0
      %p184 = por %p182, %p183
      %p185 = scmp.ne.s32.totalorder %s177, %s179
      %p186 = scmp.eq.s32.totalorder %s31, 1
      %p187 = por %p185, %p186
      %p188 = scmp.ne.s32.totalorder %s179, %s180
      %p189 = scmp.eq.s32.totalorder %s31, 0
      %p190 = por %p188, %p189
      %p191 = scmp.ne.s32.totalorder %s179, %s180
      %p192 = scmp.eq.s32.totalorder %s32, 1
      %p193 = por %p191, %p192
      %p195 = scmp.ne.s32.totalorder %s180, %s194
      %p196 = scmp.eq.s32.totalorder %s32, 0
      %p197 = por %p195, %p196
      %s199 = sadd.s32 %s198, 1
      %p202 = scmp.eq.s32.totalorder %s26, 1
      %p203 = scmp.ne.s32.totalorder %s198, %s200
      %p204 = scmp.eq.s32.totalorder %s26, 0
      %p205 = por %p203, %p204
      %p206 = scmp.ne.s32.totalorder %s198, %s200
      %p207 = scmp.eq.s32.totalorder %s31, 1
      %p208 = por %p206, %p207
      %p209 = scmp.ne.s32.totalorder %s200, %s201
      %p210 = scmp.eq.s32.totalorder %s31, 0
      %p211 = por %p209, %p210
      %p212 = scmp.ne.s32.totalorder %s200, %s201
      %p213 = scmp.eq.s32.totalorder %s32, 1
      %p214 = por %p212, %p213
      %p216 = scmp.ne.s32.totalorder %s201, %s215
      %p217 = scmp.eq.s32.totalorder %s32, 0
      %p218 = por %p216, %p217
      %s220 = sadd.s32 %s219, 1
      %p223 = scmp.eq.s32.totalorder %s26, 1
      %p224 = scmp.ne.s32.totalorder %s219, %s221
      %p225 = scmp.eq.s32.totalorder %s26, 0
      %p226 = por %p224, %p225
      %p227 = scmp.ne.s32.totalorder %s219, %s221
      %p228 = scmp.eq.s32.totalorder %s31, 1
      %p229 = por %p227, %p228
      %p230 = scmp.ne.s32.totalorder %s221, %s222
      %p231 = scmp.eq.s32.totalorder %s31, 0
      %p232 = por %p230, %p231
      %p233 = scmp.ne.s32.totalorder %s221, %s222
      %p234 = scmp.eq.s32.totalorder %s32, 1
      %p235 = por %p233, %p234
      %p237 = scmp.ne.s32.totalorder %s222, %s236
      %p238 = scmp.eq.s32.totalorder %s32, 0
      %p239 = por %p237, %p238
      %s241 = sadd.s32 %s240, 1
      %p244 = scmp.eq.s32.totalorder %s26, 1
      %p245 = scmp.ne.s32.totalorder %s240, %s242
      %p246 = scmp.eq.s32.totalorder %s26, 0
      %p247 = por %p245, %p246
      %p248 = scmp.ne.s32.totalorder %s240, %s242
      %p249 = scmp.eq.s32.totalorder %s31, 1
      %p250 = por %p248, %p249
      %p251 = scmp.ne.s32.totalorder %s242, %s243
      %p252 = scmp.eq.s32.totalorder %s31, 0
      %p253 = por %p251, %p252
      %p254 = scmp.ne.s32.totalorder %s242, %s243
      %p255 = scmp.eq.s32.totalorder %s32, 1
      %p256 = por %p254, %p255
      %p258 = scmp.ne.s32.totalorder %s243, %s257
      %p259 = scmp.eq.s32.totalorder %s32, 0
      %p260 = por %p258, %p259
      %s262 = sadd.s32 %s261, 1
      %p265 = scmp.eq.s32.totalorder %s26, 1
      %p266 = scmp.ne.s32.totalorder %s261, %s263
      %p267 = scmp.eq.s32.totalorder %s26, 0
      %p268 = por %p266, %p267
      %p269 = scmp.ne.s32.totalorder %s261, %s263
      %p270 = scmp.eq.s32.totalorder %s31, 1
      %p271 = por %p269, %p270
      %p272 = scmp.ne.s32.totalorder %s263, %s264
      %p273 = scmp.eq.s32.totalorder %s31, 0
      %p274 = por %p272, %p273
      %p275 = scmp.ne.s32.totalorder %s263, %s264
      %p276 = scmp.eq.s32.totalorder %s32, 1
      %p277 = por %p275, %p276
      %p279 = scmp.ne.s32.totalorder %s264, %s278
      %p280 = scmp.eq.s32.totalorder %s32, 0
      %p281 = por %p279, %p280
      %s283 = sadd.s32 %s282, 1
      %p286 = scmp.eq.s32.totalorder %s26, 1
      %p287 = scmp.ne.s32.totalorder %s282, %s284
      %p288 = scmp.eq.s32.totalorder %s26, 0
      %p289 = por %p287, %p288
      %p290 = scmp.ne.s32.totalorder %s282, %s284
      %p291 = scmp.eq.s32.totalorder %s31, 1
      %p292 = por %p290, %p291
      %p293 = scmp.ne.s32.totalorder %s284, %s285
      %p294 = scmp.eq.s32.totalorder %s31, 0
      %p295 = por %p293, %p294
      %p296 = scmp.ne.s32.totalorder %s284, %s285
      %p297 = scmp.eq.s32.totalorder %s32, 1
      %p298 = por %p296, %p297
      %p300 = scmp.ne.s32.totalorder %s285, %s299
      %p301 = scmp.eq.s32.totalorder %s32, 0
      %p302 = por %p300, %p301
      %s304 = sadd.s32 %s303, 1
      %p307 = scmp.eq.s32.totalorder %s26, 1
      %p308 = scmp.ne.s32.totalorder %s303, %s305
      %p309 = scmp.eq.s32.totalorder %s26, 0
      %p310 = por %p308, %p309
      %p311 = scmp.ne.s32.totalorder %s303, %s305
      %p312 = scmp.eq.s32.totalorder %s31, 1
      %p313 = por %p311, %p312
      %p314 = scmp.ne.s32.totalorder %s305, %s306
      %p315 = scmp.eq.s32.totalorder %s31, 0
      %p316 = por %p314, %p315
      %p317 = scmp.ne.s32.totalorder %s305, %s306
      %p318 = scmp.eq.s32.totalorder %s32, 1
      %p319 = por %p317, %p318
      %p321 = scmp.ne.s32.totalorder %s306, %s320
      %p322 = scmp.eq.s32.totalorder %s32, 0
      %p323 = por %p321, %p322
      %s325 = sadd.s32 %s324, 1
      %p328 = scmp.eq.s32.totalorder %s26, 1
      %p329 = scmp.ne.s32.totalorder %s324, %s326
      %p330 = scmp.eq.s32.totalorder %s26, 0
      %p331 = por %p329, %p330
      %p332 = scmp.ne.s32.totalorder %s324, %s326
      %p333 = scmp.eq.s32.totalorder %s31, 1
      %p334 = por %p332, %p333
      %p335 = scmp.ne.s32.totalorder %s326, %s327
      %p336 = scmp.eq.s32.totalorder %s31, 0
      %p337 = por %p335, %p336
      %p338 = scmp.ne.s32.totalorder %s326, %s327
      %p339 = scmp.eq.s32.totalorder %s32, 1
      %p340 = por %p338, %p339
      %p342 = scmp.ne.s32.totalorder %s327, %s341
      %p343 = scmp.eq.s32.totalorder %s32, 0
      %p344 = por %p342, %p343
      %s346 = sadd.s32 %s345, 1
      %p349 = scmp.eq.s32.totalorder %s26, 1
      %p350 = scmp.ne.s32.totalorder %s345, %s347
      %p351 = scmp.eq.s32.totalorder %s26, 0
      %p352 = por %p350, %p351
      %p353 = scmp.ne.s32.totalorder %s345, %s347
      %p354 = scmp.eq.s32.totalorder %s31, 1
      %p355 = por %p353, %p354
      %p356 = scmp.ne.s32.totalorder %s347, %s348
      %p357 = scmp.eq.s32.totalorder %s31, 0
      %p358 = por %p356, %p357
      %p359 = scmp.ne.s32.totalorder %s347, %s348
      %p360 = scmp.eq.s32.totalorder %s32, 1
      %p361 = por %p359, %p360
      %p363 = scmp.ne.s32.totalorder %s348, %s362
      %p364 = scmp.eq.s32.totalorder %s32, 0
      %p365 = por %p363, %p364
      %s367 = sadd.s32 %s366, 1
      %p370 = scmp.eq.s32.totalorder %s26, 1
      %p371 = scmp.ne.s32.totalorder %s366, %s368
      %p372 = scmp.eq.s32.totalorder %s26, 0
      %p373 = por %p371, %p372
      %p374 = scmp.ne.s32.totalorder %s366, %s368
      %p375 = scmp.eq.s32.totalorder %s31, 1
      %p376 = por %p374, %p375
      %p377 = scmp.ne.s32.totalorder %s368, %s369
      %p378 = scmp.eq.s32.totalorder %s31, 0
      %p379 = por %p377, %p378
      %p380 = scmp.ne.s32.totalorder %s368, %s369
      %p381 = scmp.eq.s32.totalorder %s32, 1
      %p382 = por %p380, %p381
      %p384 = scmp.ne.s32.totalorder %s369, %s383
      %p385 = scmp.eq.s32.totalorder %s32, 0
      %p386 = por %p384, %p385
      %s388 = sadd.s32 %s387, 1
      %p391 = scmp.eq.s32.totalorder %s26, 1
      %p392 = scmp.ne.s32.totalorder %s387, %s389
      %p393 = scmp.eq.s32.totalorder %s26, 0
      %p394 = por %p392, %p393
      %p395 = scmp.ne.s32.totalorder %s387, %s389
      %p396 = scmp.eq.s32.totalorder %s31, 1
      %p397 = por %p395, %p396
      %p398 = scmp.ne.s32.totalorder %s389, %s390
      %p399 = scmp.eq.s32.totalorder %s31, 0
      %p400 = por %p398, %p399
      %p401 = scmp.ne.s32.totalorder %s389, %s390
      %p402 = scmp.eq.s32.totalorder %s32, 1
      %p403 = por %p401, %p402
      %p405 = scmp.ne.s32.totalorder %s390, %s404
      %p406 = scmp.eq.s32.totalorder %s32, 0
      %p407 = por %p405, %p406
      %s409 = sadd.s32 %s408, 1
      %p412 = scmp.eq.s32.totalorder %s26, 1
      %p413 = scmp.ne.s32.totalorder %s408, %s410
      %p414 = scmp.eq.s32.totalorder %s26, 0
      %p415 = por %p413, %p414
      %p416 = scmp.ne.s32.totalorder %s408, %s410
      %p417 = scmp.eq.s32.totalorder %s31, 1
      %p418 = por %p416, %p417
      %p419 = scmp.ne.s32.totalorder %s410, %s411
      %p420 = scmp.eq.s32.totalorder %s31, 0
      %p421 = por %p419, %p420
      %p422 = scmp.ne.s32.totalorder %s410, %s411
      %p423 = scmp.eq.s32.totalorder %s32, 1
      %p424 = por %p422, %p423
      %p426 = scmp.ne.s32.totalorder %s411, %s425
      %p427 = scmp.eq.s32.totalorder %s32, 0
      %p428 = por %p426, %p427
      %s429 = ssub.s32 %s33, %s45
      %s430 = ssub.s32 %s34, %s41
      %s431 = sor.u32 %s429, %s430
      %p432 = scmp.eq.s32.totalorder %s431, 0
      %s434 = sadd.s32 %s433, 1
      %s435 = scalar_select %p432, %s433, %s434
      %p438 = pneg %p432
      %p439 = scmp.eq.s32.totalorder %s26, 1
      %p440 = por %p438, %p439
      %p441 = scmp.ne.s32.totalorder %s433, %s436
      %p442 = scmp.eq.s32.totalorder %s26, 0
      %p443 = por %p441, %p442
      %p444 = scmp.ne.s32.totalorder %s433, %s436
      %p445 = scmp.eq.s32.totalorder %s31, 1
      %p446 = por %p444, %p445
      %p447 = scmp.ne.s32.totalorder %s436, %s437
      %p448 = scmp.eq.s32.totalorder %s31, 0
      %p449 = por %p447, %p448
      %p450 = scmp.ne.s32.totalorder %s436, %s437
      %p451 = scmp.eq.s32.totalorder %s32, 1
      %p452 = por %p450, %p451
      %p454 = scmp.ne.s32.totalorder %s437, %s453
      %p455 = scmp.eq.s32.totalorder %s32, 0
      %p456 = por %p454, %p455
      %p457 = scmp.le.s32.totalorder 1, %s26
      %p458 = scmp.lt.s32.totalorder %s26, 3
      %p459 = pnand %p457, %p458
      %p460 = pneg %p459
      // Predicated region
      $region9: #{decoder_layer_forward.5} parent=5 // pred_check
        _
      $region10: #{decoder_layer_forward.5} parent=5 // pred_check_branch
        %462 = sbr.rel (%p459) target = $region12
      $region11: #{decoder_layer_forward.5} parent=5 // pred_region
        %s463 = ssub.s32 %s26, 1
        // Predicated region
        $region13: #{decoder_layer_forward.5} parent=11 // pred_check
          %p464 = pneg %p143
        $region14: #{decoder_layer_forward.5} parent=11 // pred_check_branch
          %466 = sbr.rel (%p464) target = $region16
        $region15: #{decoder_layer_forward.5} parent=11 // pred_region
          _
        $region16: #{decoder_layer_forward.5} parent=11 // pred_fallthru
          _
        // Predicated region
        $region17: #{decoder_layer_forward.5} parent=11 // pred_check
          %p467 = pneg %p190
        $region18: #{decoder_layer_forward.5} parent=11 // pred_check_branch
          %469 = sbr.rel (%p467) target = $region20
        $region19: #{decoder_layer_forward.5} parent=11 // pred_region
          _
        $region20: #{decoder_layer_forward.5} parent=11 // pred_fallthru
          _
        // Predicated region
        $region21: #{decoder_layer_forward.5} parent=11 // pred_check
          %p470 = pneg %p211
        $region22: #{decoder_layer_forward.5} parent=11 // pred_check_branch
          %472 = sbr.rel (%p470) target = $region24
        $region23: #{decoder_layer_forward.5} parent=11 // pred_region
          _
        $region24: #{decoder_layer_forward.5} parent=11 // pred_fallthru
          _
        // Predicated region
        $region25: #{decoder_layer_forward.5} parent=11 // pred_check
          %p473 = pneg %p232
        $region26: #{decoder_layer_forward.5} parent=11 // pred_check_branch
          %475 = sbr.rel (%p473) target = $region28
        $region27: #{decoder_layer_forward.5} parent=11 // pred_region
          _
        $region28: #{decoder_layer_forward.5} parent=11 // pred_fallthru
          _
        // Predicated region
        $region29: #{decoder_layer_forward.5} parent=11 // pred_check
          %p476 = pneg %p253
        $region30: #{decoder_layer_forward.5} parent=11 // pred_check_branch
          %478 = sbr.rel (%p476) target = $region32
        $region31: #{decoder_layer_forward.5} parent=11 // pred_region
          _
        $region32: #{decoder_layer_forward.5} parent=11 // pred_fallthru
          _
        // Predicated region
        $region33: #{decoder_layer_forward.5} parent=11 // pred_check
          %p479 = pneg %p274
        $region34: #{decoder_layer_forward.5} parent=11 // pred_check_branch
          %481 = sbr.rel (%p479) target = $region36
        $region35: #{decoder_layer_forward.5} parent=11 // pred_region
          _
        $region36: #{decoder_layer_forward.5} parent=11 // pred_fallthru
          _
        // Predicated region
        $region37: #{decoder_layer_forward.5} parent=11 // pred_check
          %p482 = pneg %p295
        $region38: #{decoder_layer_forward.5} parent=11 // pred_check_branch
          %484 = sbr.rel (%p482) target = $region40
        $region39: #{decoder_layer_forward.5} parent=11 // pred_region
          _
        $region40: #{decoder_layer_forward.5} parent=11 // pred_fallthru
          _
        // Predicated region
        $region41: #{decoder_layer_forward.5} parent=11 // pred_check
          %p485 = pneg %p316
        $region42: #{decoder_layer_forward.5} parent=11 // pred_check_branch
          %487 = sbr.rel (%p485) target = $region44
        $region43: #{decoder_layer_forward.5} parent=11 // pred_region
          _
        $region44: #{decoder_layer_forward.5} parent=11 // pred_fallthru
          _
        // Predicated region
        $region45: #{decoder_layer_forward.5} parent=11 // pred_check
          %p488 = pneg %p337
        $region46: #{decoder_layer_forward.5} parent=11 // pred_check_branch
          %490 = sbr.rel (%p488) target = $region48
        $region47: #{decoder_layer_forward.5} parent=11 // pred_region
          _
        $region48: #{decoder_layer_forward.5} parent=11 // pred_fallthru
          _
        // Predicated region
        $region49: #{decoder_layer_forward.5} parent=11 // pred_check
          %p491 = pneg %p358
        $region50: #{decoder_layer_forward.5} parent=11 // pred_check_branch
          %493 = sbr.rel (%p491) target = $region52
        $region51: #{decoder_layer_forward.5} parent=11 // pred_region
          _
        $region52: #{decoder_layer_forward.5} parent=11 // pred_fallthru
          _
        // Predicated region
        $region53: #{decoder_layer_forward.5} parent=11 // pred_check
          %p494 = pneg %p379
        $region54: #{decoder_layer_forward.5} parent=11 // pred_check_branch
          %496 = sbr.rel (%p494) target = $region56
        $region55: #{decoder_layer_forward.5} parent=11 // pred_region
          _
        $region56: #{decoder_layer_forward.5} parent=11 // pred_fallthru
          _
        // Predicated region
        $region57: #{decoder_layer_forward.5} parent=11 // pred_check
          %p497 = pneg %p400
        $region58: #{decoder_layer_forward.5} parent=11 // pred_check_branch
          %499 = sbr.rel (%p497) target = $region60
        $region59: #{decoder_layer_forward.5} parent=11 // pred_region
          _
        $region60: #{decoder_layer_forward.5} parent=11 // pred_fallthru
          _
        // Predicated region
        $region61: #{decoder_layer_forward.5} parent=11 // pred_check
          %p500 = pneg %p421
        $region62: #{decoder_layer_forward.5} parent=11 // pred_check_branch
          %502 = sbr.rel (%p500) target = $region64
        $region63: #{decoder_layer_forward.5} parent=11 // pred_region
          _
        $region64: #{decoder_layer_forward.5} parent=11 // pred_fallthru
          _
      $region12: #{decoder_layer_forward.5} parent=5 // pred_fallthru
        _
      %p503 = scmp.lt.s32.totalorder %s26, 2
      // Predicated region
      $region65: #{decoder_layer_forward.5} parent=5 // pred_check
        %p504 = pneg %p503
      $region66: #{decoder_layer_forward.5} parent=5 // pred_check_branch
        %506 = sbr.rel (%p504) target = $region68
      $region67: #{decoder_layer_forward.5} parent=5 // pred_region
        // Predicated region
        $region69: #{decoder_layer_forward.5} parent=67 // pred_check
          %p507 = pneg %p60
        $region70: #{decoder_layer_forward.5} parent=67 // pred_check_branch
          %509 = sbr.rel (%p507) target = $region72
        $region71: #{decoder_layer_forward.5} parent=67 // pred_region
          %p510 = scmp.lt.s32.totalorder %s33, 1
          %s511 = scalar_select %p510, %s33, 1
          %p512 = scmp.lt.s32.totalorder %s34, 0
          %s513 = scalar_select %p512, %s34, 0
          %s514 = sadd.s32 %s513, %s511
          %s515 = smul.addr %s514, 8
          %s516 = scalar_lea.vmem %s0, %s515
        $region72: #{decoder_layer_forward.5} parent=67 // pred_fallthru
          _
        // Predicated region
        $region73: #{decoder_layer_forward.5} parent=67 // pred_check
          %p517 = pneg %p88
        $region74: #{decoder_layer_forward.5} parent=67 // pred_check_branch
          %519 = sbr.rel (%p517) target = $region76
        $region75: #{decoder_layer_forward.5} parent=67 // pred_region
          %p520 = scmp.lt.s32.totalorder %s33, 1
          %s521 = scalar_select %p520, %s33, 1
          %p522 = scmp.lt.s32.totalorder %s34, 0
          %s523 = scalar_select %p522, %s34, 0
          %s524 = sadd.s32 %s523, %s521
          %s525 = smul.addr %s524, 4
          %s526 = scalar_lea.vmem %s1, %s525
        $region76: #{decoder_layer_forward.5} parent=67 // pred_fallthru
          _
        // Predicated region
        $region77: #{decoder_layer_forward.5} parent=67 // pred_check
          %p527 = pneg %p116
        $region78: #{decoder_layer_forward.5} parent=67 // pred_check_branch
          %529 = sbr.rel (%p527) target = $region80
        $region79: #{decoder_layer_forward.5} parent=67 // pred_region
          %p530 = scmp.lt.s32.totalorder %s33, 1
          %s531 = scalar_select %p530, %s33, 1
          %p532 = scmp.lt.s32.totalorder %s34, 0
          %s533 = scalar_select %p532, %s34, 0
          %s534 = sadd.s32 %s533, %s531
          %s535 = smul.addr %s534, 8
          %s536 = scalar_lea.vmem %s2, %s535
        $region80: #{decoder_layer_forward.5} parent=67 // pred_fallthru
          _
        // Predicated region
        $region81: #{decoder_layer_forward.5} parent=67 // pred_check
          %p537 = pneg %p163
        $region82: #{decoder_layer_forward.5} parent=67 // pred_check_branch
          %539 = sbr.rel (%p537) target = $region84
        $region83: #{decoder_layer_forward.5} parent=67 // pred_region
          %p540 = scmp.lt.s32.totalorder %s33, 1
          %s541 = scalar_select %p540, %s33, 1
          %s542 = smul.addr %s541, 10
          %s543 = smul.addr %s542, 4
          %s544 = scalar_lea.vmem %s4, %s543
        $region84: #{decoder_layer_forward.5} parent=67 // pred_fallthru
          _
      $region68: #{decoder_layer_forward.5} parent=5 // pred_fallthru
        _
      %p545 = scmp.le.s32.totalorder 1, %s26
      %p546 = scmp.lt.s32.totalorder %s26, 3
      %p547 = pnand %p545, %p546
      %p548 = pneg %p547
      // Predicated region
      $region85: #{decoder_layer_forward.5} parent=5 // pred_check
        _
      $region86: #{decoder_layer_forward.5} parent=5 // pred_check_branch
        %550 = sbr.rel (%p547) target = $region88
      $region87: #{decoder_layer_forward.5} parent=5 // pred_region
        %s551 = ssub.s32 %s26, 1
        %p552 = scmp.lt.s32.totalorder %s35, 1
        %s553 = scalar_select %p552, %s35, 1
        %p554 = scmp.lt.s32.totalorder %s36, 0
        %s555 = scalar_select %p554, %s36, 0
        %s556 = sadd.s32 %s555, %s553
        %s557 = smul.addr %s556, 8
        %s558 = scalar_lea.vmem %s0, %s557
        %p559 = pneg %p66
        %p560 = pneg %p63
        %p561 = scmp.lt.s32.totalorder %s35, 1
        %s562 = scalar_select %p561, %s35, 1
        %p563 = scmp.lt.s32.totalorder %s36, 0
        %s564 = scalar_select %p563, %s36, 0
        %s565 = sadd.s32 %s564, %s562
        %s566 = smul.addr %s565, 4
        %s567 = scalar_lea.vmem %s1, %s566
        %p568 = pneg %p94
        %p569 = pneg %p91
        %p570 = scmp.lt.s32.totalorder %s35, 1
        %s571 = scalar_select %p570, %s35, 1
        %p572 = scmp.lt.s32.totalorder %s36, 0
        %s573 = scalar_select %p572, %s36, 0
        %s574 = sadd.s32 %s573, %s571
        %s575 = smul.addr %s574, 8
        %s576 = scalar_lea.vmem %s2, %s575
        %p577 = pneg %p122
        %p578 = pneg %p119
        %p579 = pneg %p143
        %p580 = pneg %p140
        %p581 = scmp.lt.s32.totalorder %s35, 1
        %s582 = scalar_select %p581, %s35, 1
        %s583 = smul.addr %s582, 10
        %s584 = smul.addr %s583, 4
        %s585 = scalar_lea.vmem %s4, %s584
        %p586 = pneg %p169
        %p587 = pneg %p166
        %p588 = pneg %p190
        %p589 = pneg %p187
        %p590 = pneg %p211
        %p591 = pneg %p208
        %p592 = pneg %p232
        %p593 = pneg %p229
        %p594 = pneg %p253
        %p595 = pneg %p250
        %p596 = pneg %p274
        %p597 = pneg %p271
        %p598 = pneg %p295
        %p599 = pneg %p292
        %p600 = pneg %p316
        %p601 = pneg %p313
        %p602 = pneg %p337
        %p603 = pneg %p334
        %p604 = pneg %p358
        %p605 = pneg %p355
        %p606 = pneg %p379
        %p607 = pneg %p376
        %p608 = pneg %p400
        %p609 = pneg %p397
        %p610 = pneg %p421
        %p611 = pneg %p418
        %p612 = pneg %p449
        %p613 = pneg %p446
        %s614 = sand.u32 %s436, 1
        %s615 = scalar_lea.sflag [#allocation3], %s614
        %s616 = sand.u32 %s436, 1
        %s617 = smul.addr %s616, 8
        %s618 = scalar_lea.vmem [#allocation2], %s617
        %p619 = scmp.lt.s32.totalorder %s35, 1
        %s620 = scalar_select %p619, %s35, 1
        %p621 = scmp.lt.s32.totalorder %s36, 0
        %s622 = scalar_select %p621, %s36, 0
        %s623 = sadd.s32 %s622, %s620
        %s624 = smul.addr %s623, 8
        %s625 = scalar_lea.vmem %s0, %s624
        %p626 = scmp.lt.s32.totalorder %s35, 1
        %s627 = scalar_select %p626, %s35, 1
        %p628 = scmp.lt.s32.totalorder %s36, 0
        %s629 = scalar_select %p628, %s36, 0
        %s630 = sadd.s32 %s629, %s627
        %s631 = smul.addr %s630, 4
        %s632 = scalar_lea.vmem %s1, %s631
        %p633 = scmp.lt.s32.totalorder %s35, 1
        %s634 = scalar_select %p633, %s35, 1
        %p635 = scmp.lt.s32.totalorder %s36, 0
        %s636 = scalar_select %p635, %s36, 0
        %s637 = sadd.s32 %s636, %s634
        %s638 = smul.addr %s637, 8
        %s639 = scalar_lea.vmem %s2, %s638
        %p640 = scmp.lt.s32.totalorder %s35, 1
        %s641 = scalar_select %p640, %s35, 1
        %s642 = smul.addr %s641, 10
        %s643 = smul.addr %s642, 4
        %s644 = scalar_lea.vmem %s4, %s643
        %v646 = vld [vmem:[%s625] sm:$0xff]
        %v647 = vld [vmem:[%s632] sm:$0xf]
        %v648 = vld [vmem:[%s639] sm:$0xff]
        %v649 = vld [vmem:[%s5] sm:$0xf]
        %v650 = vld [vmem:[%s5 + $0x4] sm:$0xf]
        %v651 = vld [vmem:[%s5 + $0x8] sm:$0xf]
        %v652 = vld [vmem:[%s5 + $0xc] sm:$0xf]
        %v653 = vld [vmem:[%s6] sm:$0x1]
        %v655 = vlaneseq
        %v656 = vshrl.u32 %v655, 7
        %v657 = vsub.s32 0, %v656
        %v658 = vrot.slane %v653, %v657
        %v664 = vunpack.c.l.b16 %v649
        %v665 = vunpack.c.l.b16 %v650
        %v666 = vunpack.c.l.b16 %v651
        %v667 = vunpack.c.l.b16 %v652
        %v668 = vpack.c.b16 %v665, %v664
        %v669 = vpack.c.b16 %v667, %v666
        %vm672 = vcmask 261120
        %v674 = vsel %vm672, %v647, 0
        %676 = vmatprep.subr.bf16.mxu0 0
        %677 = vmatpush1.bf16.msra.mxu0 %v668
        %678 = vmatprep.subr.bf16.mxu0 0
        %679 = vmatpush1.bf16.msra.mxu0 %v669
        %680 = vmatprep.subr.bf16.mxu0 0
        %681 = vmatpush1.bf16.msra.mxu0 0
        %682 = vmatprep.subr.bf16.mxu0 0
        %683 = vmatpush1.bf16.msra.mxu0 0
        %684 = vmatprep.subr.bf16.mxu0 0
        %685 = vmatpush1.bf16.msra.mxu0 0
        %686 = vmatprep.subr.bf16.mxu0 0
        %687 = vmatpush1.bf16.msra.mxu0 0
        %688 = vmatprep.subr.bf16.mxu0 0
        %689 = vmatpush1.bf16.msra.mxu0 0
        %690 = vmatprep.subr.bf16.mxu0 0
        %691 = vmatpush1.bf16.msra.mxu0 0
        %692 = vmatprep.subr.bf16.mxu0 0
        %693 = vmatpush1.bf16.msra.mxu0 0
        %694 = vmatprep.subr.bf16.mxu0 0
        %695 = vmatpush1.bf16.msra.mxu0 0
        %696 = vmatprep.subr.bf16.mxu0 0
        %697 = vmatpush1.bf16.msra.mxu0 0
        %698 = vmatprep.subr.bf16.mxu0 0
        %699 = vmatpush1.bf16.msra.mxu0 0
        %700 = vmatprep.subr.bf16.mxu0 0
        %701 = vmatpush1.bf16.msra.mxu0 0
        %702 = vmatprep.subr.bf16.mxu0 0
        %703 = vmatpush1.bf16.msra.mxu0 0
        %704 = vmatprep.subr.bf16.mxu0 0
        %705 = vmatpush1.bf16.msra.mxu0 0
        %706 = vmatprep.subr.bf16.mxu0 0
        %707 = vmatpush1.bf16.msra.mxu0 0
        %708 = vmatprep.mubr.bf16.mxu0 0
        %709 = vmatmul.mubr.bf16.gmra.mrb[0].mxu0 %v674
        %v710 = vpop.f32.mrb[0].mxu0
        %v711 = vadd.f32 %v658, %v710
        %v712 = vpop.f32.mrb[0].mxu0
        %v713 = vpop.f32.mrb[0].mxu0
        %v714 = vpop.f32.mrb[0].mxu0
        %715 = vdwg.mxu0
        %717 = vrot.lane.b32.xlu0 %v711, 120
        %v718 = vpop.permute.xlu0 %717
        %719 = vrot.lane.b32.xlu0 %v711, 112
        %v720 = vpop.permute.xlu0 %719
        %721 = vrot.lane.b32.xlu0 %v711, 104
        %v722 = vpop.permute.xlu0 %721
        %723 = vrot.lane.b32.xlu0 %v711, 64
        %v724 = vpop.permute.xlu0 %723
        %725 = vrot.lane.b32.xlu0 %v718, 64
        %v726 = vpop.permute.xlu0 %725
        %727 = vrot.lane.b32.xlu0 %v720, 64
        %v728 = vpop.permute.xlu0 %727
        %729 = vrot.lane.b32.xlu0 %v722, 64
        %v730 = vpop.permute.xlu0 %729
        %v735 = vcombine.low %v724, %v728
        %v736 = vcombine.high %v724, %v728
        %v738 = vunpack.c.l.s4 1983009808
        %v739 = vunpack.c.0.s8 %v738
        %v740 = vlaneseq
        %v741 = vshrl.u32 %v740, 7
        %v742 = vsub.s32 %v739, %v741
        %v743 = vrot.slane %v735, %v742
        %v745 = vunpack.c.l.s4 1983009808
        %v746 = vunpack.c.0.s8 %v745
        %v747 = vlaneseq
        %v748 = vshrl.u32 %v747, 7
        %v749 = vsub.s32 %v746, %v748
        %v750 = vrot.slane %v736, %v749
        %v751 = vcombine.low %v726, %v730
        %v752 = vcombine.high %v726, %v730
        %v754 = vunpack.c.l.s4 1983009808
        %v755 = vunpack.c.0.s8 %v754
        %v756 = vlaneseq
        %v757 = vshrl.u32 %v756, 7
        %v758 = vsub.s32 %v755, %v757
        %v759 = vrot.slane %v751, %v758
        %v761 = vunpack.c.l.s4 1983009808
        %v762 = vunpack.c.0.s8 %v761
        %v763 = vlaneseq
        %v764 = vshrl.u32 %v763, 7
        %v765 = vsub.s32 %v762, %v764
        %v766 = vrot.slane %v752, %v765
        %v767 = vcombine.low %v743, %v759
        %v768 = vcombine.high %v743, %v759
        %v770 = vunpack.c.l.s4 1934713408
        %v771 = vunpack.c.0.s8 %v770
        %v772 = vlaneseq
        %v773 = vshrl.u32 %v772, 7
        %v774 = vsub.s32 %v771, %v773
        %v775 = vrot.slane %v767, %v774
        %v777 = vunpack.c.l.s4 1934713408
        %v778 = vunpack.c.0.s8 %v777
        %v779 = vlaneseq
        %v780 = vshrl.u32 %v779, 7
        %v781 = vsub.s32 %v778, %v780
        %v782 = vrot.slane %v768, %v781
        %v783 = vcombine.low %v750, %v766
        %v784 = vcombine.high %v750, %v766
        %v786 = vunpack.c.l.s4 1934713408
        %v787 = vunpack.c.0.s8 %v786
        %v788 = vlaneseq
        %v789 = vshrl.u32 %v788, 7
        %v790 = vsub.s32 %v787, %v789
        %v791 = vrot.slane %v783, %v790
        %v793 = vunpack.c.l.s4 1934713408
        %v794 = vunpack.c.0.s8 %v793
        %v795 = vlaneseq
        %v796 = vshrl.u32 %v795, 7
        %v797 = vsub.s32 %v794, %v796
        %v798 = vrot.slane %v784, %v797
        %v799 = vcombine.high %v775, 0.0
        %v800 = vcombine.high %v782, 0.0
        %v801 = vcombine.high %v791, 0.0
        %v802 = vcombine.high %v798, 0.0
        %vm803 = vcmask 60416
        %v804 = vsel %vm803, %v775, -inf
        %805 = vmax.xlane.f32.xlu0 %v804
        %v806 = vpop.xlane.xlu0 %805
        %v807 = vsel %vm803, %v799, -inf
        %808 = vmax.xlane.f32.xlu0 %v807
        %v809 = vpop.xlane.xlu0 %808
        %v810 = vsel %vm803, %v782, -inf
        %811 = vmax.xlane.f32.xlu0 %v810
        %v812 = vpop.xlane.xlu0 %811
        %v813 = vsel %vm803, %v800, -inf
        %814 = vmax.xlane.f32.xlu0 %v813
        %v815 = vpop.xlane.xlu0 %814
        %v816 = vsel %vm803, %v791, -inf
        %817 = vmax.xlane.f32.xlu0 %v816
        %v818 = vpop.xlane.xlu0 %817
        %v819 = vsel %vm803, %v801, -inf
        %820 = vmax.xlane.f32.xlu0 %v819
        %v821 = vpop.xlane.xlu0 %820
        %v822 = vsel %vm803, %v798, -inf
        %823 = vmax.xlane.f32.xlu0 %v822
        %v824 = vpop.xlane.xlu0 %823
        %v825 = vsel %vm803, %v802, -inf
        %826 = vmax.xlane.f32.xlu0 %v825
        %v827 = vpop.xlane.xlu0 %826
        %v828 = vsub.f32 %v775, %v806
        %v829 = vsub.f32 %v799, %v809
        %v830 = vsub.f32 %v782, %v812
        %v831 = vsub.f32 %v800, %v815
        %v832 = vsub.f32 %v791, %v818
        %v833 = vsub.f32 %v801, %v821
        %v834 = vsub.f32 %v798, %v824
        %v835 = vsub.f32 %v802, %v827
        %v836 = vmul.f32 %v828, 1.442695
        %v837 = vpow.pop %v836
        %v838 = vmul.f32 %v829, 1.442695
        %v839 = vpow.pop %v838
        %v840 = vmul.f32 %v830, 1.442695
        %v841 = vpow.pop %v840
        %v842 = vmul.f32 %v831, 1.442695
        %v843 = vpow.pop %v842
        %v844 = vmul.f32 %v832, 1.442695
        %v845 = vpow.pop %v844
        %v846 = vmul.f32 %v833, 1.442695
        %v847 = vpow.pop %v846
        %v848 = vmul.f32 %v834, 1.442695
        %v849 = vpow.pop %v848
        %v850 = vmul.f32 %v835, 1.442695
        %v851 = vpow.pop %v850
        %v852 = vsel %vm803, %v837, 0.0
        %853 = vadd.xlane.f32.xlu0 %v852
        %v854 = vpop.xlane.xlu0 %853
        %v855 = vsel %vm803, %v839, 0.0
        %856 = vadd.xlane.f32.xlu0 %v855
        %v857 = vpop.xlane.xlu0 %856
        %v858 = vsel %vm803, %v841, 0.0
        %859 = vadd.xlane.f32.xlu0 %v858
        %v860 = vpop.xlane.xlu0 %859
        %v861 = vsel %vm803, %v843, 0.0
        %862 = vadd.xlane.f32.xlu0 %v861
        %v863 = vpop.xlane.xlu0 %862
        %v864 = vsel %vm803, %v845, 0.0
        %865 = vadd.xlane.f32.xlu0 %v864
        %v866 = vpop.xlane.xlu0 %865
        %v867 = vsel %vm803, %v847, 0.0
        %868 = vadd.xlane.f32.xlu0 %v867
        %v869 = vpop.xlane.xlu0 %868
        %v870 = vsel %vm803, %v849, 0.0
        %871 = vadd.xlane.f32.xlu0 %v870
        %v872 = vpop.xlane.xlu0 %871
        %v873 = vsel %vm803, %v851, 0.0
        %874 = vadd.xlane.f32.xlu0 %v873
        %v875 = vpop.xlane.xlu0 %874
        %v876 = vrcp.pop %v854
        %v877 = vrcp.pop %v857
        %v878 = vrcp.pop %v860
        %v879 = vrcp.pop %v863
        %v880 = vrcp.pop %v866
        %v881 = vrcp.pop %v869
        %v882 = vrcp.pop %v872
        %v883 = vrcp.pop %v875
        %v884 = vmul.f32 %v837, %v876
        %v885 = vmul.f32 %v839, %v877
        %v886 = vmul.f32 %v841, %v878
        %v887 = vmul.f32 %v843, %v879
        %v888 = vmul.f32 %v845, %v880
        %v889 = vmul.f32 %v847, %v881
        %v890 = vmul.f32 %v849, %v882
        %v891 = vmul.f32 %v851, %v883
        %v892 = vcombine.low %v884, %v886
        %v894 = vunpack.c.l.s4 1983009808
        %v895 = vunpack.c.0.s8 %v894
        %v896 = vlaneseq
        %v897 = vshrl.u32 %v896, 7
        %v898 = vsub.s32 %v895, %v897
        %v899 = vrot.slane %v892, %v898
        %v900 = vcombine.low %v885, %v887
        %v902 = vunpack.c.l.s4 1983009808
        %v903 = vunpack.c.0.s8 %v902
        %v904 = vlaneseq
        %v905 = vshrl.u32 %v904, 7
        %v906 = vsub.s32 %v903, %v905
        %v907 = vrot.slane %v900, %v906
        %v908 = vcombine.low %v888, %v890
        %v910 = vunpack.c.l.s4 1983009808
        %v911 = vunpack.c.0.s8 %v910
        %v912 = vlaneseq
        %v913 = vshrl.u32 %v912, 7
        %v914 = vsub.s32 %v911, %v913
        %v915 = vrot.slane %v908, %v914
        %v916 = vcombine.low %v889, %v891
        %v918 = vunpack.c.l.s4 1983009808
        %v919 = vunpack.c.0.s8 %v918
        %v920 = vlaneseq
        %v921 = vshrl.u32 %v920, 7
        %v922 = vsub.s32 %v919, %v921
        %v923 = vrot.slane %v916, %v922
        %v924 = vcombine.low %v899, %v907
        %v925 = vcombine.high %v899, %v907
        %v927 = vunpack.c.l.s4 1934713408
        %v928 = vunpack.c.0.s8 %v927
        %v929 = vlaneseq
        %v930 = vshrl.u32 %v929, 7
        %v931 = vsub.s32 %v928, %v930
        %v932 = vrot.slane %v924, %v931
        %v934 = vunpack.c.l.s4 1934713408
        %v935 = vunpack.c.0.s8 %v934
        %v936 = vlaneseq
        %v937 = vshrl.u32 %v936, 7
        %v938 = vsub.s32 %v935, %v937
        %v939 = vrot.slane %v925, %v938
        %v940 = vcombine.low %v915, %v923
        %v941 = vcombine.high %v915, %v923
        %v943 = vunpack.c.l.s4 1934713408
        %v944 = vunpack.c.0.s8 %v943
        %v945 = vlaneseq
        %v946 = vshrl.u32 %v945, 7
        %v947 = vsub.s32 %v944, %v946
        %v948 = vrot.slane %v940, %v947
        %v950 = vunpack.c.l.s4 1934713408
        %v951 = vunpack.c.0.s8 %v950
        %v952 = vlaneseq
        %v953 = vshrl.u32 %v952, 7
        %v954 = vsub.s32 %v951, %v953
        %v955 = vrot.slane %v941, %v954
        %v956 = vcombine.low %v932, %v948
        %v957 = vcombine.high %v932, %v948
        %v958 = vcombine.low %v939, %v955
        %v959 = vcombine.high %v939, %v955
        %961 = vrot.lane.b32.xlu0 %v957, 8
        %v962 = vpop.permute.xlu0 %961
        %965 = vrot.lane.b32.xlu0 %v958, 16
        %v966 = vpop.permute.xlu0 %965
        %969 = vrot.lane.b32.xlu0 %v959, 24
        %v970 = vpop.permute.xlu0 %969
        %vm972 = vcmask 64512
        %v973 = vsel %vm972, %v956, %v962
        %vm974 = vcmask 130048
        %v975 = vsel %vm974, %v973, %v966
        %vm976 = vcmask 195584
        %v977 = vsel %vm976, %v975, %v970
        %979 = vset.pattern.permute.xlu0 2
        %980 = vperm.xlu0 %979, %v648
        %v981 = vpop.permute.xlu0 %980
        %v983 = vmul.f32 %v711, %v981
        %984 = vset.pattern.permute.xlu0 0
        %985 = vperm.xlu0 %984, %v648
        %v986 = vpop.permute.xlu0 %985
        %v988 = vadd.f32 %v986, %v983
        %989 = vset.pattern.permute.xlu0 3
        %990 = vperm.xlu0 %989, %v648
        %v991 = vpop.permute.xlu0 %990
        %v993 = vmul.f32 %v711, %v991
        %994 = vset.pattern.permute.xlu0 1
        %995 = vperm.xlu0 %994, %v648
        %v996 = vpop.permute.xlu0 %995
        %v998 = vadd.f32 %v996, %v993
        %v999 = vld [vmem:[%s644] sm:$0xf]
        %v1000 = vld [vmem:[%s644 + $0x4] sm:$0xf]
        %v1001 = vld [vmem:[%s644 + $0x8] sm:$0xf]
        %v1002 = vld [vmem:[%s644 + $0xc] sm:$0xf]
        %v1003 = vld [vmem:[%s644 + $0x10] sm:$0xf]
        %v1004 = vld [vmem:[%s644 + $0x14] sm:$0xf]
        %v1005 = vld [vmem:[%s644 + $0x18] sm:$0xf]
        %v1006 = vld [vmem:[%s644 + $0x1c] sm:$0xf]
        %v1007 = vld [vmem:[%s3] sm:$0x3]
        %v1008 = vmul.f32 %v998, 8.0
        %v1009 = vsub.f32 %v1008, 0.5
        %v1010 = vmul.f32 %v988, 8.0
        %v1011 = vsub.f32 %v1010, 0.5
        %v1012 = vlaneseq
        %v1013 = vshrl.u32 %v1012, 7
        %v1014 = vsub.s32 0, %v1013
        %v1015 = vrot.slane %v1007, %v1014
        %1017 = vset.pattern.permute.xlu0 32
        %1018 = vperm.xlu0 %1017, %v1009
        %v1019 = vpop.permute.xlu0 %1018
        %v1021 = vsub.f32 %v1015, %v1019
        %v1022 = vand.u32 2147483647, %v1021
        %v1023 = vsub.f32 1.0, %v1022
        %v1024 = vmax.f32 %v1023, 0.0
        %v1025 = vlaneseq
        %v1026 = vshrl.u32 %v1025, 7
        %v1027 = vsub.s32 1, %v1026
        %v1028 = vrot.slane %v1007, %v1027
        %1030 = vset.pattern.permute.xlu0 0
        %1031 = vperm.xlu0 %1030, %v1011
        %v1032 = vpop.permute.xlu0 %1031
        %v1034 = vsub.f32 %v1028, %v1032
        %v1035 = vand.u32 2147483647, %v1034
        %v1036 = vsub.f32 1.0, %v1035
        %v1037 = vmax.f32 %v1036, 0.0
        %1039 = vset.pattern.permute.xlu0 0
        %1040 = vperm.xlu0 %1039, %v977
        %v1041 = vpop.permute.xlu0 %1040
        %v1043 = vmul.f32 %v1041, %v1024
        %v1044 = vmul.f32 %v1043, %v1037
        %v1045 = vadd.f32 %v1044, 0.0
        %1046 = vset.pattern.permute.xlu0 33
        %1047 = vperm.xlu0 %1046, %v1009
        %v1048 = vpop.permute.xlu0 %1047
        %v1050 = vsub.f32 %v1015, %v1048
        %v1051 = vand.u32 2147483647, %v1050
        %v1052 = vsub.f32 1.0, %v1051
        %v1053 = vmax.f32 %v1052, 0.0
        %1054 = vset.pattern.permute.xlu0 1
        %1055 = vperm.xlu0 %1054, %v1011
        %v1056 = vpop.permute.xlu0 %1055
        %v1058 = vsub.f32 %v1028, %v1056
        %v1059 = vand.u32 2147483647, %v1058
        %v1060 = vsub.f32 1.0, %v1059
        %v1061 = vmax.f32 %v1060, 0.0
        %1062 = vset.pattern.permute.xlu0 1
        %1063 = vperm.xlu0 %1062, %v977
        %v1064 = vpop.permute.xlu0 %1063
        %v1066 = vmul.f32 %v1064, %v1053
        %v1067 = vmul.f32 %v1066, %v1061
        %v1068 = vadd.f32 %v1045, %v1067
        %1069 = vset.pattern.permute.xlu0 34
        %1070 = vperm.xlu0 %1069, %v1009
        %v1071 = vpop.permute.xlu0 %1070
        %v1073 = vsub.f32 %v1015, %v1071
        %v1074 = vand.u32 2147483647, %v1073
        %v1075 = vsub.f32 1.0, %v1074
        %v1076 = vmax.f32 %v1075, 0.0
        %1077 = vset.pattern.permute.xlu0 2
        %1078 = vperm.xlu0 %1077, %v1011
        %v1079 = vpop.permute.xlu0 %1078
        %v1081 = vsub.f32 %v1028, %v1079
        %v1082 = vand.u32 2147483647, %v1081
        %v1083 = vsub.f32 1.0, %v1082
        %v1084 = vmax.f32 %v1083, 0.0
        %1085 = vset.pattern.permute.xlu0 2
        %1086 = vperm.xlu0 %1085, %v977
        %v1087 = vpop.permute.xlu0 %1086
        %v1089 = vmul.f32 %v1087, %v1076
        %v1090 = vmul.f32 %v1089, %v1084
        %v1091 = vadd.f32 %v1068, %v1090
        %1092 = vset.pattern.permute.xlu0 35
        %1093 = vperm.xlu0 %1092, %v1009
        %v1094 = vpop.permute.xlu0 %1093
        %v1096 = vsub.f32 %v1015, %v1094
        %v1097 = vand.u32 2147483647, %v1096
        %v1098 = vsub.f32 1.0, %v1097
        %v1099 = vmax.f32 %v1098, 0.0
        %1100 = vset.pattern.permute.xlu0 3
        %1101 = vperm.xlu0 %1100, %v1011
        %v1102 = vpop.permute.xlu0 %1101
        %v1104 = vsub.f32 %v1028, %v1102
        %v1105 = vand.u32 2147483647, %v1104
        %v1106 = vsub.f32 1.0, %v1105
        %v1107 = vmax.f32 %v1106, 0.0
        %1108 = vset.pattern.permute.xlu0 3
        %1109 = vperm.xlu0 %1108, %v977
        %v1110 = vpop.permute.xlu0 %1109
        %v1112 = vmul.f32 %v1110, %v1099
        %v1113 = vmul.f32 %v1112, %v1107
        %v1114 = vadd.f32 %v1091, %v1113
        %v1115 = vpack.c.bf16 %v1114, %v1114
        %1116 = vset.pattern.permute.xlu0 40
        %1117 = vperm.xlu0 %1116, %v1009
        %v1118 = vpop.permute.xlu0 %1117
        %v1120 = vsub.f32 %v1015, %v1118
        %v1121 = vand.u32 2147483647, %v1120
        %v1122 = vsub.f32 1.0, %v1121
        %v1123 = vmax.f32 %v1122, 0.0
        %1124 = vset.pattern.permute.xlu0 8
        %1125 = vperm.xlu0 %1124, %v1011
        %v1126 = vpop.permute.xlu0 %1125
        %v1128 = vsub.f32 %v1028, %v1126
        %v1129 = vand.u32 2147483647, %v1128
        %v1130 = vsub.f32 1.0, %v1129
        %v1131 = vmax.f32 %v1130, 0.0
        %1132 = vset.pattern.permute.xlu0 8
        %1133 = vperm.xlu0 %1132, %v977
        %v1134 = vpop.permute.xlu0 %1133
        %v1136 = vmul.f32 %v1134, %v1123
        %v1137 = vmul.f32 %v1136, %v1131
        %v1138 = vadd.f32 %v1137, 0.0
        %1139 = vset.pattern.permute.xlu0 41
        %1140 = vperm.xlu0 %1139, %v1009
        %v1141 = vpop.permute.xlu0 %1140
        %v1143 = vsub.f32 %v1015, %v1141
        %v1144 = vand.u32 2147483647, %v1143
        %v1145 = vsub.f32 1.0, %v1144
        %v1146 = vmax.f32 %v1145, 0.0
        %1147 = vset.pattern.permute.xlu0 9
        %1148 = vperm.xlu0 %1147, %v1011
        %v1149 = vpop.permute.xlu0 %1148
        %v1151 = vsub.f32 %v1028, %v1149
        %v1152 = vand.u32 2147483647, %v1151
        %v1153 = vsub.f32 1.0, %v1152
        %v1154 = vmax.f32 %v1153, 0.0
        %1155 = vset.pattern.permute.xlu0 9
        %1156 = vperm.xlu0 %1155, %v977
        %v1157 = vpop.permute.xlu0 %1156
        %v1159 = vmul.f32 %v1157, %v1146
        %v1160 = vmul.f32 %v1159, %v1154
        %v1161 = vadd.f32 %v1138, %v1160
        %1162 = vset.pattern.permute.xlu0 42
        %1163 = vperm.xlu0 %1162, %v1009
        %v1164 = vpop.permute.xlu0 %1163
        %v1166 = vsub.f32 %v1015, %v1164
        %v1167 = vand.u32 2147483647, %v1166
        %v1168 = vsub.f32 1.0, %v1167
        %v1169 = vmax.f32 %v1168, 0.0
        %1170 = vset.pattern.permute.xlu0 10
        %1171 = vperm.xlu0 %1170, %v1011
        %v1172 = vpop.permute.xlu0 %1171
        %v1174 = vsub.f32 %v1028, %v1172
        %v1175 = vand.u32 2147483647, %v1174
        %v1176 = vsub.f32 1.0, %v1175
        %v1177 = vmax.f32 %v1176, 0.0
        %1178 = vset.pattern.permute.xlu0 10
        %1179 = vperm.xlu0 %1178, %v977
        %v1180 = vpop.permute.xlu0 %1179
        %v1182 = vmul.f32 %v1180, %v1169
        %v1183 = vmul.f32 %v1182, %v1177
        %v1184 = vadd.f32 %v1161, %v1183
        %1185 = vset.pattern.permute.xlu0 43
        %1186 = vperm.xlu0 %1185, %v1009
        %v1187 = vpop.permute.xlu0 %1186
        %v1189 = vsub.f32 %v1015, %v1187
        %v1190 = vand.u32 2147483647, %v1189
        %v1191 = vsub.f32 1.0, %v1190
        %v1192 = vmax.f32 %v1191, 0.0
        %1193 = vset.pattern.permute.xlu0 11
        %1194 = vperm.xlu0 %1193, %v1011
        %v1195 = vpop.permute.xlu0 %1194
        %v1197 = vsub.f32 %v1028, %v1195
        %v1198 = vand.u32 2147483647, %v1197
        %v1199 = vsub.f32 1.0, %v1198
        %v1200 = vmax.f32 %v1199, 0.0
        %1201 = vset.pattern.permute.xlu0 11
        %1202 = vperm.xlu0 %1201, %v977
        %v1203 = vpop.permute.xlu0 %1202
        %v1205 = vmul.f32 %v1203, %v1192
        %v1206 = vmul.f32 %v1205, %v1200
        %v1207 = vadd.f32 %v1184, %v1206
        %v1208 = vpack.c.bf16 %v1207, %v1207
        %1209 = vset.pattern.permute.xlu0 48
        %1210 = vperm.xlu0 %1209, %v1009
        %v1211 = vpop.permute.xlu0 %1210
        %v1213 = vsub.f32 %v1015, %v1211
        %v1214 = vand.u32 2147483647, %v1213
        %v1215 = vsub.f32 1.0, %v1214
        %v1216 = vmax.f32 %v1215, 0.0
        %1217 = vset.pattern.permute.xlu0 16
        %1218 = vperm.xlu0 %1217, %v1011
        %v1219 = vpop.permute.xlu0 %1218
        %v1221 = vsub.f32 %v1028, %v1219
        %v1222 = vand.u32 2147483647, %v1221
        %v1223 = vsub.f32 1.0, %v1222
        %v1224 = vmax.f32 %v1223, 0.0
        %1225 = vset.pattern.permute.xlu0 16
        %1226 = vperm.xlu0 %1225, %v977
        %v1227 = vpop.permute.xlu0 %1226
        %v1229 = vmul.f32 %v1227, %v1216
        %v1230 = vmul.f32 %v1229, %v1224
        %v1231 = vadd.f32 %v1230, 0.0
        %1232 = vset.pattern.permute.xlu0 49
        %1233 = vperm.xlu0 %1232, %v1009
        %v1234 = vpop.permute.xlu0 %1233
        %v1236 = vsub.f32 %v1015, %v1234
        %v1237 = vand.u32 2147483647, %v1236
        %v1238 = vsub.f32 1.0, %v1237
        %v1239 = vmax.f32 %v1238, 0.0
        %1240 = vset.pattern.permute.xlu0 17
        %1241 = vperm.xlu0 %1240, %v1011
        %v1242 = vpop.permute.xlu0 %1241
        %v1244 = vsub.f32 %v1028, %v1242
        %v1245 = vand.u32 2147483647, %v1244
        %v1246 = vsub.f32 1.0, %v1245
        %v1247 = vmax.f32 %v1246, 0.0
        %1248 = vset.pattern.permute.xlu0 17
        %1249 = vperm.xlu0 %1248, %v977
        %v1250 = vpop.permute.xlu0 %1249
        %v1252 = vmul.f32 %v1250, %v1239
        %v1253 = vmul.f32 %v1252, %v1247
        %v1254 = vadd.f32 %v1231, %v1253
        %1255 = vset.pattern.permute.xlu0 50
        %1256 = vperm.xlu0 %1255, %v1009
        %v1257 = vpop.permute.xlu0 %1256
        %v1259 = vsub.f32 %v1015, %v1257
        %v1260 = vand.u32 2147483647, %v1259
        %v1261 = vsub.f32 1.0, %v1260
        %v1262 = vmax.f32 %v1261, 0.0
        %1263 = vset.pattern.permute.xlu0 18
        %1264 = vperm.xlu0 %1263, %v1011
        %v1265 = vpop.permute.xlu0 %1264
        %v1267 = vsub.f32 %v1028, %v1265
        %v1268 = vand.u32 2147483647, %v1267
        %v1269 = vsub.f32 1.0, %v1268
        %v1270 = vmax.f32 %v1269, 0.0
        %1271 = vset.pattern.permute.xlu0 18
        %1272 = vperm.xlu0 %1271, %v977
        %v1273 = vpop.permute.xlu0 %1272
        %v1275 = vmul.f32 %v1273, %v1262
        %v1276 = vmul.f32 %v1275, %v1270
        %v1277 = vadd.f32 %v1254, %v1276
        %1278 = vset.pattern.permute.xlu0 51
        %1279 = vperm.xlu0 %1278, %v1009
        %v1280 = vpop.permute.xlu0 %1279
        %v1282 = vsub.f32 %v1015, %v1280
        %v1283 = vand.u32 2147483647, %v1282
        %v1284 = vsub.f32 1.0, %v1283
        %v1285 = vmax.f32 %v1284, 0.0
        %1286 = vset.pattern.permute.xlu0 19
        %1287 = vperm.xlu0 %1286, %v1011
        %v1288 = vpop.permute.xlu0 %1287
        %v1290 = vsub.f32 %v1028, %v1288
        %v1291 = vand.u32 2147483647, %v1290
        %v1292 = vsub.f32 1.0, %v1291
        %v1293 = vmax.f32 %v1292, 0.0
        %1294 = vset.pattern.permute.xlu0 19
        %1295 = vperm.xlu0 %1294, %v977
        %v1296 = vpop.permute.xlu0 %1295
        %v1298 = vmul.f32 %v1296, %v1285
        %v1299 = vmul.f32 %v1298, %v1293
        %v1300 = vadd.f32 %v1277, %v1299
        %v1301 = vpack.c.bf16 %v1300, %v1300
        %1302 = vset.pattern.permute.xlu0 56
        %1303 = vperm.xlu0 %1302, %v1009
        %v1304 = vpop.permute.xlu0 %1303
        %v1306 = vsub.f32 %v1015, %v1304
        %v1307 = vand.u32 2147483647, %v1306
        %v1308 = vsub.f32 1.0, %v1307
        %v1309 = vmax.f32 %v1308, 0.0
        %1310 = vset.pattern.permute.xlu0 24
        %1311 = vperm.xlu0 %1310, %v1011
        %v1312 = vpop.permute.xlu0 %1311
        %v1314 = vsub.f32 %v1028, %v1312
        %v1315 = vand.u32 2147483647, %v1314
        %v1316 = vsub.f32 1.0, %v1315
        %v1317 = vmax.f32 %v1316, 0.0
        %1318 = vset.pattern.permute.xlu0 24
        %1319 = vperm.xlu0 %1318, %v977
        %v1320 = vpop.permute.xlu0 %1319
        %v1322 = vmul.f32 %v1320, %v1309
        %v1323 = vmul.f32 %v1322, %v1317
        %v1324 = vadd.f32 %v1323, 0.0
        %1325 = vset.pattern.permute.xlu0 57
        %1326 = vperm.xlu0 %1325, %v1009
        %v1327 = vpop.permute.xlu0 %1326
        %v1329 = vsub.f32 %v1015, %v1327
        %v1330 = vand.u32 2147483647, %v1329
        %v1331 = vsub.f32 1.0, %v1330
        %v1332 = vmax.f32 %v1331, 0.0
        %1333 = vset.pattern.permute.xlu0 25
        %1334 = vperm.xlu0 %1333, %v1011
        %v1335 = vpop.permute.xlu0 %1334
        %v1337 = vsub.f32 %v1028, %v1335
        %v1338 = vand.u32 2147483647, %v1337
        %v1339 = vsub.f32 1.0, %v1338
        %v1340 = vmax.f32 %v1339, 0.0
        %1341 = vset.pattern.permute.xlu0 25
        %1342 = vperm.xlu0 %1341, %v977
        %v1343 = vpop.permute.xlu0 %1342
        %v1345 = vmul.f32 %v1343, %v1332
        %v1346 = vmul.f32 %v1345, %v1340
        %v1347 = vadd.f32 %v1324, %v1346
        %1348 = vset.pattern.permute.xlu0 58
        %1349 = vperm.xlu0 %1348, %v1009
        %v1350 = vpop.permute.xlu0 %1349
        %v1352 = vsub.f32 %v1015, %v1350
        %v1353 = vand.u32 2147483647, %v1352
        %v1354 = vsub.f32 1.0, %v1353
        %v1355 = vmax.f32 %v1354, 0.0
        %1356 = vset.pattern.permute.xlu0 26
        %1357 = vperm.xlu0 %1356, %v1011
        %v1358 = vpop.permute.xlu0 %1357
        %v1360 = vsub.f32 %v1028, %v1358
        %v1361 = vand.u32 2147483647, %v1360
        %v1362 = vsub.f32 1.0, %v1361
        %v1363 = vmax.f32 %v1362, 0.0
        %1364 = vset.pattern.permute.xlu0 26
        %1365 = vperm.xlu0 %1364, %v977
        %v1366 = vpop.permute.xlu0 %1365
        %v1368 = vmul.f32 %v1366, %v1355
        %v1369 = vmul.f32 %v1368, %v1363
        %v1370 = vadd.f32 %v1347, %v1369
        %1371 = vset.pattern.permute.xlu0 59
        %1372 = vperm.xlu0 %1371, %v1009
        %v1373 = vpop.permute.xlu0 %1372
        %v1375 = vsub.f32 %v1015, %v1373
        %v1376 = vand.u32 2147483647, %v1375
        %v1377 = vsub.f32 1.0, %v1376
        %v1378 = vmax.f32 %v1377, 0.0
        %1379 = vset.pattern.permute.xlu0 27
        %1380 = vperm.xlu0 %1379, %v1011
        %v1381 = vpop.permute.xlu0 %1380
        %v1383 = vsub.f32 %v1028, %v1381
        %v1384 = vand.u32 2147483647, %v1383
        %v1385 = vsub.f32 1.0, %v1384
        %v1386 = vmax.f32 %v1385, 0.0
        %1387 = vset.pattern.permute.xlu0 27
        %1388 = vperm.xlu0 %1387, %v977
        %v1389 = vpop.permute.xlu0 %1388
        %v1391 = vmul.f32 %v1389, %v1378
        %v1392 = vmul.f32 %v1391, %v1386
        %v1393 = vadd.f32 %v1370, %v1392
        %v1394 = vpack.c.bf16 %v1393, %v1393
        %v1395 = vld [vmem:[%s644 + $0x20] sm:$0xf]
        %v1396 = vld [vmem:[%s644 + $0x24] sm:$0xf]
        %v1397 = vmul.f32 %v998, 4.0
        %v1398 = vsub.f32 %v1397, 0.5
        %v1399 = vmul.f32 %v988, 4.0
        %v1400 = vsub.f32 %v1399, 0.5
        %1402 = vset.pattern.permute.xlu0 36
        %1403 = vperm.xlu0 %1402, %v1398
        %v1404 = vpop.permute.xlu0 %1403
        %v1406 = vsub.f32 %v1015, %v1404
        %v1407 = vand.u32 2147483647, %v1406
        %v1408 = vsub.f32 1.0, %v1407
        %v1409 = vmax.f32 %v1408, 0.0
        %1411 = vset.pattern.permute.xlu0 4
        %1412 = vperm.xlu0 %1411, %v1400
        %v1413 = vpop.permute.xlu0 %1412
        %v1415 = vsub.f32 %v1028, %v1413
        %v1416 = vand.u32 2147483647, %v1415
        %v1417 = vsub.f32 1.0, %v1416
        %v1418 = vmax.f32 %v1417, 0.0
        %1419 = vset.pattern.permute.xlu0 4
        %1420 = vperm.xlu0 %1419, %v977
        %v1421 = vpop.permute.xlu0 %1420
        %v1423 = vmul.f32 %v1421, %v1409
        %v1424 = vmul.f32 %v1423, %v1418
        %v1425 = vadd.f32 %v1424, 0.0
        %1426 = vset.pattern.permute.xlu0 37
        %1427 = vperm.xlu0 %1426, %v1398
        %v1428 = vpop.permute.xlu0 %1427
        %v1430 = vsub.f32 %v1015, %v1428
        %v1431 = vand.u32 2147483647, %v1430
        %v1432 = vsub.f32 1.0, %v1431
        %v1433 = vmax.f32 %v1432, 0.0
        %1434 = vset.pattern.permute.xlu0 5
        %1435 = vperm.xlu0 %1434, %v1400
        %v1436 = vpop.permute.xlu0 %1435
        %v1438 = vsub.f32 %v1028, %v1436
        %v1439 = vand.u32 2147483647, %v1438
        %v1440 = vsub.f32 1.0, %v1439
        %v1441 = vmax.f32 %v1440, 0.0
        %1442 = vset.pattern.permute.xlu0 5
        %1443 = vperm.xlu0 %1442, %v977
        %v1444 = vpop.permute.xlu0 %1443
        %v1446 = vmul.f32 %v1444, %v1433
        %v1447 = vmul.f32 %v1446, %v1441
        %v1448 = vadd.f32 %v1425, %v1447
        %1449 = vset.pattern.permute.xlu0 38
        %1450 = vperm.xlu0 %1449, %v1398
        %v1451 = vpop.permute.xlu0 %1450
        %v1453 = vsub.f32 %v1015, %v1451
        %v1454 = vand.u32 2147483647, %v1453
        %v1455 = vsub.f32 1.0, %v1454
        %v1456 = vmax.f32 %v1455, 0.0
        %1457 = vset.pattern.permute.xlu0 6
        %1458 = vperm.xlu0 %1457, %v1400
        %v1459 = vpop.permute.xlu0 %1458
        %v1461 = vsub.f32 %v1028, %v1459
        %v1462 = vand.u32 2147483647, %v1461
        %v1463 = vsub.f32 1.0, %v1462
        %v1464 = vmax.f32 %v1463, 0.0
        %1465 = vset.pattern.permute.xlu0 6
        %1466 = vperm.xlu0 %1465, %v977
        %v1467 = vpop.permute.xlu0 %1466
        %v1469 = vmul.f32 %v1467, %v1456
        %v1470 = vmul.f32 %v1469, %v1464
        %v1471 = vadd.f32 %v1448, %v1470
        %1472 = vset.pattern.permute.xlu0 39
        %1473 = vperm.xlu0 %1472, %v1398
        %v1474 = vpop.permute.xlu0 %1473
        %v1476 = vsub.f32 %v1015, %v1474
        %v1477 = vand.u32 2147483647, %v1476
        %v1478 = vsub.f32 1.0, %v1477
        %v1479 = vmax.f32 %v1478, 0.0
        %1480 = vset.pattern.permute.xlu0 7
        %1481 = vperm.xlu0 %1480, %v1400
        %v1482 = vpop.permute.xlu0 %1481
        %v1484 = vsub.f32 %v1028, %v1482
        %v1485 = vand.u32 2147483647, %v1484
        %v1486 = vsub.f32 1.0, %v1485
        %v1487 = vmax.f32 %v1486, 0.0
        %1488 = vset.pattern.permute.xlu0 7
        %1489 = vperm.xlu0 %1488, %v977
        %v1490 = vpop.permute.xlu0 %1489
        %v1492 = vmul.f32 %v1490, %v1479
        %v1493 = vmul.f32 %v1492, %v1487
        %v1494 = vadd.f32 %v1471, %v1493
        %v1495 = vpack.c.bf16 %v1494, %v1494
        %1497 = vrot.lane.b32.xlu0 %v1495, 64
        %v1498 = vpop.permute.xlu0 %1497
        %v1501 = vunpack.c.l.b16 %v1395
        %v1502 = vunpack.c.l.b16 %v1396
        %v1503 = vpack.c.b16 %v1502, %v1501
        %v1506 = vsel %vm974, %v1498, 0
        %1508 = vmatprep.subr.bf16.mxu0 0
        %1509 = vmatpush1.bf16.msra.mxu0 %v1503
        %1510 = vmatprep.subr.bf16.mxu0 0
        %1511 = vmatpush1.bf16.msra.mxu0 0
        %1512 = vmatprep.subr.bf16.mxu0 0
        %1513 = vmatpush1.bf16.msra.mxu0 0
        %1514 = vmatprep.subr.bf16.mxu0 0
        %1515 = vmatpush1.bf16.msra.mxu0 0
        %1516 = vmatprep.subr.bf16.mxu0 0
        %1517 = vmatpush1.bf16.msra.mxu0 0
        %1518 = vmatprep.subr.bf16.mxu0 0
        %1519 = vmatpush1.bf16.msra.mxu0 0
        %1520 = vmatprep.subr.bf16.mxu0 0
        %1521 = vmatpush1.bf16.msra.mxu0 0
        %1522 = vmatprep.subr.bf16.mxu0 0
        %1523 = vmatpush1.bf16.msra.mxu0 0
        %1524 = vmatprep.subr.bf16.mxu0 0
        %1525 = vmatpush1.bf16.msra.mxu0 0
        %1526 = vmatprep.subr.bf16.mxu0 0
        %1527 = vmatpush1.bf16.msra.mxu0 0
        %1528 = vmatprep.subr.bf16.mxu0 0
        %1529 = vmatpush1.bf16.msra.mxu0 0
        %1530 = vmatprep.subr.bf16.mxu0 0
        %1531 = vmatpush1.bf16.msra.mxu0 0
        %1532 = vmatprep.subr.bf16.mxu0 0
        %1533 = vmatpush1.bf16.msra.mxu0 0
        %1534 = vmatprep.subr.bf16.mxu0 0
        %1535 = vmatpush1.bf16.msra.mxu0 0
        %1536 = vmatprep.subr.bf16.mxu0 0
        %1537 = vmatpush1.bf16.msra.mxu0 0
        %1538 = vmatprep.subr.bf16.mxu0 0
        %1539 = vmatpush1.bf16.msra.mxu0 0
        %1540 = vmatprep.mubr.bf16.mxu0 0
        %1541 = vmatmul.mubr.bf16.gmra.mrb[0].mxu0 %v1506
        %v1542 = vpop.f32.mrb[0].mxu0
        %v1543 = vadd.f32 0.0, %v1542
        %v1544 = vpop.f32.mrb[0].mxu0
        %v1545 = vpop.f32.mrb[0].mxu0
        %v1546 = vpop.f32.mrb[0].mxu0
        %1547 = vdwg.mxu0
        %v1556 = vunpack.c.l.b16 %v999
        %v1557 = vunpack.c.l.b16 %v1000
        %v1558 = vunpack.c.l.b16 %v1001
        %v1559 = vunpack.c.l.b16 %v1002
        %v1560 = vunpack.c.l.b16 %v1003
        %v1561 = vunpack.c.l.b16 %v1004
        %v1562 = vunpack.c.l.b16 %v1005
        %v1563 = vunpack.c.l.b16 %v1006
        %v1564 = vpack.c.b16 %v1557, %v1556
        %v1565 = vpack.c.b16 %v1559, %v1558
        %v1566 = vpack.c.b16 %v1561, %v1560
        %v1567 = vpack.c.b16 %v1563, %v1562
        %vm1572 = vcmask 523264
        %v1574 = vsel %vm1572, %v1115, 0
        %1576 = vmatprep.subr.bf16.mxu0 0
        %1577 = vmatpush1.bf16.msra.mxu0 %v1564
        %1578 = vmatprep.subr.bf16.mxu0 0
        %1579 = vmatpush1.bf16.msra.mxu0 %v1565
        %1580 = vmatprep.subr.bf16.mxu0 0
        %1581 = vmatpush1.bf16.msra.mxu0 %v1566
        %1582 = vmatprep.subr.bf16.mxu0 0
        %1583 = vmatpush1.bf16.msra.mxu0 %v1567
        %1584 = vmatprep.subr.bf16.mxu0 0
        %1585 = vmatpush1.bf16.msra.mxu0 0
        %1586 = vmatprep.subr.bf16.mxu0 0
        %1587 = vmatpush1.bf16.msra.mxu0 0
        %1588 = vmatprep.subr.bf16.mxu0 0
        %1589 = vmatpush1.bf16.msra.mxu0 0
        %1590 = vmatprep.subr.bf16.mxu0 0
        %1591 = vmatpush1.bf16.msra.mxu0 0
        %1592 = vmatprep.subr.bf16.mxu0 0
        %1593 = vmatpush1.bf16.msra.mxu0 0
        %1594 = vmatprep.subr.bf16.mxu0 0
        %1595 = vmatpush1.bf16.msra.mxu0 0
        %1596 = vmatprep.subr.bf16.mxu0 0
        %1597 = vmatpush1.bf16.msra.mxu0 0
        %1598 = vmatprep.subr.bf16.mxu0 0
        %1599 = vmatpush1.bf16.msra.mxu0 0
        %1600 = vmatprep.subr.bf16.mxu0 0
        %1601 = vmatpush1.bf16.msra.mxu0 0
        %1602 = vmatprep.subr.bf16.mxu0 0
        %1603 = vmatpush1.bf16.msra.mxu0 0
        %1604 = vmatprep.subr.bf16.mxu0 0
        %1605 = vmatpush1.bf16.msra.mxu0 0
        %1606 = vmatprep.subr.bf16.mxu0 0
        %1607 = vmatpush1.bf16.msra.mxu0 0
        %1608 = vmatprep.mubr.bf16.mxu0 0
        %1609 = vmatmul.mubr.bf16.gmra.mrb[0].mxu0 %v1574
        %v1610 = vpop.f32.mrb[0].mxu0
        %v1611 = vadd.f32 %v1543, %v1610
        %v1612 = vpop.f32.mrb[0].mxu0
        %v1613 = vpop.f32.mrb[0].mxu0
        %v1614 = vpop.f32.mrb[0].mxu0
        %1615 = vdwg.mxu0
        %1616 = vset.pattern.permute.xlu0 44
        %1617 = vperm.xlu0 %1616, %v1398
        %v1618 = vpop.permute.xlu0 %1617
        %v1620 = vsub.f32 %v1015, %v1618
        %v1621 = vand.u32 2147483647, %v1620
        %v1622 = vsub.f32 1.0, %v1621
        %v1623 = vmax.f32 %v1622, 0.0
        %1624 = vset.pattern.permute.xlu0 12
        %1625 = vperm.xlu0 %1624, %v1400
        %v1626 = vpop.permute.xlu0 %1625
        %v1628 = vsub.f32 %v1028, %v1626
        %v1629 = vand.u32 2147483647, %v1628
        %v1630 = vsub.f32 1.0, %v1629
        %v1631 = vmax.f32 %v1630, 0.0
        %1632 = vset.pattern.permute.xlu0 12
        %1633 = vperm.xlu0 %1632, %v977
        %v1634 = vpop.permute.xlu0 %1633
        %v1636 = vmul.f32 %v1634, %v1623
        %v1637 = vmul.f32 %v1636, %v1631
        %v1638 = vadd.f32 %v1637, 0.0
        %1639 = vset.pattern.permute.xlu0 45
        %1640 = vperm.xlu0 %1639, %v1398
        %v1641 = vpop.permute.xlu0 %1640
        %v1643 = vsub.f32 %v1015, %v1641
        %v1644 = vand.u32 2147483647, %v1643
        %v1645 = vsub.f32 1.0, %v1644
        %v1646 = vmax.f32 %v1645, 0.0
        %1647 = vset.pattern.permute.xlu0 13
        %1648 = vperm.xlu0 %1647, %v1400
        %v1649 = vpop.permute.xlu0 %1648
        %v1651 = vsub.f32 %v1028, %v1649
        %v1652 = vand.u32 2147483647, %v1651
        %v1653 = vsub.f32 1.0, %v1652
        %v1654 = vmax.f32 %v1653, 0.0
        %1655 = vset.pattern.permute.xlu0 13
        %1656 = vperm.xlu0 %1655, %v977
        %v1657 = vpop.permute.xlu0 %1656
        %v1659 = vmul.f32 %v1657, %v1646
        %v1660 = vmul.f32 %v1659, %v1654
        %v1661 = vadd.f32 %v1638, %v1660
        %1662 = vset.pattern.permute.xlu0 46
        %1663 = vperm.xlu0 %1662, %v1398
        %v1664 = vpop.permute.xlu0 %1663
        %v1666 = vsub.f32 %v1015, %v1664
        %v1667 = vand.u32 2147483647, %v1666
        %v1668 = vsub.f32 1.0, %v1667
        %v1669 = vmax.f32 %v1668, 0.0
        %1670 = vset.pattern.permute.xlu0 14
        %1671 = vperm.xlu0 %1670, %v1400
        %v1672 = vpop.permute.xlu0 %1671
        %v1674 = vsub.f32 %v1028, %v1672
        %v1675 = vand.u32 2147483647, %v1674
        %v1676 = vsub.f32 1.0, %v1675
        %v1677 = vmax.f32 %v1676, 0.0
        %1678 = vset.pattern.permute.xlu0 14
        %1679 = vperm.xlu0 %1678, %v977
        %v1680 = vpop.permute.xlu0 %1679
        %v1682 = vmul.f32 %v1680, %v1669
        %v1683 = vmul.f32 %v1682, %v1677
        %v1684 = vadd.f32 %v1661, %v1683
        %1685 = vset.pattern.permute.xlu0 47
        %1686 = vperm.xlu0 %1685, %v1398
        %v1687 = vpop.permute.xlu0 %1686
        %v1689 = vsub.f32 %v1015, %v1687
        %v1690 = vand.u32 2147483647, %v1689
        %v1691 = vsub.f32 1.0, %v1690
        %v1692 = vmax.f32 %v1691, 0.0
        %1693 = vset.pattern.permute.xlu0 15
        %1694 = vperm.xlu0 %1693, %v1400
        %v1695 = vpop.permute.xlu0 %1694
        %v1697 = vsub.f32 %v1028, %v1695
        %v1698 = vand.u32 2147483647, %v1697
        %v1699 = vsub.f32 1.0, %v1698
        %v1700 = vmax.f32 %v1699, 0.0
        %1701 = vset.pattern.permute.xlu0 15
        %1702 = vperm.xlu0 %1701, %v977
        %v1703 = vpop.permute.xlu0 %1702
        %v1705 = vmul.f32 %v1703, %v1692
        %v1706 = vmul.f32 %v1705, %v1700
        %v1707 = vadd.f32 %v1684, %v1706
        %v1708 = vpack.c.bf16 %v1707, %v1707
        %1710 = vrot.lane.b32.xlu0 %v1708, 64
        %v1711 = vpop.permute.xlu0 %1710
        %1712 = vrot.lane.b32.xlu0 %v1503, 120
        %v1713 = vpop.permute.xlu0 %1712
        %v1716 = vsel %vm974, %v1711, 0
        %1718 = vmatprep.subr.bf16.mxu0 0
        %1719 = vmatpush1.bf16.msra.mxu0 %v1713
        %1720 = vmatprep.subr.bf16.mxu0 0
        %1721 = vmatpush1.bf16.msra.mxu0 0
        %1722 = vmatprep.subr.bf16.mxu0 0
        %1723 = vmatpush1.bf16.msra.mxu0 0
        %1724 = vmatprep.subr.bf16.mxu0 0
        %1725 = vmatpush1.bf16.msra.mxu0 0
        %1726 = vmatprep.subr.bf16.mxu0 0
        %1727 = vmatpush1.bf16.msra.mxu0 0
        %1728 = vmatprep.subr.bf16.mxu0 0
        %1729 = vmatpush1.bf16.msra.mxu0 0
        %1730 = vmatprep.subr.bf16.mxu0 0
        %1731 = vmatpush1.bf16.msra.mxu0 0
        %1732 = vmatprep.subr.bf16.mxu0 0
        %1733 = vmatpush1.bf16.msra.mxu0 0
        %1734 = vmatprep.subr.bf16.mxu0 0
        %1735 = vmatpush1.bf16.msra.mxu0 0
        %1736 = vmatprep.subr.bf16.mxu0 0
        %1737 = vmatpush1.bf16.msra.mxu0 0
        %1738 = vmatprep.subr.bf16.mxu0 0
        %1739 = vmatpush1.bf16.msra.mxu0 0
        %1740 = vmatprep.subr.bf16.mxu0 0
        %1741 = vmatpush1.bf16.msra.mxu0 0
        %1742 = vmatprep.subr.bf16.mxu0 0
        %1743 = vmatpush1.bf16.msra.mxu0 0
        %1744 = vmatprep.subr.bf16.mxu0 0
        %1745 = vmatpush1.bf16.msra.mxu0 0
        %1746 = vmatprep.subr.bf16.mxu0 0
        %1747 = vmatpush1.bf16.msra.mxu0 0
        %1748 = vmatprep.subr.bf16.mxu0 0
        %1749 = vmatpush1.bf16.msra.mxu0 0
        %1750 = vmatprep.mubr.bf16.mxu0 0
        %1751 = vmatmul.mubr.bf16.gmra.mrb[0].mxu0 %v1716
        %v1752 = vpop.f32.mrb[0].mxu0
        %v1753 = vadd.f32 0.0, %v1752
        %v1754 = vpop.f32.mrb[0].mxu0
        %v1755 = vpop.f32.mrb[0].mxu0
        %v1756 = vpop.f32.mrb[0].mxu0
        %1757 = vdwg.mxu0
        %1758 = vrot.lane.b32.xlu0 %v1564, 120
        %v1759 = vpop.permute.xlu0 %1758
        %1760 = vrot.lane.b32.xlu0 %v1565, 120
        %v1761 = vpop.permute.xlu0 %1760
        %1762 = vrot.lane.b32.xlu0 %v1566, 120
        %v1763 = vpop.permute.xlu0 %1762
        %1764 = vrot.lane.b32.xlu0 %v1567, 120
        %v1765 = vpop.permute.xlu0 %1764
        %v1771 = vsel %vm1572, %v1208, 0
        %1773 = vmatprep.subr.bf16.mxu0 0
        %1774 = vmatpush1.bf16.msra.mxu0 %v1759
        %1775 = vmatprep.subr.bf16.mxu0 0
        %1776 = vmatpush1.bf16.msra.mxu0 %v1761
        %1777 = vmatprep.subr.bf16.mxu0 0
        %1778 = vmatpush1.bf16.msra.mxu0 %v1763
        %1779 = vmatprep.subr.bf16.mxu0 0
        %1780 = vmatpush1.bf16.msra.mxu0 %v1765
        %1781 = vmatprep.subr.bf16.mxu0 0
        %1782 = vmatpush1.bf16.msra.mxu0 0
        %1783 = vmatprep.subr.bf16.mxu0 0
        %1784 = vmatpush1.bf16.msra.mxu0 0
        %1785 = vmatprep.subr.bf16.mxu0 0
        %1786 = vmatpush1.bf16.msra.mxu0 0
        %1787 = vmatprep.subr.bf16.mxu0 0
        %1788 = vmatpush1.bf16.msra.mxu0 0
        %1789 = vmatprep.subr.bf16.mxu0 0
        %1790 = vmatpush1.bf16.msra.mxu0 0
        %1791 = vmatprep.subr.bf16.mxu0 0
        %1792 = vmatpush1.bf16.msra.mxu0 0
        %1793 = vmatprep.subr.bf16.mxu0 0
        %1794 = vmatpush1.bf16.msra.mxu0 0
        %1795 = vmatprep.subr.bf16.mxu0 0
        %1796 = vmatpush1.bf16.msra.mxu0 0
        %1797 = vmatprep.subr.bf16.mxu0 0
        %1798 = vmatpush1.bf16.msra.mxu0 0
        %1799 = vmatprep.subr.bf16.mxu0 0
        %1800 = vmatpush1.bf16.msra.mxu0 0
        %1801 = vmatprep.subr.bf16.mxu0 0
        %1802 = vmatpush1.bf16.msra.mxu0 0
        %1803 = vmatprep.subr.bf16.mxu0 0
        %1804 = vmatpush1.bf16.msra.mxu0 0
        %1805 = vmatprep.mubr.bf16.mxu0 0
        %1806 = vmatmul.mubr.bf16.gmra.mrb[0].mxu0 %v1771
        %v1807 = vpop.f32.mrb[0].mxu0
        %v1808 = vadd.f32 %v1753, %v1807
        %v1809 = vpop.f32.mrb[0].mxu0
        %v1810 = vpop.f32.mrb[0].mxu0
        %v1811 = vpop.f32.mrb[0].mxu0
        %1812 = vdwg.mxu0
        %1813 = vset.pattern.permute.xlu0 52
        %1814 = vperm.xlu0 %1813, %v1398
        %v1815 = vpop.permute.xlu0 %1814
        %v1817 = vsub.f32 %v1015, %v1815
        %v1818 = vand.u32 2147483647, %v1817
        %v1819 = vsub.f32 1.0, %v1818
        %v1820 = vmax.f32 %v1819, 0.0
        %1821 = vset.pattern.permute.xlu0 20
        %1822 = vperm.xlu0 %1821, %v1400
        %v1823 = vpop.permute.xlu0 %1822
        %v1825 = vsub.f32 %v1028, %v1823
        %v1826 = vand.u32 2147483647, %v1825
        %v1827 = vsub.f32 1.0, %v1826
        %v1828 = vmax.f32 %v1827, 0.0
        %1829 = vset.pattern.permute.xlu0 20
        %1830 = vperm.xlu0 %1829, %v977
        %v1831 = vpop.permute.xlu0 %1830
        %v1833 = vmul.f32 %v1831, %v1820
        %v1834 = vmul.f32 %v1833, %v1828
        %v1835 = vadd.f32 %v1834, 0.0
        %1836 = vset.pattern.permute.xlu0 53
        %1837 = vperm.xlu0 %1836, %v1398
        %v1838 = vpop.permute.xlu0 %1837
        %v1840 = vsub.f32 %v1015, %v1838
        %v1841 = vand.u32 2147483647, %v1840
        %v1842 = vsub.f32 1.0, %v1841
        %v1843 = vmax.f32 %v1842, 0.0
        %1844 = vset.pattern.permute.xlu0 21
        %1845 = vperm.xlu0 %1844, %v1400
        %v1846 = vpop.permute.xlu0 %1845
        %v1848 = vsub.f32 %v1028, %v1846
        %v1849 = vand.u32 2147483647, %v1848
        %v1850 = vsub.f32 1.0, %v1849
        %v1851 = vmax.f32 %v1850, 0.0
        %1852 = vset.pattern.permute.xlu0 21
        %1853 = vperm.xlu0 %1852, %v977
        %v1854 = vpop.permute.xlu0 %1853
        %v1856 = vmul.f32 %v1854, %v1843
        %v1857 = vmul.f32 %v1856, %v1851
        %v1858 = vadd.f32 %v1835, %v1857
        %1859 = vset.pattern.permute.xlu0 54
        %1860 = vperm.xlu0 %1859, %v1398
        %v1861 = vpop.permute.xlu0 %1860
        %v1863 = vsub.f32 %v1015, %v1861
        %v1864 = vand.u32 2147483647, %v1863
        %v1865 = vsub.f32 1.0, %v1864
        %v1866 = vmax.f32 %v1865, 0.0
        %1867 = vset.pattern.permute.xlu0 22
        %1868 = vperm.xlu0 %1867, %v1400
        %v1869 = vpop.permute.xlu0 %1868
        %v1871 = vsub.f32 %v1028, %v1869
        %v1872 = vand.u32 2147483647, %v1871
        %v1873 = vsub.f32 1.0, %v1872
        %v1874 = vmax.f32 %v1873, 0.0
        %1875 = vset.pattern.permute.xlu0 22
        %1876 = vperm.xlu0 %1875, %v977
        %v1877 = vpop.permute.xlu0 %1876
        %v1879 = vmul.f32 %v1877, %v1866
        %v1880 = vmul.f32 %v1879, %v1874
        %v1881 = vadd.f32 %v1858, %v1880
        %1882 = vset.pattern.permute.xlu0 55
        %1883 = vperm.xlu0 %1882, %v1398
        %v1884 = vpop.permute.xlu0 %1883
        %v1886 = vsub.f32 %v1015, %v1884
        %v1887 = vand.u32 2147483647, %v1886
        %v1888 = vsub.f32 1.0, %v1887
        %v1889 = vmax.f32 %v1888, 0.0
        %1890 = vset.pattern.permute.xlu0 23
        %1891 = vperm.xlu0 %1890, %v1400
        %v1892 = vpop.permute.xlu0 %1891
        %v1894 = vsub.f32 %v1028, %v1892
        %v1895 = vand.u32 2147483647, %v1894
        %v1896 = vsub.f32 1.0, %v1895
        %v1897 = vmax.f32 %v1896, 0.0
        %1898 = vset.pattern.permute.xlu0 23
        %1899 = vperm.xlu0 %1898, %v977
        %v1900 = vpop.permute.xlu0 %1899
        %v1902 = vmul.f32 %v1900, %v1889
        %v1903 = vmul.f32 %v1902, %v1897
        %v1904 = vadd.f32 %v1881, %v1903
        %v1905 = vpack.c.bf16 %v1904, %v1904
        %1907 = vrot.lane.b32.xlu0 %v1905, 64
        %v1908 = vpop.permute.xlu0 %1907
        %1909 = vrot.lane.b32.xlu0 %v1503, 112
        %v1910 = vpop.permute.xlu0 %1909
        %v1913 = vsel %vm974, %v1908, 0
        %1915 = vmatprep.subr.bf16.mxu0 0
        %1916 = vmatpush1.bf16.msra.mxu0 %v1910
        %1917 = vmatprep.subr.bf16.mxu0 0
        %1918 = vmatpush1.bf16.msra.mxu0 0
        %1919 = vmatprep.subr.bf16.mxu0 0
        %1920 = vmatpush1.bf16.msra.mxu0 0
        %1921 = vmatprep.subr.bf16.mxu0 0
        %1922 = vmatpush1.bf16.msra.mxu0 0
        %1923 = vmatprep.subr.bf16.mxu0 0
        %1924 = vmatpush1.bf16.msra.mxu0 0
        %1925 = vmatprep.subr.bf16.mxu0 0
        %1926 = vmatpush1.bf16.msra.mxu0 0
        %1927 = vmatprep.subr.bf16.mxu0 0
        %1928 = vmatpush1.bf16.msra.mxu0 0
        %1929 = vmatprep.subr.bf16.mxu0 0
        %1930 = vmatpush1.bf16.msra.mxu0 0
        %1931 = vmatprep.subr.bf16.mxu0 0
        %1932 = vmatpush1.bf16.msra.mxu0 0
        %1933 = vmatprep.subr.bf16.mxu0 0
        %1934 = vmatpush1.bf16.msra.mxu0 0
        %1935 = vmatprep.subr.bf16.mxu0 0
        %1936 = vmatpush1.bf16.msra.mxu0 0
        %1937 = vmatprep.subr.bf16.mxu0 0
        %1938 = vmatpush1.bf16.msra.mxu0 0
        %1939 = vmatprep.subr.bf16.mxu0 0
        %1940 = vmatpush1.bf16.msra.mxu0 0
        %1941 = vmatprep.subr.bf16.mxu0 0
        %1942 = vmatpush1.bf16.msra.mxu0 0
        %1943 = vmatprep.subr.bf16.mxu0 0
        %1944 = vmatpush1.bf16.msra.mxu0 0
        %1945 = vmatprep.subr.bf16.mxu0 0
        %1946 = vmatpush1.bf16.msra.mxu0 0
        %1947 = vmatprep.mubr.bf16.mxu0 0
        %1948 = vmatmul.mubr.bf16.gmra.mrb[0].mxu0 %v1913
        %v1949 = vpop.f32.mrb[0].mxu0
        %v1950 = vadd.f32 0.0, %v1949
        %v1951 = vpop.f32.mrb[0].mxu0
        %v1952 = vpop.f32.mrb[0].mxu0
        %v1953 = vpop.f32.mrb[0].mxu0
        %1954 = vdwg.mxu0
        %1955 = vrot.lane.b32.xlu0 %v1564, 112
        %v1956 = vpop.permute.xlu0 %1955
        %1957 = vrot.lane.b32.xlu0 %v1565, 112
        %v1958 = vpop.permute.xlu0 %1957
        %1959 = vrot.lane.b32.xlu0 %v1566, 112
        %v1960 = vpop.permute.xlu0 %1959
        %1961 = vrot.lane.b32.xlu0 %v1567, 112
        %v1962 = vpop.permute.xlu0 %1961
        %v1968 = vsel %vm1572, %v1301, 0
        %1970 = vmatprep.subr.bf16.mxu0 0
        %1971 = vmatpush1.bf16.msra.mxu0 %v1956
        %1972 = vmatprep.subr.bf16.mxu0 0
        %1973 = vmatpush1.bf16.msra.mxu0 %v1958
        %1974 = vmatprep.subr.bf16.mxu0 0
        %1975 = vmatpush1.bf16.msra.mxu0 %v1960
        %1976 = vmatprep.subr.bf16.mxu0 0
        %1977 = vmatpush1.bf16.msra.mxu0 %v1962
        %1978 = vmatprep.subr.bf16.mxu0 0
        %1979 = vmatpush1.bf16.msra.mxu0 0
        %1980 = vmatprep.subr.bf16.mxu0 0
        %1981 = vmatpush1.bf16.msra.mxu0 0
        %1982 = vmatprep.subr.bf16.mxu0 0
        %1983 = vmatpush1.bf16.msra.mxu0 0
        %1984 = vmatprep.subr.bf16.mxu0 0
        %1985 = vmatpush1.bf16.msra.mxu0 0
        %1986 = vmatprep.subr.bf16.mxu0 0
        %1987 = vmatpush1.bf16.msra.mxu0 0
        %1988 = vmatprep.subr.bf16.mxu0 0
        %1989 = vmatpush1.bf16.msra.mxu0 0
        %1990 = vmatprep.subr.bf16.mxu0 0
        %1991 = vmatpush1.bf16.msra.mxu0 0
        %1992 = vmatprep.subr.bf16.mxu0 0
        %1993 = vmatpush1.bf16.msra.mxu0 0
        %1994 = vmatprep.subr.bf16.mxu0 0
        %1995 = vmatpush1.bf16.msra.mxu0 0
        %1996 = vmatprep.subr.bf16.mxu0 0
        %1997 = vmatpush1.bf16.msra.mxu0 0
        %1998 = vmatprep.subr.bf16.mxu0 0
        %1999 = vmatpush1.bf16.msra.mxu0 0
        %2000 = vmatprep.subr.bf16.mxu0 0
        %2001 = vmatpush1.bf16.msra.mxu0 0
        %2002 = vmatprep.mubr.bf16.mxu0 0
        %2003 = vmatmul.mubr.bf16.gmra.mrb[0].mxu0 %v1968
        %v2004 = vpop.f32.mrb[0].mxu0
        %v2005 = vadd.f32 %v1950, %v2004
        %v2006 = vpop.f32.mrb[0].mxu0
        %v2007 = vpop.f32.mrb[0].mxu0
        %v2008 = vpop.f32.mrb[0].mxu0
        %2009 = vdwg.mxu0
        %2010 = vset.pattern.permute.xlu0 60
        %2011 = vperm.xlu0 %2010, %v1398
        %v2012 = vpop.permute.xlu0 %2011
        %v2014 = vsub.f32 %v1015, %v2012
        %v2015 = vand.u32 2147483647, %v2014
        %v2016 = vsub.f32 1.0, %v2015
        %v2017 = vmax.f32 %v2016, 0.0
        %2018 = vset.pattern.permute.xlu0 28
        %2019 = vperm.xlu0 %2018, %v1400
        %v2020 = vpop.permute.xlu0 %2019
        %v2022 = vsub.f32 %v1028, %v2020
        %v2023 = vand.u32 2147483647, %v2022
        %v2024 = vsub.f32 1.0, %v2023
        %v2025 = vmax.f32 %v2024, 0.0
        %2026 = vset.pattern.permute.xlu0 28
        %2027 = vperm.xlu0 %2026, %v977
        %v2028 = vpop.permute.xlu0 %2027
        %v2030 = vmul.f32 %v2028, %v2017
        %v2031 = vmul.f32 %v2030, %v2025
        %v2032 = vadd.f32 %v2031, 0.0
        %2033 = vset.pattern.permute.xlu0 61
        %2034 = vperm.xlu0 %2033, %v1398
        %v2035 = vpop.permute.xlu0 %2034
        %v2037 = vsub.f32 %v1015, %v2035
        %v2038 = vand.u32 2147483647, %v2037
        %v2039 = vsub.f32 1.0, %v2038
        %v2040 = vmax.f32 %v2039, 0.0
        %2041 = vset.pattern.permute.xlu0 29
        %2042 = vperm.xlu0 %2041, %v1400
        %v2043 = vpop.permute.xlu0 %2042
        %v2045 = vsub.f32 %v1028, %v2043
        %v2046 = vand.u32 2147483647, %v2045
        %v2047 = vsub.f32 1.0, %v2046
        %v2048 = vmax.f32 %v2047, 0.0
        %2049 = vset.pattern.permute.xlu0 29
        %2050 = vperm.xlu0 %2049, %v977
        %v2051 = vpop.permute.xlu0 %2050
        %v2053 = vmul.f32 %v2051, %v2040
        %v2054 = vmul.f32 %v2053, %v2048
        %v2055 = vadd.f32 %v2032, %v2054
        %2056 = vset.pattern.permute.xlu0 62
        %2057 = vperm.xlu0 %2056, %v1398
        %v2058 = vpop.permute.xlu0 %2057
        %v2060 = vsub.f32 %v1015, %v2058
        %v2061 = vand.u32 2147483647, %v2060
        %v2062 = vsub.f32 1.0, %v2061
        %v2063 = vmax.f32 %v2062, 0.0
        %2064 = vset.pattern.permute.xlu0 30
        %2065 = vperm.xlu0 %2064, %v1400
        %v2066 = vpop.permute.xlu0 %2065
        %v2068 = vsub.f32 %v1028, %v2066
        %v2069 = vand.u32 2147483647, %v2068
        %v2070 = vsub.f32 1.0, %v2069
        %v2071 = vmax.f32 %v2070, 0.0
        %2072 = vset.pattern.permute.xlu0 30
        %2073 = vperm.xlu0 %2072, %v977
        %v2074 = vpop.permute.xlu0 %2073
        %v2076 = vmul.f32 %v2074, %v2063
        %v2077 = vmul.f32 %v2076, %v2071
        %v2078 = vadd.f32 %v2055, %v2077
        %2079 = vset.pattern.permute.xlu0 63
        %2080 = vperm.xlu0 %2079, %v1398
        %v2081 = vpop.permute.xlu0 %2080
        %v2083 = vsub.f32 %v1015, %v2081
        %v2084 = vand.u32 2147483647, %v2083
        %v2085 = vsub.f32 1.0, %v2084
        %v2086 = vmax.f32 %v2085, 0.0
        %2087 = vset.pattern.permute.xlu0 31
        %2088 = vperm.xlu0 %2087, %v1400
        %v2089 = vpop.permute.xlu0 %2088
        %v2091 = vsub.f32 %v1028, %v2089
        %v2092 = vand.u32 2147483647, %v2091
        %v2093 = vsub.f32 1.0, %v2092
        %v2094 = vmax.f32 %v2093, 0.0
        %2095 = vset.pattern.permute.xlu0 31
        %2096 = vperm.xlu0 %2095, %v977
        %v2097 = vpop.permute.xlu0 %2096
        %v2099 = vmul.f32 %v2097, %v2086
        %v2100 = vmul.f32 %v2099, %v2094
        %v2101 = vadd.f32 %v2078, %v2100
        %v2102 = vpack.c.bf16 %v2101, %v2101
        %2104 = vrot.lane.b32.xlu0 %v2102, 64
        %v2105 = vpop.permute.xlu0 %2104
        %2106 = vrot.lane.b32.xlu0 %v1503, 104
        %v2107 = vpop.permute.xlu0 %2106
        %v2110 = vsel %vm974, %v2105, 0
        %2112 = vmatprep.subr.bf16.mxu0 0
        %2113 = vmatpush1.bf16.msra.mxu0 %v2107
        %2114 = vmatprep.subr.bf16.mxu0 0
        %2115 = vmatpush1.bf16.msra.mxu0 0
        %2116 = vmatprep.subr.bf16.mxu0 0
        %2117 = vmatpush1.bf16.msra.mxu0 0
        %2118 = vmatprep.subr.bf16.mxu0 0
        %2119 = vmatpush1.bf16.msra.mxu0 0
        %2120 = vmatprep.subr.bf16.mxu0 0
        %2121 = vmatpush1.bf16.msra.mxu0 0
        %2122 = vmatprep.subr.bf16.mxu0 0
        %2123 = vmatpush1.bf16.msra.mxu0 0
        %2124 = vmatprep.subr.bf16.mxu0 0
        %2125 = vmatpush1.bf16.msra.mxu0 0
        %2126 = vmatprep.subr.bf16.mxu0 0
        %2127 = vmatpush1.bf16.msra.mxu0 0
        %2128 = vmatprep.subr.bf16.mxu0 0
        %2129 = vmatpush1.bf16.msra.mxu0 0
        %2130 = vmatprep.subr.bf16.mxu0 0
        %2131 = vmatpush1.bf16.msra.mxu0 0
        %2132 = vmatprep.subr.bf16.mxu0 0
        %2133 = vmatpush1.bf16.msra.mxu0 0
        %2134 = vmatprep.subr.bf16.mxu0 0
        %2135 = vmatpush1.bf16.msra.mxu0 0
        %2136 = vmatprep.subr.bf16.mxu0 0
        %2137 = vmatpush1.bf16.msra.mxu0 0
        %2138 = vmatprep.subr.bf16.mxu0 0
        %2139 = vmatpush1.bf16.msra.mxu0 0
        %2140 = vmatprep.subr.bf16.mxu0 0
        %2141 = vmatpush1.bf16.msra.mxu0 0
        %2142 = vmatprep.subr.bf16.mxu0 0
        %2143 = vmatpush1.bf16.msra.mxu0 0
        %2144 = vmatprep.mubr.bf16.mxu0 0
        %2145 = vmatmul.mubr.bf16.gmra.mrb[0].mxu0 %v2110
        %v2146 = vpop.f32.mrb[0].mxu0
        %v2147 = vadd.f32 0.0, %v2146
        %v2148 = vpop.f32.mrb[0].mxu0
        %v2149 = vpop.f32.mrb[0].mxu0
        %v2150 = vpop.f32.mrb[0].mxu0
        %2151 = vdwg.mxu0
        %2152 = vrot.lane.b32.xlu0 %v1564, 104
        %v2153 = vpop.permute.xlu0 %2152
        %2154 = vrot.lane.b32.xlu0 %v1565, 104
        %v2155 = vpop.permute.xlu0 %2154
        %2156 = vrot.lane.b32.xlu0 %v1566, 104
        %v2157 = vpop.permute.xlu0 %2156
        %2158 = vrot.lane.b32.xlu0 %v1567, 104
        %v2159 = vpop.permute.xlu0 %2158
        %v2165 = vsel %vm1572, %v1394, 0
        %2167 = vmatprep.subr.bf16.mxu0 0
        %2168 = vmatpush1.bf16.msra.mxu0 %v2153
        %2169 = vmatprep.subr.bf16.mxu0 0
        %2170 = vmatpush1.bf16.msra.mxu0 %v2155
        %2171 = vmatprep.subr.bf16.mxu0 0
        %2172 = vmatpush1.bf16.msra.mxu0 %v2157
        %2173 = vmatprep.subr.bf16.mxu0 0
        %2174 = vmatpush1.bf16.msra.mxu0 %v2159
        %2175 = vmatprep.subr.bf16.mxu0 0
        %2176 = vmatpush1.bf16.msra.mxu0 0
        %2177 = vmatprep.subr.bf16.mxu0 0
        %2178 = vmatpush1.bf16.msra.mxu0 0
        %2179 = vmatprep.subr.bf16.mxu0 0
        %2180 = vmatpush1.bf16.msra.mxu0 0
        %2181 = vmatprep.subr.bf16.mxu0 0
        %2182 = vmatpush1.bf16.msra.mxu0 0
        %2183 = vmatprep.subr.bf16.mxu0 0
        %2184 = vmatpush1.bf16.msra.mxu0 0
        %2185 = vmatprep.subr.bf16.mxu0 0
        %2186 = vmatpush1.bf16.msra.mxu0 0
        %2187 = vmatprep.subr.bf16.mxu0 0
        %2188 = vmatpush1.bf16.msra.mxu0 0
        %2189 = vmatprep.subr.bf16.mxu0 0
        %2190 = vmatpush1.bf16.msra.mxu0 0
        %2191 = vmatprep.subr.bf16.mxu0 0
        %2192 = vmatpush1.bf16.msra.mxu0 0
        %2193 = vmatprep.subr.bf16.mxu0 0
        %2194 = vmatpush1.bf16.msra.mxu0 0
        %2195 = vmatprep.subr.bf16.mxu0 0
        %2196 = vmatpush1.bf16.msra.mxu0 0
        %2197 = vmatprep.subr.bf16.mxu0 0
        %2198 = vmatpush1.bf16.msra.mxu0 0
        %2199 = vmatprep.mubr.bf16.mxu0 0
        %2200 = vmatmul.mubr.bf16.gmra.mrb[0].mxu0 %v2165
        %v2201 = vpop.f32.mrb[0].mxu0
        %v2202 = vadd.f32 %v2147, %v2201
        %v2203 = vpop.f32.mrb[0].mxu0
        %v2204 = vpop.f32.mrb[0].mxu0
        %v2205 = vpop.f32.mrb[0].mxu0
        %2206 = vdwg.mxu0
        %2208 = vrot.lane.b32.xlu0 %v1808, 8
        %v2209 = vpop.permute.xlu0 %2208
        %2212 = vrot.lane.b32.xlu0 %v2005, 16
        %v2213 = vpop.permute.xlu0 %2212
        %2216 = vrot.lane.b32.xlu0 %v2202, 24
        %v2217 = vpop.permute.xlu0 %2216
        %v2219 = vsel %vm972, %v1611, %v2209
        %v2220 = vsel %vm974, %v2219, %v2213
        %v2221 = vsel %vm976, %v2220, %v2217
        %v2222 = vpack.c.bf16 %v2221, %v2221
        %v2223 = vld [vmem:[%s7] sm:$0xf]
        %v2224 = vld [vmem:[%s7 + $0x4] sm:$0xf]
        %v2225 = vld [vmem:[%s7 + $0x8] sm:$0xf]
        %v2226 = vld [vmem:[%s7 + $0xc] sm:$0xf]
        %v2227 = vld [vmem:[%s8] sm:$0x1]
        %v2229 = vlaneseq
        %v2230 = vshrl.u32 %v2229, 7
        %v2231 = vsub.s32 0, %v2230
        %v2232 = vrot.slane %v2227, %v2231
        %v2238 = vunpack.c.l.b16 %v2223
        %v2239 = vunpack.c.l.b16 %v2224
        %v2240 = vunpack.c.l.b16 %v2225
        %v2241 = vunpack.c.l.b16 %v2226
        %v2242 = vpack.c.b16 %v2239, %v2238
        %v2243 = vpack.c.b16 %v2241, %v2240
        %v2247 = vsel %vm672, %v2222, 0
        %2249 = vmatprep.subr.bf16.mxu0 0
        %2250 = vmatpush1.bf16.msra.mxu0 %v2242
        %2251 = vmatprep.subr.bf16.mxu0 0
        %2252 = vmatpush1.bf16.msra.mxu0 %v2243
        %2253 = vmatprep.subr.bf16.mxu0 0
        %2254 = vmatpush1.bf16.msra.mxu0 0
        %2255 = vmatprep.subr.bf16.mxu0 0
        %2256 = vmatpush1.bf16.msra.mxu0 0
        %2257 = vmatprep.subr.bf16.mxu0 0
        %2258 = vmatpush1.bf16.msra.mxu0 0
        %2259 = vmatprep.subr.bf16.mxu0 0
        %2260 = vmatpush1.bf16.msra.mxu0 0
        %2261 = vmatprep.subr.bf16.mxu0 0
        %2262 = vmatpush1.bf16.msra.mxu0 0
        %2263 = vmatprep.subr.bf16.mxu0 0
        %2264 = vmatpush1.bf16.msra.mxu0 0
        %2265 = vmatprep.subr.bf16.mxu0 0
        %2266 = vmatpush1.bf16.msra.mxu0 0
        %2267 = vmatprep.subr.bf16.mxu0 0
        %2268 = vmatpush1.bf16.msra.mxu0 0
        %2269 = vmatprep.subr.bf16.mxu0 0
        %2270 = vmatpush1.bf16.msra.mxu0 0
        %2271 = vmatprep.subr.bf16.mxu0 0
        %2272 = vmatpush1.bf16.msra.mxu0 0
        %2273 = vmatprep.subr.bf16.mxu0 0
        %2274 = vmatpush1.bf16.msra.mxu0 0
        %2275 = vmatprep.subr.bf16.mxu0 0
        %2276 = vmatpush1.bf16.msra.mxu0 0
        %2277 = vmatprep.subr.bf16.mxu0 0
        %2278 = vmatpush1.bf16.msra.mxu0 0
        %2279 = vmatprep.subr.bf16.mxu0 0
        %2280 = vmatpush1.bf16.msra.mxu0 0
        %2281 = vmatprep.mubr.bf16.mxu0 0
        %2282 = vmatmul.mubr.bf16.gmra.mrb[0].mxu0 %v2247
        %v2283 = vpop.f32.mrb[0].mxu0
        %v2284 = vadd.f32 %v2232, %v2283
        %v2285 = vpop.f32.mrb[0].mxu0
        %v2286 = vpop.f32.mrb[0].mxu0
        %v2287 = vpop.f32.mrb[0].mxu0
        %2288 = vdwg.mxu0
        %v2289 = vadd.f32 %v646, %v2284
        %v2290 = vld [vmem:[%s9] sm:$0x1]
        %v2291 = vld [vmem:[%s10] sm:$0x1]
        %v2292 = vsel %vm672, %v2289, 0.0
        %2293 = vadd.xlane.f32.xlu0 %v2292
        %v2294 = vpop.xlane.xlu0 %2293
        %v2295 = vrcp.pop 32.0
        %v2296 = vmul.f32 %v2294, %v2295
        %v2297 = vsub.f32 %v2289, %v2296
        %v2298 = vmul.f32 %v2297, %v2297
        %v2299 = vsel %vm672, %v2298, 0.0
        %2300 = vadd.xlane.f32.xlu0 %v2299
        %v2301 = vpop.xlane.xlu0 %2300
        %v2302 = vmul.f32 %v2301, %v2295
        %v2303 = vadd.f32 %v2302, 1e-05
        %v2304 = vrsqrt.pop %v2303
        %v2305 = vmul.f32 %v2297, %v2304
        %v2307 = vlaneseq
        %v2308 = vshrl.u32 %v2307, 7
        %v2309 = vsub.s32 0, %v2308
        %v2310 = vrot.slane %v2290, %v2309
        %v2312 = vmul.f32 %v2305, %v2310
        %v2314 = vlaneseq
        %v2315 = vshrl.u32 %v2314, 7
        %v2316 = vsub.s32 0, %v2315
        %v2317 = vrot.slane %v2291, %v2316
        %v2319 = vadd.f32 %v2312, %v2317
        %v2320 = vpack.c.bf16 %v2319, %v2319
        %v2321 = vld [vmem:[%s11] sm:$0xf]
        %v2322 = vld [vmem:[%s11 + $0x4] sm:$0xf]
        %v2323 = vld [vmem:[%s11 + $0x8] sm:$0xf]
        %v2324 = vld [vmem:[%s11 + $0xc] sm:$0xf]
        %v2325 = vld [vmem:[%s12] sm:$0x1]
        %v2327 = vlaneseq
        %v2328 = vshrl.u32 %v2327, 7
        %v2329 = vsub.s32 0, %v2328
        %v2330 = vrot.slane %v2325, %v2329
        %v2336 = vunpack.c.l.b16 %v2321
        %v2337 = vunpack.c.l.b16 %v2322
        %v2338 = vunpack.c.l.b16 %v2323
        %v2339 = vunpack.c.l.b16 %v2324
        %v2340 = vpack.c.b16 %v2337, %v2336
        %v2341 = vpack.c.b16 %v2339, %v2338
        %v2345 = vsel %vm672, %v2320, 0
        %2347 = vmatprep.subr.bf16.mxu0 0
        %2348 = vmatpush1.bf16.msra.mxu0 %v2340
        %2349 = vmatprep.subr.bf16.mxu0 0
        %2350 = vmatpush1.bf16.msra.mxu0 %v2341
        %2351 = vmatprep.subr.bf16.mxu0 0
        %2352 = vmatpush1.bf16.msra.mxu0 0
        %2353 = vmatprep.subr.bf16.mxu0 0
        %2354 = vmatpush1.bf16.msra.mxu0 0
        %2355 = vmatprep.subr.bf16.mxu0 0
        %2356 = vmatpush1.bf16.msra.mxu0 0
        %2357 = vmatprep.subr.bf16.mxu0 0
        %2358 = vmatpush1.bf16.msra.mxu0 0
        %2359 = vmatprep.subr.bf16.mxu0 0
        %2360 = vmatpush1.bf16.msra.mxu0 0
        %2361 = vmatprep.subr.bf16.mxu0 0
        %2362 = vmatpush1.bf16.msra.mxu0 0
        %2363 = vmatprep.subr.bf16.mxu0 0
        %2364 = vmatpush1.bf16.msra.mxu0 0
        %2365 = vmatprep.subr.bf16.mxu0 0
        %2366 = vmatpush1.bf16.msra.mxu0 0
        %2367 = vmatprep.subr.bf16.mxu0 0
        %2368 = vmatpush1.bf16.msra.mxu0 0
        %2369 = vmatprep.subr.bf16.mxu0 0
        %2370 = vmatpush1.bf16.msra.mxu0 0
        %2371 = vmatprep.subr.bf16.mxu0 0
        %2372 = vmatpush1.bf16.msra.mxu0 0
        %2373 = vmatprep.subr.bf16.mxu0 0
        %2374 = vmatpush1.bf16.msra.mxu0 0
        %2375 = vmatprep.subr.bf16.mxu0 0
        %2376 = vmatpush1.bf16.msra.mxu0 0
        %2377 = vmatprep.subr.bf16.mxu0 0
        %2378 = vmatpush1.bf16.msra.mxu0 0
        %2379 = vmatprep.mubr.bf16.mxu0 0
        %2380 = vmatmul.mubr.bf16.gmra.mrb[0].mxu0 %v2345
        %v2381 = vpop.f32.mrb[0].mxu0
        %v2382 = vadd.f32 %v2330, %v2381
        %v2383 = vpop.f32.mrb[0].mxu0
        %v2384 = vpop.f32.mrb[0].mxu0
        %v2385 = vpop.f32.mrb[0].mxu0
        %2386 = vdwg.mxu0
        %v2387 = vmax.f32 %v2382, 0.0
        %v2388 = vpack.c.bf16 %v2387, %v2387
        %v2389 = vld [vmem:[%s13] sm:$0xf]
        %v2390 = vld [vmem:[%s13 + $0x4] sm:$0xf]
        %v2391 = vld [vmem:[%s13 + $0x8] sm:$0xf]
        %v2392 = vld [vmem:[%s13 + $0xc] sm:$0xf]
        %v2393 = vld [vmem:[%s13 + $0x10] sm:$0xf]
        %v2394 = vld [vmem:[%s13 + $0x14] sm:$0xf]
        %v2395 = vld [vmem:[%s13 + $0x18] sm:$0xf]
        %v2396 = vld [vmem:[%s13 + $0x1c] sm:$0xf]
        %v2397 = vld [vmem:[%s14] sm:$0x1]
        %v2399 = vlaneseq
        %v2400 = vshrl.u32 %v2399, 7
        %v2401 = vsub.s32 0, %v2400
        %v2402 = vrot.slane %v2397, %v2401
        %v2412 = vunpack.c.l.b16 %v2389
        %v2413 = vunpack.c.l.b16 %v2390
        %v2414 = vunpack.c.l.b16 %v2391
        %v2415 = vunpack.c.l.b16 %v2392
        %v2416 = vunpack.c.l.b16 %v2393
        %v2417 = vunpack.c.l.b16 %v2394
        %v2418 = vunpack.c.l.b16 %v2395
        %v2419 = vunpack.c.l.b16 %v2396
        %v2420 = vpack.c.b16 %v2413, %v2412
        %v2421 = vpack.c.b16 %v2415, %v2414
        %v2422 = vpack.c.b16 %v2417, %v2416
        %v2423 = vpack.c.b16 %v2419, %v2418
        %v2429 = vsel %vm1572, %v2388, 0
        %2431 = vmatprep.subr.bf16.mxu0 0
        %2432 = vmatpush1.bf16.msra.mxu0 %v2420
        %2433 = vmatprep.subr.bf16.mxu0 0
        %2434 = vmatpush1.bf16.msra.mxu0 %v2421
        %2435 = vmatprep.subr.bf16.mxu0 0
        %2436 = vmatpush1.bf16.msra.mxu0 %v2422
        %2437 = vmatprep.subr.bf16.mxu0 0
        %2438 = vmatpush1.bf16.msra.mxu0 %v2423
        %2439 = vmatprep.subr.bf16.mxu0 0
        %2440 = vmatpush1.bf16.msra.mxu0 0
        %2441 = vmatprep.subr.bf16.mxu0 0
        %2442 = vmatpush1.bf16.msra.mxu0 0
        %2443 = vmatprep.subr.bf16.mxu0 0
        %2444 = vmatpush1.bf16.msra.mxu0 0
        %2445 = vmatprep.subr.bf16.mxu0 0
        %2446 = vmatpush1.bf16.msra.mxu0 0
        %2447 = vmatprep.subr.bf16.mxu0 0
        %2448 = vmatpush1.bf16.msra.mxu0 0
        %2449 = vmatprep.subr.bf16.mxu0 0
        %2450 = vmatpush1.bf16.msra.mxu0 0
        %2451 = vmatprep.subr.bf16.mxu0 0
        %2452 = vmatpush1.bf16.msra.mxu0 0
        %2453 = vmatprep.subr.bf16.mxu0 0
        %2454 = vmatpush1.bf16.msra.mxu0 0
        %2455 = vmatprep.subr.bf16.mxu0 0
        %2456 = vmatpush1.bf16.msra.mxu0 0
        %2457 = vmatprep.subr.bf16.mxu0 0
        %2458 = vmatpush1.bf16.msra.mxu0 0
        %2459 = vmatprep.subr.bf16.mxu0 0
        %2460 = vmatpush1.bf16.msra.mxu0 0
        %2461 = vmatprep.subr.bf16.mxu0 0
        %2462 = vmatpush1.bf16.msra.mxu0 0
        %2463 = vmatprep.mubr.bf16.mxu0 0
        %2464 = vmatmul.mubr.bf16.gmra.mrb[0].mxu0 %v2429
        %v2465 = vpop.f32.mrb[0].mxu0
        %v2466 = vadd.f32 %v2402, %v2465
        %v2467 = vpop.f32.mrb[0].mxu0
        %v2468 = vpop.f32.mrb[0].mxu0
        %v2469 = vpop.f32.mrb[0].mxu0
        %2470 = vdwg.mxu0
        %v2471 = vadd.f32 %v2319, %v2466
        %v2472 = vld [vmem:[%s15] sm:$0x1]
        %v2473 = vld [vmem:[%s16] sm:$0x1]
        %v2474 = vsel %vm672, %v2471, 0.0
        %2475 = vadd.xlane.f32.xlu0 %v2474
        %v2476 = vpop.xlane.xlu0 %2475
        %v2477 = vmul.f32 %v2476, %v2295
        %v2478 = vsub.f32 %v2471, %v2477
        %v2479 = vmul.f32 %v2478, %v2478
        %v2480 = vsel %vm672, %v2479, 0.0
        %2481 = vadd.xlane.f32.xlu0 %v2480
        %v2482 = vpop.xlane.xlu0 %2481
        %v2483 = vmul.f32 %v2482, %v2295
        %v2484 = vadd.f32 %v2483, 1e-05
        %v2485 = vrsqrt.pop %v2484
        %v2486 = vmul.f32 %v2478, %v2485
        %v2488 = vlaneseq
        %v2489 = vshrl.u32 %v2488, 7
        %v2490 = vsub.s32 0, %v2489
        %v2491 = vrot.slane %v2472, %v2490
        %v2493 = vmul.f32 %v2486, %v2491
        %v2495 = vlaneseq
        %v2496 = vshrl.u32 %v2495, 7
        %v2497 = vsub.s32 0, %v2496
        %v2498 = vrot.slane %v2473, %v2497
        %v2500 = vadd.f32 %v2493, %v2498
        %2501 = vst.msk [vmem:[%s618] sm:$0xff] %vm672, %v2500
        %s2502 = sand.u32 %s436, 1
        %s2503 = scalar_lea.sflag [#allocation3], %s2502
        %s2504 = sand.u32 %s436, 1
        %s2505 = smul.addr %s2504, 8
        %s2506 = scalar_lea.vmem [#allocation2], %s2505
        // Predicated region
        $region89: #{decoder_layer_forward.5} parent=87 // pred_check
          %p2507 = pneg %p446
        $region90: #{decoder_layer_forward.5} parent=87 // pred_check_branch
          %2509 = sbr.rel (%p2507) target = $region92
        $region91: #{decoder_layer_forward.5} parent=87 // pred_region
          %s2511 = ssub.s32 128, 128
          %2512 = vsyncadd %s2503, %s2511
          %s2513 = sadd.s32 %s36, %s35
          %s2514 = smul.addr %s2513, 128
          %s2515 = scalar_lea.hbm %s17, %s2514
          %s2517 = sshll.u32 %s2506, 4
          %s2518 = int_to_ptr.vmem [resolvable:$true] %s2517
          %2520 = dma.vmem_to_hbm [thread:$0]  %s2518, 128, %s2515, %s2503
        $region92: #{decoder_layer_forward.5} parent=87 // pred_fallthru
          _
      $region88: #{decoder_layer_forward.5} parent=5 // pred_fallthru
        _
      %p2521 = scmp.le.s32.totalorder 2, %s26
      // Predicated region
      $region93: #{decoder_layer_forward.5} parent=5 // pred_check
        %p2522 = pneg %p2521
      $region94: #{decoder_layer_forward.5} parent=5 // pred_check_branch
        %2524 = sbr.rel (%p2522) target = $region96
      $region95: #{decoder_layer_forward.5} parent=5 // pred_region
        %s2525 = ssub.s32 %s26, 2
        // Predicated region
        $region97: #{decoder_layer_forward.5} parent=95 // pred_check
          %p2526 = pneg %p452
        $region98: #{decoder_layer_forward.5} parent=95 // pred_check_branch
          %2528 = sbr.rel (%p2526) target = $region100
        $region99: #{decoder_layer_forward.5} parent=95 // pred_region
          %s2529 = sand.u32 %s437, 1
          %s2530 = scalar_lea.sflag [#allocation3], %s2529
          %s2531 = sand.u32 %s437, 1
          %s2532 = smul.addr %s2531, 8
          %s2533 = scalar_lea.vmem [#allocation2], %s2532
          %2534 = dma.done %s2530, 128
        $region100: #{decoder_layer_forward.5} parent=95 // pred_fallthru
          _
      $region96: #{decoder_layer_forward.5} parent=5 // pred_fallthru
        _
    $region6: #{decoder_layer_forward.5} parent=1 // loop_footer
      %s30 = sadd.s32 1, %s26
    $region7: #{decoder_layer_forward.5} parent=1 // loop_footer_branch
      %25 = sbr.rel target = $region3
    $region8: #{decoder_layer_forward.5} parent=1 // loop_exit
      _
    %2535 = vsyncpa [#allocation3], 1
    %s2536 = scalar_lea.sflag [#allocation3], 1
    %2537 = vsyncpa %s2536, 1

</llo_original>
